<compile_context>
chip_gen: v5e
topology: v5e:2x2
jax: 0.10.0
libtpu: 0.0.40
codegen_flags: <defaults>
</compile_context>

<pallas_src>
import numpy as np
import jax
import jax.numpy as jnp
from jax.experimental import pallas as pl
from jax.experimental.pallas import tpu as pltpu

F32 = jnp.float32
BF16 = jnp.bfloat16
LN_EPS = 1e-5

# ----------------------- hyper-parameters (small, consistent with __init__) ----------
BATCH = 2
SEQ = 16
DIM = 64                      # dim
ATTN_DIM = 32                 # attn_dim
H3_DIM = DIM - ATTN_DIM       # h3_dim
HEADS = 4                     # heads
DIM_HEAD = 16                 # dim_head
ATTN_INNER = HEADS * DIM_HEAD
H3_HEAD_DIM = 8               # h3_dim_head
H3_HEADS = H3_DIM // H3_HEAD_DIM
FF_MULT = 4
FF_HIDDEN = DIM * FF_MULT
CONV_EXPANSION = 2
CONV_INNER = DIM * CONV_EXPANSION
CONV_KERNEL = 31              # conv_kernel_size (causal)
N_DW_TAPS = min(CONV_KERNEL, SEQ)          # taps beyond the causal window contribute 0
KV_CH = H3_HEAD_DIM * H3_DIM               # 256 H3 state channels, order (d1, h, d2)
SCRATCH_W = max(KV_CH, CONV_INNER, H3_DIM)

PARAM_ORDER = (
    # three FeedForward blocks (Scale(0.5, PreNorm(FFN)))
    "ff1_ln_g", "ff1_ln_b", "ff1_w1", "ff1_b1", "ff1_w2", "ff1_b2",
    "ff2_ln_g", "ff2_ln_b", "ff2_w1", "ff2_b1", "ff2_w2", "ff2_b2",
    "ff3_ln_g", "ff3_ln_b", "ff3_w1", "ff3_b1", "ff3_w2", "ff3_b2",
    # attention branch (PreNorm + MHA)
    "attn_ln_g", "attn_ln_b", "attn_wq", "attn_wk", "attn_wv",
    "attn_wo_pad", "attn_bo_pad",
    # H3 branch (PreNorm + H3Module); head expansion/reduction folded into weights
    "h3_ln_g", "h3_ln_b", "h3_wq_exp", "h3_bq_exp", "h3_wk_exp", "h3_bk_exp",
    "h3_wv_exp", "h3_bv_exp", "h3_shift_taps_exp", "h3_ssm_taps",
    "h3_wo_exp", "h3_bo_pad",
    # conformer conv module (LN -> pw conv + GLU -> causal depthwise -> Swish -> pw conv)
    "conv_ln_g", "conv_ln_b", "conv_pw1a_w", "conv_pw1a_b", "conv_pw1b_w", "conv_pw1b_b",
    "conv_dw_taps", "conv_dw_b", "conv_pw2_w", "conv_pw2_b",
    # post norm
    "post_ln_g", "post_ln_b",
)


# ----------------------------------- fused Pallas kernel -----------------------------
def _fused_block_kernel(*refs):
    n_p = len(PARAM_ORDER)
    x_ref = refs[0]
    P = dict(zip(PARAM_ORDER, refs[1:1 + n_p]))
    o_ref = refs[1 + n_p]
    shift_buf = refs[2 + n_p]          # VMEM (2*SEQ, SCRATCH_W) f32 shift scratch

    # ---------------- helpers (f32 values; bf16 MXU operands, f32 accumulate) --------
    def ln(t, pfx):
        g = P[pfx + "_ln_g"][...].astype(F32)
        b = P[pfx + "_ln_b"][...].astype(F32)
        mu = jnp.mean(t, axis=-1, keepdims=True)
        var = jnp.mean(jnp.square(t - mu), axis=-1, keepdims=True)
        return (t - mu) * jax.lax.rsqrt(var + LN_EPS) * g + b

    def mm(t, wname, bname=None):
        y = jnp.dot(t.astype(BF16), P[wname][...].astype(BF16),
                    preferred_element_type=F32)
        if bname is not None:
            y = y + P[bname][...].astype(F32)
        return y

    def ffn(t, pfx):                                   # Scale(0.5, PreNorm(FFN)) + res
        h = mm(ln(t, pfx), pfx + "_w1", pfx + "_b1")
        h = h * jax.nn.sigmoid(h)                      # Swish (f32, EUP)
        return t + 0.5 * mm(h, pfx + "_w2", pfx + "_b2")

    def causal_conv(t, taps_name, n_taps):
        # y[t, c] = sum_j taps[j, c] * x[t - j, c]  (causal, zero padding), as a K-tap
        # shifted MAC: data is parked in a zero-padded VMEM buffer and each tap reads a
        # statically shifted window.  No (N, N, C) Toeplitz tensor is ever materialized.
        C = t.shape[-1]
        taps_ref = P[taps_name]
        shift_buf[SEQ:2 * SEQ, 0:C] = t
        y = t * taps_ref[0:1, :]
        for j in range(1, n_taps):
            y = y + shift_buf[SEQ - j:2 * SEQ - j, 0:C] * taps_ref[j:j + 1, :]
        return y

    def channel_selector(offset, width):
        # 0/1 (DIM, width) selector: column j picks input channel j + offset.  Built
        # in-kernel from iota (no constant DMA); one tiny exact f32 matmul per branch.
        r = jax.lax.broadcasted_iota(jnp.int32, (DIM, width), 0)
        c = jax.lax.broadcasted_iota(jnp.int32, (DIM, width), 1)
        return (r == c + offset).astype(F32)

    # zero the padding half of the shift buffer (never overwritten afterwards)
    shift_buf[0:SEQ, :] = jnp.zeros((SEQ, SCRATCH_W), F32)

    x = x_ref[...].astype(F32)                          # (SEQ, DIM)

    # ---------------- ff1: x = 0.5 * FFN(LN(x)) + x -----------------------------------
    x = ffn(x, "ff1")

    # ---------------- split channels into attention / H3 groups -----------------------
    x1 = jnp.dot(x, channel_selector(0, ATTN_DIM), preferred_element_type=F32)
    x2 = jnp.dot(x, channel_selector(ATTN_DIM, H3_DIM), preferred_element_type=F32)

    # ---------------- attention branch: x1 = Attention(LN(x1)) ------------------------
    a = ln(x1, "attn")
    q = mm(a, "attn_wq")                                # softmax scale folded into W_q
    k = mm(a, "attn_wk")
    v = mm(a, "attn_wv")
    lane = jax.lax.broadcasted_iota(jnp.int32, (1, ATTN_INNER), 1)
    attn_o = jnp.zeros((SEQ, ATTN_INNER), F32)
    for h in range(HEADS):
        # per-head channel mask keeps every matmul full width (lane dense), no slicing
        m = jnp.logical_and(lane >= h * DIM_HEAD,
                            lane < (h + 1) * DIM_HEAD).astype(F32)   # (1, INNER)
        s = jax.lax.dot_general((q * m).astype(BF16), k.astype(BF16),
                                (((1,), (1,)), ((), ())),
                                preferred_element_type=F32)          # (SEQ, SEQ)
        s = s - jnp.max(s, axis=-1, keepdims=True)
        e = jnp.exp(s)
        pr = e * pl.reciprocal(jnp.sum(e, axis=-1, keepdims=True), approx=True)
        attn_o = attn_o + jnp.dot(pr.astype(BF16), (v * m).astype(BF16),
                                  preferred_element_type=F32)
    # out-projection padded to DIM columns (zeros over the H3 half) at init.
    x1o = mm(attn_o, "attn_wo_pad", "attn_bo_pad")      # (SEQ, DIM)
    # TODO(synk): the reference Attention's relative positional embedding term is
    # omitted (submodule definition not provided); mask=None path only.

    # ---------------- H3 branch: x2 = H3(LN(x2)) --------------------------------------
    # The per-head outer product / contraction structure (0/1 expansion & reduction
    # matrices) is folded into the projection weights at init, so the kernel only runs
    # real matmuls, two causal convs and elementwise gates on 256-lane tensors.
    hx = ln(x2, "h3")
    qe = mm(hx, "h3_wq_exp", "h3_bq_exp")               # (SEQ, KV_CH) q, expanded
    ke = mm(hx, "h3_wk_exp", "h3_bk_exp")               # (SEQ, KV_CH) k, expanded
    ve = mm(hx, "h3_wv_exp", "h3_bv_exp")               # (SEQ, KV_CH) v, expanded
    ke = causal_conv(ke, "h3_shift_taps_exp", SEQ)      # shift-SSM on k (causal conv)
    kv = ke * ve                                        # k ⊗ v per head, per time step
    kv = causal_conv(kv, "h3_ssm_taps", SEQ)            # diagonal SSM (causal conv)
    ye = qe * kv                                        # gate by q
    # d1-reduction + out-projection + padding to DIM columns folded into h3_wo_exp.
    x2o = mm(ye, "h3_wo_exp", "h3_bo_pad")              # (SEQ, DIM)

    # ---------------- merge branches, ff3, outer residual -----------------------------
    xm = x1o + x2o                                      # == concat([attn, h3], -1)
    xm = ffn(xm, "ff3")
    x = xm + x

    # ---------------- conformer conv module (causal -> no batch-norm) -----------------
    c = ln(x, "conv")
    cv = mm(c, "conv_pw1a_w", "conv_pw1a_b")            # pointwise conv, value half
    cg = mm(c, "conv_pw1b_w", "conv_pw1b_b")            # pointwise conv, gate half
    c = cv * jax.nn.sigmoid(cg)                         # GLU
    c = causal_conv(c, "conv_dw_taps", N_DW_TAPS) + P["conv_dw_b"][...].astype(F32)
    c = c * jax.nn.sigmoid(c)                           # Swish
    c = mm(c, "conv_pw2_w", "conv_pw2_b")
    x = x + c

    # ---------------- ff2 + post-norm --------------------------------------------------
    x = ffn(x, "ff2")
    x = ln(x, "post")
    o_ref[...] = x.astype(o_ref.dtype)


# --------------------------------------- wrapper --------------------------------------
def h3conformer_hybrid_block(x, params):
    B, N, D = x.shape
    assert (N, D) == (SEQ, DIM)
    flat = [params[name] for name in PARAM_ORDER]
    act_spec = pl.BlockSpec((None, SEQ, DIM), lambda b: (b, 0, 0))
    param_specs = [pl.BlockSpec(p.shape, lambda b: (0, 0)) for p in flat]
    return pl.pallas_call(
        _fused_block_kernel,
        out_shape=jax.ShapeDtypeStruct((B, SEQ, DIM), x.dtype),
        grid=(B,),
        in_specs=[act_spec] + param_specs,
        out_specs=act_spec,
        scratch_shapes=[pltpu.VMEM((2 * SEQ, SCRATCH_W), F32)],
        compiler_params=pltpu.CompilerParams(
            dimension_semantics=("parallel",)),     # batch across v7x's 2 TensorCores
    )(x, *flat)


# ------------------------------- parameter setup (init-time glue) ---------------------
def _h3_expansion_mats(H, dh):
    # 0/1 matrices encoding the per-head expansion / reduction; only used at init to
    # fold the head structure into the projection weights (never DMA'd by the kernel).
    Dm = H * dh
    C = dh * Dm                                   # kv channel order (d1, h, d2)
    e_q = np.zeros((Dm, C), np.float32)
    e_v = np.zeros((Dm, C), np.float32)
    red = np.zeros((C, Dm), np.float32)
    for d1 in range(dh):
        for h in range(H):
            for d2 in range(dh):
                c = d1 * Dm + h * dh + d2
                e_q[h * dh + d1, c] = 1.0
                e_v[h * dh + d2, c] = 1.0
                red[c, h * dh + d2] = 1.0
    return jnp.asarray(e_q), jnp.asarray(e_v), jnp.asarray(red)


def init_params(key):
    keys = iter(jax.random.split(key, 32))

    def w(shape, scale=None):
        scale = (1.0 / np.sqrt(shape[0])) if scale is None else scale
        return jax.random.normal(next(keys), shape, F32) * scale

    zeros = lambda s: jnp.zeros(s, F32)
    ones = lambda s: jnp.ones(s, F32)
    p = {}
    for name in ("ff1", "ff2", "ff3"):
        p[f"{name}_ln_g"] = ones((1, DIM)); p[f"{name}_ln_b"] = zeros((1, DIM))
        p[f"{name}_w1"] = w((DIM, FF_HIDDEN)); p[f"{name}_b1"] = zeros((1, FF_HIDDEN))
        p[f"{name}_w2"] = w((FF_HIDDEN, DIM)); p[f"{name}_b2"] = zeros((1, DIM))

    # attention (PreNorm + MHA; to_q / to_kv without bias, to_out with bias)
    p["attn_ln_g"] = ones((1, ATTN_DIM)); p["attn_ln_b"] = zeros((1, ATTN_DIM))
    wq = w((ATTN_DIM, ATTN_INNER))
    wkv = w((ATTN_DIM, 2 * ATTN_INNER))
    wo = w((ATTN_INNER, ATTN_DIM)); bo = zeros((1, ATTN_DIM))
    p["attn_wq"] = wq * (DIM_HEAD ** -0.5)                 # fold softmax scale into W_q
    p["attn_wk"] = wkv[:, :ATTN_INNER]                     # split fused to_kv at init
    p["attn_wv"] = wkv[:, ATTN_INNER:]
    # pad out-projection to the full model width (zeros over the H3 half) so both
    # branch outputs are lane-dense DIM-wide and their concat is a plain add.
    p["attn_wo_pad"] = jnp.concatenate([wo, jnp.zeros((ATTN_INNER, H3_DIM), F32)], 1)
    p["attn_bo_pad"] = jnp.concatenate([bo, jnp.zeros((1, H3_DIM), F32)], 1)

    # H3 (PreNorm + q/k/v proj, shift-SSM + diag-SSM kernels, out proj)
    p["h3_ln_g"] = ones((1, H3_DIM)); p["h3_ln_b"] = zeros((1, H3_DIM))
    e_q, e_v, red = _h3_expansion_mats(H3_HEADS, H3_HEAD_DIM)
    h3_wq = w((H3_DIM, H3_DIM)); h3_bq = zeros((1, H3_DIM))
    h3_wk = w((H3_DIM, H3_DIM)); h3_bk = zeros((1, H3_DIM))
    h3_wv = w((H3_DIM, H3_DIM)); h3_bv = zeros((1, H3_DIM))
    h3_wo = w((H3_DIM, H3_DIM)); h3_bo = zeros((1, H3_DIM))
    decay = jnp.exp(-0.25 * jnp.arange(SEQ, dtype=F32))[:, None]
    # TODO(synk): the SSM (A,B,C,D) parameterization is materialized directly as its
    # equivalent length-L causal convolution taps (skip D folded into tap 0).
    shift_taps = w((SEQ, H3_DIM), 0.3) * decay
    p["h3_ssm_taps"] = w((SEQ, KV_CH), 0.3) * decay
    # Fold the 0/1 head-expansion (e_q, e_v) and d1-reduction (red) matrices into the
    # projection weights / conv taps ONCE here, so the kernel never executes 0/1
    # expansion matmuls nor DMAs those constants (perf-review item).
    p["h3_wq_exp"] = h3_wq @ e_q; p["h3_bq_exp"] = h3_bq @ e_q
    p["h3_wk_exp"] = h3_wk @ e_q; p["h3_bk_exp"] = h3_bk @ e_q
    p["h3_wv_exp"] = h3_wv @ e_v; p["h3_bv_exp"] = h3_bv @ e_v
    p["h3_shift_taps_exp"] = shift_taps @ e_q              # expand per-channel taps
    h3_wo_pad = jnp.concatenate([jnp.zeros((H3_DIM, ATTN_DIM), F32), h3_wo], 1)
    p["h3_wo_exp"] = red @ h3_wo_pad                       # d1-sum + out-proj + pad
    p["h3_bo_pad"] = jnp.concatenate([jnp.zeros((1, ATTN_DIM), F32), h3_bo], 1)

    # conformer conv module (pw conv split into GLU value/gate halves at init)
    p["conv_ln_g"] = ones((1, DIM)); p["conv_ln_b"] = zeros((1, DIM))
    pw1_w = w((DIM, 2 * CONV_INNER)); pw1_b = zeros((1, 2 * CONV_INNER))
    p["conv_pw1a_w"] = pw1_w[:, :CONV_INNER]; p["conv_pw1a_b"] = pw1_b[:, :CONV_INNER]
    p["conv_pw1b_w"] = pw1_w[:, CONV_INNER:]; p["conv_pw1b_b"] = pw1_b[:, CONV_INNER:]
    p["conv_dw_taps"] = w((CONV_KERNEL, CONV_INNER), 0.2)
    p["conv_dw_b"] = zeros((1, CONV_INNER))
    p["conv_pw2_w"] = w((CONV_INNER, DIM)); p["conv_pw2_b"] = zeros((1, DIM))

    # post norm
    p["post_ln_g"] = ones((1, DIM)); p["post_ln_b"] = zeros((1, DIM))
    return p


if __name__ == "__main__":
    key = jax.random.PRNGKey(0)
    pkey, xkey = jax.random.split(key)
    params = init_params(pkey)
    x = jax.random.normal(xkey, (BATCH, SEQ, DIM), dtype=F32)
    y = jax.jit(h3conformer_hybrid_block)(x, params)
    jax.block_until_ready(y)
    assert y.shape == (BATCH, SEQ, DIM) and y.dtype == F32
    assert bool(jnp.all(jnp.isfinite(y)))
    print("KERNEL_OK")
</pallas_src>

<mosaic_0001>
module attributes {stable_mosaic.version = 11 : i64} {
  func.func @_fused_block_kernel(%arg0: i32, %arg1: memref<1x16x64xf32, #tpu.memory_space<vmem>>, %arg2: memref<1x64xf32, #tpu.memory_space<vmem>>, %arg3: memref<1x64xf32, #tpu.memory_space<vmem>>, %arg4: memref<64x256xf32, #tpu.memory_space<vmem>>, %arg5: memref<1x256xf32, #tpu.memory_space<vmem>>, %arg6: memref<256x64xf32, #tpu.memory_space<vmem>>, %arg7: memref<1x64xf32, #tpu.memory_space<vmem>>, %arg8: memref<1x64xf32, #tpu.memory_space<vmem>>, %arg9: memref<1x64xf32, #tpu.memory_space<vmem>>, %arg10: memref<64x256xf32, #tpu.memory_space<vmem>>, %arg11: memref<1x256xf32, #tpu.memory_space<vmem>>, %arg12: memref<256x64xf32, #tpu.memory_space<vmem>>, %arg13: memref<1x64xf32, #tpu.memory_space<vmem>>, %arg14: memref<1x64xf32, #tpu.memory_space<vmem>>, %arg15: memref<1x64xf32, #tpu.memory_space<vmem>>, %arg16: memref<64x256xf32, #tpu.memory_space<vmem>>, %arg17: memref<1x256xf32, #tpu.memory_space<vmem>>, %arg18: memref<256x64xf32, #tpu.memory_space<vmem>>, %arg19: memref<1x64xf32, #tpu.memory_space<vmem>>, %arg20: memref<1x32xf32, #tpu.memory_space<vmem>>, %arg21: memref<1x32xf32, #tpu.memory_space<vmem>>, %arg22: memref<32x64xf32, #tpu.memory_space<vmem>>, %arg23: memref<32x64xf32, #tpu.memory_space<vmem>>, %arg24: memref<32x64xf32, #tpu.memory_space<vmem>>, %arg25: memref<64x64xf32, #tpu.memory_space<vmem>>, %arg26: memref<1x64xf32, #tpu.memory_space<vmem>>, %arg27: memref<1x32xf32, #tpu.memory_space<vmem>>, %arg28: memref<1x32xf32, #tpu.memory_space<vmem>>, %arg29: memref<32x256xf32, #tpu.memory_space<vmem>>, %arg30: memref<1x256xf32, #tpu.memory_space<vmem>>, %arg31: memref<32x256xf32, #tpu.memory_space<vmem>>, %arg32: memref<1x256xf32, #tpu.memory_space<vmem>>, %arg33: memref<32x256xf32, #tpu.memory_space<vmem>>, %arg34: memref<1x256xf32, #tpu.memory_space<vmem>>, %arg35: memref<16x256xf32, #tpu.memory_space<vmem>>, %arg36: memref<16x256xf32, #tpu.memory_space<vmem>>, %arg37: memref<256x64xf32, #tpu.memory_space<vmem>>, %arg38: memref<1x64xf32, #tpu.memory_space<vmem>>, %arg39: memref<1x64xf32, #tpu.memory_space<vmem>>, %arg40: memref<1x64xf32, #tpu.memory_space<vmem>>, %arg41: memref<64x128xf32, #tpu.memory_space<vmem>>, %arg42: memref<1x128xf32, #tpu.memory_space<vmem>>, %arg43: memref<64x128xf32, #tpu.memory_space<vmem>>, %arg44: memref<1x128xf32, #tpu.memory_space<vmem>>, %arg45: memref<31x128xf32, #tpu.memory_space<vmem>>, %arg46: memref<1x128xf32, #tpu.memory_space<vmem>>, %arg47: memref<128x64xf32, #tpu.memory_space<vmem>>, %arg48: memref<1x64xf32, #tpu.memory_space<vmem>>, %arg49: memref<1x64xf32, #tpu.memory_space<vmem>>, %arg50: memref<1x64xf32, #tpu.memory_space<vmem>>, %arg51: memref<1x16x64xf32, #tpu.memory_space<vmem>>, %arg52: memref<32x256xf32, #tpu.memory_space<vmem>>) attributes {dimension_semantics = [#tpu.dimension_semantics<parallel>], iteration_bounds = array<i64: 2>, scalar_prefetch = 0 : i64, scratch_operands = 1 : i64, tpu.core_type = #tpu.core_type<tc>, window_params = [{transform_indices = @transform_0, window_bounds = array<i64: 1, 16, 64>}, {pipeline_mode = #tpu.pipeline_mode<synchronous>, transform_indices = @transform_1, window_bounds = array<i64: 1, 64>}, {pipeline_mode = #tpu.pipeline_mode<synchronous>, transform_indices = @transform_2, window_bounds = array<i64: 1, 64>}, {pipeline_mode = #tpu.pipeline_mode<synchronous>, transform_indices = @transform_3, window_bounds = array<i64: 64, 256>}, {pipeline_mode = #tpu.pipeline_mode<synchronous>, transform_indices = @transform_4, window_bounds = array<i64: 1, 256>}, {pipeline_mode = #tpu.pipeline_mode<synchronous>, transform_indices = @transform_5, window_bounds = array<i64: 256, 64>}, {pipeline_mode = #tpu.pipeline_mode<synchronous>, transform_indices = @transform_6, window_bounds = array<i64: 1, 64>}, {pipeline_mode = #tpu.pipeline_mode<synchronous>, transform_indices = @transform_7, window_bounds = array<i64: 1, 64>}, {pipeline_mode = #tpu.pipeline_mode<synchronous>, transform_indices = @transform_8, window_bounds = array<i64: 1, 64>}, {pipeline_mode = #tpu.pipeline_mode<synchronous>, transform_indices = @transform_9, window_bounds = array<i64: 64, 256>}, {pipeline_mode = #tpu.pipeline_mode<synchronous>, transform_indices = @transform_10, window_bounds = array<i64: 1, 256>}, {pipeline_mode = #tpu.pipeline_mode<synchronous>, transform_indices = @transform_11, window_bounds = array<i64: 256, 64>}, {pipeline_mode = #tpu.pipeline_mode<synchronous>, transform_indices = @transform_12, window_bounds = array<i64: 1, 64>}, {pipeline_mode = #tpu.pipeline_mode<synchronous>, transform_indices = @transform_13, window_bounds = array<i64: 1, 64>}, {pipeline_mode = #tpu.pipeline_mode<synchronous>, transform_indices = @transform_14, window_bounds = array<i64: 1, 64>}, {pipeline_mode = #tpu.pipeline_mode<synchronous>, transform_indices = @transform_15, window_bounds = array<i64: 64, 256>}, {pipeline_mode = #tpu.pipeline_mode<synchronous>, transform_indices = @transform_16, window_bounds = array<i64: 1, 256>}, {pipeline_mode = #tpu.pipeline_mode<synchronous>, transform_indices = @transform_17, window_bounds = array<i64: 256, 64>}, {pipeline_mode = #tpu.pipeline_mode<synchronous>, transform_indices = @transform_18, window_bounds = array<i64: 1, 64>}, {pipeline_mode = #tpu.pipeline_mode<synchronous>, transform_indices = @transform_19, window_bounds = array<i64: 1, 32>}, {pipeline_mode = #tpu.pipeline_mode<synchronous>, transform_indices = @transform_20, window_bounds = array<i64: 1, 32>}, {pipeline_mode = #tpu.pipeline_mode<synchronous>, transform_indices = @transform_21, window_bounds = array<i64: 32, 64>}, {pipeline_mode = #tpu.pipeline_mode<synchronous>, transform_indices = @transform_22, window_bounds = array<i64: 32, 64>}, {pipeline_mode = #tpu.pipeline_mode<synchronous>, transform_indices = @transform_23, window_bounds = array<i64: 32, 64>}, {pipeline_mode = #tpu.pipeline_mode<synchronous>, transform_indices = @transform_24, window_bounds = array<i64: 64, 64>}, {pipeline_mode = #tpu.pipeline_mode<synchronous>, transform_indices = @transform_25, window_bounds = array<i64: 1, 64>}, {pipeline_mode = #tpu.pipeline_mode<synchronous>, transform_indices = @transform_26, window_bounds = array<i64: 1, 32>}, {pipeline_mode = #tpu.pipeline_mode<synchronous>, transform_indices = @transform_27, window_bounds = array<i64: 1, 32>}, {pipeline_mode = #tpu.pipeline_mode<synchronous>, transform_indices = @transform_28, window_bounds = array<i64: 32, 256>}, {pipeline_mode = #tpu.pipeline_mode<synchronous>, transform_indices = @transform_29, window_bounds = array<i64: 1, 256>}, {pipeline_mode = #tpu.pipeline_mode<synchronous>, transform_indices = @transform_30, window_bounds = array<i64: 32, 256>}, {pipeline_mode = #tpu.pipeline_mode<synchronous>, transform_indices = @transform_31, window_bounds = array<i64: 1, 256>}, {pipeline_mode = #tpu.pipeline_mode<synchronous>, transform_indices = @transform_32, window_bounds = array<i64: 32, 256>}, {pipeline_mode = #tpu.pipeline_mode<synchronous>, transform_indices = @transform_33, window_bounds = array<i64: 1, 256>}, {pipeline_mode = #tpu.pipeline_mode<synchronous>, transform_indices = @transform_34, window_bounds = array<i64: 16, 256>}, {pipeline_mode = #tpu.pipeline_mode<synchronous>, transform_indices = @transform_35, window_bounds = array<i64: 16, 256>}, {pipeline_mode = #tpu.pipeline_mode<synchronous>, transform_indices = @transform_36, window_bounds = array<i64: 256, 64>}, {pipeline_mode = #tpu.pipeline_mode<synchronous>, transform_indices = @transform_37, window_bounds = array<i64: 1, 64>}, {pipeline_mode = #tpu.pipeline_mode<synchronous>, transform_indices = @transform_38, window_bounds = array<i64: 1, 64>}, {pipeline_mode = #tpu.pipeline_mode<synchronous>, transform_indices = @transform_39, window_bounds = array<i64: 1, 64>}, {pipeline_mode = #tpu.pipeline_mode<synchronous>, transform_indices = @transform_40, window_bounds = array<i64: 64, 128>}, {pipeline_mode = #tpu.pipeline_mode<synchronous>, transform_indices = @transform_41, window_bounds = array<i64: 1, 128>}, {pipeline_mode = #tpu.pipeline_mode<synchronous>, transform_indices = @transform_42, window_bounds = array<i64: 64, 128>}, {pipeline_mode = #tpu.pipeline_mode<synchronous>, transform_indices = @transform_43, window_bounds = array<i64: 1, 128>}, {pipeline_mode = #tpu.pipeline_mode<synchronous>, transform_indices = @transform_44, window_bounds = array<i64: 31, 128>}, {pipeline_mode = #tpu.pipeline_mode<synchronous>, transform_indices = @transform_45, window_bounds = array<i64: 1, 128>}, {pipeline_mode = #tpu.pipeline_mode<synchronous>, transform_indices = @transform_46, window_bounds = array<i64: 128, 64>}, {pipeline_mode = #tpu.pipeline_mode<synchronous>, transform_indices = @transform_47, window_bounds = array<i64: 1, 64>}, {pipeline_mode = #tpu.pipeline_mode<synchronous>, transform_indices = @transform_48, window_bounds = array<i64: 1, 64>}, {pipeline_mode = #tpu.pipeline_mode<synchronous>, transform_indices = @transform_49, window_bounds = array<i64: 1, 64>}, {transform_indices = @transform_50, window_bounds = array<i64: 1, 16, 64>}]} {
    %cst = arith.constant 0.000000e+00 : f32
    %0 = vector.broadcast %cst : f32 to vector<16x256xf32>
    %c0 = arith.constant 0 : index
    %c0_0 = arith.constant 0 : index
    %1 = vector.load %arg52[%c0, %c0_0] : memref<32x256xf32, #tpu.memory_space<vmem>>, vector<16x256xf32>
    tpu.vector_store %arg52[%c0, %c0_0], %0 {strides = array<i32>} : memref<32x256xf32, #tpu.memory_space<vmem>>, vector<16x256xf32>,
    %c0_1 = arith.constant 0 : index
    %c0_2 = arith.constant 0 : index
    %c0_3 = arith.constant 0 : index
    %2 = vector.load %arg1[%c0_1, %c0_2, %c0_3] : memref<1x16x64xf32, #tpu.memory_space<vmem>>, vector<1x16x64xf32>
    %3 = vector.shape_cast %2 : vector<1x16x64xf32> to vector<16x64xf32>
    %c0_4 = arith.constant 0 : index
    %c0_5 = arith.constant 0 : index
    %4 = vector.load %arg2[%c0_4, %c0_5] : memref<1x64xf32, #tpu.memory_space<vmem>>, vector<1x64xf32>
    %c0_6 = arith.constant 0 : index
    %c0_7 = arith.constant 0 : index
    %5 = vector.load %arg3[%c0_6, %c0_7] : memref<1x64xf32, #tpu.memory_space<vmem>>, vector<1x64xf32>
    %cst_8 = arith.constant dense<0.000000e+00> : vector<16xf32>
    %6 = vector.multi_reduction <add>, %3, %cst_8 [1] : vector<16x64xf32> to vector<16xf32>
    %7 = vector.shape_cast %6 : vector<16xf32> to vector<16x1xf32>
    %cst_9 = arith.constant 6.400000e+01 : f32
    %8 = vector.broadcast %cst_9 : f32 to vector<16x1xf32>
    %9 = arith.divf %7, %8 : vector<16x1xf32>
    %10 = vector.broadcast %9 : vector<16x1xf32> to vector<16x64xf32>
    %11 = arith.subf %3, %10 : vector<16x64xf32>
    %12 = arith.mulf %11, %11 : vector<16x64xf32>
    %cst_10 = arith.constant dense<0.000000e+00> : vector<16xf32>
    %13 = vector.multi_reduction <add>, %12, %cst_10 [1] : vector<16x64xf32> to vector<16xf32>
    %14 = vector.shape_cast %13 : vector<16xf32> to vector<16x1xf32>
    %cst_11 = arith.constant 6.400000e+01 : f32
    %15 = vector.broadcast %cst_11 : f32 to vector<16x1xf32>
    %16 = arith.divf %14, %15 : vector<16x1xf32>
    %17 = vector.broadcast %9 : vector<16x1xf32> to vector<16x64xf32>
    %18 = arith.subf %3, %17 : vector<16x64xf32>
    %cst_12 = arith.constant 9.99999974E-6 : f32
    %19 = vector.broadcast %cst_12 : f32 to vector<16x1xf32>
    %20 = arith.addf %16, %19 : vector<16x1xf32>
    %21 = math.rsqrt %20 : vector<16x1xf32>
    %22 = vector.broadcast %21 : vector<16x1xf32> to vector<16x64xf32>
    %23 = arith.mulf %18, %22 : vector<16x64xf32>
    %24 = vector.broadcast %4 : vector<1x64xf32> to vector<16x64xf32>
    %25 = arith.mulf %23, %24 : vector<16x64xf32>
    %26 = vector.broadcast %5 : vector<1x64xf32> to vector<16x64xf32>
    %27 = arith.addf %25, %26 : vector<16x64xf32>
    %28 = arith.truncf %27 : vector<16x64xf32> to vector<16x64xbf16>
    %c0_13 = arith.constant 0 : index
    %c0_14 = arith.constant 0 : index
    %29 = vector.load %arg4[%c0_13, %c0_14] : memref<64x256xf32, #tpu.memory_space<vmem>>, vector<64x256xf32>
    %30 = arith.truncf %29 : vector<64x256xf32> to vector<64x256xbf16>
    %cst_15 = arith.constant dense<0.000000e+00> : vector<16x256xf32>
    %31 = tpu.matmul %28, %30, %cst_15 {dimension_numbers = #tpu.dot_dimension_numbers<[1], [0], [0], [1], [0, 0, 1, 1], [], []>} : vector<16x64xbf16>, vector<64x256xbf16>, vector<16x256xf32> -> vector<16x256xf32>
    %c0_16 = arith.constant 0 : index
    %c0_17 = arith.constant 0 : index
    %32 = vector.load %arg5[%c0_16, %c0_17] : memref<1x256xf32, #tpu.memory_space<vmem>>, vector<1x256xf32>
    %33 = vector.broadcast %32 : vector<1x256xf32> to vector<16x256xf32>
    %34 = arith.addf %31, %33 : vector<16x256xf32>
    %35 = arith.negf %34 : vector<16x256xf32>
    %36 = math.exp %35 : vector<16x256xf32>
    %cst_18 = arith.constant 1.000000e+00 : f32
    %37 = vector.broadcast %cst_18 : f32 to vector<16x256xf32>
    %38 = arith.addf %37, %36 : vector<16x256xf32>
    %39 = arith.divf %37, %38 : vector<16x256xf32>
    %40 = arith.mulf %34, %39 : vector<16x256xf32>
    %41 = arith.truncf %40 : vector<16x256xf32> to vector<16x256xbf16>
    %c0_19 = arith.constant 0 : index
    %c0_20 = arith.constant 0 : index
    %42 = vector.load %arg6[%c0_19, %c0_20] : memref<256x64xf32, #tpu.memory_space<vmem>>, vector<256x64xf32>
    %43 = arith.truncf %42 : vector<256x64xf32> to vector<256x64xbf16>
    %cst_21 = arith.constant dense<0.000000e+00> : vector<16x64xf32>
    %44 = tpu.matmul %41, %43, %cst_21 {dimension_numbers = #tpu.dot_dimension_numbers<[1], [0], [0], [1], [0, 0, 1, 1], [], []>} : vector<16x256xbf16>, vector<256x64xbf16>, vector<16x64xf32> -> vector<16x64xf32>
    %c0_22 = arith.constant 0 : index
    %c0_23 = arith.constant 0 : index
    %45 = vector.load %arg7[%c0_22, %c0_23] : memref<1x64xf32, #tpu.memory_space<vmem>>, vector<1x64xf32>
    %46 = vector.broadcast %45 : vector<1x64xf32> to vector<16x64xf32>
    %47 = arith.addf %44, %46 : vector<16x64xf32>
    %cst_24 = arith.constant 5.000000e-01 : f32
    %48 = vector.broadcast %cst_24 : f32 to vector<16x64xf32>
    %49 = arith.mulf %48, %47 : vector<16x64xf32>
    %50 = arith.addf %3, %49 : vector<16x64xf32>
    %51 = tpu.iota {dimensions = array<i32: 0>} : vector<64x32xi32>
    %52 = tpu.iota {dimensions = array<i32: 1>} : vector<64x32xi32>
    %c0_i32 = arith.constant 0 : i32
    %53 = vector.broadcast %c0_i32 : i32 to vector<64x32xi32>
    %54 = arith.addi %52, %53 : vector<64x32xi32>
    %55 = arith.cmpi eq, %51, %54 : vector<64x32xi32>
    %56 = arith.extui %55 : vector<64x32xi1> to vector<64x32xi32>
    %57 = arith.sitofp %56 : vector<64x32xi32> to vector<64x32xf32>
    %cst_25 = arith.constant dense<0.000000e+00> : vector<16x32xf32>
    %58 = tpu.matmul %50, %57, %cst_25 {dimension_numbers = #tpu.dot_dimension_numbers<[1], [0], [0], [1], [0, 0, 1, 1], [], []>} : vector<16x64xf32>, vector<64x32xf32>, vector<16x32xf32> -> vector<16x32xf32>
    %59 = tpu.iota {dimensions = array<i32: 0>} : vector<64x32xi32>
    %60 = tpu.iota {dimensions = array<i32: 1>} : vector<64x32xi32>
    %c32_i32 = arith.constant 32 : i32
    %61 = vector.broadcast %c32_i32 : i32 to vector<64x32xi32>
    %62 = arith.addi %60, %61 : vector<64x32xi32>
    %63 = arith.cmpi eq, %59, %62 : vector<64x32xi32>
    %64 = arith.extui %63 : vector<64x32xi1> to vector<64x32xi32>
    %65 = arith.sitofp %64 : vector<64x32xi32> to vector<64x32xf32>
    %cst_26 = arith.constant dense<0.000000e+00> : vector<16x32xf32>
    %66 = tpu.matmul %50, %65, %cst_26 {dimension_numbers = #tpu.dot_dimension_numbers<[1], [0], [0], [1], [0, 0, 1, 1], [], []>} : vector<16x64xf32>, vector<64x32xf32>, vector<16x32xf32> -> vector<16x32xf32>
    %c0_27 = arith.constant 0 : index
    %c0_28 = arith.constant 0 : index
    %67 = vector.load %arg20[%c0_27, %c0_28] : memref<1x32xf32, #tpu.memory_space<vmem>>, vector<1x32xf32>
    %c0_29 = arith.constant 0 : index
    %c0_30 = arith.constant 0 : index
    %68 = vector.load %arg21[%c0_29, %c0_30] : memref<1x32xf32, #tpu.memory_space<vmem>>, vector<1x32xf32>
    %cst_31 = arith.constant dense<0.000000e+00> : vector<16xf32>
    %69 = vector.multi_reduction <add>, %58, %cst_31 [1] : vector<16x32xf32> to vector<16xf32>
    %70 = vector.shape_cast %69 : vector<16xf32> to vector<16x1xf32>
    %cst_32 = arith.constant 3.200000e+01 : f32
    %71 = vector.broadcast %cst_32 : f32 to vector<16x1xf32>
    %72 = arith.divf %70, %71 : vector<16x1xf32>
    %73 = vector.broadcast %72 : vector<16x1xf32> to vector<16x32xf32>
    %74 = arith.subf %58, %73 : vector<16x32xf32>
    %75 = arith.mulf %74, %74 : vector<16x32xf32>
    %cst_33 = arith.constant dense<0.000000e+00> : vector<16xf32>
    %76 = vector.multi_reduction <add>, %75, %cst_33 [1] : vector<16x32xf32> to vector<16xf32>
    %77 = vector.shape_cast %76 : vector<16xf32> to vector<16x1xf32>
    %cst_34 = arith.constant 3.200000e+01 : f32
    %78 = vector.broadcast %cst_34 : f32 to vector<16x1xf32>
    %79 = arith.divf %77, %78 : vector<16x1xf32>
    %80 = vector.broadcast %72 : vector<16x1xf32> to vector<16x32xf32>
    %81 = arith.subf %58, %80 : vector<16x32xf32>
    %cst_35 = arith.constant 9.99999974E-6 : f32
    %82 = vector.broadcast %cst_35 : f32 to vector<16x1xf32>
    %83 = arith.addf %79, %82 : vector<16x1xf32>
    %84 = math.rsqrt %83 : vector<16x1xf32>
    %85 = vector.broadcast %84 : vector<16x1xf32> to vector<16x32xf32>
    %86 = arith.mulf %81, %85 : vector<16x32xf32>
    %87 = vector.broadcast %67 : vector<1x32xf32> to vector<16x32xf32>
    %88 = arith.mulf %86, %87 : vector<16x32xf32>
    %89 = vector.broadcast %68 : vector<1x32xf32> to vector<16x32xf32>
    %90 = arith.addf %88, %89 : vector<16x32xf32>
    %91 = arith.truncf %90 : vector<16x32xf32> to vector<16x32xbf16>
    %c0_36 = arith.constant 0 : index
    %c0_37 = arith.constant 0 : index
    %92 = vector.load %arg22[%c0_36, %c0_37] : memref<32x64xf32, #tpu.memory_space<vmem>>, vector<32x64xf32>
    %93 = arith.truncf %92 : vector<32x64xf32> to vector<32x64xbf16>
    %cst_38 = arith.constant dense<0.000000e+00> : vector<16x64xf32>
    %94 = tpu.matmul %91, %93, %cst_38 {dimension_numbers = #tpu.dot_dimension_numbers<[1], [0], [0], [1], [0, 0, 1, 1], [], []>} : vector<16x32xbf16>, vector<32x64xbf16>, vector<16x64xf32> -> vector<16x64xf32>
    %95 = arith.truncf %90 : vector<16x32xf32> to vector<16x32xbf16>
    %c0_39 = arith.constant 0 : index
    %c0_40 = arith.constant 0 : index
    %96 = vector.load %arg23[%c0_39, %c0_40] : memref<32x64xf32, #tpu.memory_space<vmem>>, vector<32x64xf32>
    %97 = arith.truncf %96 : vector<32x64xf32> to vector<32x64xbf16>
    %cst_41 = arith.constant dense<0.000000e+00> : vector<16x64xf32>
    %98 = tpu.matmul %95, %97, %cst_41 {dimension_numbers = #tpu.dot_dimension_numbers<[1], [0], [0], [1], [0, 0, 1, 1], [], []>} : vector<16x32xbf16>, vector<32x64xbf16>, vector<16x64xf32> -> vector<16x64xf32>
    %99 = arith.truncf %90 : vector<16x32xf32> to vector<16x32xbf16>
    %c0_42 = arith.constant 0 : index
    %c0_43 = arith.constant 0 : index
    %100 = vector.load %arg24[%c0_42, %c0_43] : memref<32x64xf32, #tpu.memory_space<vmem>>, vector<32x64xf32>
    %101 = arith.truncf %100 : vector<32x64xf32> to vector<32x64xbf16>
    %cst_44 = arith.constant dense<0.000000e+00> : vector<16x64xf32>
    %102 = tpu.matmul %99, %101, %cst_44 {dimension_numbers = #tpu.dot_dimension_numbers<[1], [0], [0], [1], [0, 0, 1, 1], [], []>} : vector<16x32xbf16>, vector<32x64xbf16>, vector<16x64xf32> -> vector<16x64xf32>
    %103 = tpu.iota {dimensions = array<i32: 1>} : vector<1x64xi32>
    %cst_45 = arith.constant 0.000000e+00 : f32
    %104 = vector.broadcast %cst_45 : f32 to vector<16x64xf32>
    %c0_i32_46 = arith.constant 0 : i32
    %105 = vector.broadcast %c0_i32_46 : i32 to vector<1x64xi32>
    %106 = arith.cmpi sge, %103, %105 : vector<1x64xi32>
    %c16_i32 = arith.constant 16 : i32
    %107 = vector.broadcast %c16_i32 : i32 to vector<1x64xi32>
    %108 = arith.cmpi slt, %103, %107 : vector<1x64xi32>
    %109 = arith.andi %106, %108 : vector<1x64xi1>
    %110 = arith.extui %109 : vector<1x64xi1> to vector<1x64xi32>
    %111 = arith.sitofp %110 : vector<1x64xi32> to vector<1x64xf32>
    %112 = vector.broadcast %111 : vector<1x64xf32> to vector<16x64xf32>
    %113 = arith.mulf %94, %112 : vector<16x64xf32>
    %114 = arith.truncf %113 : vector<16x64xf32> to vector<16x64xbf16>
    %115 = arith.truncf %98 : vector<16x64xf32> to vector<16x64xbf16>
    %cst_47 = arith.constant dense<0.000000e+00> : vector<16x16xf32>
    %116 = tpu.matmul %114, %115, %cst_47 {dimension_numbers = #tpu.dot_dimension_numbers<[1], [1], [0], [0], [0, 0, 1, 0], [], []>} : vector<16x64xbf16>, vector<16x64xbf16>, vector<16x16xf32> -> vector<16x16xf32>
    %cst_48 = arith.constant dense<0xFF800000> : vector<16xf32>
    %117 = vector.multi_reduction <maximumf>, %116, %cst_48 [1] : vector<16x16xf32> to vector<16xf32>
    %118 = vector.shape_cast %117 : vector<16xf32> to vector<16x1xf32>
    %119 = vector.broadcast %118 : vector<16x1xf32> to vector<16x16xf32>
    %120 = arith.subf %116, %119 : vector<16x16xf32>
    %121 = math.exp %120 : vector<16x16xf32>
    %cst_49 = arith.constant dense<0.000000e+00> : vector<16xf32>
    %122 = vector.multi_reduction <add>, %121, %cst_49 [1] : vector<16x16xf32> to vector<16xf32>
    %123 = vector.shape_cast %122 : vector<16xf32> to vector<16x1xf32>
    %124 = tpu.reciprocal %123 {approx = true} : vector<16x1xf32> -> vector<16x1xf32>
    %125 = vector.broadcast %124 : vector<16x1xf32> to vector<16x16xf32>
    %126 = arith.mulf %121, %125 : vector<16x16xf32>
    %127 = arith.truncf %126 : vector<16x16xf32> to vector<16x16xbf16>
    %128 = vector.broadcast %111 : vector<1x64xf32> to vector<16x64xf32>
    %129 = arith.mulf %102, %128 : vector<16x64xf32>
    %130 = arith.truncf %129 : vector<16x64xf32> to vector<16x64xbf16>
    %cst_50 = arith.constant dense<0.000000e+00> : vector<16x64xf32>
    %131 = tpu.matmul %127, %130, %cst_50 {dimension_numbers = #tpu.dot_dimension_numbers<[1], [0], [0], [1], [0, 0, 1, 1], [], []>} : vector<16x16xbf16>, vector<16x64xbf16>, vector<16x64xf32> -> vector<16x64xf32>
    %132 = arith.addf %104, %131 : vector<16x64xf32>
    %c16_i32_51 = arith.constant 16 : i32
    %133 = vector.broadcast %c16_i32_51 : i32 to vector<1x64xi32>
    %134 = arith.cmpi sge, %103, %133 : vector<1x64xi32>
    %c32_i32_52 = arith.constant 32 : i32
    %135 = vector.broadcast %c32_i32_52 : i32 to vector<1x64xi32>
    %136 = arith.cmpi slt, %103, %135 : vector<1x64xi32>
    %137 = arith.andi %134, %136 : vector<1x64xi1>
    %138 = arith.extui %137 : vector<1x64xi1> to vector<1x64xi32>
    %139 = arith.sitofp %138 : vector<1x64xi32> to vector<1x64xf32>
    %140 = vector.broadcast %139 : vector<1x64xf32> to vector<16x64xf32>
    %141 = arith.mulf %94, %140 : vector<16x64xf32>
    %142 = arith.truncf %141 : vector<16x64xf32> to vector<16x64xbf16>
    %143 = arith.truncf %98 : vector<16x64xf32> to vector<16x64xbf16>
    %cst_53 = arith.constant dense<0.000000e+00> : vector<16x16xf32>
    %144 = tpu.matmul %142, %143, %cst_53 {dimension_numbers = #tpu.dot_dimension_numbers<[1], [1], [0], [0], [0, 0, 1, 0], [], []>} : vector<16x64xbf16>, vector<16x64xbf16>, vector<16x16xf32> -> vector<16x16xf32>
    %cst_54 = arith.constant dense<0xFF800000> : vector<16xf32>
    %145 = vector.multi_reduction <maximumf>, %144, %cst_54 [1] : vector<16x16xf32> to vector<16xf32>
    %146 = vector.shape_cast %145 : vector<16xf32> to vector<16x1xf32>
    %147 = vector.broadcast %146 : vector<16x1xf32> to vector<16x16xf32>
    %148 = arith.subf %144, %147 : vector<16x16xf32>
    %149 = math.exp %148 : vector<16x16xf32>
    %cst_55 = arith.constant dense<0.000000e+00> : vector<16xf32>
    %150 = vector.multi_reduction <add>, %149, %cst_55 [1] : vector<16x16xf32> to vector<16xf32>
    %151 = vector.shape_cast %150 : vector<16xf32> to vector<16x1xf32>
    %152 = tpu.reciprocal %151 {approx = true} : vector<16x1xf32> -> vector<16x1xf32>
    %153 = vector.broadcast %152 : vector<16x1xf32> to vector<16x16xf32>
    %154 = arith.mulf %149, %153 : vector<16x16xf32>
    %155 = arith.truncf %154 : vector<16x16xf32> to vector<16x16xbf16>
    %156 = vector.broadcast %139 : vector<1x64xf32> to vector<16x64xf32>
    %157 = arith.mulf %102, %156 : vector<16x64xf32>
    %158 = arith.truncf %157 : vector<16x64xf32> to vector<16x64xbf16>
    %cst_56 = arith.constant dense<0.000000e+00> : vector<16x64xf32>
    %159 = tpu.matmul %155, %158, %cst_56 {dimension_numbers = #tpu.dot_dimension_numbers<[1], [0], [0], [1], [0, 0, 1, 1], [], []>} : vector<16x16xbf16>, vector<16x64xbf16>, vector<16x64xf32> -> vector<16x64xf32>
    %160 = arith.addf %132, %159 : vector<16x64xf32>
    %c32_i32_57 = arith.constant 32 : i32
    %161 = vector.broadcast %c32_i32_57 : i32 to vector<1x64xi32>
    %162 = arith.cmpi sge, %103, %161 : vector<1x64xi32>
    %c48_i32 = arith.constant 48 : i32
    %163 = vector.broadcast %c48_i32 : i32 to vector<1x64xi32>
    %164 = arith.cmpi slt, %103, %163 : vector<1x64xi32>
    %165 = arith.andi %162, %164 : vector<1x64xi1>
    %166 = arith.extui %165 : vector<1x64xi1> to vector<1x64xi32>
    %167 = arith.sitofp %166 : vector<1x64xi32> to vector<1x64xf32>
    %168 = vector.broadcast %167 : vector<1x64xf32> to vector<16x64xf32>
    %169 = arith.mulf %94, %168 : vector<16x64xf32>
    %170 = arith.truncf %169 : vector<16x64xf32> to vector<16x64xbf16>
    %171 = arith.truncf %98 : vector<16x64xf32> to vector<16x64xbf16>
    %cst_58 = arith.constant dense<0.000000e+00> : vector<16x16xf32>
    %172 = tpu.matmul %170, %171, %cst_58 {dimension_numbers = #tpu.dot_dimension_numbers<[1], [1], [0], [0], [0, 0, 1, 0], [], []>} : vector<16x64xbf16>, vector<16x64xbf16>, vector<16x16xf32> -> vector<16x16xf32>
    %cst_59 = arith.constant dense<0xFF800000> : vector<16xf32>
    %173 = vector.multi_reduction <maximumf>, %172, %cst_59 [1] : vector<16x16xf32> to vector<16xf32>
    %174 = vector.shape_cast %173 : vector<16xf32> to vector<16x1xf32>
    %175 = vector.broadcast %174 : vector<16x1xf32> to vector<16x16xf32>
    %176 = arith.subf %172, %175 : vector<16x16xf32>
    %177 = math.exp %176 : vector<16x16xf32>
    %cst_60 = arith.constant dense<0.000000e+00> : vector<16xf32>
    %178 = vector.multi_reduction <add>, %177, %cst_60 [1] : vector<16x16xf32> to vector<16xf32>
    %179 = vector.shape_cast %178 : vector<16xf32> to vector<16x1xf32>
    %180 = tpu.reciprocal %179 {approx = true} : vector<16x1xf32> -> vector<16x1xf32>
    %181 = vector.broadcast %180 : vector<16x1xf32> to vector<16x16xf32>
    %182 = arith.mulf %177, %181 : vector<16x16xf32>
    %183 = arith.truncf %182 : vector<16x16xf32> to vector<16x16xbf16>
    %184 = vector.broadcast %167 : vector<1x64xf32> to vector<16x64xf32>
    %185 = arith.mulf %102, %184 : vector<16x64xf32>
    %186 = arith.truncf %185 : vector<16x64xf32> to vector<16x64xbf16>
    %cst_61 = arith.constant dense<0.000000e+00> : vector<16x64xf32>
    %187 = tpu.matmul %183, %186, %cst_61 {dimension_numbers = #tpu.dot_dimension_numbers<[1], [0], [0], [1], [0, 0, 1, 1], [], []>} : vector<16x16xbf16>, vector<16x64xbf16>, vector<16x64xf32> -> vector<16x64xf32>
    %188 = arith.addf %160, %187 : vector<16x64xf32>
    %c48_i32_62 = arith.constant 48 : i32
    %189 = vector.broadcast %c48_i32_62 : i32 to vector<1x64xi32>
    %190 = arith.cmpi sge, %103, %189 : vector<1x64xi32>
    %c64_i32 = arith.constant 64 : i32
    %191 = vector.broadcast %c64_i32 : i32 to vector<1x64xi32>
    %192 = arith.cmpi slt, %103, %191 : vector<1x64xi32>
    %193 = arith.andi %190, %192 : vector<1x64xi1>
    %194 = arith.extui %193 : vector<1x64xi1> to vector<1x64xi32>
    %195 = arith.sitofp %194 : vector<1x64xi32> to vector<1x64xf32>
    %196 = vector.broadcast %195 : vector<1x64xf32> to vector<16x64xf32>
    %197 = arith.mulf %94, %196 : vector<16x64xf32>
    %198 = arith.truncf %197 : vector<16x64xf32> to vector<16x64xbf16>
    %199 = arith.truncf %98 : vector<16x64xf32> to vector<16x64xbf16>
    %cst_63 = arith.constant dense<0.000000e+00> : vector<16x16xf32>
    %200 = tpu.matmul %198, %199, %cst_63 {dimension_numbers = #tpu.dot_dimension_numbers<[1], [1], [0], [0], [0, 0, 1, 0], [], []>} : vector<16x64xbf16>, vector<16x64xbf16>, vector<16x16xf32> -> vector<16x16xf32>
    %cst_64 = arith.constant dense<0xFF800000> : vector<16xf32>
    %201 = vector.multi_reduction <maximumf>, %200, %cst_64 [1] : vector<16x16xf32> to vector<16xf32>
    %202 = vector.shape_cast %201 : vector<16xf32> to vector<16x1xf32>
    %203 = vector.broadcast %202 : vector<16x1xf32> to vector<16x16xf32>
    %204 = arith.subf %200, %203 : vector<16x16xf32>
    %205 = math.exp %204 : vector<16x16xf32>
    %cst_65 = arith.constant dense<0.000000e+00> : vector<16xf32>
    %206 = vector.multi_reduction <add>, %205, %cst_65 [1] : vector<16x16xf32> to vector<16xf32>
    %207 = vector.shape_cast %206 : vector<16xf32> to vector<16x1xf32>
    %208 = tpu.reciprocal %207 {approx = true} : vector<16x1xf32> -> vector<16x1xf32>
    %209 = vector.broadcast %208 : vector<16x1xf32> to vector<16x16xf32>
    %210 = arith.mulf %205, %209 : vector<16x16xf32>
    %211 = arith.truncf %210 : vector<16x16xf32> to vector<16x16xbf16>
    %212 = vector.broadcast %195 : vector<1x64xf32> to vector<16x64xf32>
    %213 = arith.mulf %102, %212 : vector<16x64xf32>
    %214 = arith.truncf %213 : vector<16x64xf32> to vector<16x64xbf16>
    %cst_66 = arith.constant dense<0.000000e+00> : vector<16x64xf32>
    %215 = tpu.matmul %211, %214, %cst_66 {dimension_numbers = #tpu.dot_dimension_numbers<[1], [0], [0], [1], [0, 0, 1, 1], [], []>} : vector<16x16xbf16>, vector<16x64xbf16>, vector<16x64xf32> -> vector<16x64xf32>
    %216 = arith.addf %188, %215 : vector<16x64xf32>
    %217 = arith.truncf %216 : vector<16x64xf32> to vector<16x64xbf16>
    %c0_67 = arith.constant 0 : index
    %c0_68 = arith.constant 0 : index
    %218 = vector.load %arg25[%c0_67, %c0_68] : memref<64x64xf32, #tpu.memory_space<vmem>>, vector<64x64xf32>
    %219 = arith.truncf %218 : vector<64x64xf32> to vector<64x64xbf16>
    %cst_69 = arith.constant dense<0.000000e+00> : vector<16x64xf32>
    %220 = tpu.matmul %217, %219, %cst_69 {dimension_numbers = #tpu.dot_dimension_numbers<[1], [0], [0], [1], [0, 0, 1, 1], [], []>} : vector<16x64xbf16>, vector<64x64xbf16>, vector<16x64xf32> -> vector<16x64xf32>
    %c0_70 = arith.constant 0 : index
    %c0_71 = arith.constant 0 : index
    %221 = vector.load %arg26[%c0_70, %c0_71] : memref<1x64xf32, #tpu.memory_space<vmem>>, vector<1x64xf32>
    %222 = vector.broadcast %221 : vector<1x64xf32> to vector<16x64xf32>
    %223 = arith.addf %220, %222 : vector<16x64xf32>
    %c0_72 = arith.constant 0 : index
    %c0_73 = arith.constant 0 : index
    %224 = vector.load %arg27[%c0_72, %c0_73] : memref<1x32xf32, #tpu.memory_space<vmem>>, vector<1x32xf32>
    %c0_74 = arith.constant 0 : index
    %c0_75 = arith.constant 0 : index
    %225 = vector.load %arg28[%c0_74, %c0_75] : memref<1x32xf32, #tpu.memory_space<vmem>>, vector<1x32xf32>
    %cst_76 = arith.constant dense<0.000000e+00> : vector<16xf32>
    %226 = vector.multi_reduction <add>, %66, %cst_76 [1] : vector<16x32xf32> to vector<16xf32>
    %227 = vector.shape_cast %226 : vector<16xf32> to vector<16x1xf32>
    %cst_77 = arith.constant 3.200000e+01 : f32
    %228 = vector.broadcast %cst_77 : f32 to vector<16x1xf32>
    %229 = arith.divf %227, %228 : vector<16x1xf32>
    %230 = vector.broadcast %229 : vector<16x1xf32> to vector<16x32xf32>
    %231 = arith.subf %66, %230 : vector<16x32xf32>
    %232 = arith.mulf %231, %231 : vector<16x32xf32>
    %cst_78 = arith.constant dense<0.000000e+00> : vector<16xf32>
    %233 = vector.multi_reduction <add>, %232, %cst_78 [1] : vector<16x32xf32> to vector<16xf32>
    %234 = vector.shape_cast %233 : vector<16xf32> to vector<16x1xf32>
    %cst_79 = arith.constant 3.200000e+01 : f32
    %235 = vector.broadcast %cst_79 : f32 to vector<16x1xf32>
    %236 = arith.divf %234, %235 : vector<16x1xf32>
    %237 = vector.broadcast %229 : vector<16x1xf32> to vector<16x32xf32>
    %238 = arith.subf %66, %237 : vector<16x32xf32>
    %cst_80 = arith.constant 9.99999974E-6 : f32
    %239 = vector.broadcast %cst_80 : f32 to vector<16x1xf32>
    %240 = arith.addf %236, %239 : vector<16x1xf32>
    %241 = math.rsqrt %240 : vector<16x1xf32>
    %242 = vector.broadcast %241 : vector<16x1xf32> to vector<16x32xf32>
    %243 = arith.mulf %238, %242 : vector<16x32xf32>
    %244 = vector.broadcast %224 : vector<1x32xf32> to vector<16x32xf32>
    %245 = arith.mulf %243, %244 : vector<16x32xf32>
    %246 = vector.broadcast %225 : vector<1x32xf32> to vector<16x32xf32>
    %247 = arith.addf %245, %246 : vector<16x32xf32>
    %248 = arith.truncf %247 : vector<16x32xf32> to vector<16x32xbf16>
    %c0_81 = arith.constant 0 : index
    %c0_82 = arith.constant 0 : index
    %249 = vector.load %arg29[%c0_81, %c0_82] : memref<32x256xf32, #tpu.memory_space<vmem>>, vector<32x256xf32>
    %250 = arith.truncf %249 : vector<32x256xf32> to vector<32x256xbf16>
    %cst_83 = arith.constant dense<0.000000e+00> : vector<16x256xf32>
    %251 = tpu.matmul %248, %250, %cst_83 {dimension_numbers = #tpu.dot_dimension_numbers<[1], [0], [0], [1], [0, 0, 1, 1], [], []>} : vector<16x32xbf16>, vector<32x256xbf16>, vector<16x256xf32> -> vector<16x256xf32>
    %c0_84 = arith.constant 0 : index
    %c0_85 = arith.constant 0 : index
    %252 = vector.load %arg30[%c0_84, %c0_85] : memref<1x256xf32, #tpu.memory_space<vmem>>, vector<1x256xf32>
    %253 = vector.broadcast %252 : vector<1x256xf32> to vector<16x256xf32>
    %254 = arith.addf %251, %253 : vector<16x256xf32>
    %255 = arith.truncf %247 : vector<16x32xf32> to vector<16x32xbf16>
    %c0_86 = arith.constant 0 : index
    %c0_87 = arith.constant 0 : index
    %256 = vector.load %arg31[%c0_86, %c0_87] : memref<32x256xf32, #tpu.memory_space<vmem>>, vector<32x256xf32>
    %257 = arith.truncf %256 : vector<32x256xf32> to vector<32x256xbf16>
    %cst_88 = arith.constant dense<0.000000e+00> : vector<16x256xf32>
    %258 = tpu.matmul %255, %257, %cst_88 {dimension_numbers = #tpu.dot_dimension_numbers<[1], [0], [0], [1], [0, 0, 1, 1], [], []>} : vector<16x32xbf16>, vector<32x256xbf16>, vector<16x256xf32> -> vector<16x256xf32>
    %c0_89 = arith.constant 0 : index
    %c0_90 = arith.constant 0 : index
    %259 = vector.load %arg32[%c0_89, %c0_90] : memref<1x256xf32, #tpu.memory_space<vmem>>, vector<1x256xf32>
    %260 = vector.broadcast %259 : vector<1x256xf32> to vector<16x256xf32>
    %261 = arith.addf %258, %260 : vector<16x256xf32>
    %262 = arith.truncf %247 : vector<16x32xf32> to vector<16x32xbf16>
    %c0_91 = arith.constant 0 : index
    %c0_92 = arith.constant 0 : index
    %263 = vector.load %arg33[%c0_91, %c0_92] : memref<32x256xf32, #tpu.memory_space<vmem>>, vector<32x256xf32>
    %264 = arith.truncf %263 : vector<32x256xf32> to vector<32x256xbf16>
    %cst_93 = arith.constant dense<0.000000e+00> : vector<16x256xf32>
    %265 = tpu.matmul %262, %264, %cst_93 {dimension_numbers = #tpu.dot_dimension_numbers<[1], [0], [0], [1], [0, 0, 1, 1], [], []>} : vector<16x32xbf16>, vector<32x256xbf16>, vector<16x256xf32> -> vector<16x256xf32>
    %c0_94 = arith.constant 0 : index
    %c0_95 = arith.constant 0 : index
    %266 = vector.load %arg34[%c0_94, %c0_95] : memref<1x256xf32, #tpu.memory_space<vmem>>, vector<1x256xf32>
    %267 = vector.broadcast %266 : vector<1x256xf32> to vector<16x256xf32>
    %268 = arith.addf %265, %267 : vector<16x256xf32>
    %c16 = arith.constant 16 : index
    %c0_96 = arith.constant 0 : index
    %269 = vector.load %arg52[%c16, %c0_96] : memref<32x256xf32, #tpu.memory_space<vmem>>, vector<16x256xf32>
    tpu.vector_store %arg52[%c16, %c0_96], %261 {strides = array<i32>} : memref<32x256xf32, #tpu.memory_space<vmem>>, vector<16x256xf32>,
    %c0_97 = arith.constant 0 : index
    %c0_98 = arith.constant 0 : index
    %270 = vector.load %arg35[%c0_97, %c0_98] : memref<16x256xf32, #tpu.memory_space<vmem>>, vector<1x256xf32>
    %271 = vector.broadcast %270 : vector<1x256xf32> to vector<16x256xf32>
    %272 = arith.mulf %261, %271 : vector<16x256xf32>
    %c15 = arith.constant 15 : index
    %c0_99 = arith.constant 0 : index
    %273 = vector.load %arg52[%c15, %c0_99] : memref<32x256xf32, #tpu.memory_space<vmem>>, vector<16x256xf32>
    %c1 = arith.constant 1 : index
    %c0_100 = arith.constant 0 : index
    %274 = vector.load %arg35[%c1, %c0_100] : memref<16x256xf32, #tpu.memory_space<vmem>>, vector<1x256xf32>
    %275 = vector.broadcast %274 : vector<1x256xf32> to vector<16x256xf32>
    %276 = arith.mulf %273, %275 : vector<16x256xf32>
    %277 = arith.addf %272, %276 : vector<16x256xf32>
    %c14 = arith.constant 14 : index
    %c0_101 = arith.constant 0 : index
    %278 = vector.load %arg52[%c14, %c0_101] : memref<32x256xf32, #tpu.memory_space<vmem>>, vector<16x256xf32>
    %c2 = arith.constant 2 : index
    %c0_102 = arith.constant 0 : index
    %279 = vector.load %arg35[%c2, %c0_102] : memref<16x256xf32, #tpu.memory_space<vmem>>, vector<1x256xf32>
    %280 = vector.broadcast %279 : vector<1x256xf32> to vector<16x256xf32>
    %281 = arith.mulf %278, %280 : vector<16x256xf32>
    %282 = arith.addf %277, %281 : vector<16x256xf32>
    %c13 = arith.constant 13 : index
    %c0_103 = arith.constant 0 : index
    %283 = vector.load %arg52[%c13, %c0_103] : memref<32x256xf32, #tpu.memory_space<vmem>>, vector<16x256xf32>
    %c3 = arith.constant 3 : index
    %c0_104 = arith.constant 0 : index
    %284 = vector.load %arg35[%c3, %c0_104] : memref<16x256xf32, #tpu.memory_space<vmem>>, vector<1x256xf32>
    %285 = vector.broadcast %284 : vector<1x256xf32> to vector<16x256xf32>
    %286 = arith.mulf %283, %285 : vector<16x256xf32>
    %287 = arith.addf %282, %286 : vector<16x256xf32>
    %c12 = arith.constant 12 : index
    %c0_105 = arith.constant 0 : index
    %288 = vector.load %arg52[%c12, %c0_105] : memref<32x256xf32, #tpu.memory_space<vmem>>, vector<16x256xf32>
    %c4 = arith.constant 4 : index
    %c0_106 = arith.constant 0 : index
    %289 = vector.load %arg35[%c4, %c0_106] : memref<16x256xf32, #tpu.memory_space<vmem>>, vector<1x256xf32>
    %290 = vector.broadcast %289 : vector<1x256xf32> to vector<16x256xf32>
    %291 = arith.mulf %288, %290 : vector<16x256xf32>
    %292 = arith.addf %287, %291 : vector<16x256xf32>
    %c11 = arith.constant 11 : index
    %c0_107 = arith.constant 0 : index
    %293 = vector.load %arg52[%c11, %c0_107] : memref<32x256xf32, #tpu.memory_space<vmem>>, vector<16x256xf32>
    %c5 = arith.constant 5 : index
    %c0_108 = arith.constant 0 : index
    %294 = vector.load %arg35[%c5, %c0_108] : memref<16x256xf32, #tpu.memory_space<vmem>>, vector<1x256xf32>
    %295 = vector.broadcast %294 : vector<1x256xf32> to vector<16x256xf32>
    %296 = arith.mulf %293, %295 : vector<16x256xf32>
    %297 = arith.addf %292, %296 : vector<16x256xf32>
    %c10 = arith.constant 10 : index
    %c0_109 = arith.constant 0 : index
    %298 = vector.load %arg52[%c10, %c0_109] : memref<32x256xf32, #tpu.memory_space<vmem>>, vector<16x256xf32>
    %c6 = arith.constant 6 : index
    %c0_110 = arith.constant 0 : index
    %299 = vector.load %arg35[%c6, %c0_110] : memref<16x256xf32, #tpu.memory_space<vmem>>, vector<1x256xf32>
    %300 = vector.broadcast %299 : vector<1x256xf32> to vector<16x256xf32>
    %301 = arith.mulf %298, %300 : vector<16x256xf32>
    %302 = arith.addf %297, %301 : vector<16x256xf32>
    %c9 = arith.constant 9 : index
    %c0_111 = arith.constant 0 : index
    %303 = vector.load %arg52[%c9, %c0_111] : memref<32x256xf32, #tpu.memory_space<vmem>>, vector<16x256xf32>
    %c7 = arith.constant 7 : index
    %c0_112 = arith.constant 0 : index
    %304 = vector.load %arg35[%c7, %c0_112] : memref<16x256xf32, #tpu.memory_space<vmem>>, vector<1x256xf32>
    %305 = vector.broadcast %304 : vector<1x256xf32> to vector<16x256xf32>
    %306 = arith.mulf %303, %305 : vector<16x256xf32>
    %307 = arith.addf %302, %306 : vector<16x256xf32>
    %c8 = arith.constant 8 : index
    %c0_113 = arith.constant 0 : index
    %308 = vector.load %arg52[%c8, %c0_113] : memref<32x256xf32, #tpu.memory_space<vmem>>, vector<16x256xf32>
    %c8_114 = arith.constant 8 : index
    %c0_115 = arith.constant 0 : index
    %309 = vector.load %arg35[%c8_114, %c0_115] : memref<16x256xf32, #tpu.memory_space<vmem>>, vector<1x256xf32>
    %310 = vector.broadcast %309 : vector<1x256xf32> to vector<16x256xf32>
    %311 = arith.mulf %308, %310 : vector<16x256xf32>
    %312 = arith.addf %307, %311 : vector<16x256xf32>
    %c7_116 = arith.constant 7 : index
    %c0_117 = arith.constant 0 : index
    %313 = vector.load %arg52[%c7_116, %c0_117] : memref<32x256xf32, #tpu.memory_space<vmem>>, vector<16x256xf32>
    %c9_118 = arith.constant 9 : index
    %c0_119 = arith.constant 0 : index
    %314 = vector.load %arg35[%c9_118, %c0_119] : memref<16x256xf32, #tpu.memory_space<vmem>>, vector<1x256xf32>
    %315 = vector.broadcast %314 : vector<1x256xf32> to vector<16x256xf32>
    %316 = arith.mulf %313, %315 : vector<16x256xf32>
    %317 = arith.addf %312, %316 : vector<16x256xf32>
    %c6_120 = arith.constant 6 : index
    %c0_121 = arith.constant 0 : index
    %318 = vector.load %arg52[%c6_120, %c0_121] : memref<32x256xf32, #tpu.memory_space<vmem>>, vector<16x256xf32>
    %c10_122 = arith.constant 10 : index
    %c0_123 = arith.constant 0 : index
    %319 = vector.load %arg35[%c10_122, %c0_123] : memref<16x256xf32, #tpu.memory_space<vmem>>, vector<1x256xf32>
    %320 = vector.broadcast %319 : vector<1x256xf32> to vector<16x256xf32>
    %321 = arith.mulf %318, %320 : vector<16x256xf32>
    %322 = arith.addf %317, %321 : vector<16x256xf32>
    %c5_124 = arith.constant 5 : index
    %c0_125 = arith.constant 0 : index
    %323 = vector.load %arg52[%c5_124, %c0_125] : memref<32x256xf32, #tpu.memory_space<vmem>>, vector<16x256xf32>
    %c11_126 = arith.constant 11 : index
    %c0_127 = arith.constant 0 : index
    %324 = vector.load %arg35[%c11_126, %c0_127] : memref<16x256xf32, #tpu.memory_space<vmem>>, vector<1x256xf32>
    %325 = vector.broadcast %324 : vector<1x256xf32> to vector<16x256xf32>
    %326 = arith.mulf %323, %325 : vector<16x256xf32>
    %327 = arith.addf %322, %326 : vector<16x256xf32>
    %c4_128 = arith.constant 4 : index
    %c0_129 = arith.constant 0 : index
    %328 = vector.load %arg52[%c4_128, %c0_129] : memref<32x256xf32, #tpu.memory_space<vmem>>, vector<16x256xf32>
    %c12_130 = arith.constant 12 : index
    %c0_131 = arith.constant 0 : index
    %329 = vector.load %arg35[%c12_130, %c0_131] : memref<16x256xf32, #tpu.memory_space<vmem>>, vector<1x256xf32>
    %330 = vector.broadcast %329 : vector<1x256xf32> to vector<16x256xf32>
    %331 = arith.mulf %328, %330 : vector<16x256xf32>
    %332 = arith.addf %327, %331 : vector<16x256xf32>
    %c3_132 = arith.constant 3 : index
    %c0_133 = arith.constant 0 : index
    %333 = vector.load %arg52[%c3_132, %c0_133] : memref<32x256xf32, #tpu.memory_space<vmem>>, vector<16x256xf32>
    %c13_134 = arith.constant 13 : index
    %c0_135 = arith.constant 0 : index
    %334 = vector.load %arg35[%c13_134, %c0_135] : memref<16x256xf32, #tpu.memory_space<vmem>>, vector<1x256xf32>
    %335 = vector.broadcast %334 : vector<1x256xf32> to vector<16x256xf32>
    %336 = arith.mulf %333, %335 : vector<16x256xf32>
    %337 = arith.addf %332, %336 : vector<16x256xf32>
    %c2_136 = arith.constant 2 : index
    %c0_137 = arith.constant 0 : index
    %338 = vector.load %arg52[%c2_136, %c0_137] : memref<32x256xf32, #tpu.memory_space<vmem>>, vector<16x256xf32>
    %c14_138 = arith.constant 14 : index
    %c0_139 = arith.constant 0 : index
    %339 = vector.load %arg35[%c14_138, %c0_139] : memref<16x256xf32, #tpu.memory_space<vmem>>, vector<1x256xf32>
    %340 = vector.broadcast %339 : vector<1x256xf32> to vector<16x256xf32>
    %341 = arith.mulf %338, %340 : vector<16x256xf32>
    %342 = arith.addf %337, %341 : vector<16x256xf32>
    %c1_140 = arith.constant 1 : index
    %c0_141 = arith.constant 0 : index
    %343 = vector.load %arg52[%c1_140, %c0_141] : memref<32x256xf32, #tpu.memory_space<vmem>>, vector<16x256xf32>
    %c15_142 = arith.constant 15 : index
    %c0_143 = arith.constant 0 : index
    %344 = vector.load %arg35[%c15_142, %c0_143] : memref<16x256xf32, #tpu.memory_space<vmem>>, vector<1x256xf32>
    %345 = vector.broadcast %344 : vector<1x256xf32> to vector<16x256xf32>
    %346 = arith.mulf %343, %345 : vector<16x256xf32>
    %347 = arith.addf %342, %346 : vector<16x256xf32>
    %348 = arith.mulf %347, %268 : vector<16x256xf32>
    %c16_144 = arith.constant 16 : index
    %c0_145 = arith.constant 0 : index
    %349 = vector.load %arg52[%c16_144, %c0_145] : memref<32x256xf32, #tpu.memory_space<vmem>>, vector<16x256xf32>
    tpu.vector_store %arg52[%c16_144, %c0_145], %348 {strides = array<i32>} : memref<32x256xf32, #tpu.memory_space<vmem>>, vector<16x256xf32>,
    %c0_146 = arith.constant 0 : index
    %c0_147 = arith.constant 0 : index
    %350 = vector.load %arg36[%c0_146, %c0_147] : memref<16x256xf32, #tpu.memory_space<vmem>>, vector<1x256xf32>
    %351 = vector.broadcast %350 : vector<1x256xf32> to vector<16x256xf32>
    %352 = arith.mulf %348, %351 : vector<16x256xf32>
    %c15_148 = arith.constant 15 : index
    %c0_149 = arith.constant 0 : index
    %353 = vector.load %arg52[%c15_148, %c0_149] : memref<32x256xf32, #tpu.memory_space<vmem>>, vector<16x256xf32>
    %c1_150 = arith.constant 1 : index
    %c0_151 = arith.constant 0 : index
    %354 = vector.load %arg36[%c1_150, %c0_151] : memref<16x256xf32, #tpu.memory_space<vmem>>, vector<1x256xf32>
    %355 = vector.broadcast %354 : vector<1x256xf32> to vector<16x256xf32>
    %356 = arith.mulf %353, %355 : vector<16x256xf32>
    %357 = arith.addf %352, %356 : vector<16x256xf32>
    %c14_152 = arith.constant 14 : index
    %c0_153 = arith.constant 0 : index
    %358 = vector.load %arg52[%c14_152, %c0_153] : memref<32x256xf32, #tpu.memory_space<vmem>>, vector<16x256xf32>
    %c2_154 = arith.constant 2 : index
    %c0_155 = arith.constant 0 : index
    %359 = vector.load %arg36[%c2_154, %c0_155] : memref<16x256xf32, #tpu.memory_space<vmem>>, vector<1x256xf32>
    %360 = vector.broadcast %359 : vector<1x256xf32> to vector<16x256xf32>
    %361 = arith.mulf %358, %360 : vector<16x256xf32>
    %362 = arith.addf %357, %361 : vector<16x256xf32>
    %c13_156 = arith.constant 13 : index
    %c0_157 = arith.constant 0 : index
    %363 = vector.load %arg52[%c13_156, %c0_157] : memref<32x256xf32, #tpu.memory_space<vmem>>, vector<16x256xf32>
    %c3_158 = arith.constant 3 : index
    %c0_159 = arith.constant 0 : index
    %364 = vector.load %arg36[%c3_158, %c0_159] : memref<16x256xf32, #tpu.memory_space<vmem>>, vector<1x256xf32>
    %365 = vector.broadcast %364 : vector<1x256xf32> to vector<16x256xf32>
    %366 = arith.mulf %363, %365 : vector<16x256xf32>
    %367 = arith.addf %362, %366 : vector<16x256xf32>
    %c12_160 = arith.constant 12 : index
    %c0_161 = arith.constant 0 : index
    %368 = vector.load %arg52[%c12_160, %c0_161] : memref<32x256xf32, #tpu.memory_space<vmem>>, vector<16x256xf32>
    %c4_162 = arith.constant 4 : index
    %c0_163 = arith.constant 0 : index
    %369 = vector.load %arg36[%c4_162, %c0_163] : memref<16x256xf32, #tpu.memory_space<vmem>>, vector<1x256xf32>
    %370 = vector.broadcast %369 : vector<1x256xf32> to vector<16x256xf32>
    %371 = arith.mulf %368, %370 : vector<16x256xf32>
    %372 = arith.addf %367, %371 : vector<16x256xf32>
    %c11_164 = arith.constant 11 : index
    %c0_165 = arith.constant 0 : index
    %373 = vector.load %arg52[%c11_164, %c0_165] : memref<32x256xf32, #tpu.memory_space<vmem>>, vector<16x256xf32>
    %c5_166 = arith.constant 5 : index
    %c0_167 = arith.constant 0 : index
    %374 = vector.load %arg36[%c5_166, %c0_167] : memref<16x256xf32, #tpu.memory_space<vmem>>, vector<1x256xf32>
    %375 = vector.broadcast %374 : vector<1x256xf32> to vector<16x256xf32>
    %376 = arith.mulf %373, %375 : vector<16x256xf32>
    %377 = arith.addf %372, %376 : vector<16x256xf32>
    %c10_168 = arith.constant 10 : index
    %c0_169 = arith.constant 0 : index
    %378 = vector.load %arg52[%c10_168, %c0_169] : memref<32x256xf32, #tpu.memory_space<vmem>>, vector<16x256xf32>
    %c6_170 = arith.constant 6 : index
    %c0_171 = arith.constant 0 : index
    %379 = vector.load %arg36[%c6_170, %c0_171] : memref<16x256xf32, #tpu.memory_space<vmem>>, vector<1x256xf32>
    %380 = vector.broadcast %379 : vector<1x256xf32> to vector<16x256xf32>
    %381 = arith.mulf %378, %380 : vector<16x256xf32>
    %382 = arith.addf %377, %381 : vector<16x256xf32>
    %c9_172 = arith.constant 9 : index
    %c0_173 = arith.constant 0 : index
    %383 = vector.load %arg52[%c9_172, %c0_173] : memref<32x256xf32, #tpu.memory_space<vmem>>, vector<16x256xf32>
    %c7_174 = arith.constant 7 : index
    %c0_175 = arith.constant 0 : index
    %384 = vector.load %arg36[%c7_174, %c0_175] : memref<16x256xf32, #tpu.memory_space<vmem>>, vector<1x256xf32>
    %385 = vector.broadcast %384 : vector<1x256xf32> to vector<16x256xf32>
    %386 = arith.mulf %383, %385 : vector<16x256xf32>
    %387 = arith.addf %382, %386 : vector<16x256xf32>
    %c8_176 = arith.constant 8 : index
    %c0_177 = arith.constant 0 : index
    %388 = vector.load %arg52[%c8_176, %c0_177] : memref<32x256xf32, #tpu.memory_space<vmem>>, vector<16x256xf32>
    %c8_178 = arith.constant 8 : index
    %c0_179 = arith.constant 0 : index
    %389 = vector.load %arg36[%c8_178, %c0_179] : memref<16x256xf32, #tpu.memory_space<vmem>>, vector<1x256xf32>
    %390 = vector.broadcast %389 : vector<1x256xf32> to vector<16x256xf32>
    %391 = arith.mulf %388, %390 : vector<16x256xf32>
    %392 = arith.addf %387, %391 : vector<16x256xf32>
    %c7_180 = arith.constant 7 : index
    %c0_181 = arith.constant 0 : index
    %393 = vector.load %arg52[%c7_180, %c0_181] : memref<32x256xf32, #tpu.memory_space<vmem>>, vector<16x256xf32>
    %c9_182 = arith.constant 9 : index
    %c0_183 = arith.constant 0 : index
    %394 = vector.load %arg36[%c9_182, %c0_183] : memref<16x256xf32, #tpu.memory_space<vmem>>, vector<1x256xf32>
    %395 = vector.broadcast %394 : vector<1x256xf32> to vector<16x256xf32>
    %396 = arith.mulf %393, %395 : vector<16x256xf32>
    %397 = arith.addf %392, %396 : vector<16x256xf32>
    %c6_184 = arith.constant 6 : index
    %c0_185 = arith.constant 0 : index
    %398 = vector.load %arg52[%c6_184, %c0_185] : memref<32x256xf32, #tpu.memory_space<vmem>>, vector<16x256xf32>
    %c10_186 = arith.constant 10 : index
    %c0_187 = arith.constant 0 : index
    %399 = vector.load %arg36[%c10_186, %c0_187] : memref<16x256xf32, #tpu.memory_space<vmem>>, vector<1x256xf32>
    %400 = vector.broadcast %399 : vector<1x256xf32> to vector<16x256xf32>
    %401 = arith.mulf %398, %400 : vector<16x256xf32>
    %402 = arith.addf %397, %401 : vector<16x256xf32>
    %c5_188 = arith.constant 5 : index
    %c0_189 = arith.constant 0 : index
    %403 = vector.load %arg52[%c5_188, %c0_189] : memref<32x256xf32, #tpu.memory_space<vmem>>, vector<16x256xf32>
    %c11_190 = arith.constant 11 : index
    %c0_191 = arith.constant 0 : index
    %404 = vector.load %arg36[%c11_190, %c0_191] : memref<16x256xf32, #tpu.memory_space<vmem>>, vector<1x256xf32>
    %405 = vector.broadcast %404 : vector<1x256xf32> to vector<16x256xf32>
    %406 = arith.mulf %403, %405 : vector<16x256xf32>
    %407 = arith.addf %402, %406 : vector<16x256xf32>
    %c4_192 = arith.constant 4 : index
    %c0_193 = arith.constant 0 : index
    %408 = vector.load %arg52[%c4_192, %c0_193] : memref<32x256xf32, #tpu.memory_space<vmem>>, vector<16x256xf32>
    %c12_194 = arith.constant 12 : index
    %c0_195 = arith.constant 0 : index
    %409 = vector.load %arg36[%c12_194, %c0_195] : memref<16x256xf32, #tpu.memory_space<vmem>>, vector<1x256xf32>
    %410 = vector.broadcast %409 : vector<1x256xf32> to vector<16x256xf32>
    %411 = arith.mulf %408, %410 : vector<16x256xf32>
    %412 = arith.addf %407, %411 : vector<16x256xf32>
    %c3_196 = arith.constant 3 : index
    %c0_197 = arith.constant 0 : index
    %413 = vector.load %arg52[%c3_196, %c0_197] : memref<32x256xf32, #tpu.memory_space<vmem>>, vector<16x256xf32>
    %c13_198 = arith.constant 13 : index
    %c0_199 = arith.constant 0 : index
    %414 = vector.load %arg36[%c13_198, %c0_199] : memref<16x256xf32, #tpu.memory_space<vmem>>, vector<1x256xf32>
    %415 = vector.broadcast %414 : vector<1x256xf32> to vector<16x256xf32>
    %416 = arith.mulf %413, %415 : vector<16x256xf32>
    %417 = arith.addf %412, %416 : vector<16x256xf32>
    %c2_200 = arith.constant 2 : index
    %c0_201 = arith.constant 0 : index
    %418 = vector.load %arg52[%c2_200, %c0_201] : memref<32x256xf32, #tpu.memory_space<vmem>>, vector<16x256xf32>
    %c14_202 = arith.constant 14 : index
    %c0_203 = arith.constant 0 : index
    %419 = vector.load %arg36[%c14_202, %c0_203] : memref<16x256xf32, #tpu.memory_space<vmem>>, vector<1x256xf32>
    %420 = vector.broadcast %419 : vector<1x256xf32> to vector<16x256xf32>
    %421 = arith.mulf %418, %420 : vector<16x256xf32>
    %422 = arith.addf %417, %421 : vector<16x256xf32>
    %c1_204 = arith.constant 1 : index
    %c0_205 = arith.constant 0 : index
    %423 = vector.load %arg52[%c1_204, %c0_205] : memref<32x256xf32, #tpu.memory_space<vmem>>, vector<16x256xf32>
    %c15_206 = arith.constant 15 : index
    %c0_207 = arith.constant 0 : index
    %424 = vector.load %arg36[%c15_206, %c0_207] : memref<16x256xf32, #tpu.memory_space<vmem>>, vector<1x256xf32>
    %425 = vector.broadcast %424 : vector<1x256xf32> to vector<16x256xf32>
    %426 = arith.mulf %423, %425 : vector<16x256xf32>
    %427 = arith.addf %422, %426 : vector<16x256xf32>
    %428 = arith.mulf %254, %427 : vector<16x256xf32>
    %429 = arith.truncf %428 : vector<16x256xf32> to vector<16x256xbf16>
    %c0_208 = arith.constant 0 : index
    %c0_209 = arith.constant 0 : index
    %430 = vector.load %arg37[%c0_208, %c0_209] : memref<256x64xf32, #tpu.memory_space<vmem>>, vector<256x64xf32>
    %431 = arith.truncf %430 : vector<256x64xf32> to vector<256x64xbf16>
    %cst_210 = arith.constant dense<0.000000e+00> : vector<16x64xf32>
    %432 = tpu.matmul %429, %431, %cst_210 {dimension_numbers = #tpu.dot_dimension_numbers<[1], [0], [0], [1], [0, 0, 1, 1], [], []>} : vector<16x256xbf16>, vector<256x64xbf16>, vector<16x64xf32> -> vector<16x64xf32>
    %c0_211 = arith.constant 0 : index
    %c0_212 = arith.constant 0 : index
    %433 = vector.load %arg38[%c0_211, %c0_212] : memref<1x64xf32, #tpu.memory_space<vmem>>, vector<1x64xf32>
    %434 = vector.broadcast %433 : vector<1x64xf32> to vector<16x64xf32>
    %435 = arith.addf %432, %434 : vector<16x64xf32>
    %436 = arith.addf %223, %435 : vector<16x64xf32>
    %c0_213 = arith.constant 0 : index
    %c0_214 = arith.constant 0 : index
    %437 = vector.load %arg14[%c0_213, %c0_214] : memref<1x64xf32, #tpu.memory_space<vmem>>, vector<1x64xf32>
    %c0_215 = arith.constant 0 : index
    %c0_216 = arith.constant 0 : index
    %438 = vector.load %arg15[%c0_215, %c0_216] : memref<1x64xf32, #tpu.memory_space<vmem>>, vector<1x64xf32>
    %cst_217 = arith.constant dense<0.000000e+00> : vector<16xf32>
    %439 = vector.multi_reduction <add>, %436, %cst_217 [1] : vector<16x64xf32> to vector<16xf32>
    %440 = vector.shape_cast %439 : vector<16xf32> to vector<16x1xf32>
    %cst_218 = arith.constant 6.400000e+01 : f32
    %441 = vector.broadcast %cst_218 : f32 to vector<16x1xf32>
    %442 = arith.divf %440, %441 : vector<16x1xf32>
    %443 = vector.broadcast %442 : vector<16x1xf32> to vector<16x64xf32>
    %444 = arith.subf %436, %443 : vector<16x64xf32>
    %445 = arith.mulf %444, %444 : vector<16x64xf32>
    %cst_219 = arith.constant dense<0.000000e+00> : vector<16xf32>
    %446 = vector.multi_reduction <add>, %445, %cst_219 [1] : vector<16x64xf32> to vector<16xf32>
    %447 = vector.shape_cast %446 : vector<16xf32> to vector<16x1xf32>
    %cst_220 = arith.constant 6.400000e+01 : f32
    %448 = vector.broadcast %cst_220 : f32 to vector<16x1xf32>
    %449 = arith.divf %447, %448 : vector<16x1xf32>
    %450 = vector.broadcast %442 : vector<16x1xf32> to vector<16x64xf32>
    %451 = arith.subf %436, %450 : vector<16x64xf32>
    %cst_221 = arith.constant 9.99999974E-6 : f32
    %452 = vector.broadcast %cst_221 : f32 to vector<16x1xf32>
    %453 = arith.addf %449, %452 : vector<16x1xf32>
    %454 = math.rsqrt %453 : vector<16x1xf32>
    %455 = vector.broadcast %454 : vector<16x1xf32> to vector<16x64xf32>
    %456 = arith.mulf %451, %455 : vector<16x64xf32>
    %457 = vector.broadcast %437 : vector<1x64xf32> to vector<16x64xf32>
    %458 = arith.mulf %456, %457 : vector<16x64xf32>
    %459 = vector.broadcast %438 : vector<1x64xf32> to vector<16x64xf32>
    %460 = arith.addf %458, %459 : vector<16x64xf32>
    %461 = arith.truncf %460 : vector<16x64xf32> to vector<16x64xbf16>
    %c0_222 = arith.constant 0 : index
    %c0_223 = arith.constant 0 : index
    %462 = vector.load %arg16[%c0_222, %c0_223] : memref<64x256xf32, #tpu.memory_space<vmem>>, vector<64x256xf32>
    %463 = arith.truncf %462 : vector<64x256xf32> to vector<64x256xbf16>
    %cst_224 = arith.constant dense<0.000000e+00> : vector<16x256xf32>
    %464 = tpu.matmul %461, %463, %cst_224 {dimension_numbers = #tpu.dot_dimension_numbers<[1], [0], [0], [1], [0, 0, 1, 1], [], []>} : vector<16x64xbf16>, vector<64x256xbf16>, vector<16x256xf32> -> vector<16x256xf32>
    %c0_225 = arith.constant 0 : index
    %c0_226 = arith.constant 0 : index
    %465 = vector.load %arg17[%c0_225, %c0_226] : memref<1x256xf32, #tpu.memory_space<vmem>>, vector<1x256xf32>
    %466 = vector.broadcast %465 : vector<1x256xf32> to vector<16x256xf32>
    %467 = arith.addf %464, %466 : vector<16x256xf32>
    %468 = arith.negf %467 : vector<16x256xf32>
    %469 = math.exp %468 : vector<16x256xf32>
    %cst_227 = arith.constant 1.000000e+00 : f32
    %470 = vector.broadcast %cst_227 : f32 to vector<16x256xf32>
    %471 = arith.addf %470, %469 : vector<16x256xf32>
    %472 = arith.divf %470, %471 : vector<16x256xf32>
    %473 = arith.mulf %467, %472 : vector<16x256xf32>
    %474 = arith.truncf %473 : vector<16x256xf32> to vector<16x256xbf16>
    %c0_228 = arith.constant 0 : index
    %c0_229 = arith.constant 0 : index
    %475 = vector.load %arg18[%c0_228, %c0_229] : memref<256x64xf32, #tpu.memory_space<vmem>>, vector<256x64xf32>
    %476 = arith.truncf %475 : vector<256x64xf32> to vector<256x64xbf16>
    %cst_230 = arith.constant dense<0.000000e+00> : vector<16x64xf32>
    %477 = tpu.matmul %474, %476, %cst_230 {dimension_numbers = #tpu.dot_dimension_numbers<[1], [0], [0], [1], [0, 0, 1, 1], [], []>} : vector<16x256xbf16>, vector<256x64xbf16>, vector<16x64xf32> -> vector<16x64xf32>
    %c0_231 = arith.constant 0 : index
    %c0_232 = arith.constant 0 : index
    %478 = vector.load %arg19[%c0_231, %c0_232] : memref<1x64xf32, #tpu.memory_space<vmem>>, vector<1x64xf32>
    %479 = vector.broadcast %478 : vector<1x64xf32> to vector<16x64xf32>
    %480 = arith.addf %477, %479 : vector<16x64xf32>
    %cst_233 = arith.constant 5.000000e-01 : f32
    %481 = vector.broadcast %cst_233 : f32 to vector<16x64xf32>
    %482 = arith.mulf %481, %480 : vector<16x64xf32>
    %483 = arith.addf %436, %482 : vector<16x64xf32>
    %484 = arith.addf %483, %50 : vector<16x64xf32>
    %c0_234 = arith.constant 0 : index
    %c0_235 = arith.constant 0 : index
    %485 = vector.load %arg39[%c0_234, %c0_235] : memref<1x64xf32, #tpu.memory_space<vmem>>, vector<1x64xf32>
    %c0_236 = arith.constant 0 : index
    %c0_237 = arith.constant 0 : index
    %486 = vector.load %arg40[%c0_236, %c0_237] : memref<1x64xf32, #tpu.memory_space<vmem>>, vector<1x64xf32>
    %cst_238 = arith.constant dense<0.000000e+00> : vector<16xf32>
    %487 = vector.multi_reduction <add>, %484, %cst_238 [1] : vector<16x64xf32> to vector<16xf32>
    %488 = vector.shape_cast %487 : vector<16xf32> to vector<16x1xf32>
    %cst_239 = arith.constant 6.400000e+01 : f32
    %489 = vector.broadcast %cst_239 : f32 to vector<16x1xf32>
    %490 = arith.divf %488, %489 : vector<16x1xf32>
    %491 = vector.broadcast %490 : vector<16x1xf32> to vector<16x64xf32>
    %492 = arith.subf %484, %491 : vector<16x64xf32>
    %493 = arith.mulf %492, %492 : vector<16x64xf32>
    %cst_240 = arith.constant dense<0.000000e+00> : vector<16xf32>
    %494 = vector.multi_reduction <add>, %493, %cst_240 [1] : vector<16x64xf32> to vector<16xf32>
    %495 = vector.shape_cast %494 : vector<16xf32> to vector<16x1xf32>
    %cst_241 = arith.constant 6.400000e+01 : f32
    %496 = vector.broadcast %cst_241 : f32 to vector<16x1xf32>
    %497 = arith.divf %495, %496 : vector<16x1xf32>
    %498 = vector.broadcast %490 : vector<16x1xf32> to vector<16x64xf32>
    %499 = arith.subf %484, %498 : vector<16x64xf32>
    %cst_242 = arith.constant 9.99999974E-6 : f32
    %500 = vector.broadcast %cst_242 : f32 to vector<16x1xf32>
    %501 = arith.addf %497, %500 : vector<16x1xf32>
    %502 = math.rsqrt %501 : vector<16x1xf32>
    %503 = vector.broadcast %502 : vector<16x1xf32> to vector<16x64xf32>
    %504 = arith.mulf %499, %503 : vector<16x64xf32>
    %505 = vector.broadcast %485 : vector<1x64xf32> to vector<16x64xf32>
    %506 = arith.mulf %504, %505 : vector<16x64xf32>
    %507 = vector.broadcast %486 : vector<1x64xf32> to vector<16x64xf32>
    %508 = arith.addf %506, %507 : vector<16x64xf32>
    %509 = arith.truncf %508 : vector<16x64xf32> to vector<16x64xbf16>
    %c0_243 = arith.constant 0 : index
    %c0_244 = arith.constant 0 : index
    %510 = vector.load %arg41[%c0_243, %c0_244] : memref<64x128xf32, #tpu.memory_space<vmem>>, vector<64x128xf32>
    %511 = arith.truncf %510 : vector<64x128xf32> to vector<64x128xbf16>
    %cst_245 = arith.constant dense<0.000000e+00> : vector<16x128xf32>
    %512 = tpu.matmul %509, %511, %cst_245 {dimension_numbers = #tpu.dot_dimension_numbers<[1], [0], [0], [1], [0, 0, 1, 1], [], []>} : vector<16x64xbf16>, vector<64x128xbf16>, vector<16x128xf32> -> vector<16x128xf32>
    %c0_246 = arith.constant 0 : index
    %c0_247 = arith.constant 0 : index
    %513 = vector.load %arg42[%c0_246, %c0_247] : memref<1x128xf32, #tpu.memory_space<vmem>>, vector<1x128xf32>
    %514 = vector.broadcast %513 : vector<1x128xf32> to vector<16x128xf32>
    %515 = arith.addf %512, %514 : vector<16x128xf32>
    %516 = arith.truncf %508 : vector<16x64xf32> to vector<16x64xbf16>
    %c0_248 = arith.constant 0 : index
    %c0_249 = arith.constant 0 : index
    %517 = vector.load %arg43[%c0_248, %c0_249] : memref<64x128xf32, #tpu.memory_space<vmem>>, vector<64x128xf32>
    %518 = arith.truncf %517 : vector<64x128xf32> to vector<64x128xbf16>
    %cst_250 = arith.constant dense<0.000000e+00> : vector<16x128xf32>
    %519 = tpu.matmul %516, %518, %cst_250 {dimension_numbers = #tpu.dot_dimension_numbers<[1], [0], [0], [1], [0, 0, 1, 1], [], []>} : vector<16x64xbf16>, vector<64x128xbf16>, vector<16x128xf32> -> vector<16x128xf32>
    %c0_251 = arith.constant 0 : index
    %c0_252 = arith.constant 0 : index
    %520 = vector.load %arg44[%c0_251, %c0_252] : memref<1x128xf32, #tpu.memory_space<vmem>>, vector<1x128xf32>
    %521 = vector.broadcast %520 : vector<1x128xf32> to vector<16x128xf32>
    %522 = arith.addf %519, %521 : vector<16x128xf32>
    %523 = arith.negf %522 : vector<16x128xf32>
    %524 = math.exp %523 : vector<16x128xf32>
    %cst_253 = arith.constant 1.000000e+00 : f32
    %525 = vector.broadcast %cst_253 : f32 to vector<16x128xf32>
    %526 = arith.addf %525, %524 : vector<16x128xf32>
    %527 = arith.divf %525, %526 : vector<16x128xf32>
    %528 = arith.mulf %515, %527 : vector<16x128xf32>
    %c16_254 = arith.constant 16 : index
    %c0_255 = arith.constant 0 : index
    %529 = vector.load %arg52[%c16_254, %c0_255] : memref<32x256xf32, #tpu.memory_space<vmem>>, vector<16x128xf32>
    tpu.vector_store %arg52[%c16_254, %c0_255], %528 {strides = array<i32>} : memref<32x256xf32, #tpu.memory_space<vmem>>, vector<16x128xf32>,
    %c0_256 = arith.constant 0 : index
    %c0_257 = arith.constant 0 : index
    %530 = vector.load %arg45[%c0_256, %c0_257] : memref<31x128xf32, #tpu.memory_space<vmem>>, vector<1x128xf32>
    %531 = vector.broadcast %530 : vector<1x128xf32> to vector<16x128xf32>
    %532 = arith.mulf %528, %531 : vector<16x128xf32>
    %c15_258 = arith.constant 15 : index
    %c0_259 = arith.constant 0 : index
    %533 = vector.load %arg52[%c15_258, %c0_259] : memref<32x256xf32, #tpu.memory_space<vmem>>, vector<16x128xf32>
    %c1_260 = arith.constant 1 : index
    %c0_261 = arith.constant 0 : index
    %534 = vector.load %arg45[%c1_260, %c0_261] : memref<31x128xf32, #tpu.memory_space<vmem>>, vector<1x128xf32>
    %535 = vector.broadcast %534 : vector<1x128xf32> to vector<16x128xf32>
    %536 = arith.mulf %533, %535 : vector<16x128xf32>
    %537 = arith.addf %532, %536 : vector<16x128xf32>
    %c14_262 = arith.constant 14 : index
    %c0_263 = arith.constant 0 : index
    %538 = vector.load %arg52[%c14_262, %c0_263] : memref<32x256xf32, #tpu.memory_space<vmem>>, vector<16x128xf32>
    %c2_264 = arith.constant 2 : index
    %c0_265 = arith.constant 0 : index
    %539 = vector.load %arg45[%c2_264, %c0_265] : memref<31x128xf32, #tpu.memory_space<vmem>>, vector<1x128xf32>
    %540 = vector.broadcast %539 : vector<1x128xf32> to vector<16x128xf32>
    %541 = arith.mulf %538, %540 : vector<16x128xf32>
    %542 = arith.addf %537, %541 : vector<16x128xf32>
    %c13_266 = arith.constant 13 : index
    %c0_267 = arith.constant 0 : index
    %543 = vector.load %arg52[%c13_266, %c0_267] : memref<32x256xf32, #tpu.memory_space<vmem>>, vector<16x128xf32>
    %c3_268 = arith.constant 3 : index
    %c0_269 = arith.constant 0 : index
    %544 = vector.load %arg45[%c3_268, %c0_269] : memref<31x128xf32, #tpu.memory_space<vmem>>, vector<1x128xf32>
    %545 = vector.broadcast %544 : vector<1x128xf32> to vector<16x128xf32>
    %546 = arith.mulf %543, %545 : vector<16x128xf32>
    %547 = arith.addf %542, %546 : vector<16x128xf32>
    %c12_270 = arith.constant 12 : index
    %c0_271 = arith.constant 0 : index
    %548 = vector.load %arg52[%c12_270, %c0_271] : memref<32x256xf32, #tpu.memory_space<vmem>>, vector<16x128xf32>
    %c4_272 = arith.constant 4 : index
    %c0_273 = arith.constant 0 : index
    %549 = vector.load %arg45[%c4_272, %c0_273] : memref<31x128xf32, #tpu.memory_space<vmem>>, vector<1x128xf32>
    %550 = vector.broadcast %549 : vector<1x128xf32> to vector<16x128xf32>
    %551 = arith.mulf %548, %550 : vector<16x128xf32>
    %552 = arith.addf %547, %551 : vector<16x128xf32>
    %c11_274 = arith.constant 11 : index
    %c0_275 = arith.constant 0 : index
    %553 = vector.load %arg52[%c11_274, %c0_275] : memref<32x256xf32, #tpu.memory_space<vmem>>, vector<16x128xf32>
    %c5_276 = arith.constant 5 : index
    %c0_277 = arith.constant 0 : index
    %554 = vector.load %arg45[%c5_276, %c0_277] : memref<31x128xf32, #tpu.memory_space<vmem>>, vector<1x128xf32>
    %555 = vector.broadcast %554 : vector<1x128xf32> to vector<16x128xf32>
    %556 = arith.mulf %553, %555 : vector<16x128xf32>
    %557 = arith.addf %552, %556 : vector<16x128xf32>
    %c10_278 = arith.constant 10 : index
    %c0_279 = arith.constant 0 : index
    %558 = vector.load %arg52[%c10_278, %c0_279] : memref<32x256xf32, #tpu.memory_space<vmem>>, vector<16x128xf32>
    %c6_280 = arith.constant 6 : index
    %c0_281 = arith.constant 0 : index
    %559 = vector.load %arg45[%c6_280, %c0_281] : memref<31x128xf32, #tpu.memory_space<vmem>>, vector<1x128xf32>
    %560 = vector.broadcast %559 : vector<1x128xf32> to vector<16x128xf32>
    %561 = arith.mulf %558, %560 : vector<16x128xf32>
    %562 = arith.addf %557, %561 : vector<16x128xf32>
    %c9_282 = arith.constant 9 : index
    %c0_283 = arith.constant 0 : index
    %563 = vector.load %arg52[%c9_282, %c0_283] : memref<32x256xf32, #tpu.memory_space<vmem>>, vector<16x128xf32>
    %c7_284 = arith.constant 7 : index
    %c0_285 = arith.constant 0 : index
    %564 = vector.load %arg45[%c7_284, %c0_285] : memref<31x128xf32, #tpu.memory_space<vmem>>, vector<1x128xf32>
    %565 = vector.broadcast %564 : vector<1x128xf32> to vector<16x128xf32>
    %566 = arith.mulf %563, %565 : vector<16x128xf32>
    %567 = arith.addf %562, %566 : vector<16x128xf32>
    %c8_286 = arith.constant 8 : index
    %c0_287 = arith.constant 0 : index
    %568 = vector.load %arg52[%c8_286, %c0_287] : memref<32x256xf32, #tpu.memory_space<vmem>>, vector<16x128xf32>
    %c8_288 = arith.constant 8 : index
    %c0_289 = arith.constant 0 : index
    %569 = vector.load %arg45[%c8_288, %c0_289] : memref<31x128xf32, #tpu.memory_space<vmem>>, vector<1x128xf32>
    %570 = vector.broadcast %569 : vector<1x128xf32> to vector<16x128xf32>
    %571 = arith.mulf %568, %570 : vector<16x128xf32>
    %572 = arith.addf %567, %571 : vector<16x128xf32>
    %c7_290 = arith.constant 7 : index
    %c0_291 = arith.constant 0 : index
    %573 = vector.load %arg52[%c7_290, %c0_291] : memref<32x256xf32, #tpu.memory_space<vmem>>, vector<16x128xf32>
    %c9_292 = arith.constant 9 : index
    %c0_293 = arith.constant 0 : index
    %574 = vector.load %arg45[%c9_292, %c0_293] : memref<31x128xf32, #tpu.memory_space<vmem>>, vector<1x128xf32>
    %575 = vector.broadcast %574 : vector<1x128xf32> to vector<16x128xf32>
    %576 = arith.mulf %573, %575 : vector<16x128xf32>
    %577 = arith.addf %572, %576 : vector<16x128xf32>
    %c6_294 = arith.constant 6 : index
    %c0_295 = arith.constant 0 : index
    %578 = vector.load %arg52[%c6_294, %c0_295] : memref<32x256xf32, #tpu.memory_space<vmem>>, vector<16x128xf32>
    %c10_296 = arith.constant 10 : index
    %c0_297 = arith.constant 0 : index
    %579 = vector.load %arg45[%c10_296, %c0_297] : memref<31x128xf32, #tpu.memory_space<vmem>>, vector<1x128xf32>
    %580 = vector.broadcast %579 : vector<1x128xf32> to vector<16x128xf32>
    %581 = arith.mulf %578, %580 : vector<16x128xf32>
    %582 = arith.addf %577, %581 : vector<16x128xf32>
    %c5_298 = arith.constant 5 : index
    %c0_299 = arith.constant 0 : index
    %583 = vector.load %arg52[%c5_298, %c0_299] : memref<32x256xf32, #tpu.memory_space<vmem>>, vector<16x128xf32>
    %c11_300 = arith.constant 11 : index
    %c0_301 = arith.constant 0 : index
    %584 = vector.load %arg45[%c11_300, %c0_301] : memref<31x128xf32, #tpu.memory_space<vmem>>, vector<1x128xf32>
    %585 = vector.broadcast %584 : vector<1x128xf32> to vector<16x128xf32>
    %586 = arith.mulf %583, %585 : vector<16x128xf32>
    %587 = arith.addf %582, %586 : vector<16x128xf32>
    %c4_302 = arith.constant 4 : index
    %c0_303 = arith.constant 0 : index
    %588 = vector.load %arg52[%c4_302, %c0_303] : memref<32x256xf32, #tpu.memory_space<vmem>>, vector<16x128xf32>
    %c12_304 = arith.constant 12 : index
    %c0_305 = arith.constant 0 : index
    %589 = vector.load %arg45[%c12_304, %c0_305] : memref<31x128xf32, #tpu.memory_space<vmem>>, vector<1x128xf32>
    %590 = vector.broadcast %589 : vector<1x128xf32> to vector<16x128xf32>
    %591 = arith.mulf %588, %590 : vector<16x128xf32>
    %592 = arith.addf %587, %591 : vector<16x128xf32>
    %c3_306 = arith.constant 3 : index
    %c0_307 = arith.constant 0 : index
    %593 = vector.load %arg52[%c3_306, %c0_307] : memref<32x256xf32, #tpu.memory_space<vmem>>, vector<16x128xf32>
    %c13_308 = arith.constant 13 : index
    %c0_309 = arith.constant 0 : index
    %594 = vector.load %arg45[%c13_308, %c0_309] : memref<31x128xf32, #tpu.memory_space<vmem>>, vector<1x128xf32>
    %595 = vector.broadcast %594 : vector<1x128xf32> to vector<16x128xf32>
    %596 = arith.mulf %593, %595 : vector<16x128xf32>
    %597 = arith.addf %592, %596 : vector<16x128xf32>
    %c2_310 = arith.constant 2 : index
    %c0_311 = arith.constant 0 : index
    %598 = vector.load %arg52[%c2_310, %c0_311] : memref<32x256xf32, #tpu.memory_space<vmem>>, vector<16x128xf32>
    %c14_312 = arith.constant 14 : index
    %c0_313 = arith.constant 0 : index
    %599 = vector.load %arg45[%c14_312, %c0_313] : memref<31x128xf32, #tpu.memory_space<vmem>>, vector<1x128xf32>
    %600 = vector.broadcast %599 : vector<1x128xf32> to vector<16x128xf32>
    %601 = arith.mulf %598, %600 : vector<16x128xf32>
    %602 = arith.addf %597, %601 : vector<16x128xf32>
    %c1_314 = arith.constant 1 : index
    %c0_315 = arith.constant 0 : index
    %603 = vector.load %arg52[%c1_314, %c0_315] : memref<32x256xf32, #tpu.memory_space<vmem>>, vector<16x128xf32>
    %c15_316 = arith.constant 15 : index
    %c0_317 = arith.constant 0 : index
    %604 = vector.load %arg45[%c15_316, %c0_317] : memref<31x128xf32, #tpu.memory_space<vmem>>, vector<1x128xf32>
    %605 = vector.broadcast %604 : vector<1x128xf32> to vector<16x128xf32>
    %606 = arith.mulf %603, %605 : vector<16x128xf32>
    %607 = arith.addf %602, %606 : vector<16x128xf32>
    %c0_318 = arith.constant 0 : index
    %c0_319 = arith.constant 0 : index
    %608 = vector.load %arg46[%c0_318, %c0_319] : memref<1x128xf32, #tpu.memory_space<vmem>>, vector<1x128xf32>
    %609 = vector.broadcast %608 : vector<1x128xf32> to vector<16x128xf32>
    %610 = arith.addf %607, %609 : vector<16x128xf32>
    %611 = arith.negf %610 : vector<16x128xf32>
    %612 = math.exp %611 : vector<16x128xf32>
    %cst_320 = arith.constant 1.000000e+00 : f32
    %613 = vector.broadcast %cst_320 : f32 to vector<16x128xf32>
    %614 = arith.addf %613, %612 : vector<16x128xf32>
    %615 = arith.divf %613, %614 : vector<16x128xf32>
    %616 = arith.mulf %610, %615 : vector<16x128xf32>
    %617 = arith.truncf %616 : vector<16x128xf32> to vector<16x128xbf16>
    %c0_321 = arith.constant 0 : index
    %c0_322 = arith.constant 0 : index
    %618 = vector.load %arg47[%c0_321, %c0_322] : memref<128x64xf32, #tpu.memory_space<vmem>>, vector<128x64xf32>
    %619 = arith.truncf %618 : vector<128x64xf32> to vector<128x64xbf16>
    %cst_323 = arith.constant dense<0.000000e+00> : vector<16x64xf32>
    %620 = tpu.matmul %617, %619, %cst_323 {dimension_numbers = #tpu.dot_dimension_numbers<[1], [0], [0], [1], [0, 0, 1, 1], [], []>} : vector<16x128xbf16>, vector<128x64xbf16>, vector<16x64xf32> -> vector<16x64xf32>
    %c0_324 = arith.constant 0 : index
    %c0_325 = arith.constant 0 : index
    %621 = vector.load %arg48[%c0_324, %c0_325] : memref<1x64xf32, #tpu.memory_space<vmem>>, vector<1x64xf32>
    %622 = vector.broadcast %621 : vector<1x64xf32> to vector<16x64xf32>
    %623 = arith.addf %620, %622 : vector<16x64xf32>
    %624 = arith.addf %484, %623 : vector<16x64xf32>
    %c0_326 = arith.constant 0 : index
    %c0_327 = arith.constant 0 : index
    %625 = vector.load %arg8[%c0_326, %c0_327] : memref<1x64xf32, #tpu.memory_space<vmem>>, vector<1x64xf32>
    %c0_328 = arith.constant 0 : index
    %c0_329 = arith.constant 0 : index
    %626 = vector.load %arg9[%c0_328, %c0_329] : memref<1x64xf32, #tpu.memory_space<vmem>>, vector<1x64xf32>
    %cst_330 = arith.constant dense<0.000000e+00> : vector<16xf32>
    %627 = vector.multi_reduction <add>, %624, %cst_330 [1] : vector<16x64xf32> to vector<16xf32>
    %628 = vector.shape_cast %627 : vector<16xf32> to vector<16x1xf32>
    %cst_331 = arith.constant 6.400000e+01 : f32
    %629 = vector.broadcast %cst_331 : f32 to vector<16x1xf32>
    %630 = arith.divf %628, %629 : vector<16x1xf32>
    %631 = vector.broadcast %630 : vector<16x1xf32> to vector<16x64xf32>
    %632 = arith.subf %624, %631 : vector<16x64xf32>
    %633 = arith.mulf %632, %632 : vector<16x64xf32>
    %cst_332 = arith.constant dense<0.000000e+00> : vector<16xf32>
    %634 = vector.multi_reduction <add>, %633, %cst_332 [1] : vector<16x64xf32> to vector<16xf32>
    %635 = vector.shape_cast %634 : vector<16xf32> to vector<16x1xf32>
    %cst_333 = arith.constant 6.400000e+01 : f32
    %636 = vector.broadcast %cst_333 : f32 to vector<16x1xf32>
    %637 = arith.divf %635, %636 : vector<16x1xf32>
    %638 = vector.broadcast %630 : vector<16x1xf32> to vector<16x64xf32>
    %639 = arith.subf %624, %638 : vector<16x64xf32>
    %cst_334 = arith.constant 9.99999974E-6 : f32
    %640 = vector.broadcast %cst_334 : f32 to vector<16x1xf32>
    %641 = arith.addf %637, %640 : vector<16x1xf32>
    %642 = math.rsqrt %641 : vector<16x1xf32>
    %643 = vector.broadcast %642 : vector<16x1xf32> to vector<16x64xf32>
    %644 = arith.mulf %639, %643 : vector<16x64xf32>
    %645 = vector.broadcast %625 : vector<1x64xf32> to vector<16x64xf32>
    %646 = arith.mulf %644, %645 : vector<16x64xf32>
    %647 = vector.broadcast %626 : vector<1x64xf32> to vector<16x64xf32>
    %648 = arith.addf %646, %647 : vector<16x64xf32>
    %649 = arith.truncf %648 : vector<16x64xf32> to vector<16x64xbf16>
    %c0_335 = arith.constant 0 : index
    %c0_336 = arith.constant 0 : index
    %650 = vector.load %arg10[%c0_335, %c0_336] : memref<64x256xf32, #tpu.memory_space<vmem>>, vector<64x256xf32>
    %651 = arith.truncf %650 : vector<64x256xf32> to vector<64x256xbf16>
    %cst_337 = arith.constant dense<0.000000e+00> : vector<16x256xf32>
    %652 = tpu.matmul %649, %651, %cst_337 {dimension_numbers = #tpu.dot_dimension_numbers<[1], [0], [0], [1], [0, 0, 1, 1], [], []>} : vector<16x64xbf16>, vector<64x256xbf16>, vector<16x256xf32> -> vector<16x256xf32>
    %c0_338 = arith.constant 0 : index
    %c0_339 = arith.constant 0 : index
    %653 = vector.load %arg11[%c0_338, %c0_339] : memref<1x256xf32, #tpu.memory_space<vmem>>, vector<1x256xf32>
    %654 = vector.broadcast %653 : vector<1x256xf32> to vector<16x256xf32>
    %655 = arith.addf %652, %654 : vector<16x256xf32>
    %656 = arith.negf %655 : vector<16x256xf32>
    %657 = math.exp %656 : vector<16x256xf32>
    %cst_340 = arith.constant 1.000000e+00 : f32
    %658 = vector.broadcast %cst_340 : f32 to vector<16x256xf32>
    %659 = arith.addf %658, %657 : vector<16x256xf32>
    %660 = arith.divf %658, %659 : vector<16x256xf32>
    %661 = arith.mulf %655, %660 : vector<16x256xf32>
    %662 = arith.truncf %661 : vector<16x256xf32> to vector<16x256xbf16>
    %c0_341 = arith.constant 0 : index
    %c0_342 = arith.constant 0 : index
    %663 = vector.load %arg12[%c0_341, %c0_342] : memref<256x64xf32, #tpu.memory_space<vmem>>, vector<256x64xf32>
    %664 = arith.truncf %663 : vector<256x64xf32> to vector<256x64xbf16>
    %cst_343 = arith.constant dense<0.000000e+00> : vector<16x64xf32>
    %665 = tpu.matmul %662, %664, %cst_343 {dimension_numbers = #tpu.dot_dimension_numbers<[1], [0], [0], [1], [0, 0, 1, 1], [], []>} : vector<16x256xbf16>, vector<256x64xbf16>, vector<16x64xf32> -> vector<16x64xf32>
    %c0_344 = arith.constant 0 : index
    %c0_345 = arith.constant 0 : index
    %666 = vector.load %arg13[%c0_344, %c0_345] : memref<1x64xf32, #tpu.memory_space<vmem>>, vector<1x64xf32>
    %667 = vector.broadcast %666 : vector<1x64xf32> to vector<16x64xf32>
    %668 = arith.addf %665, %667 : vector<16x64xf32>
    %cst_346 = arith.constant 5.000000e-01 : f32
    %669 = vector.broadcast %cst_346 : f32 to vector<16x64xf32>
    %670 = arith.mulf %669, %668 : vector<16x64xf32>
    %671 = arith.addf %624, %670 : vector<16x64xf32>
    %c0_347 = arith.constant 0 : index
    %c0_348 = arith.constant 0 : index
    %672 = vector.load %arg49[%c0_347, %c0_348] : memref<1x64xf32, #tpu.memory_space<vmem>>, vector<1x64xf32>
    %c0_349 = arith.constant 0 : index
    %c0_350 = arith.constant 0 : index
    %673 = vector.load %arg50[%c0_349, %c0_350] : memref<1x64xf32, #tpu.memory_space<vmem>>, vector<1x64xf32>
    %cst_351 = arith.constant dense<0.000000e+00> : vector<16xf32>
    %674 = vector.multi_reduction <add>, %671, %cst_351 [1] : vector<16x64xf32> to vector<16xf32>
    %675 = vector.shape_cast %674 : vector<16xf32> to vector<16x1xf32>
    %cst_352 = arith.constant 6.400000e+01 : f32
    %676 = vector.broadcast %cst_352 : f32 to vector<16x1xf32>
    %677 = arith.divf %675, %676 : vector<16x1xf32>
    %678 = vector.broadcast %677 : vector<16x1xf32> to vector<16x64xf32>
    %679 = arith.subf %671, %678 : vector<16x64xf32>
    %680 = arith.mulf %679, %679 : vector<16x64xf32>
    %cst_353 = arith.constant dense<0.000000e+00> : vector<16xf32>
    %681 = vector.multi_reduction <add>, %680, %cst_353 [1] : vector<16x64xf32> to vector<16xf32>
    %682 = vector.shape_cast %681 : vector<16xf32> to vector<16x1xf32>
    %cst_354 = arith.constant 6.400000e+01 : f32
    %683 = vector.broadcast %cst_354 : f32 to vector<16x1xf32>
    %684 = arith.divf %682, %683 : vector<16x1xf32>
    %685 = vector.broadcast %677 : vector<16x1xf32> to vector<16x64xf32>
    %686 = arith.subf %671, %685 : vector<16x64xf32>
    %cst_355 = arith.constant 9.99999974E-6 : f32
    %687 = vector.broadcast %cst_355 : f32 to vector<16x1xf32>
    %688 = arith.addf %684, %687 : vector<16x1xf32>
    %689 = math.rsqrt %688 : vector<16x1xf32>
    %690 = vector.broadcast %689 : vector<16x1xf32> to vector<16x64xf32>
    %691 = arith.mulf %686, %690 : vector<16x64xf32>
    %692 = vector.broadcast %672 : vector<1x64xf32> to vector<16x64xf32>
    %693 = arith.mulf %691, %692 : vector<16x64xf32>
    %694 = vector.broadcast %673 : vector<1x64xf32> to vector<16x64xf32>
    %695 = arith.addf %693, %694 : vector<16x64xf32>
    %c0_356 = arith.constant 0 : index
    %c0_357 = arith.constant 0 : index
    %c0_358 = arith.constant 0 : index
    %696 = vector.load %arg51[%c0_356, %c0_357, %c0_358] : memref<1x16x64xf32, #tpu.memory_space<vmem>>, vector<1x16x64xf32>
    %697 = vector.shape_cast %696 : vector<1x16x64xf32> to vector<16x64xf32>
    %698 = vector.shape_cast %695 : vector<16x64xf32> to vector<1x16x64xf32>
    tpu.vector_store %arg51[%c0_356, %c0_357, %c0_358], %698 {strides = array<i32>} : memref<1x16x64xf32, #tpu.memory_space<vmem>>, vector<1x16x64xf32>,
    return
  }
  func.func @transform_0(%arg0: i32) -> (i32, i32, i32) {
    %c0_i32 = arith.constant 0 : i32
    %c0_i32_0 = arith.constant 0 : i32
    %c0_i32_1 = arith.constant 0 : i32
    return %arg0, %c0_i32, %c0_i32_0 : i32, i32, i32
  }
  func.func @transform_1(%arg0: i32) -> (i32, i32) {
    %c0_i32 = arith.constant 0 : i32
    %c0_i32_0 = arith.constant 0 : i32
    %c0_i32_1 = arith.constant 0 : i32
    return %c0_i32, %c0_i32_0 : i32, i32
  }
  func.func @transform_2(%arg0: i32) -> (i32, i32) {
    %c0_i32 = arith.constant 0 : i32
    %c0_i32_0 = arith.constant 0 : i32
    %c0_i32_1 = arith.constant 0 : i32
    return %c0_i32, %c0_i32_0 : i32, i32
  }
  func.func @transform_3(%arg0: i32) -> (i32, i32) {
    %c0_i32 = arith.constant 0 : i32
    %c0_i32_0 = arith.constant 0 : i32
    %c0_i32_1 = arith.constant 0 : i32
    return %c0_i32, %c0_i32_0 : i32, i32
  }
  func.func @transform_4(%arg0: i32) -> (i32, i32) {
    %c0_i32 = arith.constant 0 : i32
    %c0_i32_0 = arith.constant 0 : i32
    %c0_i32_1 = arith.constant 0 : i32
    return %c0_i32, %c0_i32_0 : i32, i32
  }
  func.func @transform_5(%arg0: i32) -> (i32, i32) {
    %c0_i32 = arith.constant 0 : i32
    %c0_i32_0 = arith.constant 0 : i32
    %c0_i32_1 = arith.constant 0 : i32
    return %c0_i32, %c0_i32_0 : i32, i32
  }
  func.func @transform_6(%arg0: i32) -> (i32, i32) {
    %c0_i32 = arith.constant 0 : i32
    %c0_i32_0 = arith.constant 0 : i32
    %c0_i32_1 = arith.constant 0 : i32
    return %c0_i32, %c0_i32_0 : i32, i32
  }
  func.func @transform_7(%arg0: i32) -> (i32, i32) {
    %c0_i32 = arith.constant 0 : i32
    %c0_i32_0 = arith.constant 0 : i32
    %c0_i32_1 = arith.constant 0 : i32
    return %c0_i32, %c0_i32_0 : i32, i32
  }
  func.func @transform_8(%arg0: i32) -> (i32, i32) {
    %c0_i32 = arith.constant 0 : i32
    %c0_i32_0 = arith.constant 0 : i32
    %c0_i32_1 = arith.constant 0 : i32
    return %c0_i32, %c0_i32_0 : i32, i32
  }
  func.func @transform_9(%arg0: i32) -> (i32, i32) {
    %c0_i32 = arith.constant 0 : i32
    %c0_i32_0 = arith.constant 0 : i32
    %c0_i32_1 = arith.constant 0 : i32
    return %c0_i32, %c0_i32_0 : i32, i32
  }
  func.func @transform_10(%arg0: i32) -> (i32, i32) {
    %c0_i32 = arith.constant 0 : i32
    %c0_i32_0 = arith.constant 0 : i32
    %c0_i32_1 = arith.constant 0 : i32
    return %c0_i32, %c0_i32_0 : i32, i32
  }
  func.func @transform_11(%arg0: i32) -> (i32, i32) {
    %c0_i32 = arith.constant 0 : i32
    %c0_i32_0 = arith.constant 0 : i32
    %c0_i32_1 = arith.constant 0 : i32
    return %c0_i32, %c0_i32_0 : i32, i32
  }
  func.func @transform_12(%arg0: i32) -> (i32, i32) {
    %c0_i32 = arith.constant 0 : i32
    %c0_i32_0 = arith.constant 0 : i32
    %c0_i32_1 = arith.constant 0 : i32
    return %c0_i32, %c0_i32_0 : i32, i32
  }
  func.func @transform_13(%arg0: i32) -> (i32, i32) {
    %c0_i32 = arith.constant 0 : i32
    %c0_i32_0 = arith.constant 0 : i32
    %c0_i32_1 = arith.constant 0 : i32
    return %c0_i32, %c0_i32_0 : i32, i32
  }
  func.func @transform_14(%arg0: i32) -> (i32, i32) {
    %c0_i32 = arith.constant 0 : i32
    %c0_i32_0 = arith.constant 0 : i32
    %c0_i32_1 = arith.constant 0 : i32
    return %c0_i32, %c0_i32_0 : i32, i32
  }
  func.func @transform_15(%arg0: i32) -> (i32, i32) {
    %c0_i32 = arith.constant 0 : i32
    %c0_i32_0 = arith.constant 0 : i32
    %c0_i32_1 = arith.constant 0 : i32
    return %c0_i32, %c0_i32_0 : i32, i32
  }
  func.func @transform_16(%arg0: i32) -> (i32, i32) {
    %c0_i32 = arith.constant 0 : i32
    %c0_i32_0 = arith.constant 0 : i32
    %c0_i32_1 = arith.constant 0 : i32
    return %c0_i32, %c0_i32_0 : i32, i32
  }
  func.func @transform_17(%arg0: i32) -> (i32, i32) {
    %c0_i32 = arith.constant 0 : i32
    %c0_i32_0 = arith.constant 0 : i32
    %c0_i32_1 = arith.constant 0 : i32
    return %c0_i32, %c0_i32_0 : i32, i32
  }
  func.func @transform_18(%arg0: i32) -> (i32, i32) {
    %c0_i32 = arith.constant 0 : i32
    %c0_i32_0 = arith.constant 0 : i32
    %c0_i32_1 = arith.constant 0 : i32
    return %c0_i32, %c0_i32_0 : i32, i32
  }
  func.func @transform_19(%arg0: i32) -> (i32, i32) {
    %c0_i32 = arith.constant 0 : i32
    %c0_i32_0 = arith.constant 0 : i32
    %c0_i32_1 = arith.constant 0 : i32
    return %c0_i32, %c0_i32_0 : i32, i32
  }
  func.func @transform_20(%arg0: i32) -> (i32, i32) {
    %c0_i32 = arith.constant 0 : i32
    %c0_i32_0 = arith.constant 0 : i32
    %c0_i32_1 = arith.constant 0 : i32
    return %c0_i32, %c0_i32_0 : i32, i32
  }
  func.func @transform_21(%arg0: i32) -> (i32, i32) {
    %c0_i32 = arith.constant 0 : i32
    %c0_i32_0 = arith.constant 0 : i32
    %c0_i32_1 = arith.constant 0 : i32
    return %c0_i32, %c0_i32_0 : i32, i32
  }
  func.func @transform_22(%arg0: i32) -> (i32, i32) {
    %c0_i32 = arith.constant 0 : i32
    %c0_i32_0 = arith.constant 0 : i32
    %c0_i32_1 = arith.constant 0 : i32
    return %c0_i32, %c0_i32_0 : i32, i32
  }
  func.func @transform_23(%arg0: i32) -> (i32, i32) {
    %c0_i32 = arith.constant 0 : i32
    %c0_i32_0 = arith.constant 0 : i32
    %c0_i32_1 = arith.constant 0 : i32
    return %c0_i32, %c0_i32_0 : i32, i32
  }
  func.func @transform_24(%arg0: i32) -> (i32, i32) {
    %c0_i32 = arith.constant 0 : i32
    %c0_i32_0 = arith.constant 0 : i32
    %c0_i32_1 = arith.constant 0 : i32
    return %c0_i32, %c0_i32_0 : i32, i32
  }
  func.func @transform_25(%arg0: i32) -> (i32, i32) {
    %c0_i32 = arith.constant 0 : i32
    %c0_i32_0 = arith.constant 0 : i32
    %c0_i32_1 = arith.constant 0 : i32
    return %c0_i32, %c0_i32_0 : i32, i32
  }
  func.func @transform_26(%arg0: i32) -> (i32, i32) {
    %c0_i32 = arith.constant 0 : i32
    %c0_i32_0 = arith.constant 0 : i32
    %c0_i32_1 = arith.constant 0 : i32
    return %c0_i32, %c0_i32_0 : i32, i32
  }
  func.func @transform_27(%arg0: i32) -> (i32, i32) {
    %c0_i32 = arith.constant 0 : i32
    %c0_i32_0 = arith.constant 0 : i32
    %c0_i32_1 = arith.constant 0 : i32
    return %c0_i32, %c0_i32_0 : i32, i32
  }
  func.func @transform_28(%arg0: i32) -> (i32, i32) {
    %c0_i32 = arith.constant 0 : i32
    %c0_i32_0 = arith.constant 0 : i32
    %c0_i32_1 = arith.constant 0 : i32
    return %c0_i32, %c0_i32_0 : i32, i32
  }
  func.func @transform_29(%arg0: i32) -> (i32, i32) {
    %c0_i32 = arith.constant 0 : i32
    %c0_i32_0 = arith.constant 0 : i32
    %c0_i32_1 = arith.constant 0 : i32
    return %c0_i32, %c0_i32_0 : i32, i32
  }
  func.func @transform_30(%arg0: i32) -> (i32, i32) {
    %c0_i32 = arith.constant 0 : i32
    %c0_i32_0 = arith.constant 0 : i32
    %c0_i32_1 = arith.constant 0 : i32
    return %c0_i32, %c0_i32_0 : i32, i32
  }
  func.func @transform_31(%arg0: i32) -> (i32, i32) {
    %c0_i32 = arith.constant 0 : i32
    %c0_i32_0 = arith.constant 0 : i32
    %c0_i32_1 = arith.constant 0 : i32
    return %c0_i32, %c0_i32_0 : i32, i32
  }
  func.func @transform_32(%arg0: i32) -> (i32, i32) {
    %c0_i32 = arith.constant 0 : i32
    %c0_i32_0 = arith.constant 0 : i32
    %c0_i32_1 = arith.constant 0 : i32
    return %c0_i32, %c0_i32_0 : i32, i32
  }
  func.func @transform_33(%arg0: i32) -> (i32, i32) {
    %c0_i32 = arith.constant 0 : i32
    %c0_i32_0 = arith.constant 0 : i32
    %c0_i32_1 = arith.constant 0 : i32
    return %c0_i32, %c0_i32_0 : i32, i32
  }
  func.func @transform_34(%arg0: i32) -> (i32, i32) {
    %c0_i32 = arith.constant 0 : i32
    %c0_i32_0 = arith.constant 0 : i32
    %c0_i32_1 = arith.constant 0 : i32
    return %c0_i32, %c0_i32_0 : i32, i32
  }
  func.func @transform_35(%arg0: i32) -> (i32, i32) {
    %c0_i32 = arith.constant 0 : i32
    %c0_i32_0 = arith.constant 0 : i32
    %c0_i32_1 = arith.constant 0 : i32
    return %c0_i32, %c0_i32_0 : i32, i32
  }
  func.func @transform_36(%arg0: i32) -> (i32, i32) {
    %c0_i32 = arith.constant 0 : i32
    %c0_i32_0 = arith.constant 0 : i32
    %c0_i32_1 = arith.constant 0 : i32
    return %c0_i32, %c0_i32_0 : i32, i32
  }
  func.func @transform_37(%arg0: i32) -> (i32, i32) {
    %c0_i32 = arith.constant 0 : i32
    %c0_i32_0 = arith.constant 0 : i32
    %c0_i32_1 = arith.constant 0 : i32
    return %c0_i32, %c0_i32_0 : i32, i32
  }
  func.func @transform_38(%arg0: i32) -> (i32, i32) {
    %c0_i32 = arith.constant 0 : i32
    %c0_i32_0 = arith.constant 0 : i32
    %c0_i32_1 = arith.constant 0 : i32
    return %c0_i32, %c0_i32_0 : i32, i32
  }
  func.func @transform_39(%arg0: i32) -> (i32, i32) {
    %c0_i32 = arith.constant 0 : i32
    %c0_i32_0 = arith.constant 0 : i32
    %c0_i32_1 = arith.constant 0 : i32
    return %c0_i32, %c0_i32_0 : i32, i32
  }
  func.func @transform_40(%arg0: i32) -> (i32, i32) {
    %c0_i32 = arith.constant 0 : i32
    %c0_i32_0 = arith.constant 0 : i32
    %c0_i32_1 = arith.constant 0 : i32
    return %c0_i32, %c0_i32_0 : i32, i32
  }
  func.func @transform_41(%arg0: i32) -> (i32, i32) {
    %c0_i32 = arith.constant 0 : i32
    %c0_i32_0 = arith.constant 0 : i32
    %c0_i32_1 = arith.constant 0 : i32
    return %c0_i32, %c0_i32_0 : i32, i32
  }
  func.func @transform_42(%arg0: i32) -> (i32, i32) {
    %c0_i32 = arith.constant 0 : i32
    %c0_i32_0 = arith.constant 0 : i32
    %c0_i32_1 = arith.constant 0 : i32
    return %c0_i32, %c0_i32_0 : i32, i32
  }
  func.func @transform_43(%arg0: i32) -> (i32, i32) {
    %c0_i32 = arith.constant 0 : i32
    %c0_i32_0 = arith.constant 0 : i32
    %c0_i32_1 = arith.constant 0 : i32
    return %c0_i32, %c0_i32_0 : i32, i32
  }
  func.func @transform_44(%arg0: i32) -> (i32, i32) {
    %c0_i32 = arith.constant 0 : i32
    %c0_i32_0 = arith.constant 0 : i32
    %c0_i32_1 = arith.constant 0 : i32
    return %c0_i32, %c0_i32_0 : i32, i32
  }
  func.func @transform_45(%arg0: i32) -> (i32, i32) {
    %c0_i32 = arith.constant 0 : i32
    %c0_i32_0 = arith.constant 0 : i32
    %c0_i32_1 = arith.constant 0 : i32
    return %c0_i32, %c0_i32_0 : i32, i32
  }
  func.func @transform_46(%arg0: i32) -> (i32, i32) {
    %c0_i32 = arith.constant 0 : i32
    %c0_i32_0 = arith.constant 0 : i32
    %c0_i32_1 = arith.constant 0 : i32
    return %c0_i32, %c0_i32_0 : i32, i32
  }
  func.func @transform_47(%arg0: i32) -> (i32, i32) {
    %c0_i32 = arith.constant 0 : i32
    %c0_i32_0 = arith.constant 0 : i32
    %c0_i32_1 = arith.constant 0 : i32
    return %c0_i32, %c0_i32_0 : i32, i32
  }
  func.func @transform_48(%arg0: i32) -> (i32, i32) {
    %c0_i32 = arith.constant 0 : i32
    %c0_i32_0 = arith.constant 0 : i32
    %c0_i32_1 = arith.constant 0 : i32
    return %c0_i32, %c0_i32_0 : i32, i32
  }
  func.func @transform_49(%arg0: i32) -> (i32, i32) {
    %c0_i32 = arith.constant 0 : i32
    %c0_i32_0 = arith.constant 0 : i32
    %c0_i32_1 = arith.constant 0 : i32
    return %c0_i32, %c0_i32_0 : i32, i32
  }
  func.func @transform_50(%arg0: i32) -> (i32, i32, i32) {
    %c0_i32 = arith.constant 0 : i32
    %c0_i32_0 = arith.constant 0 : i32
    %c0_i32_1 = arith.constant 0 : i32
    return %arg0, %c0_i32, %c0_i32_0 : i32, i32, i32
  }
}

</mosaic_0001>

<llo_original>
// kernel: h3conformer_hybrid_block.1
$region0: #{h3conformer_hybrid_block.1}
  #allocation0 [shape = 'u32[]', space=smem, size = 0x4, offset = 0x4, fixed_abs, tag = 'smem constant byte address 0x4 - core index']
  #allocation1 [shape = 'u32[72,128]{1,0:T(1,128)}', space=vmem, size = 0x9000, scoped, tag = 'internal scratch']
  #allocation2 [shape = 'f32[32,256]{1,0:T(8,128)}', space=vmem, size = 0x8000, scoped, tag = 'scratch operand']
  %s0 = inlined_call_operand.smem [shape: u32[51], index: -1, kind: input, shape index: {}]
  %s1 = sld [smem:[%s0]]
  %s2 = scalar_lea.smem %s0, 1
  %s3 = sld [smem:[%s2]]
  %s4 = scalar_lea.smem %s0, 2
  %s5 = sld [smem:[%s4]]
  %s6 = scalar_lea.smem %s0, 3
  %s7 = sld [smem:[%s6]]
  %s8 = scalar_lea.smem %s0, 4
  %s9 = sld [smem:[%s8]]
  %s10 = scalar_lea.smem %s0, 5
  %s11 = sld [smem:[%s10]]
  %s12 = scalar_lea.smem %s0, 6
  %s13 = sld [smem:[%s12]]
  %s14 = scalar_lea.smem %s0, 7
  %s15 = sld [smem:[%s14]]
  %s16 = scalar_lea.smem %s0, 8
  %s17 = sld [smem:[%s16]]
  %s18 = scalar_lea.smem %s0, 9
  %s19 = sld [smem:[%s18]]
  %s20 = scalar_lea.smem %s0, 10
  %s21 = sld [smem:[%s20]]
  %s22 = scalar_lea.smem %s0, 11
  %s23 = sld [smem:[%s22]]
  %s24 = scalar_lea.smem %s0, 12
  %s25 = sld [smem:[%s24]]
  %s26 = scalar_lea.smem %s0, 13
  %s27 = sld [smem:[%s26]]
  %s28 = scalar_lea.smem %s0, 14
  %s29 = sld [smem:[%s28]]
  %s30 = scalar_lea.smem %s0, 15
  %s31 = sld [smem:[%s30]]
  %s32 = scalar_lea.smem %s0, 16
  %s33 = sld [smem:[%s32]]
  %s34 = scalar_lea.smem %s0, 17
  %s35 = sld [smem:[%s34]]
  %s36 = scalar_lea.smem %s0, 18
  %s37 = sld [smem:[%s36]]
  %s38 = scalar_lea.smem %s0, 19
  %s39 = sld [smem:[%s38]]
  %s40 = scalar_lea.smem %s0, 20
  %s41 = sld [smem:[%s40]]
  %s42 = scalar_lea.smem %s0, 21
  %s43 = sld [smem:[%s42]]
  %s44 = scalar_lea.smem %s0, 22
  %s45 = sld [smem:[%s44]]
  %s46 = scalar_lea.smem %s0, 23
  %s47 = sld [smem:[%s46]]
  %s48 = scalar_lea.smem %s0, 24
  %s49 = sld [smem:[%s48]]
  %s50 = scalar_lea.smem %s0, 25
  %s51 = sld [smem:[%s50]]
  %s52 = scalar_lea.smem %s0, 26
  %s53 = sld [smem:[%s52]]
  %s54 = scalar_lea.smem %s0, 27
  %s55 = sld [smem:[%s54]]
  %s56 = scalar_lea.smem %s0, 28
  %s57 = sld [smem:[%s56]]
  %s58 = scalar_lea.smem %s0, 29
  %s59 = sld [smem:[%s58]]
  %s60 = scalar_lea.smem %s0, 30
  %s61 = sld [smem:[%s60]]
  %s62 = scalar_lea.smem %s0, 31
  %s63 = sld [smem:[%s62]]
  %s64 = scalar_lea.smem %s0, 32
  %s65 = sld [smem:[%s64]]
  %s66 = scalar_lea.smem %s0, 33
  %s67 = sld [smem:[%s66]]
  %s68 = scalar_lea.smem %s0, 34
  %s69 = sld [smem:[%s68]]
  %s70 = scalar_lea.smem %s0, 35
  %s71 = sld [smem:[%s70]]
  %s72 = scalar_lea.smem %s0, 36
  %s73 = sld [smem:[%s72]]
  %s74 = scalar_lea.smem %s0, 37
  %s75 = sld [smem:[%s74]]
  %s76 = scalar_lea.smem %s0, 38
  %s77 = sld [smem:[%s76]]
  %s78 = scalar_lea.smem %s0, 39
  %s79 = sld [smem:[%s78]]
  %s80 = scalar_lea.smem %s0, 40
  %s81 = sld [smem:[%s80]]
  %s82 = scalar_lea.smem %s0, 41
  %s83 = sld [smem:[%s82]]
  %s84 = scalar_lea.smem %s0, 42
  %s85 = sld [smem:[%s84]]
  %s86 = scalar_lea.smem %s0, 43
  %s87 = sld [smem:[%s86]]
  %s88 = scalar_lea.smem %s0, 44
  %s89 = sld [smem:[%s88]]
  %s90 = scalar_lea.smem %s0, 45
  %s91 = sld [smem:[%s90]]
  %s92 = scalar_lea.smem %s0, 46
  %s93 = sld [smem:[%s92]]
  %s94 = scalar_lea.smem %s0, 47
  %s95 = sld [smem:[%s94]]
  %s96 = scalar_lea.smem %s0, 48
  %s97 = sld [smem:[%s96]]
  %s98 = scalar_lea.smem %s0, 49
  %s99 = sld [smem:[%s98]]
  %s100 = scalar_lea.smem %s0, 50
  %s101 = sld [smem:[%s100]]
  %s102 = sld [smem:[#allocation0]]
  $region269: #{h3conformer_hybrid_block.1} parent=0
    _
  %s104 = ssub.s32 1, %s102
  %s105 = scalar_select 0, %s104, %s102
  $region1: #{h3conformer_hybrid_block.1} parent=0
    #allocation3 [shape = 'u8[512]{0}', space=vmem, size = 0x400, scoped, tag = 'input window, operand 37, single buffered']
    #allocation4 [shape = 's32[2]{0}', space=sflag, size = 0x8, scoped, tag = 'scoped memory for h3conformer_hybrid_block.1']
    #allocation5 [shape = 's32[2]{0}', space=sflag, size = 0x8, scoped, tag = 'scoped memory for h3conformer_hybrid_block.1']
    #allocation6 [shape = 'u8[512]{0}', space=vmem, size = 0x400, scoped, tag = 'input window, operand 38, single buffered']
    #allocation7 [shape = 's32[1]{0}', space=sflag, size = 0x4, scoped, tag = 'scoped memory for h3conformer_hybrid_block.1']
    #allocation8 [shape = 'u8[512]{0}', space=vmem, size = 0x400, scoped, tag = 'input window, operand 39, single buffered']
    #allocation9 [shape = 'u8[512]{0}', space=vmem, size = 0x400, scoped, tag = 'input window, operand 41, single buffered']
    #allocation10 [shape = 's32[1]{0}', space=sflag, size = 0x4, scoped, tag = 'scoped memory for h3conformer_hybrid_block.1']
    #allocation11 [shape = 'u8[512]{0}', space=vmem, size = 0x400, scoped, tag = 'input window, operand 43, single buffered']
    #allocation12 [shape = 'u8[512]{0}', space=vmem, size = 0x400, scoped, tag = 'input window, operand 45, single buffered']
    #allocation13 [shape = 's32[1]{0}', space=sflag, size = 0x4, scoped, tag = 'scoped memory for h3conformer_hybrid_block.1']
    #allocation14 [shape = 'u8[512]{0}', space=vmem, size = 0x400, scoped, tag = 'input window, operand 47, single buffered']
    #allocation15 [shape = 'u8[512]{0}', space=vmem, size = 0x400, scoped, tag = 'input window, operand 48, single buffered']
    #allocation16 [shape = 's32[1]{0}', space=sflag, size = 0x4, scoped, tag = 'scoped memory for h3conformer_hybrid_block.1']
    #allocation17 [shape = 'u8[512]{0}', space=vmem, size = 0x400, scoped, tag = 'input window, operand 49, single buffered']
    #allocation18 [shape = 'u8[16384]{0}', space=vmem, size = 0x4000, scoped, tag = 'output window, operand 0']
    %106 = vsyncpa [#allocation4], 0
    %107 = vsyncpa [#allocation7], 0
    %108 = vsyncpa [#allocation10], 0
    %109 = vsyncpa [#allocation13], 0
    %110 = vsyncpa [#allocation16], 0
    %111 = vsyncpa [#allocation5], 0
    %s112 = scalar_lea.sflag [#allocation5], 1
    %113 = vsyncpa %s112, 0
    loop: start=0, step=1, limit=4
    $region2: #{h3conformer_hybrid_block.1} parent=1 // loop_pre_header
      _
    $region3: #{h3conformer_hybrid_block.1} parent=1 // loop_header
      %s115 = sphi 0, %s119
      %p116 = scmp.ge.s32.totalorder %s115, 4
      %s125 = sphi 0, %s127
      %s128 = sphi 0, %s125
      %s129 = sphi 0, %s128
      %s145 = sphi 0, %s129
      %s149 = sphi 0, %s149
      %s151 = sphi 0, %s149
      %s152 = sphi 0, %s151
      %s166 = sphi 0, %s152
      %s170 = sphi 0, %s170
      %s172 = sphi 0, %s170
      %s173 = sphi 0, %s172
      %s187 = sphi 0, %s173
      %s191 = sphi 0, %s191
      %s193 = sphi 0, %s191
      %s194 = sphi 0, %s193
      %s208 = sphi 0, %s194
      %s212 = sphi 0, %s212
      %s214 = sphi 0, %s212
      %s215 = sphi 0, %s214
      %s229 = sphi 0, %s215
      %s233 = sphi 0, %s233
      %s235 = sphi 0, %s233
      %s236 = sphi 0, %s235
      %s250 = sphi 0, %s236
      %s254 = sphi 0, %s254
      %s256 = sphi 0, %s254
      %s257 = sphi 0, %s256
      %s271 = sphi 0, %s257
      %s275 = sphi 0, %s275
      %s277 = sphi 0, %s275
      %s278 = sphi 0, %s277
      %s292 = sphi 0, %s278
      %s296 = sphi 0, %s296
      %s298 = sphi 0, %s296
      %s299 = sphi 0, %s298
      %s313 = sphi 0, %s299
      %s317 = sphi 0, %s317
      %s319 = sphi 0, %s317
      %s320 = sphi 0, %s319
      %s334 = sphi 0, %s320
      %s338 = sphi 0, %s338
      %s340 = sphi 0, %s338
      %s341 = sphi 0, %s340
      %s355 = sphi 0, %s341
      %s359 = sphi 0, %s359
      %s361 = sphi 0, %s359
      %s362 = sphi 0, %s361
      %s376 = sphi 0, %s362
      %s380 = sphi 0, %s380
      %s382 = sphi 0, %s380
      %s383 = sphi 0, %s382
      %s397 = sphi 0, %s383
      %s401 = sphi 0, %s401
      %s403 = sphi 0, %s401
      %s404 = sphi 0, %s403
      %s418 = sphi 0, %s404
      %s422 = sphi 0, %s422
      %s424 = sphi 0, %s422
      %s425 = sphi 0, %s424
      %s439 = sphi 0, %s425
      %s443 = sphi 0, %s443
      %s445 = sphi 0, %s443
      %s446 = sphi 0, %s445
      %s460 = sphi 0, %s446
      %s464 = sphi 0, %s464
      %s466 = sphi 0, %s464
      %s467 = sphi 0, %s466
      %s481 = sphi 0, %s467
      %s485 = sphi 0, %s485
      %s487 = sphi 0, %s485
      %s488 = sphi 0, %s487
      %s502 = sphi 0, %s488
      %s506 = sphi 0, %s506
      %s508 = sphi 0, %s506
      %s509 = sphi 0, %s508
      %s523 = sphi 0, %s509
      %s527 = sphi 0, %s527
      %s529 = sphi 0, %s527
      %s530 = sphi 0, %s529
      %s544 = sphi 0, %s530
      %s548 = sphi 0, %s548
      %s550 = sphi 0, %s548
      %s551 = sphi 0, %s550
      %s565 = sphi 0, %s551
      %s569 = sphi 0, %s569
      %s571 = sphi 0, %s569
      %s572 = sphi 0, %s571
      %s586 = sphi 0, %s572
      %s590 = sphi 0, %s590
      %s592 = sphi 0, %s590
      %s593 = sphi 0, %s592
      %s607 = sphi 0, %s593
      %s611 = sphi 0, %s611
      %s613 = sphi 0, %s611
      %s614 = sphi 0, %s613
      %s628 = sphi 0, %s614
      %s632 = sphi 0, %s632
      %s634 = sphi 0, %s632
      %s635 = sphi 0, %s634
      %s649 = sphi 0, %s635
      %s653 = sphi 0, %s653
      %s655 = sphi 0, %s653
      %s656 = sphi 0, %s655
      %s670 = sphi 0, %s656
      %s674 = sphi 0, %s674
      %s676 = sphi 0, %s674
      %s677 = sphi 0, %s676
      %s691 = sphi 0, %s677
      %s695 = sphi 0, %s695
      %s697 = sphi 0, %s695
      %s698 = sphi 0, %s697
      %s712 = sphi 0, %s698
      %s716 = sphi 0, %s716
      %s718 = sphi 0, %s716
      %s719 = sphi 0, %s718
      %s733 = sphi 0, %s719
      %s737 = sphi 0, %s737
      %s739 = sphi 0, %s737
      %s740 = sphi 0, %s739
      %s754 = sphi 0, %s740
      %s758 = sphi 0, %s758
      %s760 = sphi 0, %s758
      %s761 = sphi 0, %s760
      %s775 = sphi 0, %s761
      %s779 = sphi 0, %s779
      %s781 = sphi 0, %s779
      %s782 = sphi 0, %s781
      %s796 = sphi 0, %s782
      %s800 = sphi 0, %s800
      %s802 = sphi 0, %s800
      %s803 = sphi 0, %s802
      %s817 = sphi 0, %s803
      %s821 = sphi 0, %s821
      %s823 = sphi 0, %s821
      %s824 = sphi 0, %s823
      %s838 = sphi 0, %s824
      %s842 = sphi 0, %s842
      %s844 = sphi 0, %s842
      %s845 = sphi 0, %s844
      %s859 = sphi 0, %s845
      %s863 = sphi 0, %s863
      %s865 = sphi 0, %s863
      %s866 = sphi 0, %s865
      %s880 = sphi 0, %s866
      %s884 = sphi 0, %s884
      %s886 = sphi 0, %s884
      %s887 = sphi 0, %s886
      %s901 = sphi 0, %s887
      %s905 = sphi 0, %s905
      %s907 = sphi 0, %s905
      %s908 = sphi 0, %s907
      %s922 = sphi 0, %s908
      %s926 = sphi 0, %s926
      %s928 = sphi 0, %s926
      %s929 = sphi 0, %s928
      %s943 = sphi 0, %s929
      %s947 = sphi 0, %s947
      %s949 = sphi 0, %s947
      %s950 = sphi 0, %s949
      %s964 = sphi 0, %s950
      %s968 = sphi 0, %s968
      %s970 = sphi 0, %s968
      %s971 = sphi 0, %s970
      %s985 = sphi 0, %s971
      %s989 = sphi 0, %s989
      %s991 = sphi 0, %s989
      %s992 = sphi 0, %s991
      %s1006 = sphi 0, %s992
      %s1010 = sphi 0, %s1010
      %s1012 = sphi 0, %s1010
      %s1013 = sphi 0, %s1012
      %s1027 = sphi 0, %s1013
      %s1031 = sphi 0, %s1031
      %s1033 = sphi 0, %s1031
      %s1034 = sphi 0, %s1033
      %s1048 = sphi 0, %s1034
      %s1052 = sphi 0, %s1052
      %s1054 = sphi 0, %s1052
      %s1055 = sphi 0, %s1054
      %s1069 = sphi 0, %s1055
      %s1073 = sphi 0, %s1073
      %s1075 = sphi 0, %s1073
      %s1076 = sphi 0, %s1075
      %s1090 = sphi 0, %s1076
      %s1094 = sphi 0, %s1094
      %s1096 = sphi 0, %s1094
      %s1097 = sphi 0, %s1096
      %s1111 = sphi 0, %s1097
      %s1115 = sphi 0, %s1115
      %s1117 = sphi 0, %s1115
      %s1118 = sphi 0, %s1117
      %s1132 = sphi 0, %s1118
      %s1136 = sphi 0, %s1136
      %s1138 = sphi 0, %s1136
      %s1139 = sphi 0, %s1138
      %s1153 = sphi 0, %s1139
      %s1157 = sphi 0, %s1157
      %s1159 = sphi 0, %s1157
      %s1160 = sphi 0, %s1159
      %s1174 = sphi 0, %s1160
      %s1180 = sphi 0, %s1182
      %s1183 = sphi 0, %s1180
      %s1184 = sphi 0, %s1183
      %s1200 = sphi 0, %s1184
    $region4: #{h3conformer_hybrid_block.1} parent=1 // loop_header_branch
      %118 = sbr.rel (%p116) target = $region8
    $region5: #{h3conformer_hybrid_block.1} parent=1 // loop_body
      %s120 = ssub.s32 %s115, 1
      %s121 = ssub.s32 %s115, 2
      %s122 = sadd.s32 %s115, 1
      %s123 = ssub.s32 %s115, %s122
      %p124 = scmp.eq.s32.totalorder %s123, 0
      %s126 = sadd.s32 %s125, 1
      %s127 = scalar_select %p124, %s125, %s126
      %p130 = pneg %p124
      %p131 = scmp.eq.s32.totalorder %s115, 1
      %p132 = por %p130, %p131
      %p133 = scmp.ne.s32.totalorder %s125, %s128
      %p134 = scmp.eq.s32.totalorder %s115, 0
      %p135 = por %p133, %p134
      %p136 = scmp.ne.s32.totalorder %s125, %s128
      %p137 = scmp.eq.s32.totalorder %s120, 1
      %p138 = por %p136, %p137
      %p139 = scmp.ne.s32.totalorder %s128, %s129
      %p140 = scmp.eq.s32.totalorder %s120, 0
      %p141 = por %p139, %p140
      %p142 = scmp.ne.s32.totalorder %s128, %s129
      %p143 = scmp.eq.s32.totalorder %s121, 1
      %p144 = por %p142, %p143
      %p146 = scmp.ne.s32.totalorder %s129, %s145
      %p147 = scmp.eq.s32.totalorder %s121, 0
      %p148 = por %p146, %p147
      %s150 = sadd.s32 %s149, 1
      %p153 = scmp.eq.s32.totalorder %s115, 1
      %p154 = scmp.ne.s32.totalorder %s149, %s151
      %p155 = scmp.eq.s32.totalorder %s115, 0
      %p156 = por %p154, %p155
      %p157 = scmp.ne.s32.totalorder %s149, %s151
      %p158 = scmp.eq.s32.totalorder %s120, 1
      %p159 = por %p157, %p158
      %p160 = scmp.ne.s32.totalorder %s151, %s152
      %p161 = scmp.eq.s32.totalorder %s120, 0
      %p162 = por %p160, %p161
      %p163 = scmp.ne.s32.totalorder %s151, %s152
      %p164 = scmp.eq.s32.totalorder %s121, 1
      %p165 = por %p163, %p164
      %p167 = scmp.ne.s32.totalorder %s152, %s166
      %p168 = scmp.eq.s32.totalorder %s121, 0
      %p169 = por %p167, %p168
      %s171 = sadd.s32 %s170, 1
      %p174 = scmp.eq.s32.totalorder %s115, 1
      %p175 = scmp.ne.s32.totalorder %s170, %s172
      %p176 = scmp.eq.s32.totalorder %s115, 0
      %p177 = por %p175, %p176
      %p178 = scmp.ne.s32.totalorder %s170, %s172
      %p179 = scmp.eq.s32.totalorder %s120, 1
      %p180 = por %p178, %p179
      %p181 = scmp.ne.s32.totalorder %s172, %s173
      %p182 = scmp.eq.s32.totalorder %s120, 0
      %p183 = por %p181, %p182
      %p184 = scmp.ne.s32.totalorder %s172, %s173
      %p185 = scmp.eq.s32.totalorder %s121, 1
      %p186 = por %p184, %p185
      %p188 = scmp.ne.s32.totalorder %s173, %s187
      %p189 = scmp.eq.s32.totalorder %s121, 0
      %p190 = por %p188, %p189
      %s192 = sadd.s32 %s191, 1
      %p195 = scmp.eq.s32.totalorder %s115, 1
      %p196 = scmp.ne.s32.totalorder %s191, %s193
      %p197 = scmp.eq.s32.totalorder %s115, 0
      %p198 = por %p196, %p197
      %p199 = scmp.ne.s32.totalorder %s191, %s193
      %p200 = scmp.eq.s32.totalorder %s120, 1
      %p201 = por %p199, %p200
      %p202 = scmp.ne.s32.totalorder %s193, %s194
      %p203 = scmp.eq.s32.totalorder %s120, 0
      %p204 = por %p202, %p203
      %p205 = scmp.ne.s32.totalorder %s193, %s194
      %p206 = scmp.eq.s32.totalorder %s121, 1
      %p207 = por %p205, %p206
      %p209 = scmp.ne.s32.totalorder %s194, %s208
      %p210 = scmp.eq.s32.totalorder %s121, 0
      %p211 = por %p209, %p210
      %s213 = sadd.s32 %s212, 1
      %p216 = scmp.eq.s32.totalorder %s115, 1
      %p217 = scmp.ne.s32.totalorder %s212, %s214
      %p218 = scmp.eq.s32.totalorder %s115, 0
      %p219 = por %p217, %p218
      %p220 = scmp.ne.s32.totalorder %s212, %s214
      %p221 = scmp.eq.s32.totalorder %s120, 1
      %p222 = por %p220, %p221
      %p223 = scmp.ne.s32.totalorder %s214, %s215
      %p224 = scmp.eq.s32.totalorder %s120, 0
      %p225 = por %p223, %p224
      %p226 = scmp.ne.s32.totalorder %s214, %s215
      %p227 = scmp.eq.s32.totalorder %s121, 1
      %p228 = por %p226, %p227
      %p230 = scmp.ne.s32.totalorder %s215, %s229
      %p231 = scmp.eq.s32.totalorder %s121, 0
      %p232 = por %p230, %p231
      %s234 = sadd.s32 %s233, 1
      %p237 = scmp.eq.s32.totalorder %s115, 1
      %p238 = scmp.ne.s32.totalorder %s233, %s235
      %p239 = scmp.eq.s32.totalorder %s115, 0
      %p240 = por %p238, %p239
      %p241 = scmp.ne.s32.totalorder %s233, %s235
      %p242 = scmp.eq.s32.totalorder %s120, 1
      %p243 = por %p241, %p242
      %p244 = scmp.ne.s32.totalorder %s235, %s236
      %p245 = scmp.eq.s32.totalorder %s120, 0
      %p246 = por %p244, %p245
      %p247 = scmp.ne.s32.totalorder %s235, %s236
      %p248 = scmp.eq.s32.totalorder %s121, 1
      %p249 = por %p247, %p248
      %p251 = scmp.ne.s32.totalorder %s236, %s250
      %p252 = scmp.eq.s32.totalorder %s121, 0
      %p253 = por %p251, %p252
      %s255 = sadd.s32 %s254, 1
      %p258 = scmp.eq.s32.totalorder %s115, 1
      %p259 = scmp.ne.s32.totalorder %s254, %s256
      %p260 = scmp.eq.s32.totalorder %s115, 0
      %p261 = por %p259, %p260
      %p262 = scmp.ne.s32.totalorder %s254, %s256
      %p263 = scmp.eq.s32.totalorder %s120, 1
      %p264 = por %p262, %p263
      %p265 = scmp.ne.s32.totalorder %s256, %s257
      %p266 = scmp.eq.s32.totalorder %s120, 0
      %p267 = por %p265, %p266
      %p268 = scmp.ne.s32.totalorder %s256, %s257
      %p269 = scmp.eq.s32.totalorder %s121, 1
      %p270 = por %p268, %p269
      %p272 = scmp.ne.s32.totalorder %s257, %s271
      %p273 = scmp.eq.s32.totalorder %s121, 0
      %p274 = por %p272, %p273
      %s276 = sadd.s32 %s275, 1
      %p279 = scmp.eq.s32.totalorder %s115, 1
      %p280 = scmp.ne.s32.totalorder %s275, %s277
      %p281 = scmp.eq.s32.totalorder %s115, 0
      %p282 = por %p280, %p281
      %p283 = scmp.ne.s32.totalorder %s275, %s277
      %p284 = scmp.eq.s32.totalorder %s120, 1
      %p285 = por %p283, %p284
      %p286 = scmp.ne.s32.totalorder %s277, %s278
      %p287 = scmp.eq.s32.totalorder %s120, 0
      %p288 = por %p286, %p287
      %p289 = scmp.ne.s32.totalorder %s277, %s278
      %p290 = scmp.eq.s32.totalorder %s121, 1
      %p291 = por %p289, %p290
      %p293 = scmp.ne.s32.totalorder %s278, %s292
      %p294 = scmp.eq.s32.totalorder %s121, 0
      %p295 = por %p293, %p294
      %s297 = sadd.s32 %s296, 1
      %p300 = scmp.eq.s32.totalorder %s115, 1
      %p301 = scmp.ne.s32.totalorder %s296, %s298
      %p302 = scmp.eq.s32.totalorder %s115, 0
      %p303 = por %p301, %p302
      %p304 = scmp.ne.s32.totalorder %s296, %s298
      %p305 = scmp.eq.s32.totalorder %s120, 1
      %p306 = por %p304, %p305
      %p307 = scmp.ne.s32.totalorder %s298, %s299
      %p308 = scmp.eq.s32.totalorder %s120, 0
      %p309 = por %p307, %p308
      %p310 = scmp.ne.s32.totalorder %s298, %s299
      %p311 = scmp.eq.s32.totalorder %s121, 1
      %p312 = por %p310, %p311
      %p314 = scmp.ne.s32.totalorder %s299, %s313
      %p315 = scmp.eq.s32.totalorder %s121, 0
      %p316 = por %p314, %p315
      %s318 = sadd.s32 %s317, 1
      %p321 = scmp.eq.s32.totalorder %s115, 1
      %p322 = scmp.ne.s32.totalorder %s317, %s319
      %p323 = scmp.eq.s32.totalorder %s115, 0
      %p324 = por %p322, %p323
      %p325 = scmp.ne.s32.totalorder %s317, %s319
      %p326 = scmp.eq.s32.totalorder %s120, 1
      %p327 = por %p325, %p326
      %p328 = scmp.ne.s32.totalorder %s319, %s320
      %p329 = scmp.eq.s32.totalorder %s120, 0
      %p330 = por %p328, %p329
      %p331 = scmp.ne.s32.totalorder %s319, %s320
      %p332 = scmp.eq.s32.totalorder %s121, 1
      %p333 = por %p331, %p332
      %p335 = scmp.ne.s32.totalorder %s320, %s334
      %p336 = scmp.eq.s32.totalorder %s121, 0
      %p337 = por %p335, %p336
      %s339 = sadd.s32 %s338, 1
      %p342 = scmp.eq.s32.totalorder %s115, 1
      %p343 = scmp.ne.s32.totalorder %s338, %s340
      %p344 = scmp.eq.s32.totalorder %s115, 0
      %p345 = por %p343, %p344
      %p346 = scmp.ne.s32.totalorder %s338, %s340
      %p347 = scmp.eq.s32.totalorder %s120, 1
      %p348 = por %p346, %p347
      %p349 = scmp.ne.s32.totalorder %s340, %s341
      %p350 = scmp.eq.s32.totalorder %s120, 0
      %p351 = por %p349, %p350
      %p352 = scmp.ne.s32.totalorder %s340, %s341
      %p353 = scmp.eq.s32.totalorder %s121, 1
      %p354 = por %p352, %p353
      %p356 = scmp.ne.s32.totalorder %s341, %s355
      %p357 = scmp.eq.s32.totalorder %s121, 0
      %p358 = por %p356, %p357
      %s360 = sadd.s32 %s359, 1
      %p363 = scmp.eq.s32.totalorder %s115, 1
      %p364 = scmp.ne.s32.totalorder %s359, %s361
      %p365 = scmp.eq.s32.totalorder %s115, 0
      %p366 = por %p364, %p365
      %p367 = scmp.ne.s32.totalorder %s359, %s361
      %p368 = scmp.eq.s32.totalorder %s120, 1
      %p369 = por %p367, %p368
      %p370 = scmp.ne.s32.totalorder %s361, %s362
      %p371 = scmp.eq.s32.totalorder %s120, 0
      %p372 = por %p370, %p371
      %p373 = scmp.ne.s32.totalorder %s361, %s362
      %p374 = scmp.eq.s32.totalorder %s121, 1
      %p375 = por %p373, %p374
      %p377 = scmp.ne.s32.totalorder %s362, %s376
      %p378 = scmp.eq.s32.totalorder %s121, 0
      %p379 = por %p377, %p378
      %s381 = sadd.s32 %s380, 1
      %p384 = scmp.eq.s32.totalorder %s115, 1
      %p385 = scmp.ne.s32.totalorder %s380, %s382
      %p386 = scmp.eq.s32.totalorder %s115, 0
      %p387 = por %p385, %p386
      %p388 = scmp.ne.s32.totalorder %s380, %s382
      %p389 = scmp.eq.s32.totalorder %s120, 1
      %p390 = por %p388, %p389
      %p391 = scmp.ne.s32.totalorder %s382, %s383
      %p392 = scmp.eq.s32.totalorder %s120, 0
      %p393 = por %p391, %p392
      %p394 = scmp.ne.s32.totalorder %s382, %s383
      %p395 = scmp.eq.s32.totalorder %s121, 1
      %p396 = por %p394, %p395
      %p398 = scmp.ne.s32.totalorder %s383, %s397
      %p399 = scmp.eq.s32.totalorder %s121, 0
      %p400 = por %p398, %p399
      %s402 = sadd.s32 %s401, 1
      %p405 = scmp.eq.s32.totalorder %s115, 1
      %p406 = scmp.ne.s32.totalorder %s401, %s403
      %p407 = scmp.eq.s32.totalorder %s115, 0
      %p408 = por %p406, %p407
      %p409 = scmp.ne.s32.totalorder %s401, %s403
      %p410 = scmp.eq.s32.totalorder %s120, 1
      %p411 = por %p409, %p410
      %p412 = scmp.ne.s32.totalorder %s403, %s404
      %p413 = scmp.eq.s32.totalorder %s120, 0
      %p414 = por %p412, %p413
      %p415 = scmp.ne.s32.totalorder %s403, %s404
      %p416 = scmp.eq.s32.totalorder %s121, 1
      %p417 = por %p415, %p416
      %p419 = scmp.ne.s32.totalorder %s404, %s418
      %p420 = scmp.eq.s32.totalorder %s121, 0
      %p421 = por %p419, %p420
      %s423 = sadd.s32 %s422, 1
      %p426 = scmp.eq.s32.totalorder %s115, 1
      %p427 = scmp.ne.s32.totalorder %s422, %s424
      %p428 = scmp.eq.s32.totalorder %s115, 0
      %p429 = por %p427, %p428
      %p430 = scmp.ne.s32.totalorder %s422, %s424
      %p431 = scmp.eq.s32.totalorder %s120, 1
      %p432 = por %p430, %p431
      %p433 = scmp.ne.s32.totalorder %s424, %s425
      %p434 = scmp.eq.s32.totalorder %s120, 0
      %p435 = por %p433, %p434
      %p436 = scmp.ne.s32.totalorder %s424, %s425
      %p437 = scmp.eq.s32.totalorder %s121, 1
      %p438 = por %p436, %p437
      %p440 = scmp.ne.s32.totalorder %s425, %s439
      %p441 = scmp.eq.s32.totalorder %s121, 0
      %p442 = por %p440, %p441
      %s444 = sadd.s32 %s443, 1
      %p447 = scmp.eq.s32.totalorder %s115, 1
      %p448 = scmp.ne.s32.totalorder %s443, %s445
      %p449 = scmp.eq.s32.totalorder %s115, 0
      %p450 = por %p448, %p449
      %p451 = scmp.ne.s32.totalorder %s443, %s445
      %p452 = scmp.eq.s32.totalorder %s120, 1
      %p453 = por %p451, %p452
      %p454 = scmp.ne.s32.totalorder %s445, %s446
      %p455 = scmp.eq.s32.totalorder %s120, 0
      %p456 = por %p454, %p455
      %p457 = scmp.ne.s32.totalorder %s445, %s446
      %p458 = scmp.eq.s32.totalorder %s121, 1
      %p459 = por %p457, %p458
      %p461 = scmp.ne.s32.totalorder %s446, %s460
      %p462 = scmp.eq.s32.totalorder %s121, 0
      %p463 = por %p461, %p462
      %s465 = sadd.s32 %s464, 1
      %p468 = scmp.eq.s32.totalorder %s115, 1
      %p469 = scmp.ne.s32.totalorder %s464, %s466
      %p470 = scmp.eq.s32.totalorder %s115, 0
      %p471 = por %p469, %p470
      %p472 = scmp.ne.s32.totalorder %s464, %s466
      %p473 = scmp.eq.s32.totalorder %s120, 1
      %p474 = por %p472, %p473
      %p475 = scmp.ne.s32.totalorder %s466, %s467
      %p476 = scmp.eq.s32.totalorder %s120, 0
      %p477 = por %p475, %p476
      %p478 = scmp.ne.s32.totalorder %s466, %s467
      %p479 = scmp.eq.s32.totalorder %s121, 1
      %p480 = por %p478, %p479
      %p482 = scmp.ne.s32.totalorder %s467, %s481
      %p483 = scmp.eq.s32.totalorder %s121, 0
      %p484 = por %p482, %p483
      %s486 = sadd.s32 %s485, 1
      %p489 = scmp.eq.s32.totalorder %s115, 1
      %p490 = scmp.ne.s32.totalorder %s485, %s487
      %p491 = scmp.eq.s32.totalorder %s115, 0
      %p492 = por %p490, %p491
      %p493 = scmp.ne.s32.totalorder %s485, %s487
      %p494 = scmp.eq.s32.totalorder %s120, 1
      %p495 = por %p493, %p494
      %p496 = scmp.ne.s32.totalorder %s487, %s488
      %p497 = scmp.eq.s32.totalorder %s120, 0
      %p498 = por %p496, %p497
      %p499 = scmp.ne.s32.totalorder %s487, %s488
      %p500 = scmp.eq.s32.totalorder %s121, 1
      %p501 = por %p499, %p500
      %p503 = scmp.ne.s32.totalorder %s488, %s502
      %p504 = scmp.eq.s32.totalorder %s121, 0
      %p505 = por %p503, %p504
      %s507 = sadd.s32 %s506, 1
      %p510 = scmp.eq.s32.totalorder %s115, 1
      %p511 = scmp.ne.s32.totalorder %s506, %s508
      %p512 = scmp.eq.s32.totalorder %s115, 0
      %p513 = por %p511, %p512
      %p514 = scmp.ne.s32.totalorder %s506, %s508
      %p515 = scmp.eq.s32.totalorder %s120, 1
      %p516 = por %p514, %p515
      %p517 = scmp.ne.s32.totalorder %s508, %s509
      %p518 = scmp.eq.s32.totalorder %s120, 0
      %p519 = por %p517, %p518
      %p520 = scmp.ne.s32.totalorder %s508, %s509
      %p521 = scmp.eq.s32.totalorder %s121, 1
      %p522 = por %p520, %p521
      %p524 = scmp.ne.s32.totalorder %s509, %s523
      %p525 = scmp.eq.s32.totalorder %s121, 0
      %p526 = por %p524, %p525
      %s528 = sadd.s32 %s527, 1
      %p531 = scmp.eq.s32.totalorder %s115, 1
      %p532 = scmp.ne.s32.totalorder %s527, %s529
      %p533 = scmp.eq.s32.totalorder %s115, 0
      %p534 = por %p532, %p533
      %p535 = scmp.ne.s32.totalorder %s527, %s529
      %p536 = scmp.eq.s32.totalorder %s120, 1
      %p537 = por %p535, %p536
      %p538 = scmp.ne.s32.totalorder %s529, %s530
      %p539 = scmp.eq.s32.totalorder %s120, 0
      %p540 = por %p538, %p539
      %p541 = scmp.ne.s32.totalorder %s529, %s530
      %p542 = scmp.eq.s32.totalorder %s121, 1
      %p543 = por %p541, %p542
      %p545 = scmp.ne.s32.totalorder %s530, %s544
      %p546 = scmp.eq.s32.totalorder %s121, 0
      %p547 = por %p545, %p546
      %s549 = sadd.s32 %s548, 1
      %p552 = scmp.eq.s32.totalorder %s115, 1
      %p553 = scmp.ne.s32.totalorder %s548, %s550
      %p554 = scmp.eq.s32.totalorder %s115, 0
      %p555 = por %p553, %p554
      %p556 = scmp.ne.s32.totalorder %s548, %s550
      %p557 = scmp.eq.s32.totalorder %s120, 1
      %p558 = por %p556, %p557
      %p559 = scmp.ne.s32.totalorder %s550, %s551
      %p560 = scmp.eq.s32.totalorder %s120, 0
      %p561 = por %p559, %p560
      %p562 = scmp.ne.s32.totalorder %s550, %s551
      %p563 = scmp.eq.s32.totalorder %s121, 1
      %p564 = por %p562, %p563
      %p566 = scmp.ne.s32.totalorder %s551, %s565
      %p567 = scmp.eq.s32.totalorder %s121, 0
      %p568 = por %p566, %p567
      %s570 = sadd.s32 %s569, 1
      %p573 = scmp.eq.s32.totalorder %s115, 1
      %p574 = scmp.ne.s32.totalorder %s569, %s571
      %p575 = scmp.eq.s32.totalorder %s115, 0
      %p576 = por %p574, %p575
      %p577 = scmp.ne.s32.totalorder %s569, %s571
      %p578 = scmp.eq.s32.totalorder %s120, 1
      %p579 = por %p577, %p578
      %p580 = scmp.ne.s32.totalorder %s571, %s572
      %p581 = scmp.eq.s32.totalorder %s120, 0
      %p582 = por %p580, %p581
      %p583 = scmp.ne.s32.totalorder %s571, %s572
      %p584 = scmp.eq.s32.totalorder %s121, 1
      %p585 = por %p583, %p584
      %p587 = scmp.ne.s32.totalorder %s572, %s586
      %p588 = scmp.eq.s32.totalorder %s121, 0
      %p589 = por %p587, %p588
      %s591 = sadd.s32 %s590, 1
      %p594 = scmp.eq.s32.totalorder %s115, 1
      %p595 = scmp.ne.s32.totalorder %s590, %s592
      %p596 = scmp.eq.s32.totalorder %s115, 0
      %p597 = por %p595, %p596
      %p598 = scmp.ne.s32.totalorder %s590, %s592
      %p599 = scmp.eq.s32.totalorder %s120, 1
      %p600 = por %p598, %p599
      %p601 = scmp.ne.s32.totalorder %s592, %s593
      %p602 = scmp.eq.s32.totalorder %s120, 0
      %p603 = por %p601, %p602
      %p604 = scmp.ne.s32.totalorder %s592, %s593
      %p605 = scmp.eq.s32.totalorder %s121, 1
      %p606 = por %p604, %p605
      %p608 = scmp.ne.s32.totalorder %s593, %s607
      %p609 = scmp.eq.s32.totalorder %s121, 0
      %p610 = por %p608, %p609
      %s612 = sadd.s32 %s611, 1
      %p615 = scmp.eq.s32.totalorder %s115, 1
      %p616 = scmp.ne.s32.totalorder %s611, %s613
      %p617 = scmp.eq.s32.totalorder %s115, 0
      %p618 = por %p616, %p617
      %p619 = scmp.ne.s32.totalorder %s611, %s613
      %p620 = scmp.eq.s32.totalorder %s120, 1
      %p621 = por %p619, %p620
      %p622 = scmp.ne.s32.totalorder %s613, %s614
      %p623 = scmp.eq.s32.totalorder %s120, 0
      %p624 = por %p622, %p623
      %p625 = scmp.ne.s32.totalorder %s613, %s614
      %p626 = scmp.eq.s32.totalorder %s121, 1
      %p627 = por %p625, %p626
      %p629 = scmp.ne.s32.totalorder %s614, %s628
      %p630 = scmp.eq.s32.totalorder %s121, 0
      %p631 = por %p629, %p630
      %s633 = sadd.s32 %s632, 1
      %p636 = scmp.eq.s32.totalorder %s115, 1
      %p637 = scmp.ne.s32.totalorder %s632, %s634
      %p638 = scmp.eq.s32.totalorder %s115, 0
      %p639 = por %p637, %p638
      %p640 = scmp.ne.s32.totalorder %s632, %s634
      %p641 = scmp.eq.s32.totalorder %s120, 1
      %p642 = por %p640, %p641
      %p643 = scmp.ne.s32.totalorder %s634, %s635
      %p644 = scmp.eq.s32.totalorder %s120, 0
      %p645 = por %p643, %p644
      %p646 = scmp.ne.s32.totalorder %s634, %s635
      %p647 = scmp.eq.s32.totalorder %s121, 1
      %p648 = por %p646, %p647
      %p650 = scmp.ne.s32.totalorder %s635, %s649
      %p651 = scmp.eq.s32.totalorder %s121, 0
      %p652 = por %p650, %p651
      %s654 = sadd.s32 %s653, 1
      %p657 = scmp.eq.s32.totalorder %s115, 1
      %p658 = scmp.ne.s32.totalorder %s653, %s655
      %p659 = scmp.eq.s32.totalorder %s115, 0
      %p660 = por %p658, %p659
      %p661 = scmp.ne.s32.totalorder %s653, %s655
      %p662 = scmp.eq.s32.totalorder %s120, 1
      %p663 = por %p661, %p662
      %p664 = scmp.ne.s32.totalorder %s655, %s656
      %p665 = scmp.eq.s32.totalorder %s120, 0
      %p666 = por %p664, %p665
      %p667 = scmp.ne.s32.totalorder %s655, %s656
      %p668 = scmp.eq.s32.totalorder %s121, 1
      %p669 = por %p667, %p668
      %p671 = scmp.ne.s32.totalorder %s656, %s670
      %p672 = scmp.eq.s32.totalorder %s121, 0
      %p673 = por %p671, %p672
      %s675 = sadd.s32 %s674, 1
      %p678 = scmp.eq.s32.totalorder %s115, 1
      %p679 = scmp.ne.s32.totalorder %s674, %s676
      %p680 = scmp.eq.s32.totalorder %s115, 0
      %p681 = por %p679, %p680
      %p682 = scmp.ne.s32.totalorder %s674, %s676
      %p683 = scmp.eq.s32.totalorder %s120, 1
      %p684 = por %p682, %p683
      %p685 = scmp.ne.s32.totalorder %s676, %s677
      %p686 = scmp.eq.s32.totalorder %s120, 0
      %p687 = por %p685, %p686
      %p688 = scmp.ne.s32.totalorder %s676, %s677
      %p689 = scmp.eq.s32.totalorder %s121, 1
      %p690 = por %p688, %p689
      %p692 = scmp.ne.s32.totalorder %s677, %s691
      %p693 = scmp.eq.s32.totalorder %s121, 0
      %p694 = por %p692, %p693
      %s696 = sadd.s32 %s695, 1
      %p699 = scmp.eq.s32.totalorder %s115, 1
      %p700 = scmp.ne.s32.totalorder %s695, %s697
      %p701 = scmp.eq.s32.totalorder %s115, 0
      %p702 = por %p700, %p701
      %p703 = scmp.ne.s32.totalorder %s695, %s697
      %p704 = scmp.eq.s32.totalorder %s120, 1
      %p705 = por %p703, %p704
      %p706 = scmp.ne.s32.totalorder %s697, %s698
      %p707 = scmp.eq.s32.totalorder %s120, 0
      %p708 = por %p706, %p707
      %p709 = scmp.ne.s32.totalorder %s697, %s698
      %p710 = scmp.eq.s32.totalorder %s121, 1
      %p711 = por %p709, %p710
      %p713 = scmp.ne.s32.totalorder %s698, %s712
      %p714 = scmp.eq.s32.totalorder %s121, 0
      %p715 = por %p713, %p714
      %s717 = sadd.s32 %s716, 1
      %p720 = scmp.eq.s32.totalorder %s115, 1
      %p721 = scmp.ne.s32.totalorder %s716, %s718
      %p722 = scmp.eq.s32.totalorder %s115, 0
      %p723 = por %p721, %p722
      %p724 = scmp.ne.s32.totalorder %s716, %s718
      %p725 = scmp.eq.s32.totalorder %s120, 1
      %p726 = por %p724, %p725
      %p727 = scmp.ne.s32.totalorder %s718, %s719
      %p728 = scmp.eq.s32.totalorder %s120, 0
      %p729 = por %p727, %p728
      %p730 = scmp.ne.s32.totalorder %s718, %s719
      %p731 = scmp.eq.s32.totalorder %s121, 1
      %p732 = por %p730, %p731
      %p734 = scmp.ne.s32.totalorder %s719, %s733
      %p735 = scmp.eq.s32.totalorder %s121, 0
      %p736 = por %p734, %p735
      %s738 = sadd.s32 %s737, 1
      %p741 = scmp.eq.s32.totalorder %s115, 1
      %p742 = scmp.ne.s32.totalorder %s737, %s739
      %p743 = scmp.eq.s32.totalorder %s115, 0
      %p744 = por %p742, %p743
      %p745 = scmp.ne.s32.totalorder %s737, %s739
      %p746 = scmp.eq.s32.totalorder %s120, 1
      %p747 = por %p745, %p746
      %p748 = scmp.ne.s32.totalorder %s739, %s740
      %p749 = scmp.eq.s32.totalorder %s120, 0
      %p750 = por %p748, %p749
      %p751 = scmp.ne.s32.totalorder %s739, %s740
      %p752 = scmp.eq.s32.totalorder %s121, 1
      %p753 = por %p751, %p752
      %p755 = scmp.ne.s32.totalorder %s740, %s754
      %p756 = scmp.eq.s32.totalorder %s121, 0
      %p757 = por %p755, %p756
      %s759 = sadd.s32 %s758, 1
      %p762 = scmp.eq.s32.totalorder %s115, 1
      %p763 = scmp.ne.s32.totalorder %s758, %s760
      %p764 = scmp.eq.s32.totalorder %s115, 0
      %p765 = por %p763, %p764
      %p766 = scmp.ne.s32.totalorder %s758, %s760
      %p767 = scmp.eq.s32.totalorder %s120, 1
      %p768 = por %p766, %p767
      %p769 = scmp.ne.s32.totalorder %s760, %s761
      %p770 = scmp.eq.s32.totalorder %s120, 0
      %p771 = por %p769, %p770
      %p772 = scmp.ne.s32.totalorder %s760, %s761
      %p773 = scmp.eq.s32.totalorder %s121, 1
      %p774 = por %p772, %p773
      %p776 = scmp.ne.s32.totalorder %s761, %s775
      %p777 = scmp.eq.s32.totalorder %s121, 0
      %p778 = por %p776, %p777
      %s780 = sadd.s32 %s779, 1
      %p783 = scmp.eq.s32.totalorder %s115, 1
      %p784 = scmp.ne.s32.totalorder %s779, %s781
      %p785 = scmp.eq.s32.totalorder %s115, 0
      %p786 = por %p784, %p785
      %p787 = scmp.ne.s32.totalorder %s779, %s781
      %p788 = scmp.eq.s32.totalorder %s120, 1
      %p789 = por %p787, %p788
      %p790 = scmp.ne.s32.totalorder %s781, %s782
      %p791 = scmp.eq.s32.totalorder %s120, 0
      %p792 = por %p790, %p791
      %p793 = scmp.ne.s32.totalorder %s781, %s782
      %p794 = scmp.eq.s32.totalorder %s121, 1
      %p795 = por %p793, %p794
      %p797 = scmp.ne.s32.totalorder %s782, %s796
      %p798 = scmp.eq.s32.totalorder %s121, 0
      %p799 = por %p797, %p798
      %s801 = sadd.s32 %s800, 1
      %p804 = scmp.eq.s32.totalorder %s115, 1
      %p805 = scmp.ne.s32.totalorder %s800, %s802
      %p806 = scmp.eq.s32.totalorder %s115, 0
      %p807 = por %p805, %p806
      %p808 = scmp.ne.s32.totalorder %s800, %s802
      %p809 = scmp.eq.s32.totalorder %s120, 1
      %p810 = por %p808, %p809
      %p811 = scmp.ne.s32.totalorder %s802, %s803
      %p812 = scmp.eq.s32.totalorder %s120, 0
      %p813 = por %p811, %p812
      %p814 = scmp.ne.s32.totalorder %s802, %s803
      %p815 = scmp.eq.s32.totalorder %s121, 1
      %p816 = por %p814, %p815
      %p818 = scmp.ne.s32.totalorder %s803, %s817
      %p819 = scmp.eq.s32.totalorder %s121, 0
      %p820 = por %p818, %p819
      %s822 = sadd.s32 %s821, 1
      %p825 = scmp.eq.s32.totalorder %s115, 1
      %p826 = scmp.ne.s32.totalorder %s821, %s823
      %p827 = scmp.eq.s32.totalorder %s115, 0
      %p828 = por %p826, %p827
      %p829 = scmp.ne.s32.totalorder %s821, %s823
      %p830 = scmp.eq.s32.totalorder %s120, 1
      %p831 = por %p829, %p830
      %p832 = scmp.ne.s32.totalorder %s823, %s824
      %p833 = scmp.eq.s32.totalorder %s120, 0
      %p834 = por %p832, %p833
      %p835 = scmp.ne.s32.totalorder %s823, %s824
      %p836 = scmp.eq.s32.totalorder %s121, 1
      %p837 = por %p835, %p836
      %p839 = scmp.ne.s32.totalorder %s824, %s838
      %p840 = scmp.eq.s32.totalorder %s121, 0
      %p841 = por %p839, %p840
      %s843 = sadd.s32 %s842, 1
      %p846 = scmp.eq.s32.totalorder %s115, 1
      %p847 = scmp.ne.s32.totalorder %s842, %s844
      %p848 = scmp.eq.s32.totalorder %s115, 0
      %p849 = por %p847, %p848
      %p850 = scmp.ne.s32.totalorder %s842, %s844
      %p851 = scmp.eq.s32.totalorder %s120, 1
      %p852 = por %p850, %p851
      %p853 = scmp.ne.s32.totalorder %s844, %s845
      %p854 = scmp.eq.s32.totalorder %s120, 0
      %p855 = por %p853, %p854
      %p856 = scmp.ne.s32.totalorder %s844, %s845
      %p857 = scmp.eq.s32.totalorder %s121, 1
      %p858 = por %p856, %p857
      %p860 = scmp.ne.s32.totalorder %s845, %s859
      %p861 = scmp.eq.s32.totalorder %s121, 0
      %p862 = por %p860, %p861
      %s864 = sadd.s32 %s863, 1
      %p867 = scmp.eq.s32.totalorder %s115, 1
      %p868 = scmp.ne.s32.totalorder %s863, %s865
      %p869 = scmp.eq.s32.totalorder %s115, 0
      %p870 = por %p868, %p869
      %p871 = scmp.ne.s32.totalorder %s863, %s865
      %p872 = scmp.eq.s32.totalorder %s120, 1
      %p873 = por %p871, %p872
      %p874 = scmp.ne.s32.totalorder %s865, %s866
      %p875 = scmp.eq.s32.totalorder %s120, 0
      %p876 = por %p874, %p875
      %p877 = scmp.ne.s32.totalorder %s865, %s866
      %p878 = scmp.eq.s32.totalorder %s121, 1
      %p879 = por %p877, %p878
      %p881 = scmp.ne.s32.totalorder %s866, %s880
      %p882 = scmp.eq.s32.totalorder %s121, 0
      %p883 = por %p881, %p882
      %s885 = sadd.s32 %s884, 1
      %p888 = scmp.eq.s32.totalorder %s115, 1
      %p889 = scmp.ne.s32.totalorder %s884, %s886
      %p890 = scmp.eq.s32.totalorder %s115, 0
      %p891 = por %p889, %p890
      %p892 = scmp.ne.s32.totalorder %s884, %s886
      %p893 = scmp.eq.s32.totalorder %s120, 1
      %p894 = por %p892, %p893
      %p895 = scmp.ne.s32.totalorder %s886, %s887
      %p896 = scmp.eq.s32.totalorder %s120, 0
      %p897 = por %p895, %p896
      %p898 = scmp.ne.s32.totalorder %s886, %s887
      %p899 = scmp.eq.s32.totalorder %s121, 1
      %p900 = por %p898, %p899
      %p902 = scmp.ne.s32.totalorder %s887, %s901
      %p903 = scmp.eq.s32.totalorder %s121, 0
      %p904 = por %p902, %p903
      %s906 = sadd.s32 %s905, 1
      %p909 = scmp.eq.s32.totalorder %s115, 1
      %p910 = scmp.ne.s32.totalorder %s905, %s907
      %p911 = scmp.eq.s32.totalorder %s115, 0
      %p912 = por %p910, %p911
      %p913 = scmp.ne.s32.totalorder %s905, %s907
      %p914 = scmp.eq.s32.totalorder %s120, 1
      %p915 = por %p913, %p914
      %p916 = scmp.ne.s32.totalorder %s907, %s908
      %p917 = scmp.eq.s32.totalorder %s120, 0
      %p918 = por %p916, %p917
      %p919 = scmp.ne.s32.totalorder %s907, %s908
      %p920 = scmp.eq.s32.totalorder %s121, 1
      %p921 = por %p919, %p920
      %p923 = scmp.ne.s32.totalorder %s908, %s922
      %p924 = scmp.eq.s32.totalorder %s121, 0
      %p925 = por %p923, %p924
      %s927 = sadd.s32 %s926, 1
      %p930 = scmp.eq.s32.totalorder %s115, 1
      %p931 = scmp.ne.s32.totalorder %s926, %s928
      %p932 = scmp.eq.s32.totalorder %s115, 0
      %p933 = por %p931, %p932
      %p934 = scmp.ne.s32.totalorder %s926, %s928
      %p935 = scmp.eq.s32.totalorder %s120, 1
      %p936 = por %p934, %p935
      %p937 = scmp.ne.s32.totalorder %s928, %s929
      %p938 = scmp.eq.s32.totalorder %s120, 0
      %p939 = por %p937, %p938
      %p940 = scmp.ne.s32.totalorder %s928, %s929
      %p941 = scmp.eq.s32.totalorder %s121, 1
      %p942 = por %p940, %p941
      %p944 = scmp.ne.s32.totalorder %s929, %s943
      %p945 = scmp.eq.s32.totalorder %s121, 0
      %p946 = por %p944, %p945
      %s948 = sadd.s32 %s947, 1
      %p951 = scmp.eq.s32.totalorder %s115, 1
      %p952 = scmp.ne.s32.totalorder %s947, %s949
      %p953 = scmp.eq.s32.totalorder %s115, 0
      %p954 = por %p952, %p953
      %p955 = scmp.ne.s32.totalorder %s947, %s949
      %p956 = scmp.eq.s32.totalorder %s120, 1
      %p957 = por %p955, %p956
      %p958 = scmp.ne.s32.totalorder %s949, %s950
      %p959 = scmp.eq.s32.totalorder %s120, 0
      %p960 = por %p958, %p959
      %p961 = scmp.ne.s32.totalorder %s949, %s950
      %p962 = scmp.eq.s32.totalorder %s121, 1
      %p963 = por %p961, %p962
      %p965 = scmp.ne.s32.totalorder %s950, %s964
      %p966 = scmp.eq.s32.totalorder %s121, 0
      %p967 = por %p965, %p966
      %s969 = sadd.s32 %s968, 1
      %p972 = scmp.eq.s32.totalorder %s115, 1
      %p973 = scmp.ne.s32.totalorder %s968, %s970
      %p974 = scmp.eq.s32.totalorder %s115, 0
      %p975 = por %p973, %p974
      %p976 = scmp.ne.s32.totalorder %s968, %s970
      %p977 = scmp.eq.s32.totalorder %s120, 1
      %p978 = por %p976, %p977
      %p979 = scmp.ne.s32.totalorder %s970, %s971
      %p980 = scmp.eq.s32.totalorder %s120, 0
      %p981 = por %p979, %p980
      %p982 = scmp.ne.s32.totalorder %s970, %s971
      %p983 = scmp.eq.s32.totalorder %s121, 1
      %p984 = por %p982, %p983
      %p986 = scmp.ne.s32.totalorder %s971, %s985
      %p987 = scmp.eq.s32.totalorder %s121, 0
      %p988 = por %p986, %p987
      %s990 = sadd.s32 %s989, 1
      %p993 = scmp.eq.s32.totalorder %s115, 1
      %p994 = scmp.ne.s32.totalorder %s989, %s991
      %p995 = scmp.eq.s32.totalorder %s115, 0
      %p996 = por %p994, %p995
      %p997 = scmp.ne.s32.totalorder %s989, %s991
      %p998 = scmp.eq.s32.totalorder %s120, 1
      %p999 = por %p997, %p998
      %p1000 = scmp.ne.s32.totalorder %s991, %s992
      %p1001 = scmp.eq.s32.totalorder %s120, 0
      %p1002 = por %p1000, %p1001
      %p1003 = scmp.ne.s32.totalorder %s991, %s992
      %p1004 = scmp.eq.s32.totalorder %s121, 1
      %p1005 = por %p1003, %p1004
      %p1007 = scmp.ne.s32.totalorder %s992, %s1006
      %p1008 = scmp.eq.s32.totalorder %s121, 0
      %p1009 = por %p1007, %p1008
      %s1011 = sadd.s32 %s1010, 1
      %p1014 = scmp.eq.s32.totalorder %s115, 1
      %p1015 = scmp.ne.s32.totalorder %s1010, %s1012
      %p1016 = scmp.eq.s32.totalorder %s115, 0
      %p1017 = por %p1015, %p1016
      %p1018 = scmp.ne.s32.totalorder %s1010, %s1012
      %p1019 = scmp.eq.s32.totalorder %s120, 1
      %p1020 = por %p1018, %p1019
      %p1021 = scmp.ne.s32.totalorder %s1012, %s1013
      %p1022 = scmp.eq.s32.totalorder %s120, 0
      %p1023 = por %p1021, %p1022
      %p1024 = scmp.ne.s32.totalorder %s1012, %s1013
      %p1025 = scmp.eq.s32.totalorder %s121, 1
      %p1026 = por %p1024, %p1025
      %p1028 = scmp.ne.s32.totalorder %s1013, %s1027
      %p1029 = scmp.eq.s32.totalorder %s121, 0
      %p1030 = por %p1028, %p1029
      %s1032 = sadd.s32 %s1031, 1
      %p1035 = scmp.eq.s32.totalorder %s115, 1
      %p1036 = scmp.ne.s32.totalorder %s1031, %s1033
      %p1037 = scmp.eq.s32.totalorder %s115, 0
      %p1038 = por %p1036, %p1037
      %p1039 = scmp.ne.s32.totalorder %s1031, %s1033
      %p1040 = scmp.eq.s32.totalorder %s120, 1
      %p1041 = por %p1039, %p1040
      %p1042 = scmp.ne.s32.totalorder %s1033, %s1034
      %p1043 = scmp.eq.s32.totalorder %s120, 0
      %p1044 = por %p1042, %p1043
      %p1045 = scmp.ne.s32.totalorder %s1033, %s1034
      %p1046 = scmp.eq.s32.totalorder %s121, 1
      %p1047 = por %p1045, %p1046
      %p1049 = scmp.ne.s32.totalorder %s1034, %s1048
      %p1050 = scmp.eq.s32.totalorder %s121, 0
      %p1051 = por %p1049, %p1050
      %s1053 = sadd.s32 %s1052, 1
      %p1056 = scmp.eq.s32.totalorder %s115, 1
      %p1057 = scmp.ne.s32.totalorder %s1052, %s1054
      %p1058 = scmp.eq.s32.totalorder %s115, 0
      %p1059 = por %p1057, %p1058
      %p1060 = scmp.ne.s32.totalorder %s1052, %s1054
      %p1061 = scmp.eq.s32.totalorder %s120, 1
      %p1062 = por %p1060, %p1061
      %p1063 = scmp.ne.s32.totalorder %s1054, %s1055
      %p1064 = scmp.eq.s32.totalorder %s120, 0
      %p1065 = por %p1063, %p1064
      %p1066 = scmp.ne.s32.totalorder %s1054, %s1055
      %p1067 = scmp.eq.s32.totalorder %s121, 1
      %p1068 = por %p1066, %p1067
      %p1070 = scmp.ne.s32.totalorder %s1055, %s1069
      %p1071 = scmp.eq.s32.totalorder %s121, 0
      %p1072 = por %p1070, %p1071
      %s1074 = sadd.s32 %s1073, 1
      %p1077 = scmp.eq.s32.totalorder %s115, 1
      %p1078 = scmp.ne.s32.totalorder %s1073, %s1075
      %p1079 = scmp.eq.s32.totalorder %s115, 0
      %p1080 = por %p1078, %p1079
      %p1081 = scmp.ne.s32.totalorder %s1073, %s1075
      %p1082 = scmp.eq.s32.totalorder %s120, 1
      %p1083 = por %p1081, %p1082
      %p1084 = scmp.ne.s32.totalorder %s1075, %s1076
      %p1085 = scmp.eq.s32.totalorder %s120, 0
      %p1086 = por %p1084, %p1085
      %p1087 = scmp.ne.s32.totalorder %s1075, %s1076
      %p1088 = scmp.eq.s32.totalorder %s121, 1
      %p1089 = por %p1087, %p1088
      %p1091 = scmp.ne.s32.totalorder %s1076, %s1090
      %p1092 = scmp.eq.s32.totalorder %s121, 0
      %p1093 = por %p1091, %p1092
      %s1095 = sadd.s32 %s1094, 1
      %p1098 = scmp.eq.s32.totalorder %s115, 1
      %p1099 = scmp.ne.s32.totalorder %s1094, %s1096
      %p1100 = scmp.eq.s32.totalorder %s115, 0
      %p1101 = por %p1099, %p1100
      %p1102 = scmp.ne.s32.totalorder %s1094, %s1096
      %p1103 = scmp.eq.s32.totalorder %s120, 1
      %p1104 = por %p1102, %p1103
      %p1105 = scmp.ne.s32.totalorder %s1096, %s1097
      %p1106 = scmp.eq.s32.totalorder %s120, 0
      %p1107 = por %p1105, %p1106
      %p1108 = scmp.ne.s32.totalorder %s1096, %s1097
      %p1109 = scmp.eq.s32.totalorder %s121, 1
      %p1110 = por %p1108, %p1109
      %p1112 = scmp.ne.s32.totalorder %s1097, %s1111
      %p1113 = scmp.eq.s32.totalorder %s121, 0
      %p1114 = por %p1112, %p1113
      %s1116 = sadd.s32 %s1115, 1
      %p1119 = scmp.eq.s32.totalorder %s115, 1
      %p1120 = scmp.ne.s32.totalorder %s1115, %s1117
      %p1121 = scmp.eq.s32.totalorder %s115, 0
      %p1122 = por %p1120, %p1121
      %p1123 = scmp.ne.s32.totalorder %s1115, %s1117
      %p1124 = scmp.eq.s32.totalorder %s120, 1
      %p1125 = por %p1123, %p1124
      %p1126 = scmp.ne.s32.totalorder %s1117, %s1118
      %p1127 = scmp.eq.s32.totalorder %s120, 0
      %p1128 = por %p1126, %p1127
      %p1129 = scmp.ne.s32.totalorder %s1117, %s1118
      %p1130 = scmp.eq.s32.totalorder %s121, 1
      %p1131 = por %p1129, %p1130
      %p1133 = scmp.ne.s32.totalorder %s1118, %s1132
      %p1134 = scmp.eq.s32.totalorder %s121, 0
      %p1135 = por %p1133, %p1134
      %s1137 = sadd.s32 %s1136, 1
      %p1140 = scmp.eq.s32.totalorder %s115, 1
      %p1141 = scmp.ne.s32.totalorder %s1136, %s1138
      %p1142 = scmp.eq.s32.totalorder %s115, 0
      %p1143 = por %p1141, %p1142
      %p1144 = scmp.ne.s32.totalorder %s1136, %s1138
      %p1145 = scmp.eq.s32.totalorder %s120, 1
      %p1146 = por %p1144, %p1145
      %p1147 = scmp.ne.s32.totalorder %s1138, %s1139
      %p1148 = scmp.eq.s32.totalorder %s120, 0
      %p1149 = por %p1147, %p1148
      %p1150 = scmp.ne.s32.totalorder %s1138, %s1139
      %p1151 = scmp.eq.s32.totalorder %s121, 1
      %p1152 = por %p1150, %p1151
      %p1154 = scmp.ne.s32.totalorder %s1139, %s1153
      %p1155 = scmp.eq.s32.totalorder %s121, 0
      %p1156 = por %p1154, %p1155
      %s1158 = sadd.s32 %s1157, 1
      %p1161 = scmp.eq.s32.totalorder %s115, 1
      %p1162 = scmp.ne.s32.totalorder %s1157, %s1159
      %p1163 = scmp.eq.s32.totalorder %s115, 0
      %p1164 = por %p1162, %p1163
      %p1165 = scmp.ne.s32.totalorder %s1157, %s1159
      %p1166 = scmp.eq.s32.totalorder %s120, 1
      %p1167 = por %p1165, %p1166
      %p1168 = scmp.ne.s32.totalorder %s1159, %s1160
      %p1169 = scmp.eq.s32.totalorder %s120, 0
      %p1170 = por %p1168, %p1169
      %p1171 = scmp.ne.s32.totalorder %s1159, %s1160
      %p1172 = scmp.eq.s32.totalorder %s121, 1
      %p1173 = por %p1171, %p1172
      %p1175 = scmp.ne.s32.totalorder %s1160, %s1174
      %p1176 = scmp.eq.s32.totalorder %s121, 0
      %p1177 = por %p1175, %p1176
      %s1178 = ssub.s32 %s115, %s122
      %p1179 = scmp.eq.s32.totalorder %s1178, 0
      %s1181 = sadd.s32 %s1180, 1
      %s1182 = scalar_select %p1179, %s1180, %s1181
      %p1185 = pneg %p1179
      %p1186 = scmp.eq.s32.totalorder %s115, 1
      %p1187 = por %p1185, %p1186
      %p1188 = scmp.ne.s32.totalorder %s1180, %s1183
      %p1189 = scmp.eq.s32.totalorder %s115, 0
      %p1190 = por %p1188, %p1189
      %p1191 = scmp.ne.s32.totalorder %s1180, %s1183
      %p1192 = scmp.eq.s32.totalorder %s120, 1
      %p1193 = por %p1191, %p1192
      %p1194 = scmp.ne.s32.totalorder %s1183, %s1184
      %p1195 = scmp.eq.s32.totalorder %s120, 0
      %p1196 = por %p1194, %p1195
      %p1197 = scmp.ne.s32.totalorder %s1183, %s1184
      %p1198 = scmp.eq.s32.totalorder %s121, 1
      %p1199 = por %p1197, %p1198
      %p1201 = scmp.ne.s32.totalorder %s1184, %s1200
      %p1202 = scmp.eq.s32.totalorder %s121, 0
      %p1203 = por %p1201, %p1202
      %p1204 = scmp.le.s32.totalorder 1, %s115
      %p1205 = scmp.lt.s32.totalorder %s115, 3
      %p1206 = pnand %p1204, %p1205
      %p1207 = pneg %p1206
      // Predicated region
      $region9: #{h3conformer_hybrid_block.1} parent=5 // pred_check
        _
      $region10: #{h3conformer_hybrid_block.1} parent=5 // pred_check_branch
        %1209 = sbr.rel (%p1206) target = $region12
      $region11: #{h3conformer_hybrid_block.1} parent=5 // pred_region
        %s1210 = ssub.s32 %s115, 1
        // Predicated region
        $region13: #{h3conformer_hybrid_block.1} parent=11 // pred_check
          %p1211 = pneg %p162
        $region14: #{h3conformer_hybrid_block.1} parent=11 // pred_check_branch
          %1213 = sbr.rel (%p1211) target = $region16
        $region15: #{h3conformer_hybrid_block.1} parent=11 // pred_region
          _
        $region16: #{h3conformer_hybrid_block.1} parent=11 // pred_fallthru
          _
        // Predicated region
        $region17: #{h3conformer_hybrid_block.1} parent=11 // pred_check
          %p1214 = pneg %p183
        $region18: #{h3conformer_hybrid_block.1} parent=11 // pred_check_branch
          %1216 = sbr.rel (%p1214) target = $region20
        $region19: #{h3conformer_hybrid_block.1} parent=11 // pred_region
          _
        $region20: #{h3conformer_hybrid_block.1} parent=11 // pred_fallthru
          _
        // Predicated region
        $region21: #{h3conformer_hybrid_block.1} parent=11 // pred_check
          %p1217 = pneg %p204
        $region22: #{h3conformer_hybrid_block.1} parent=11 // pred_check_branch
          %1219 = sbr.rel (%p1217) target = $region24
        $region23: #{h3conformer_hybrid_block.1} parent=11 // pred_region
          _
        $region24: #{h3conformer_hybrid_block.1} parent=11 // pred_fallthru
          _
        // Predicated region
        $region25: #{h3conformer_hybrid_block.1} parent=11 // pred_check
          %p1220 = pneg %p225
        $region26: #{h3conformer_hybrid_block.1} parent=11 // pred_check_branch
          %1222 = sbr.rel (%p1220) target = $region28
        $region27: #{h3conformer_hybrid_block.1} parent=11 // pred_region
          _
        $region28: #{h3conformer_hybrid_block.1} parent=11 // pred_fallthru
          _
        // Predicated region
        $region29: #{h3conformer_hybrid_block.1} parent=11 // pred_check
          %p1223 = pneg %p246
        $region30: #{h3conformer_hybrid_block.1} parent=11 // pred_check_branch
          %1225 = sbr.rel (%p1223) target = $region32
        $region31: #{h3conformer_hybrid_block.1} parent=11 // pred_region
          _
        $region32: #{h3conformer_hybrid_block.1} parent=11 // pred_fallthru
          _
        // Predicated region
        $region33: #{h3conformer_hybrid_block.1} parent=11 // pred_check
          %p1226 = pneg %p267
        $region34: #{h3conformer_hybrid_block.1} parent=11 // pred_check_branch
          %1228 = sbr.rel (%p1226) target = $region36
        $region35: #{h3conformer_hybrid_block.1} parent=11 // pred_region
          _
        $region36: #{h3conformer_hybrid_block.1} parent=11 // pred_fallthru
          _
        // Predicated region
        $region37: #{h3conformer_hybrid_block.1} parent=11 // pred_check
          %p1229 = pneg %p288
        $region38: #{h3conformer_hybrid_block.1} parent=11 // pred_check_branch
          %1231 = sbr.rel (%p1229) target = $region40
        $region39: #{h3conformer_hybrid_block.1} parent=11 // pred_region
          _
        $region40: #{h3conformer_hybrid_block.1} parent=11 // pred_fallthru
          _
        // Predicated region
        $region41: #{h3conformer_hybrid_block.1} parent=11 // pred_check
          %p1232 = pneg %p309
        $region42: #{h3conformer_hybrid_block.1} parent=11 // pred_check_branch
          %1234 = sbr.rel (%p1232) target = $region44
        $region43: #{h3conformer_hybrid_block.1} parent=11 // pred_region
          _
        $region44: #{h3conformer_hybrid_block.1} parent=11 // pred_fallthru
          _
        // Predicated region
        $region45: #{h3conformer_hybrid_block.1} parent=11 // pred_check
          %p1235 = pneg %p330
        $region46: #{h3conformer_hybrid_block.1} parent=11 // pred_check_branch
          %1237 = sbr.rel (%p1235) target = $region48
        $region47: #{h3conformer_hybrid_block.1} parent=11 // pred_region
          _
        $region48: #{h3conformer_hybrid_block.1} parent=11 // pred_fallthru
          _
        // Predicated region
        $region49: #{h3conformer_hybrid_block.1} parent=11 // pred_check
          %p1238 = pneg %p351
        $region50: #{h3conformer_hybrid_block.1} parent=11 // pred_check_branch
          %1240 = sbr.rel (%p1238) target = $region52
        $region51: #{h3conformer_hybrid_block.1} parent=11 // pred_region
          _
        $region52: #{h3conformer_hybrid_block.1} parent=11 // pred_fallthru
          _
        // Predicated region
        $region53: #{h3conformer_hybrid_block.1} parent=11 // pred_check
          %p1241 = pneg %p372
        $region54: #{h3conformer_hybrid_block.1} parent=11 // pred_check_branch
          %1243 = sbr.rel (%p1241) target = $region56
        $region55: #{h3conformer_hybrid_block.1} parent=11 // pred_region
          _
        $region56: #{h3conformer_hybrid_block.1} parent=11 // pred_fallthru
          _
        // Predicated region
        $region57: #{h3conformer_hybrid_block.1} parent=11 // pred_check
          %p1244 = pneg %p393
        $region58: #{h3conformer_hybrid_block.1} parent=11 // pred_check_branch
          %1246 = sbr.rel (%p1244) target = $region60
        $region59: #{h3conformer_hybrid_block.1} parent=11 // pred_region
          _
        $region60: #{h3conformer_hybrid_block.1} parent=11 // pred_fallthru
          _
        // Predicated region
        $region61: #{h3conformer_hybrid_block.1} parent=11 // pred_check
          %p1247 = pneg %p414
        $region62: #{h3conformer_hybrid_block.1} parent=11 // pred_check_branch
          %1249 = sbr.rel (%p1247) target = $region64
        $region63: #{h3conformer_hybrid_block.1} parent=11 // pred_region
          _
        $region64: #{h3conformer_hybrid_block.1} parent=11 // pred_fallthru
          _
        // Predicated region
        $region65: #{h3conformer_hybrid_block.1} parent=11 // pred_check
          %p1250 = pneg %p435
        $region66: #{h3conformer_hybrid_block.1} parent=11 // pred_check_branch
          %1252 = sbr.rel (%p1250) target = $region68
        $region67: #{h3conformer_hybrid_block.1} parent=11 // pred_region
          _
        $region68: #{h3conformer_hybrid_block.1} parent=11 // pred_fallthru
          _
        // Predicated region
        $region69: #{h3conformer_hybrid_block.1} parent=11 // pred_check
          %p1253 = pneg %p456
        $region70: #{h3conformer_hybrid_block.1} parent=11 // pred_check_branch
          %1255 = sbr.rel (%p1253) target = $region72
        $region71: #{h3conformer_hybrid_block.1} parent=11 // pred_region
          _
        $region72: #{h3conformer_hybrid_block.1} parent=11 // pred_fallthru
          _
        // Predicated region
        $region73: #{h3conformer_hybrid_block.1} parent=11 // pred_check
          %p1256 = pneg %p477
        $region74: #{h3conformer_hybrid_block.1} parent=11 // pred_check_branch
          %1258 = sbr.rel (%p1256) target = $region76
        $region75: #{h3conformer_hybrid_block.1} parent=11 // pred_region
          _
        $region76: #{h3conformer_hybrid_block.1} parent=11 // pred_fallthru
          _
        // Predicated region
        $region77: #{h3conformer_hybrid_block.1} parent=11 // pred_check
          %p1259 = pneg %p498
        $region78: #{h3conformer_hybrid_block.1} parent=11 // pred_check_branch
          %1261 = sbr.rel (%p1259) target = $region80
        $region79: #{h3conformer_hybrid_block.1} parent=11 // pred_region
          _
        $region80: #{h3conformer_hybrid_block.1} parent=11 // pred_fallthru
          _
        // Predicated region
        $region81: #{h3conformer_hybrid_block.1} parent=11 // pred_check
          %p1262 = pneg %p519
        $region82: #{h3conformer_hybrid_block.1} parent=11 // pred_check_branch
          %1264 = sbr.rel (%p1262) target = $region84
        $region83: #{h3conformer_hybrid_block.1} parent=11 // pred_region
          _
        $region84: #{h3conformer_hybrid_block.1} parent=11 // pred_fallthru
          _
        // Predicated region
        $region85: #{h3conformer_hybrid_block.1} parent=11 // pred_check
          %p1265 = pneg %p540
        $region86: #{h3conformer_hybrid_block.1} parent=11 // pred_check_branch
          %1267 = sbr.rel (%p1265) target = $region88
        $region87: #{h3conformer_hybrid_block.1} parent=11 // pred_region
          _
        $region88: #{h3conformer_hybrid_block.1} parent=11 // pred_fallthru
          _
        // Predicated region
        $region89: #{h3conformer_hybrid_block.1} parent=11 // pred_check
          %p1268 = pneg %p561
        $region90: #{h3conformer_hybrid_block.1} parent=11 // pred_check_branch
          %1270 = sbr.rel (%p1268) target = $region92
        $region91: #{h3conformer_hybrid_block.1} parent=11 // pred_region
          _
        $region92: #{h3conformer_hybrid_block.1} parent=11 // pred_fallthru
          _
        // Predicated region
        $region93: #{h3conformer_hybrid_block.1} parent=11 // pred_check
          %p1271 = pneg %p582
        $region94: #{h3conformer_hybrid_block.1} parent=11 // pred_check_branch
          %1273 = sbr.rel (%p1271) target = $region96
        $region95: #{h3conformer_hybrid_block.1} parent=11 // pred_region
          _
        $region96: #{h3conformer_hybrid_block.1} parent=11 // pred_fallthru
          _
        // Predicated region
        $region97: #{h3conformer_hybrid_block.1} parent=11 // pred_check
          %p1274 = pneg %p603
        $region98: #{h3conformer_hybrid_block.1} parent=11 // pred_check_branch
          %1276 = sbr.rel (%p1274) target = $region100
        $region99: #{h3conformer_hybrid_block.1} parent=11 // pred_region
          _
        $region100: #{h3conformer_hybrid_block.1} parent=11 // pred_fallthru
          _
        // Predicated region
        $region101: #{h3conformer_hybrid_block.1} parent=11 // pred_check
          %p1277 = pneg %p624
        $region102: #{h3conformer_hybrid_block.1} parent=11 // pred_check_branch
          %1279 = sbr.rel (%p1277) target = $region104
        $region103: #{h3conformer_hybrid_block.1} parent=11 // pred_region
          _
        $region104: #{h3conformer_hybrid_block.1} parent=11 // pred_fallthru
          _
        // Predicated region
        $region105: #{h3conformer_hybrid_block.1} parent=11 // pred_check
          %p1280 = pneg %p645
        $region106: #{h3conformer_hybrid_block.1} parent=11 // pred_check_branch
          %1282 = sbr.rel (%p1280) target = $region108
        $region107: #{h3conformer_hybrid_block.1} parent=11 // pred_region
          _
        $region108: #{h3conformer_hybrid_block.1} parent=11 // pred_fallthru
          _
        // Predicated region
        $region109: #{h3conformer_hybrid_block.1} parent=11 // pred_check
          %p1283 = pneg %p666
        $region110: #{h3conformer_hybrid_block.1} parent=11 // pred_check_branch
          %1285 = sbr.rel (%p1283) target = $region112
        $region111: #{h3conformer_hybrid_block.1} parent=11 // pred_region
          _
        $region112: #{h3conformer_hybrid_block.1} parent=11 // pred_fallthru
          _
        // Predicated region
        $region113: #{h3conformer_hybrid_block.1} parent=11 // pred_check
          %p1286 = pneg %p687
        $region114: #{h3conformer_hybrid_block.1} parent=11 // pred_check_branch
          %1288 = sbr.rel (%p1286) target = $region116
        $region115: #{h3conformer_hybrid_block.1} parent=11 // pred_region
          _
        $region116: #{h3conformer_hybrid_block.1} parent=11 // pred_fallthru
          _
        // Predicated region
        $region117: #{h3conformer_hybrid_block.1} parent=11 // pred_check
          %p1289 = pneg %p708
        $region118: #{h3conformer_hybrid_block.1} parent=11 // pred_check_branch
          %1291 = sbr.rel (%p1289) target = $region120
        $region119: #{h3conformer_hybrid_block.1} parent=11 // pred_region
          _
        $region120: #{h3conformer_hybrid_block.1} parent=11 // pred_fallthru
          _
        // Predicated region
        $region121: #{h3conformer_hybrid_block.1} parent=11 // pred_check
          %p1292 = pneg %p729
        $region122: #{h3conformer_hybrid_block.1} parent=11 // pred_check_branch
          %1294 = sbr.rel (%p1292) target = $region124
        $region123: #{h3conformer_hybrid_block.1} parent=11 // pred_region
          _
        $region124: #{h3conformer_hybrid_block.1} parent=11 // pred_fallthru
          _
        // Predicated region
        $region125: #{h3conformer_hybrid_block.1} parent=11 // pred_check
          %p1295 = pneg %p750
        $region126: #{h3conformer_hybrid_block.1} parent=11 // pred_check_branch
          %1297 = sbr.rel (%p1295) target = $region128
        $region127: #{h3conformer_hybrid_block.1} parent=11 // pred_region
          _
        $region128: #{h3conformer_hybrid_block.1} parent=11 // pred_fallthru
          _
        // Predicated region
        $region129: #{h3conformer_hybrid_block.1} parent=11 // pred_check
          %p1298 = pneg %p771
        $region130: #{h3conformer_hybrid_block.1} parent=11 // pred_check_branch
          %1300 = sbr.rel (%p1298) target = $region132
        $region131: #{h3conformer_hybrid_block.1} parent=11 // pred_region
          _
        $region132: #{h3conformer_hybrid_block.1} parent=11 // pred_fallthru
          _
        // Predicated region
        $region133: #{h3conformer_hybrid_block.1} parent=11 // pred_check
          %p1301 = pneg %p792
        $region134: #{h3conformer_hybrid_block.1} parent=11 // pred_check_branch
          %1303 = sbr.rel (%p1301) target = $region136
        $region135: #{h3conformer_hybrid_block.1} parent=11 // pred_region
          _
        $region136: #{h3conformer_hybrid_block.1} parent=11 // pred_fallthru
          _
        // Predicated region
        $region137: #{h3conformer_hybrid_block.1} parent=11 // pred_check
          %p1304 = pneg %p813
        $region138: #{h3conformer_hybrid_block.1} parent=11 // pred_check_branch
          %1306 = sbr.rel (%p1304) target = $region140
        $region139: #{h3conformer_hybrid_block.1} parent=11 // pred_region
          _
        $region140: #{h3conformer_hybrid_block.1} parent=11 // pred_fallthru
          _
        // Predicated region
        $region141: #{h3conformer_hybrid_block.1} parent=11 // pred_check
          %p1307 = pneg %p834
        $region142: #{h3conformer_hybrid_block.1} parent=11 // pred_check_branch
          %1309 = sbr.rel (%p1307) target = $region144
        $region143: #{h3conformer_hybrid_block.1} parent=11 // pred_region
          _
        $region144: #{h3conformer_hybrid_block.1} parent=11 // pred_fallthru
          _
        // Predicated region
        $region145: #{h3conformer_hybrid_block.1} parent=11 // pred_check
          %p1310 = pneg %p855
        $region146: #{h3conformer_hybrid_block.1} parent=11 // pred_check_branch
          %1312 = sbr.rel (%p1310) target = $region148
        $region147: #{h3conformer_hybrid_block.1} parent=11 // pred_region
          _
        $region148: #{h3conformer_hybrid_block.1} parent=11 // pred_fallthru
          _
        // Predicated region
        $region149: #{h3conformer_hybrid_block.1} parent=11 // pred_check
          %p1313 = pneg %p876
        $region150: #{h3conformer_hybrid_block.1} parent=11 // pred_check_branch
          %1315 = sbr.rel (%p1313) target = $region152
        $region151: #{h3conformer_hybrid_block.1} parent=11 // pred_region
          _
        $region152: #{h3conformer_hybrid_block.1} parent=11 // pred_fallthru
          _
        // Predicated region
        $region153: #{h3conformer_hybrid_block.1} parent=11 // pred_check
          %p1316 = pneg %p897
        $region154: #{h3conformer_hybrid_block.1} parent=11 // pred_check_branch
          %1318 = sbr.rel (%p1316) target = $region156
        $region155: #{h3conformer_hybrid_block.1} parent=11 // pred_region
          _
        $region156: #{h3conformer_hybrid_block.1} parent=11 // pred_fallthru
          _
        // Predicated region
        $region157: #{h3conformer_hybrid_block.1} parent=11 // pred_check
          %p1319 = pneg %p918
        $region158: #{h3conformer_hybrid_block.1} parent=11 // pred_check_branch
          %1321 = sbr.rel (%p1319) target = $region160
        $region159: #{h3conformer_hybrid_block.1} parent=11 // pred_region
          %1323 = vsyncadd [#allocation4], 0
          %s1325 = sshll.u32 %s75, 4
          %s1326 = int_to_ptr.hbm [resolvable:$true] %s1325
          %s1327 = sshll.u32 [#allocation3], 4
          %s1328 = int_to_ptr.vmem [resolvable:$true] %s1327
          %1330 = dma.hbm_to_vmem [thread:$0]  %s1326, 16, %s1328, [#allocation4]
        $region160: #{h3conformer_hybrid_block.1} parent=11 // pred_fallthru
          _
        // Predicated region
        $region161: #{h3conformer_hybrid_block.1} parent=11 // pred_check
          %p1331 = pneg %p939
        $region162: #{h3conformer_hybrid_block.1} parent=11 // pred_check_branch
          %1333 = sbr.rel (%p1331) target = $region164
        $region163: #{h3conformer_hybrid_block.1} parent=11 // pred_region
          %1335 = vsyncadd [#allocation7], 0
          %s1337 = sshll.u32 %s77, 4
          %s1338 = int_to_ptr.hbm [resolvable:$true] %s1337
          %s1339 = sshll.u32 [#allocation6], 4
          %s1340 = int_to_ptr.vmem [resolvable:$true] %s1339
          %1342 = dma.hbm_to_vmem [thread:$0]  %s1338, 16, %s1340, [#allocation7]
        $region164: #{h3conformer_hybrid_block.1} parent=11 // pred_fallthru
          _
        // Predicated region
        $region165: #{h3conformer_hybrid_block.1} parent=11 // pred_check
          %p1343 = pneg %p960
        $region166: #{h3conformer_hybrid_block.1} parent=11 // pred_check_branch
          %1345 = sbr.rel (%p1343) target = $region168
        $region167: #{h3conformer_hybrid_block.1} parent=11 // pred_region
          %1347 = vsyncadd [#allocation7], 0
          %s1349 = sshll.u32 %s79, 4
          %s1350 = int_to_ptr.hbm [resolvable:$true] %s1349
          %s1351 = sshll.u32 [#allocation8], 4
          %s1352 = int_to_ptr.vmem [resolvable:$true] %s1351
          %1354 = dma.hbm_to_vmem [thread:$0]  %s1350, 16, %s1352, [#allocation7]
        $region168: #{h3conformer_hybrid_block.1} parent=11 // pred_fallthru
          _
        // Predicated region
        $region169: #{h3conformer_hybrid_block.1} parent=11 // pred_check
          %p1355 = pneg %p981
        $region170: #{h3conformer_hybrid_block.1} parent=11 // pred_check_branch
          %1357 = sbr.rel (%p1355) target = $region172
        $region171: #{h3conformer_hybrid_block.1} parent=11 // pred_region
          _
        $region172: #{h3conformer_hybrid_block.1} parent=11 // pred_fallthru
          _
        // Predicated region
        $region173: #{h3conformer_hybrid_block.1} parent=11 // pred_check
          %p1358 = pneg %p1002
        $region174: #{h3conformer_hybrid_block.1} parent=11 // pred_check_branch
          %1360 = sbr.rel (%p1358) target = $region176
        $region175: #{h3conformer_hybrid_block.1} parent=11 // pred_region
          %1362 = vsyncadd [#allocation10], 0
          %s1364 = sshll.u32 %s83, 4
          %s1365 = int_to_ptr.hbm [resolvable:$true] %s1364
          %s1366 = sshll.u32 [#allocation9], 4
          %s1367 = int_to_ptr.vmem [resolvable:$true] %s1366
          %1369 = dma.hbm_to_vmem [thread:$0]  %s1365, 16, %s1367, [#allocation10]
        $region176: #{h3conformer_hybrid_block.1} parent=11 // pred_fallthru
          _
        // Predicated region
        $region177: #{h3conformer_hybrid_block.1} parent=11 // pred_check
          %p1370 = pneg %p1023
        $region178: #{h3conformer_hybrid_block.1} parent=11 // pred_check_branch
          %1372 = sbr.rel (%p1370) target = $region180
        $region179: #{h3conformer_hybrid_block.1} parent=11 // pred_region
          _
        $region180: #{h3conformer_hybrid_block.1} parent=11 // pred_fallthru
          _
        // Predicated region
        $region181: #{h3conformer_hybrid_block.1} parent=11 // pred_check
          %p1373 = pneg %p1044
        $region182: #{h3conformer_hybrid_block.1} parent=11 // pred_check_branch
          %1375 = sbr.rel (%p1373) target = $region184
        $region183: #{h3conformer_hybrid_block.1} parent=11 // pred_region
          %1377 = vsyncadd [#allocation10], 0
          %s1379 = sshll.u32 %s87, 4
          %s1380 = int_to_ptr.hbm [resolvable:$true] %s1379
          %s1381 = sshll.u32 [#allocation11], 4
          %s1382 = int_to_ptr.vmem [resolvable:$true] %s1381
          %1384 = dma.hbm_to_vmem [thread:$0]  %s1380, 16, %s1382, [#allocation10]
        $region184: #{h3conformer_hybrid_block.1} parent=11 // pred_fallthru
          _
        // Predicated region
        $region185: #{h3conformer_hybrid_block.1} parent=11 // pred_check
          %p1385 = pneg %p1065
        $region186: #{h3conformer_hybrid_block.1} parent=11 // pred_check_branch
          %1387 = sbr.rel (%p1385) target = $region188
        $region187: #{h3conformer_hybrid_block.1} parent=11 // pred_region
          _
        $region188: #{h3conformer_hybrid_block.1} parent=11 // pred_fallthru
          _
        // Predicated region
        $region189: #{h3conformer_hybrid_block.1} parent=11 // pred_check
          %p1388 = pneg %p1086
        $region190: #{h3conformer_hybrid_block.1} parent=11 // pred_check_branch
          %1390 = sbr.rel (%p1388) target = $region192
        $region191: #{h3conformer_hybrid_block.1} parent=11 // pred_region
          %1392 = vsyncadd [#allocation13], 0
          %s1394 = sshll.u32 %s91, 4
          %s1395 = int_to_ptr.hbm [resolvable:$true] %s1394
          %s1396 = sshll.u32 [#allocation12], 4
          %s1397 = int_to_ptr.vmem [resolvable:$true] %s1396
          %1399 = dma.hbm_to_vmem [thread:$0]  %s1395, 16, %s1397, [#allocation13]
        $region192: #{h3conformer_hybrid_block.1} parent=11 // pred_fallthru
          _
        // Predicated region
        $region193: #{h3conformer_hybrid_block.1} parent=11 // pred_check
          %p1400 = pneg %p1107
        $region194: #{h3conformer_hybrid_block.1} parent=11 // pred_check_branch
          %1402 = sbr.rel (%p1400) target = $region196
        $region195: #{h3conformer_hybrid_block.1} parent=11 // pred_region
          _
        $region196: #{h3conformer_hybrid_block.1} parent=11 // pred_fallthru
          _
        // Predicated region
        $region197: #{h3conformer_hybrid_block.1} parent=11 // pred_check
          %p1403 = pneg %p1128
        $region198: #{h3conformer_hybrid_block.1} parent=11 // pred_check_branch
          %1405 = sbr.rel (%p1403) target = $region200
        $region199: #{h3conformer_hybrid_block.1} parent=11 // pred_region
          %1407 = vsyncadd [#allocation13], 0
          %s1409 = sshll.u32 %s95, 4
          %s1410 = int_to_ptr.hbm [resolvable:$true] %s1409
          %s1411 = sshll.u32 [#allocation14], 4
          %s1412 = int_to_ptr.vmem [resolvable:$true] %s1411
          %1414 = dma.hbm_to_vmem [thread:$0]  %s1410, 16, %s1412, [#allocation13]
        $region200: #{h3conformer_hybrid_block.1} parent=11 // pred_fallthru
          _
        // Predicated region
        $region201: #{h3conformer_hybrid_block.1} parent=11 // pred_check
          %p1415 = pneg %p1149
        $region202: #{h3conformer_hybrid_block.1} parent=11 // pred_check_branch
          %1417 = sbr.rel (%p1415) target = $region204
        $region203: #{h3conformer_hybrid_block.1} parent=11 // pred_region
          %1419 = vsyncadd [#allocation16], 0
          %s1421 = sshll.u32 %s97, 4
          %s1422 = int_to_ptr.hbm [resolvable:$true] %s1421
          %s1423 = sshll.u32 [#allocation15], 4
          %s1424 = int_to_ptr.vmem [resolvable:$true] %s1423
          %1426 = dma.hbm_to_vmem [thread:$0]  %s1422, 16, %s1424, [#allocation16]
        $region204: #{h3conformer_hybrid_block.1} parent=11 // pred_fallthru
          _
        // Predicated region
        $region205: #{h3conformer_hybrid_block.1} parent=11 // pred_check
          %p1427 = pneg %p1170
        $region206: #{h3conformer_hybrid_block.1} parent=11 // pred_check_branch
          %1429 = sbr.rel (%p1427) target = $region208
        $region207: #{h3conformer_hybrid_block.1} parent=11 // pred_region
          %1431 = vsyncadd [#allocation16], 0
          %s1433 = sshll.u32 %s99, 4
          %s1434 = int_to_ptr.hbm [resolvable:$true] %s1433
          %s1435 = sshll.u32 [#allocation17], 4
          %s1436 = int_to_ptr.vmem [resolvable:$true] %s1435
          %1438 = dma.hbm_to_vmem [thread:$0]  %s1434, 16, %s1436, [#allocation16]
        $region208: #{h3conformer_hybrid_block.1} parent=11 // pred_fallthru
          _
      $region12: #{h3conformer_hybrid_block.1} parent=5 // pred_fallthru
        _
      %p1439 = scmp.lt.s32.totalorder %s115, 2
      // Predicated region
      $region209: #{h3conformer_hybrid_block.1} parent=5 // pred_check
        %p1440 = pneg %p1439
      $region210: #{h3conformer_hybrid_block.1} parent=5 // pred_check_branch
        %1442 = sbr.rel (%p1440) target = $region212
      $region211: #{h3conformer_hybrid_block.1} parent=5 // pred_region
        // Predicated region
        $region213: #{h3conformer_hybrid_block.1} parent=211 // pred_check
          %p1443 = pneg %p135
        $region214: #{h3conformer_hybrid_block.1} parent=211 // pred_check_branch
          %1445 = sbr.rel (%p1443) target = $region216
        $region215: #{h3conformer_hybrid_block.1} parent=211 // pred_region
          %p1446 = scmp.lt.s32.totalorder %s115, 1
          %s1447 = scalar_select %p1446, %s115, 1
          %s1448 = smul.addr %s1447, 2
          %s1449 = smul.addr %s1448, 8
          %s1450 = scalar_lea.vmem %s1, %s1449
        $region216: #{h3conformer_hybrid_block.1} parent=211 // pred_fallthru
          _
      $region212: #{h3conformer_hybrid_block.1} parent=5 // pred_fallthru
        _
      %p1451 = scmp.le.s32.totalorder 1, %s115
      %p1452 = scmp.lt.s32.totalorder %s115, 3
      %p1453 = pnand %p1451, %p1452
      %p1454 = pneg %p1453
      // Predicated region
      $region217: #{h3conformer_hybrid_block.1} parent=5 // pred_check
        _
      $region218: #{h3conformer_hybrid_block.1} parent=5 // pred_check_branch
        %1456 = sbr.rel (%p1453) target = $region220
      $region219: #{h3conformer_hybrid_block.1} parent=5 // pred_region
        %s1457 = ssub.s32 %s115, 1
        // Predicated region
        $region221: #{h3conformer_hybrid_block.1} parent=219 // pred_check
          %p1458 = pneg %p918
        $region222: #{h3conformer_hybrid_block.1} parent=219 // pred_check_branch
          %1460 = sbr.rel (%p1458) target = $region224
        $region223: #{h3conformer_hybrid_block.1} parent=219 // pred_region
          %1462 = dma.done [#allocation4], 16
        $region224: #{h3conformer_hybrid_block.1} parent=219 // pred_fallthru
          _
        // Predicated region
        $region225: #{h3conformer_hybrid_block.1} parent=219 // pred_check
          %p1463 = pneg %p939
        $region226: #{h3conformer_hybrid_block.1} parent=219 // pred_check_branch
          %1465 = sbr.rel (%p1463) target = $region228
        $region227: #{h3conformer_hybrid_block.1} parent=219 // pred_region
          %1467 = dma.done [#allocation7], 16
        $region228: #{h3conformer_hybrid_block.1} parent=219 // pred_fallthru
          _
        // Predicated region
        $region229: #{h3conformer_hybrid_block.1} parent=219 // pred_check
          %p1468 = pneg %p960
        $region230: #{h3conformer_hybrid_block.1} parent=219 // pred_check_branch
          %1470 = sbr.rel (%p1468) target = $region232
        $region231: #{h3conformer_hybrid_block.1} parent=219 // pred_region
          %1472 = dma.done [#allocation7], 16
        $region232: #{h3conformer_hybrid_block.1} parent=219 // pred_fallthru
          _
        // Predicated region
        $region233: #{h3conformer_hybrid_block.1} parent=219 // pred_check
          %p1473 = pneg %p1002
        $region234: #{h3conformer_hybrid_block.1} parent=219 // pred_check_branch
          %1475 = sbr.rel (%p1473) target = $region236
        $region235: #{h3conformer_hybrid_block.1} parent=219 // pred_region
          %1477 = dma.done [#allocation10], 16
        $region236: #{h3conformer_hybrid_block.1} parent=219 // pred_fallthru
          _
        // Predicated region
        $region237: #{h3conformer_hybrid_block.1} parent=219 // pred_check
          %p1478 = pneg %p1044
        $region238: #{h3conformer_hybrid_block.1} parent=219 // pred_check_branch
          %1480 = sbr.rel (%p1478) target = $region240
        $region239: #{h3conformer_hybrid_block.1} parent=219 // pred_region
          %1482 = dma.done [#allocation10], 16
        $region240: #{h3conformer_hybrid_block.1} parent=219 // pred_fallthru
          _
        // Predicated region
        $region241: #{h3conformer_hybrid_block.1} parent=219 // pred_check
          %p1483 = pneg %p1086
        $region242: #{h3conformer_hybrid_block.1} parent=219 // pred_check_branch
          %1485 = sbr.rel (%p1483) target = $region244
        $region243: #{h3conformer_hybrid_block.1} parent=219 // pred_region
          %1487 = dma.done [#allocation13], 16
        $region244: #{h3conformer_hybrid_block.1} parent=219 // pred_fallthru
          _
        // Predicated region
        $region245: #{h3conformer_hybrid_block.1} parent=219 // pred_check
          %p1488 = pneg %p1128
        $region246: #{h3conformer_hybrid_block.1} parent=219 // pred_check_branch
          %1490 = sbr.rel (%p1488) target = $region248
        $region247: #{h3conformer_hybrid_block.1} parent=219 // pred_region
          %1492 = dma.done [#allocation13], 16
        $region248: #{h3conformer_hybrid_block.1} parent=219 // pred_fallthru
          _
        // Predicated region
        $region249: #{h3conformer_hybrid_block.1} parent=219 // pred_check
          %p1493 = pneg %p1149
        $region250: #{h3conformer_hybrid_block.1} parent=219 // pred_check_branch
          %1495 = sbr.rel (%p1493) target = $region252
        $region251: #{h3conformer_hybrid_block.1} parent=219 // pred_region
          %1497 = dma.done [#allocation16], 16
        $region252: #{h3conformer_hybrid_block.1} parent=219 // pred_fallthru
          _
        // Predicated region
        $region253: #{h3conformer_hybrid_block.1} parent=219 // pred_check
          %p1498 = pneg %p1170
        $region254: #{h3conformer_hybrid_block.1} parent=219 // pred_check_branch
          %1500 = sbr.rel (%p1498) target = $region256
        $region255: #{h3conformer_hybrid_block.1} parent=219 // pred_region
          %1502 = dma.done [#allocation16], 16
        $region256: #{h3conformer_hybrid_block.1} parent=219 // pred_fallthru
          _
        %p1503 = scmp.lt.s32.totalorder %s120, 1
        %s1504 = scalar_select %p1503, %s120, 1
        %s1505 = smul.addr %s1504, 2
        %s1506 = smul.addr %s1505, 8
        %s1507 = scalar_lea.vmem %s1, %s1506
        %p1508 = pneg %p141
        %p1509 = pneg %p138
        %p1510 = pneg %p162
        %p1511 = pneg %p159
        %p1512 = pneg %p183
        %p1513 = pneg %p180
        %p1514 = pneg %p204
        %p1515 = pneg %p201
        %p1516 = pneg %p225
        %p1517 = pneg %p222
        %p1518 = pneg %p246
        %p1519 = pneg %p243
        %p1520 = pneg %p267
        %p1521 = pneg %p264
        %p1522 = pneg %p288
        %p1523 = pneg %p285
        %p1524 = pneg %p309
        %p1525 = pneg %p306
        %p1526 = pneg %p330
        %p1527 = pneg %p327
        %p1528 = pneg %p351
        %p1529 = pneg %p348
        %p1530 = pneg %p372
        %p1531 = pneg %p369
        %p1532 = pneg %p393
        %p1533 = pneg %p390
        %p1534 = pneg %p414
        %p1535 = pneg %p411
        %p1536 = pneg %p435
        %p1537 = pneg %p432
        %p1538 = pneg %p456
        %p1539 = pneg %p453
        %p1540 = pneg %p477
        %p1541 = pneg %p474
        %p1542 = pneg %p498
        %p1543 = pneg %p495
        %p1544 = pneg %p519
        %p1545 = pneg %p516
        %p1546 = pneg %p540
        %p1547 = pneg %p537
        %p1548 = pneg %p561
        %p1549 = pneg %p558
        %p1550 = pneg %p582
        %p1551 = pneg %p579
        %p1552 = pneg %p603
        %p1553 = pneg %p600
        %p1554 = pneg %p624
        %p1555 = pneg %p621
        %p1556 = pneg %p645
        %p1557 = pneg %p642
        %p1558 = pneg %p666
        %p1559 = pneg %p663
        %p1560 = pneg %p687
        %p1561 = pneg %p684
        %p1562 = pneg %p708
        %p1563 = pneg %p705
        %p1564 = pneg %p729
        %p1565 = pneg %p726
        %p1566 = pneg %p750
        %p1567 = pneg %p747
        %p1568 = pneg %p771
        %p1569 = pneg %p768
        %p1570 = pneg %p792
        %p1571 = pneg %p789
        %p1572 = pneg %p813
        %p1573 = pneg %p810
        %p1574 = pneg %p834
        %p1575 = pneg %p831
        %p1576 = pneg %p855
        %p1577 = pneg %p852
        %p1578 = pneg %p876
        %p1579 = pneg %p873
        %p1580 = pneg %p897
        %p1581 = pneg %p894
        %p1582 = pneg %p918
        %p1583 = pneg %p915
        %p1584 = pneg %p939
        %p1585 = pneg %p936
        %p1586 = pneg %p960
        %p1587 = pneg %p957
        %p1588 = pneg %p981
        %p1589 = pneg %p978
        %p1590 = pneg %p1002
        %p1591 = pneg %p999
        %p1592 = pneg %p1023
        %p1593 = pneg %p1020
        %p1594 = pneg %p1044
        %p1595 = pneg %p1041
        %p1596 = pneg %p1065
        %p1597 = pneg %p1062
        %p1598 = pneg %p1086
        %p1599 = pneg %p1083
        %p1600 = pneg %p1107
        %p1601 = pneg %p1104
        %p1602 = pneg %p1128
        %p1603 = pneg %p1125
        %p1604 = pneg %p1149
        %p1605 = pneg %p1146
        %p1606 = pneg %p1170
        %p1607 = pneg %p1167
        %p1608 = pneg %p1196
        %p1609 = pneg %p1193
        %s1610 = sand.u32 %s1183, 1
        %s1611 = scalar_lea.sflag [#allocation5], %s1610
        %s1612 = sand.u32 %s1183, 1
        %s1613 = smul.addr %s1612, 16
        %s1614 = scalar_lea.vmem [#allocation18], %s1613
        %p1615 = scmp.lt.s32.totalorder %s120, 1
        %s1616 = scalar_select %p1615, %s120, 1
        %s1617 = smul.addr %s1616, 2
        %s1618 = smul.addr %s1617, 8
        %s1619 = scalar_lea.vmem %s1, %s1618
        %1621 = vst [vmem:[#allocation2] sm:$0xff] 0.0
        %1622 = vst [vmem:[#allocation2 + $0x8] sm:$0xff] 0.0
        %1623 = vst [vmem:[#allocation2 + $0x10] sm:$0xff] 0.0
        %1624 = vst [vmem:[#allocation2 + $0x18] sm:$0xff] 0.0
        %v1625 = vld [vmem:[%s1619] sm:$0xff]
        %v1626 = vld [vmem:[%s1619 + $0x8] sm:$0xff]
        %v1627 = vld [vmem:[%s3] sm:$0x1]
        %v1628 = vld [vmem:[%s5] sm:$0x1]
        %vm1629 = vcmask 523264
        %v1630 = vsel %vm1629, %v1625, 0.0
        %1631 = vadd.xlane.f32.xlu0 %v1630
        %v1632 = vpop.xlane.xlu0 %1631
        %v1633 = vsel %vm1629, %v1626, 0.0
        %1634 = vadd.xlane.f32.xlu0 %v1633
        %v1635 = vpop.xlane.xlu0 %1634
        %v1636 = vrcp.pop 64.0
        %v1637 = vmul.f32 64.0, %v1636
        %v1638 = vsub.f32 1.0, %v1637
        %v1639 = vmul.f32 %v1636, %v1638
        %v1640 = vadd.f32 %v1636, %v1639
        %vm1641 = vweird.f32 %v1636
        %v1642 = vsel %vm1641, %v1636, %v1640
        %v1643 = vmul.f32 %v1632, %v1642
        %v1644 = vmul.f32 %v1635, %v1642
        %v1645 = vsub.f32 %v1625, %v1643
        %v1646 = vsub.f32 %v1626, %v1644
        %v1647 = vmul.f32 %v1645, %v1645
        %v1648 = vmul.f32 %v1646, %v1646
        %v1649 = vsel %vm1629, %v1647, 0.0
        %1650 = vadd.xlane.f32.xlu0 %v1649
        %v1651 = vpop.xlane.xlu0 %1650
        %v1652 = vsel %vm1629, %v1648, 0.0
        %1653 = vadd.xlane.f32.xlu0 %v1652
        %v1654 = vpop.xlane.xlu0 %1653
        %v1655 = vmul.f32 %v1651, %v1642
        %v1656 = vmul.f32 %v1654, %v1642
        %v1657 = vadd.f32 %v1655, 1e-05
        %v1658 = vadd.f32 %v1656, 1e-05
        %v1659 = vrsqrt.pop %v1657
        %v1660 = vmul.f32 %v1659, %v1657
        %v1661 = vmul.f32 %v1660, %v1659
        %v1662 = vmul.f32 0.5, %v1661
        %v1663 = vsub.f32 1.5, %v1662
        %v1664 = vmul.f32 %v1659, %v1663
        %vm1665 = vweird.f32 %v1657
        %vm1666 = vweird.f32 %v1659
        %vm1667 = vmor %vm1665, %vm1666
        %v1668 = vsel %vm1667, %v1659, %v1664
        %v1669 = vrsqrt.pop %v1658
        %v1670 = vmul.f32 %v1669, %v1658
        %v1671 = vmul.f32 %v1670, %v1669
        %v1672 = vmul.f32 0.5, %v1671
        %v1673 = vsub.f32 1.5, %v1672
        %v1674 = vmul.f32 %v1669, %v1673
        %vm1675 = vweird.f32 %v1658
        %vm1676 = vweird.f32 %v1669
        %vm1677 = vmor %vm1675, %vm1676
        %v1678 = vsel %vm1677, %v1669, %v1674
        %v1679 = vmul.f32 %v1645, %v1668
        %v1680 = vmul.f32 %v1646, %v1678
        %v1682 = vperm.slane %v1627, 0
        %v1684 = vmul.f32 %v1679, %v1682
        %v1685 = vmul.f32 %v1680, %v1682
        %v1687 = vperm.slane %v1628, 0
        %v1689 = vadd.f32 %v1684, %v1687
        %v1690 = vadd.f32 %v1685, %v1687
        %v1691 = vpack.c.bf16 %v1690, %v1689
        %v1692 = vld [vmem:[%s7] sm:$0xff]
        %v1693 = vld [vmem:[%s7 + $0x8] sm:$0xff]
        %v1694 = vld [vmem:[%s7 + $0x10] sm:$0xff]
        %v1695 = vld [vmem:[%s7 + $0x18] sm:$0xff]
        %v1696 = vld [vmem:[%s7 + $0x20] sm:$0xff]
        %v1697 = vld [vmem:[%s7 + $0x28] sm:$0xff]
        %v1698 = vld [vmem:[%s7 + $0x30] sm:$0xff]
        %v1699 = vld [vmem:[%s7 + $0x38] sm:$0xff]
        %v1700 = vld [vmem:[%s7 + $0x40] sm:$0xff]
        %v1701 = vld [vmem:[%s7 + $0x48] sm:$0xff]
        %v1702 = vld [vmem:[%s7 + $0x50] sm:$0xff]
        %v1703 = vld [vmem:[%s7 + $0x58] sm:$0xff]
        %v1704 = vld [vmem:[%s7 + $0x60] sm:$0xff]
        %v1705 = vld [vmem:[%s7 + $0x68] sm:$0xff]
        %v1706 = vld [vmem:[%s7 + $0x70] sm:$0xff]
        %v1707 = vld [vmem:[%s7 + $0x78] sm:$0xff]
        %v1708 = vpack.c.bf16 %v1694, %v1692
        %v1709 = vpack.c.bf16 %v1695, %v1693
        %v1710 = vpack.c.bf16 %v1698, %v1696
        %v1711 = vpack.c.bf16 %v1699, %v1697
        %v1712 = vpack.c.bf16 %v1702, %v1700
        %v1713 = vpack.c.bf16 %v1703, %v1701
        %v1714 = vpack.c.bf16 %v1706, %v1704
        %v1715 = vpack.c.bf16 %v1707, %v1705
        %v1716 = vld [vmem:[%s9] sm:$0x3]
        %v1718 = vperm.slane %v1716, 0
        %v1719 = vperm.slane %v1716, 1
        %v1723 = vsel %vm1629, %v1691, 0
        %1725 = vmatpush.bf16.msra.mxu0 0
        %1726 = vmatpush.bf16.msra.mxu0 0
        %1727 = vmatpush.bf16.msra.mxu0 0
        %1728 = vmatpush.bf16.msra.mxu0 0
        %1729 = vmatpush.bf16.msra.mxu0 %v1714
        %1730 = vmatpush.bf16.msra.mxu0 %v1712
        %1731 = vmatpush.bf16.msra.mxu0 %v1710
        %1732 = vmatpush.bf16.msra.mxu0 %v1708
        %1733 = vmatmul.bf16.gmra.mxu0 %v1723
        %v1734 = vpop.f32.mrf.mxu0
        %v1735 = vadd.f32 %v1718, %v1734
        %v1736 = vpop.f32.mrf.mxu0
        %v1737 = vadd.f32 %v1718, %v1736
        %1738 = vdwg.mxu0
        %1739 = vmatpush.bf16.msra.mxu0 0
        %1740 = vmatpush.bf16.msra.mxu0 0
        %1741 = vmatpush.bf16.msra.mxu0 0
        %1742 = vmatpush.bf16.msra.mxu0 0
        %1743 = vmatpush.bf16.msra.mxu0 %v1715
        %1744 = vmatpush.bf16.msra.mxu0 %v1713
        %1745 = vmatpush.bf16.msra.mxu0 %v1711
        %1746 = vmatpush.bf16.msra.mxu0 %v1709
        %1747 = vmatmul.bf16.gmra.mxu0 %v1723
        %v1748 = vpop.f32.mrf.mxu0
        %v1749 = vadd.f32 %v1719, %v1748
        %v1750 = vpop.f32.mrf.mxu0
        %v1751 = vadd.f32 %v1719, %v1750
        %1752 = vdwg.mxu0
        %v1753 = vxor.u32 %v1735, 2147483648
        %v1754 = vxor.u32 %v1749, 2147483648
        %v1755 = vxor.u32 %v1737, 2147483648
        %v1756 = vxor.u32 %v1751, 2147483648
        %v1757 = vmul.f32 %v1753, 1.442695
        %v1758 = vpow.pop %v1757
        %v1759 = vmul.f32 %v1754, 1.442695
        %v1760 = vpow.pop %v1759
        %v1761 = vmul.f32 %v1755, 1.442695
        %v1762 = vpow.pop %v1761
        %v1763 = vmul.f32 %v1756, 1.442695
        %v1764 = vpow.pop %v1763
        %v1765 = vadd.f32 %v1758, 1.0
        %v1766 = vadd.f32 %v1760, 1.0
        %v1767 = vadd.f32 %v1762, 1.0
        %v1768 = vadd.f32 %v1764, 1.0
        %v1769 = vrcp.pop %v1765
        %v1770 = vmul.f32 %v1765, %v1769
        %v1771 = vsub.f32 1.0, %v1770
        %v1772 = vmul.f32 %v1769, %v1771
        %v1773 = vadd.f32 %v1769, %v1772
        %vm1774 = vweird.f32 %v1765
        %vm1775 = vweird.f32 %v1769
        %vm1776 = vmor %vm1774, %vm1775
        %v1777 = vsel %vm1776, %v1769, %v1773
        %v1778 = vand.u32 2147483647, %v1765
        %vm1779 = vcmp.eq.f32.partialorder %v1778, 8.507059e+37
        %v1780 = vand.u32 %v1765, 2147483648
        %v1781 = vor.u32 1.1754944e-38, %v1780
        %v1782 = vsel %vm1779, %v1781, %v1777
        %v1783 = vmul.f32 1.0, %v1782
        %v1784 = vrcp.pop %v1766
        %v1785 = vmul.f32 %v1766, %v1784
        %v1786 = vsub.f32 1.0, %v1785
        %v1787 = vmul.f32 %v1784, %v1786
        %v1788 = vadd.f32 %v1784, %v1787
        %vm1789 = vweird.f32 %v1766
        %vm1790 = vweird.f32 %v1784
        %vm1791 = vmor %vm1789, %vm1790
        %v1792 = vsel %vm1791, %v1784, %v1788
        %v1793 = vand.u32 2147483647, %v1766
        %vm1794 = vcmp.eq.f32.partialorder %v1793, 8.507059e+37
        %v1795 = vand.u32 %v1766, 2147483648
        %v1796 = vor.u32 1.1754944e-38, %v1795
        %v1797 = vsel %vm1794, %v1796, %v1792
        %v1798 = vmul.f32 1.0, %v1797
        %v1799 = vrcp.pop %v1767
        %v1800 = vmul.f32 %v1767, %v1799
        %v1801 = vsub.f32 1.0, %v1800
        %v1802 = vmul.f32 %v1799, %v1801
        %v1803 = vadd.f32 %v1799, %v1802
        %vm1804 = vweird.f32 %v1767
        %vm1805 = vweird.f32 %v1799
        %vm1806 = vmor %vm1804, %vm1805
        %v1807 = vsel %vm1806, %v1799, %v1803
        %v1808 = vand.u32 2147483647, %v1767
        %vm1809 = vcmp.eq.f32.partialorder %v1808, 8.507059e+37
        %v1810 = vand.u32 %v1767, 2147483648
        %v1811 = vor.u32 1.1754944e-38, %v1810
        %v1812 = vsel %vm1809, %v1811, %v1807
        %v1813 = vmul.f32 1.0, %v1812
        %v1814 = vrcp.pop %v1768
        %v1815 = vmul.f32 %v1768, %v1814
        %v1816 = vsub.f32 1.0, %v1815
        %v1817 = vmul.f32 %v1814, %v1816
        %v1818 = vadd.f32 %v1814, %v1817
        %vm1819 = vweird.f32 %v1768
        %vm1820 = vweird.f32 %v1814
        %vm1821 = vmor %vm1819, %vm1820
        %v1822 = vsel %vm1821, %v1814, %v1818
        %v1823 = vand.u32 2147483647, %v1768
        %vm1824 = vcmp.eq.f32.partialorder %v1823, 8.507059e+37
        %v1825 = vand.u32 %v1768, 2147483648
        %v1826 = vor.u32 1.1754944e-38, %v1825
        %v1827 = vsel %vm1824, %v1826, %v1822
        %v1828 = vmul.f32 1.0, %v1827
        %v1829 = vmul.f32 %v1735, %v1783
        %v1830 = vmul.f32 %v1749, %v1798
        %v1831 = vmul.f32 %v1737, %v1813
        %v1832 = vmul.f32 %v1751, %v1828
        %v1833 = vpack.c.bf16 %v1831, %v1829
        %v1834 = vpack.c.bf16 %v1832, %v1830
        %v1835 = vld [vmem:[%s11] sm:$0xff]
        %v1836 = vld [vmem:[%s11 + $0x8] sm:$0xff]
        %v1837 = vld [vmem:[%s11 + $0x10] sm:$0xff]
        %v1838 = vld [vmem:[%s11 + $0x18] sm:$0xff]
        %v1839 = vld [vmem:[%s11 + $0x20] sm:$0xff]
        %v1840 = vld [vmem:[%s11 + $0x28] sm:$0xff]
        %v1841 = vld [vmem:[%s11 + $0x30] sm:$0xff]
        %v1842 = vld [vmem:[%s11 + $0x38] sm:$0xff]
        %v1843 = vld [vmem:[%s11 + $0x40] sm:$0xff]
        %v1844 = vld [vmem:[%s11 + $0x48] sm:$0xff]
        %v1845 = vld [vmem:[%s11 + $0x50] sm:$0xff]
        %v1846 = vld [vmem:[%s11 + $0x58] sm:$0xff]
        %v1847 = vld [vmem:[%s11 + $0x60] sm:$0xff]
        %v1848 = vld [vmem:[%s11 + $0x68] sm:$0xff]
        %v1849 = vld [vmem:[%s11 + $0x70] sm:$0xff]
        %v1850 = vld [vmem:[%s11 + $0x78] sm:$0xff]
        %v1851 = vld [vmem:[%s11 + $0x80] sm:$0xff]
        %v1852 = vld [vmem:[%s11 + $0x88] sm:$0xff]
        %v1853 = vld [vmem:[%s11 + $0x90] sm:$0xff]
        %v1854 = vld [vmem:[%s11 + $0x98] sm:$0xff]
        %v1855 = vld [vmem:[%s11 + $0xa0] sm:$0xff]
        %v1856 = vld [vmem:[%s11 + $0xa8] sm:$0xff]
        %v1857 = vld [vmem:[%s11 + $0xb0] sm:$0xff]
        %v1858 = vld [vmem:[%s11 + $0xb8] sm:$0xff]
        %v1859 = vld [vmem:[%s11 + $0xc0] sm:$0xff]
        %v1860 = vld [vmem:[%s11 + $0xc8] sm:$0xff]
        %v1861 = vld [vmem:[%s11 + $0xd0] sm:$0xff]
        %v1862 = vld [vmem:[%s11 + $0xd8] sm:$0xff]
        %v1863 = vld [vmem:[%s11 + $0xe0] sm:$0xff]
        %v1864 = vld [vmem:[%s11 + $0xe8] sm:$0xff]
        %v1865 = vld [vmem:[%s11 + $0xf0] sm:$0xff]
        %v1866 = vld [vmem:[%s11 + $0xf8] sm:$0xff]
        %v1867 = vpack.c.bf16 %v1836, %v1835
        %v1868 = vpack.c.bf16 %v1838, %v1837
        %v1869 = vpack.c.bf16 %v1840, %v1839
        %v1870 = vpack.c.bf16 %v1842, %v1841
        %v1871 = vpack.c.bf16 %v1844, %v1843
        %v1872 = vpack.c.bf16 %v1846, %v1845
        %v1873 = vpack.c.bf16 %v1848, %v1847
        %v1874 = vpack.c.bf16 %v1850, %v1849
        %v1875 = vpack.c.bf16 %v1852, %v1851
        %v1876 = vpack.c.bf16 %v1854, %v1853
        %v1877 = vpack.c.bf16 %v1856, %v1855
        %v1878 = vpack.c.bf16 %v1858, %v1857
        %v1879 = vpack.c.bf16 %v1860, %v1859
        %v1880 = vpack.c.bf16 %v1862, %v1861
        %v1881 = vpack.c.bf16 %v1864, %v1863
        %v1882 = vpack.c.bf16 %v1866, %v1865
        %v1883 = vld [vmem:[%s13] sm:$0x1]
        %v1885 = vperm.slane %v1883, 0
        %1887 = vmatpush.bf16.msra.mxu0 %v1874
        %1888 = vmatpush.bf16.msra.mxu0 %v1873
        %1889 = vmatpush.bf16.msra.mxu0 %v1872
        %1890 = vmatpush.bf16.msra.mxu0 %v1871
        %1891 = vmatpush.bf16.msra.mxu0 %v1870
        %1892 = vmatpush.bf16.msra.mxu0 %v1869
        %1893 = vmatpush.bf16.msra.mxu0 %v1868
        %1894 = vmatpush.bf16.msra.mxu0 %v1867
        %1895 = vmatmul.bf16.gmra.mxu0 %v1833
        %v1896 = vpop.f32.mrf.mxu0
        %v1897 = vadd.f32 %v1885, %v1896
        %v1898 = vpop.f32.mrf.mxu0
        %v1899 = vadd.f32 %v1885, %v1898
        %1900 = vdwg.mxu0
        %1901 = vmatpush.bf16.msra.mxu0 %v1882
        %1902 = vmatpush.bf16.msra.mxu0 %v1881
        %1903 = vmatpush.bf16.msra.mxu0 %v1880
        %1904 = vmatpush.bf16.msra.mxu0 %v1879
        %1905 = vmatpush.bf16.msra.mxu0 %v1878
        %1906 = vmatpush.bf16.msra.mxu0 %v1877
        %1907 = vmatpush.bf16.msra.mxu0 %v1876
        %1908 = vmatpush.bf16.msra.mxu0 %v1875
        %1909 = vmatmul.bf16.gmra.mxu0 %v1834
        %v1910 = vpop.f32.mrf.mxu0
        %v1911 = vadd.f32 %v1897, %v1910
        %v1912 = vpop.f32.mrf.mxu0
        %v1913 = vadd.f32 %v1899, %v1912
        %1914 = vdwg.mxu0
        %v1915 = vmul.f32 %v1911, 0.5
        %v1916 = vmul.f32 %v1913, 0.5
        %v1917 = vadd.f32 %v1625, %v1915
        %v1918 = vadd.f32 %v1626, %v1916
        %v1919 = vlaneseq
        %v1920 = vshrl.u32 %v1919, 7
        %v1921 = vadd.s32 %v1920, 8
        %v1922 = vadd.s32 %v1920, 16
        %v1923 = vadd.s32 %v1920, 24
        %v1924 = vadd.s32 %v1920, 32
        %v1925 = vadd.s32 %v1920, 40
        %v1926 = vadd.s32 %v1920, 48
        %v1927 = vadd.s32 %v1920, 56
        %v1928 = vlaneseq
        %v1929 = vand.u32 %v1928, 127
        %vm1930 = vcmp.eq.s32.totalorder %v1920, %v1929
        %vm1931 = vcmp.eq.s32.totalorder %v1921, %v1929
        %vm1932 = vcmp.eq.s32.totalorder %v1922, %v1929
        %vm1933 = vcmp.eq.s32.totalorder %v1923, %v1929
        %vm1934 = vcmp.eq.s32.totalorder %v1924, %v1929
        %vm1935 = vcmp.eq.s32.totalorder %v1925, %v1929
        %vm1936 = vcmp.eq.s32.totalorder %v1926, %v1929
        %vm1937 = vcmp.eq.s32.totalorder %v1927, %v1929
        %v1938 = vsel %vm1930, 1, 0
        %v1939 = vsel %vm1931, 1, 0
        %v1940 = vsel %vm1932, 1, 0
        %v1941 = vsel %vm1933, 1, 0
        %v1942 = vsel %vm1934, 1, 0
        %v1943 = vsel %vm1935, 1, 0
        %v1944 = vsel %vm1936, 1, 0
        %v1945 = vsel %vm1937, 1, 0
        %v1946 = vcvt.s32.f32 %v1938
        %v1947 = vcvt.s32.f32 %v1939
        %v1948 = vcvt.s32.f32 %v1940
        %v1949 = vcvt.s32.f32 %v1941
        %v1950 = vcvt.s32.f32 %v1942
        %v1951 = vcvt.s32.f32 %v1943
        %v1952 = vcvt.s32.f32 %v1944
        %v1953 = vcvt.s32.f32 %v1945
        %v1955 = vsel %vm1629, %v1917, 0
        %v1958 = vsel %vm1629, %v1918, 0
        %1960 = vmatpush.msra.mxu0 0.0
        %1961 = vmatpush.msra.mxu0 0.0
        %1962 = vmatpush.msra.mxu0 0.0
        %1963 = vmatpush.msra.mxu0 0.0
        %1964 = vmatpush.msra.mxu0 0.0
        %1965 = vmatpush.msra.mxu0 0.0
        %1966 = vmatpush.msra.mxu0 0.0
        %1967 = vmatpush.msra.mxu0 0.0
        %1968 = vmatpush.msra.mxu0 %v1953
        %1969 = vmatpush.msra.mxu0 %v1952
        %1970 = vmatpush.msra.mxu0 %v1951
        %1971 = vmatpush.msra.mxu0 %v1950
        %1972 = vmatpush.msra.mxu0 %v1949
        %1973 = vmatpush.msra.mxu0 %v1948
        %1974 = vmatpush.msra.mxu0 %v1947
        %1975 = vmatpush.msra.mxu0 %v1946
        %1976 = vmatmul.f32.gmra.mxu0 %v1955
        %v1977 = vpop.f32.mrf.mxu0
        %v1978 = vadd.f32 0.0, %v1977
        %1979 = vmatmul.f32.gmra.mxu0 %v1958
        %v1980 = vpop.f32.mrf.mxu0
        %v1981 = vadd.f32 0.0, %v1980
        %1982 = vdwg.mxu0
        %v1983 = vadd.s32 %v1929, 32
        %vm1984 = vcmp.eq.s32.totalorder %v1920, %v1983
        %vm1985 = vcmp.eq.s32.totalorder %v1921, %v1983
        %vm1986 = vcmp.eq.s32.totalorder %v1922, %v1983
        %vm1987 = vcmp.eq.s32.totalorder %v1923, %v1983
        %vm1988 = vcmp.eq.s32.totalorder %v1924, %v1983
        %vm1989 = vcmp.eq.s32.totalorder %v1925, %v1983
        %vm1990 = vcmp.eq.s32.totalorder %v1926, %v1983
        %vm1991 = vcmp.eq.s32.totalorder %v1927, %v1983
        %v1992 = vsel %vm1984, 1, 0
        %v1993 = vsel %vm1985, 1, 0
        %v1994 = vsel %vm1986, 1, 0
        %v1995 = vsel %vm1987, 1, 0
        %v1996 = vsel %vm1988, 1, 0
        %v1997 = vsel %vm1989, 1, 0
        %v1998 = vsel %vm1990, 1, 0
        %v1999 = vsel %vm1991, 1, 0
        %v2000 = vcvt.s32.f32 %v1992
        %v2001 = vcvt.s32.f32 %v1993
        %v2002 = vcvt.s32.f32 %v1994
        %v2003 = vcvt.s32.f32 %v1995
        %v2004 = vcvt.s32.f32 %v1996
        %v2005 = vcvt.s32.f32 %v1997
        %v2006 = vcvt.s32.f32 %v1998
        %v2007 = vcvt.s32.f32 %v1999
        %2008 = vmatpush.msra.mxu0 0.0
        %2009 = vmatpush.msra.mxu0 0.0
        %2010 = vmatpush.msra.mxu0 0.0
        %2011 = vmatpush.msra.mxu0 0.0
        %2012 = vmatpush.msra.mxu0 0.0
        %2013 = vmatpush.msra.mxu0 0.0
        %2014 = vmatpush.msra.mxu0 0.0
        %2015 = vmatpush.msra.mxu0 0.0
        %2016 = vmatpush.msra.mxu0 %v2007
        %2017 = vmatpush.msra.mxu0 %v2006
        %2018 = vmatpush.msra.mxu0 %v2005
        %2019 = vmatpush.msra.mxu0 %v2004
        %2020 = vmatpush.msra.mxu0 %v2003
        %2021 = vmatpush.msra.mxu0 %v2002
        %2022 = vmatpush.msra.mxu0 %v2001
        %2023 = vmatpush.msra.mxu0 %v2000
        %2024 = vmatmul.f32.gmra.mxu0 %v1955
        %v2025 = vpop.f32.mrf.mxu0
        %v2026 = vadd.f32 0.0, %v2025
        %2027 = vmatmul.f32.gmra.mxu0 %v1958
        %v2028 = vpop.f32.mrf.mxu0
        %v2029 = vadd.f32 0.0, %v2028
        %2030 = vdwg.mxu0
        %v2031 = vld [vmem:[%s39] sm:$0x1]
        %v2032 = vld [vmem:[%s41] sm:$0x1]
        %vm2033 = vcmask 261120
        %v2034 = vsel %vm2033, %v1978, 0.0
        %2035 = vadd.xlane.f32.xlu0 %v2034
        %v2036 = vpop.xlane.xlu0 %2035
        %v2037 = vsel %vm2033, %v1981, 0.0
        %2038 = vadd.xlane.f32.xlu0 %v2037
        %v2039 = vpop.xlane.xlu0 %2038
        %v2040 = vrcp.pop 32.0
        %v2041 = vmul.f32 32.0, %v2040
        %v2042 = vsub.f32 1.0, %v2041
        %v2043 = vmul.f32 %v2040, %v2042
        %v2044 = vadd.f32 %v2040, %v2043
        %vm2045 = vweird.f32 %v2040
        %v2046 = vsel %vm2045, %v2040, %v2044
        %v2047 = vmul.f32 %v2036, %v2046
        %v2048 = vmul.f32 %v2039, %v2046
        %v2049 = vsub.f32 %v1978, %v2047
        %v2050 = vsub.f32 %v1981, %v2048
        %v2051 = vmul.f32 %v2049, %v2049
        %v2052 = vmul.f32 %v2050, %v2050
        %v2053 = vsel %vm2033, %v2051, 0.0
        %2054 = vadd.xlane.f32.xlu0 %v2053
        %v2055 = vpop.xlane.xlu0 %2054
        %v2056 = vsel %vm2033, %v2052, 0.0
        %2057 = vadd.xlane.f32.xlu0 %v2056
        %v2058 = vpop.xlane.xlu0 %2057
        %v2059 = vmul.f32 %v2055, %v2046
        %v2060 = vmul.f32 %v2058, %v2046
        %v2061 = vadd.f32 %v2059, 1e-05
        %v2062 = vadd.f32 %v2060, 1e-05
        %v2063 = vrsqrt.pop %v2061
        %v2064 = vmul.f32 %v2063, %v2061
        %v2065 = vmul.f32 %v2064, %v2063
        %v2066 = vmul.f32 0.5, %v2065
        %v2067 = vsub.f32 1.5, %v2066
        %v2068 = vmul.f32 %v2063, %v2067
        %vm2069 = vweird.f32 %v2061
        %vm2070 = vweird.f32 %v2063
        %vm2071 = vmor %vm2069, %vm2070
        %v2072 = vsel %vm2071, %v2063, %v2068
        %v2073 = vrsqrt.pop %v2062
        %v2074 = vmul.f32 %v2073, %v2062
        %v2075 = vmul.f32 %v2074, %v2073
        %v2076 = vmul.f32 0.5, %v2075
        %v2077 = vsub.f32 1.5, %v2076
        %v2078 = vmul.f32 %v2073, %v2077
        %vm2079 = vweird.f32 %v2062
        %vm2080 = vweird.f32 %v2073
        %vm2081 = vmor %vm2079, %vm2080
        %v2082 = vsel %vm2081, %v2073, %v2078
        %v2083 = vmul.f32 %v2049, %v2072
        %v2084 = vmul.f32 %v2050, %v2082
        %v2086 = vperm.slane %v2031, 0
        %v2088 = vmul.f32 %v2083, %v2086
        %v2089 = vmul.f32 %v2084, %v2086
        %v2091 = vperm.slane %v2032, 0
        %v2093 = vadd.f32 %v2088, %v2091
        %v2094 = vadd.f32 %v2089, %v2091
        %v2095 = vpack.c.bf16 %v2094, %v2093
        %v2096 = vld [vmem:[%s43] sm:$0xff]
        %v2097 = vld [vmem:[%s43 + $0x8] sm:$0xff]
        %v2098 = vld [vmem:[%s43 + $0x10] sm:$0xff]
        %v2099 = vld [vmem:[%s43 + $0x18] sm:$0xff]
        %v2100 = vpack.c.bf16 %v2097, %v2096
        %v2101 = vpack.c.bf16 %v2099, %v2098
        %v2103 = vsel %vm2033, %v2095, 0
        %2105 = vmatpush.bf16.msra.mxu0 0
        %2106 = vmatpush.bf16.msra.mxu0 0
        %2107 = vmatpush.bf16.msra.mxu0 0
        %2108 = vmatpush.bf16.msra.mxu0 0
        %2109 = vmatpush.bf16.msra.mxu0 0
        %2110 = vmatpush.bf16.msra.mxu0 0
        %2111 = vmatpush.bf16.msra.mxu0 %v2101
        %2112 = vmatpush.bf16.msra.mxu0 %v2100
        %2113 = vmatmul.bf16.gmra.mxu0 %v2103
        %v2114 = vpop.f32.mrf.mxu0
        %v2115 = vadd.f32 0.0, %v2114
        %v2116 = vpop.f32.mrf.mxu0
        %v2117 = vadd.f32 0.0, %v2116
        %2118 = vdwg.mxu0
        %v2119 = vld [vmem:[%s45] sm:$0xff]
        %v2120 = vld [vmem:[%s45 + $0x8] sm:$0xff]
        %v2121 = vld [vmem:[%s45 + $0x10] sm:$0xff]
        %v2122 = vld [vmem:[%s45 + $0x18] sm:$0xff]
        %v2123 = vpack.c.bf16 %v2120, %v2119
        %v2124 = vpack.c.bf16 %v2122, %v2121
        %2125 = vmatpush.bf16.msra.mxu0 0
        %2126 = vmatpush.bf16.msra.mxu0 0
        %2127 = vmatpush.bf16.msra.mxu0 0
        %2128 = vmatpush.bf16.msra.mxu0 0
        %2129 = vmatpush.bf16.msra.mxu0 0
        %2130 = vmatpush.bf16.msra.mxu0 0
        %2131 = vmatpush.bf16.msra.mxu0 %v2124
        %2132 = vmatpush.bf16.msra.mxu0 %v2123
        %2133 = vmatmul.bf16.gmra.mxu0 %v2103
        %v2134 = vpop.f32.mrf.mxu0
        %v2135 = vadd.f32 0.0, %v2134
        %v2136 = vpop.f32.mrf.mxu0
        %v2137 = vadd.f32 0.0, %v2136
        %2138 = vdwg.mxu0
        %v2139 = vld [vmem:[%s47] sm:$0xff]
        %v2140 = vld [vmem:[%s47 + $0x8] sm:$0xff]
        %v2141 = vld [vmem:[%s47 + $0x10] sm:$0xff]
        %v2142 = vld [vmem:[%s47 + $0x18] sm:$0xff]
        %v2143 = vpack.c.bf16 %v2140, %v2139
        %v2144 = vpack.c.bf16 %v2142, %v2141
        %2145 = vmatpush.bf16.msra.mxu0 0
        %2146 = vmatpush.bf16.msra.mxu0 0
        %2147 = vmatpush.bf16.msra.mxu0 0
        %2148 = vmatpush.bf16.msra.mxu0 0
        %2149 = vmatpush.bf16.msra.mxu0 0
        %2150 = vmatpush.bf16.msra.mxu0 0
        %2151 = vmatpush.bf16.msra.mxu0 %v2144
        %2152 = vmatpush.bf16.msra.mxu0 %v2143
        %2153 = vmatmul.bf16.gmra.mxu0 %v2103
        %v2154 = vpop.f32.mrf.mxu0
        %v2155 = vadd.f32 0.0, %v2154
        %v2156 = vpop.f32.mrf.mxu0
        %v2157 = vadd.f32 0.0, %v2156
        %2158 = vdwg.mxu0
        %vm2159 = vcmp.ge.s32.totalorder %v1929, 0
        %vm2160 = vcmp.lt.s32.totalorder %v1929, 16
        %vm2161 = vmand %vm2159, %vm2160
        %v2162 = vsel %vm2161, 1, 0
        %v2163 = vcvt.s32.f32 %v2162
        %v2164 = vmul.f32 %v2115, %v2163
        %v2165 = vmul.f32 %v2117, %v2163
        %v2166 = vpack.c.bf16 %v2165, %v2164
        %v2167 = vpack.c.bf16 %v2137, %v2135
        %v2169 = vsel %vm1629, %v2166, 0
        %v2172 = vsel %vm1629, %v2167, 0
        %2174 = vmatpush.bf16.xpose.msra.mxu0 0
        %2175 = vmatpush.bf16.xpose.msra.mxu0 0
        %2176 = vmatpush.bf16.xpose.msra.mxu0 0
        %2177 = vmatpush.bf16.xpose.msra.mxu0 0
        %2178 = vmatpush.bf16.xpose.msra.mxu0 0
        %2179 = vmatpush.bf16.xpose.msra.mxu0 0
        %2180 = vmatpush.bf16.xpose.msra.mxu0 0
        %2181 = vmatpush.bf16.xpose.msra.mxu0 %v2172
        %2182 = vmatmul.bf16.gmra.mxu0 %v2169
        %v2183 = vpop.f32.mrf.mxu0
        %v2184 = vadd.f32 0.0, %v2183
        %v2185 = vpop.f32.mrf.mxu0
        %v2186 = vadd.f32 0.0, %v2185
        %2187 = vdwg.mxu0
        %vm2188 = vcmask 130048
        %v2189 = vsel %vm2188, %v2184, -inf
        %2190 = vmax.xlane.f32.xlu0 %v2189
        %v2191 = vpop.xlane.xlu0 %2190
        %v2192 = vsel %vm2188, %v2186, -inf
        %2193 = vmax.xlane.f32.xlu0 %v2192
        %v2194 = vpop.xlane.xlu0 %2193
        %v2195 = vsub.f32 %v2184, %v2191
        %v2196 = vsub.f32 %v2186, %v2194
        %v2197 = vmul.f32 %v2195, 1.442695
        %v2198 = vpow.pop %v2197
        %v2199 = vmul.f32 %v2196, 1.442695
        %v2200 = vpow.pop %v2199
        %v2201 = vsel %vm2188, %v2198, 0.0
        %2202 = vadd.xlane.f32.xlu0 %v2201
        %v2203 = vpop.xlane.xlu0 %2202
        %v2204 = vsel %vm2188, %v2200, 0.0
        %2205 = vadd.xlane.f32.xlu0 %v2204
        %v2206 = vpop.xlane.xlu0 %2205
        %v2207 = vrcp.pop %v2203
        %v2208 = vrcp.pop %v2206
        %v2209 = vmul.f32 %v2198, %v2207
        %v2210 = vmul.f32 %v2200, %v2208
        %v2211 = vpack.c.bf16 %v2210, %v2209
        %v2212 = vmul.f32 %v2155, %v2163
        %v2213 = vmul.f32 %v2157, %v2163
        %v2214 = vpack.c.bf16 %v2213, %v2212
        %vm2215 = vcmp.ge.s32.totalorder %v1929, 16
        %vm2216 = vcmp.lt.s32.totalorder %v1929, 32
        %vm2217 = vmand %vm2215, %vm2216
        %v2218 = vsel %vm2217, 1, 0
        %v2219 = vcvt.s32.f32 %v2218
        %v2220 = vmul.f32 %v2115, %v2219
        %v2221 = vmul.f32 %v2117, %v2219
        %v2222 = vpack.c.bf16 %v2221, %v2220
        %v2224 = vsel %vm1629, %v2222, 0
        %2226 = vmatpush.bf16.xpose.msra.mxu0 0
        %2227 = vmatpush.bf16.xpose.msra.mxu0 0
        %2228 = vmatpush.bf16.xpose.msra.mxu0 0
        %2229 = vmatpush.bf16.xpose.msra.mxu0 0
        %2230 = vmatpush.bf16.xpose.msra.mxu0 0
        %2231 = vmatpush.bf16.xpose.msra.mxu0 0
        %2232 = vmatpush.bf16.xpose.msra.mxu0 0
        %2233 = vmatpush.bf16.xpose.msra.mxu0 %v2172
        %2234 = vmatmul.bf16.gmra.mxu0 %v2224
        %v2235 = vpop.f32.mrf.mxu0
        %v2236 = vadd.f32 0.0, %v2235
        %v2237 = vpop.f32.mrf.mxu0
        %v2238 = vadd.f32 0.0, %v2237
        %2239 = vdwg.mxu0
        %v2240 = vsel %vm2188, %v2236, -inf
        %2241 = vmax.xlane.f32.xlu0 %v2240
        %v2242 = vpop.xlane.xlu0 %2241
        %v2243 = vsel %vm2188, %v2238, -inf
        %2244 = vmax.xlane.f32.xlu0 %v2243
        %v2245 = vpop.xlane.xlu0 %2244
        %v2246 = vsub.f32 %v2236, %v2242
        %v2247 = vsub.f32 %v2238, %v2245
        %v2248 = vmul.f32 %v2246, 1.442695
        %v2249 = vpow.pop %v2248
        %v2250 = vmul.f32 %v2247, 1.442695
        %v2251 = vpow.pop %v2250
        %v2252 = vsel %vm2188, %v2249, 0.0
        %2253 = vadd.xlane.f32.xlu0 %v2252
        %v2254 = vpop.xlane.xlu0 %2253
        %v2255 = vsel %vm2188, %v2251, 0.0
        %2256 = vadd.xlane.f32.xlu0 %v2255
        %v2257 = vpop.xlane.xlu0 %2256
        %v2258 = vrcp.pop %v2254
        %v2259 = vrcp.pop %v2257
        %v2260 = vmul.f32 %v2249, %v2258
        %v2261 = vmul.f32 %v2251, %v2259
        %v2262 = vpack.c.bf16 %v2261, %v2260
        %v2263 = vmul.f32 %v2155, %v2219
        %v2264 = vmul.f32 %v2157, %v2219
        %v2265 = vpack.c.bf16 %v2264, %v2263
        %v2267 = vsel %vm2188, %v2262, 0
        %2269 = vmatpush.bf16.msra.mxu0 0
        %2270 = vmatpush.bf16.msra.mxu0 0
        %2271 = vmatpush.bf16.msra.mxu0 0
        %2272 = vmatpush.bf16.msra.mxu0 0
        %2273 = vmatpush.bf16.msra.mxu0 0
        %2274 = vmatpush.bf16.msra.mxu0 0
        %2275 = vmatpush.bf16.msra.mxu0 0
        %2276 = vmatpush.bf16.msra.mxu0 %v2265
        %2277 = vmatmul.bf16.gmra.mxu0 %v2267
        %v2278 = vpop.f32.mrf.mxu0
        %v2279 = vadd.f32 0.0, %v2278
        %v2280 = vpop.f32.mrf.mxu0
        %v2281 = vadd.f32 0.0, %v2280
        %2282 = vdwg.mxu0
        %v2284 = vsel %vm2188, %v2211, 0
        %2286 = vmatpush.bf16.msra.mxu0 0
        %2287 = vmatpush.bf16.msra.mxu0 0
        %2288 = vmatpush.bf16.msra.mxu0 0
        %2289 = vmatpush.bf16.msra.mxu0 0
        %2290 = vmatpush.bf16.msra.mxu0 0
        %2291 = vmatpush.bf16.msra.mxu0 0
        %2292 = vmatpush.bf16.msra.mxu0 0
        %2293 = vmatpush.bf16.msra.mxu0 %v2214
        %2294 = vmatmul.bf16.gmra.mxu0 %v2284
        %v2295 = vpop.f32.mrf.mxu0
        %v2296 = vadd.f32 %v2279, %v2295
        %v2297 = vpop.f32.mrf.mxu0
        %v2298 = vadd.f32 %v2281, %v2297
        %2299 = vdwg.mxu0
        %vm2300 = vcmp.ge.s32.totalorder %v1929, 32
        %vm2301 = vcmp.lt.s32.totalorder %v1929, 48
        %vm2302 = vmand %vm2300, %vm2301
        %v2303 = vsel %vm2302, 1, 0
        %v2304 = vcvt.s32.f32 %v2303
        %v2305 = vmul.f32 %v2115, %v2304
        %v2306 = vmul.f32 %v2117, %v2304
        %v2307 = vpack.c.bf16 %v2306, %v2305
        %v2309 = vsel %vm1629, %v2307, 0
        %2311 = vmatpush.bf16.xpose.msra.mxu0 0
        %2312 = vmatpush.bf16.xpose.msra.mxu0 0
        %2313 = vmatpush.bf16.xpose.msra.mxu0 0
        %2314 = vmatpush.bf16.xpose.msra.mxu0 0
        %2315 = vmatpush.bf16.xpose.msra.mxu0 0
        %2316 = vmatpush.bf16.xpose.msra.mxu0 0
        %2317 = vmatpush.bf16.xpose.msra.mxu0 0
        %2318 = vmatpush.bf16.xpose.msra.mxu0 %v2172
        %2319 = vmatmul.bf16.gmra.mxu0 %v2309
        %v2320 = vpop.f32.mrf.mxu0
        %v2321 = vadd.f32 0.0, %v2320
        %v2322 = vpop.f32.mrf.mxu0
        %v2323 = vadd.f32 0.0, %v2322
        %2324 = vdwg.mxu0
        %v2325 = vsel %vm2188, %v2321, -inf
        %2326 = vmax.xlane.f32.xlu0 %v2325
        %v2327 = vpop.xlane.xlu0 %2326
        %v2328 = vsel %vm2188, %v2323, -inf
        %2329 = vmax.xlane.f32.xlu0 %v2328
        %v2330 = vpop.xlane.xlu0 %2329
        %v2331 = vsub.f32 %v2321, %v2327
        %v2332 = vsub.f32 %v2323, %v2330
        %v2333 = vmul.f32 %v2331, 1.442695
        %v2334 = vpow.pop %v2333
        %v2335 = vmul.f32 %v2332, 1.442695
        %v2336 = vpow.pop %v2335
        %v2337 = vsel %vm2188, %v2334, 0.0
        %2338 = vadd.xlane.f32.xlu0 %v2337
        %v2339 = vpop.xlane.xlu0 %2338
        %v2340 = vsel %vm2188, %v2336, 0.0
        %2341 = vadd.xlane.f32.xlu0 %v2340
        %v2342 = vpop.xlane.xlu0 %2341
        %v2343 = vrcp.pop %v2339
        %v2344 = vrcp.pop %v2342
        %v2345 = vmul.f32 %v2334, %v2343
        %v2346 = vmul.f32 %v2336, %v2344
        %v2347 = vpack.c.bf16 %v2346, %v2345
        %v2348 = vmul.f32 %v2155, %v2304
        %v2349 = vmul.f32 %v2157, %v2304
        %v2350 = vpack.c.bf16 %v2349, %v2348
        %v2352 = vsel %vm2188, %v2347, 0
        %2354 = vmatpush.bf16.msra.mxu0 0
        %2355 = vmatpush.bf16.msra.mxu0 0
        %2356 = vmatpush.bf16.msra.mxu0 0
        %2357 = vmatpush.bf16.msra.mxu0 0
        %2358 = vmatpush.bf16.msra.mxu0 0
        %2359 = vmatpush.bf16.msra.mxu0 0
        %2360 = vmatpush.bf16.msra.mxu0 0
        %2361 = vmatpush.bf16.msra.mxu0 %v2350
        %2362 = vmatmul.bf16.gmra.mxu0 %v2352
        %v2363 = vpop.f32.mrf.mxu0
        %v2364 = vadd.f32 0.0, %v2363
        %v2365 = vpop.f32.mrf.mxu0
        %v2366 = vadd.f32 0.0, %v2365
        %2367 = vdwg.mxu0
        %v2368 = vadd.f32 %v2296, %v2364
        %v2369 = vadd.f32 %v2298, %v2366
        %vm2370 = vcmp.ge.s32.totalorder %v1929, 48
        %vm2371 = vcmp.lt.s32.totalorder %v1929, 64
        %vm2372 = vmand %vm2370, %vm2371
        %v2373 = vsel %vm2372, 1, 0
        %v2374 = vcvt.s32.f32 %v2373
        %v2375 = vmul.f32 %v2115, %v2374
        %v2376 = vmul.f32 %v2117, %v2374
        %v2377 = vpack.c.bf16 %v2376, %v2375
        %v2379 = vsel %vm1629, %v2377, 0
        %2381 = vmatpush.bf16.xpose.msra.mxu0 0
        %2382 = vmatpush.bf16.xpose.msra.mxu0 0
        %2383 = vmatpush.bf16.xpose.msra.mxu0 0
        %2384 = vmatpush.bf16.xpose.msra.mxu0 0
        %2385 = vmatpush.bf16.xpose.msra.mxu0 0
        %2386 = vmatpush.bf16.xpose.msra.mxu0 0
        %2387 = vmatpush.bf16.xpose.msra.mxu0 0
        %2388 = vmatpush.bf16.xpose.msra.mxu0 %v2172
        %2389 = vmatmul.bf16.gmra.mxu0 %v2379
        %v2390 = vpop.f32.mrf.mxu0
        %v2391 = vadd.f32 0.0, %v2390
        %v2392 = vpop.f32.mrf.mxu0
        %v2393 = vadd.f32 0.0, %v2392
        %2394 = vdwg.mxu0
        %v2395 = vsel %vm2188, %v2391, -inf
        %2396 = vmax.xlane.f32.xlu0 %v2395
        %v2397 = vpop.xlane.xlu0 %2396
        %v2398 = vsel %vm2188, %v2393, -inf
        %2399 = vmax.xlane.f32.xlu0 %v2398
        %v2400 = vpop.xlane.xlu0 %2399
        %v2401 = vsub.f32 %v2391, %v2397
        %v2402 = vsub.f32 %v2393, %v2400
        %v2403 = vmul.f32 %v2401, 1.442695
        %v2404 = vpow.pop %v2403
        %v2405 = vmul.f32 %v2402, 1.442695
        %v2406 = vpow.pop %v2405
        %v2407 = vsel %vm2188, %v2404, 0.0
        %2408 = vadd.xlane.f32.xlu0 %v2407
        %v2409 = vpop.xlane.xlu0 %2408
        %v2410 = vsel %vm2188, %v2406, 0.0
        %2411 = vadd.xlane.f32.xlu0 %v2410
        %v2412 = vpop.xlane.xlu0 %2411
        %v2413 = vrcp.pop %v2409
        %v2414 = vrcp.pop %v2412
        %v2415 = vmul.f32 %v2404, %v2413
        %v2416 = vmul.f32 %v2406, %v2414
        %v2417 = vpack.c.bf16 %v2416, %v2415
        %v2418 = vmul.f32 %v2155, %v2374
        %v2419 = vmul.f32 %v2157, %v2374
        %v2420 = vpack.c.bf16 %v2419, %v2418
        %v2422 = vsel %vm2188, %v2417, 0
        %2424 = vmatpush.bf16.msra.mxu0 0
        %2425 = vmatpush.bf16.msra.mxu0 0
        %2426 = vmatpush.bf16.msra.mxu0 0
        %2427 = vmatpush.bf16.msra.mxu0 0
        %2428 = vmatpush.bf16.msra.mxu0 0
        %2429 = vmatpush.bf16.msra.mxu0 0
        %2430 = vmatpush.bf16.msra.mxu0 0
        %2431 = vmatpush.bf16.msra.mxu0 %v2420
        %2432 = vmatmul.bf16.gmra.mxu0 %v2422
        %v2433 = vpop.f32.mrf.mxu0
        %v2434 = vadd.f32 0.0, %v2433
        %v2435 = vpop.f32.mrf.mxu0
        %v2436 = vadd.f32 0.0, %v2435
        %2437 = vdwg.mxu0
        %v2438 = vadd.f32 %v2368, %v2434
        %v2439 = vadd.f32 %v2369, %v2436
        %v2440 = vpack.c.bf16 %v2439, %v2438
        %v2441 = vld [vmem:[%s49] sm:$0xff]
        %v2442 = vld [vmem:[%s49 + $0x8] sm:$0xff]
        %v2443 = vld [vmem:[%s49 + $0x10] sm:$0xff]
        %v2444 = vld [vmem:[%s49 + $0x18] sm:$0xff]
        %v2445 = vld [vmem:[%s49 + $0x20] sm:$0xff]
        %v2446 = vld [vmem:[%s49 + $0x28] sm:$0xff]
        %v2447 = vld [vmem:[%s49 + $0x30] sm:$0xff]
        %v2448 = vld [vmem:[%s49 + $0x38] sm:$0xff]
        %v2449 = vpack.c.bf16 %v2442, %v2441
        %v2450 = vpack.c.bf16 %v2444, %v2443
        %v2451 = vpack.c.bf16 %v2446, %v2445
        %v2452 = vpack.c.bf16 %v2448, %v2447
        %v2453 = vld [vmem:[%s51] sm:$0x1]
        %v2455 = vperm.slane %v2453, 0
        %v2458 = vsel %vm1629, %v2440, 0
        %2460 = vmatpush.bf16.msra.mxu0 0
        %2461 = vmatpush.bf16.msra.mxu0 0
        %2462 = vmatpush.bf16.msra.mxu0 0
        %2463 = vmatpush.bf16.msra.mxu0 0
        %2464 = vmatpush.bf16.msra.mxu0 %v2452
        %2465 = vmatpush.bf16.msra.mxu0 %v2451
        %2466 = vmatpush.bf16.msra.mxu0 %v2450
        %2467 = vmatpush.bf16.msra.mxu0 %v2449
        %2468 = vmatmul.bf16.gmra.mxu0 %v2458
        %v2469 = vpop.f32.mrf.mxu0
        %v2470 = vadd.f32 %v2455, %v2469
        %v2471 = vpop.f32.mrf.mxu0
        %v2472 = vadd.f32 %v2455, %v2471
        %2473 = vdwg.mxu0
        %v2474 = vld [vmem:[%s53] sm:$0x1]
        %v2475 = vld [vmem:[%s55] sm:$0x1]
        %v2476 = vsel %vm2033, %v2026, 0.0
        %2477 = vadd.xlane.f32.xlu0 %v2476
        %v2478 = vpop.xlane.xlu0 %2477
        %v2479 = vsel %vm2033, %v2029, 0.0
        %2480 = vadd.xlane.f32.xlu0 %v2479
        %v2481 = vpop.xlane.xlu0 %2480
        %v2482 = vmul.f32 %v2478, %v2046
        %v2483 = vmul.f32 %v2481, %v2046
        %v2484 = vsub.f32 %v2026, %v2482
        %v2485 = vsub.f32 %v2029, %v2483
        %v2486 = vmul.f32 %v2484, %v2484
        %v2487 = vmul.f32 %v2485, %v2485
        %v2488 = vsel %vm2033, %v2486, 0.0
        %2489 = vadd.xlane.f32.xlu0 %v2488
        %v2490 = vpop.xlane.xlu0 %2489
        %v2491 = vsel %vm2033, %v2487, 0.0
        %2492 = vadd.xlane.f32.xlu0 %v2491
        %v2493 = vpop.xlane.xlu0 %2492
        %v2494 = vmul.f32 %v2490, %v2046
        %v2495 = vmul.f32 %v2493, %v2046
        %v2496 = vadd.f32 %v2494, 1e-05
        %v2497 = vadd.f32 %v2495, 1e-05
        %v2498 = vrsqrt.pop %v2496
        %v2499 = vmul.f32 %v2498, %v2496
        %v2500 = vmul.f32 %v2499, %v2498
        %v2501 = vmul.f32 0.5, %v2500
        %v2502 = vsub.f32 1.5, %v2501
        %v2503 = vmul.f32 %v2498, %v2502
        %vm2504 = vweird.f32 %v2496
        %vm2505 = vweird.f32 %v2498
        %vm2506 = vmor %vm2504, %vm2505
        %v2507 = vsel %vm2506, %v2498, %v2503
        %v2508 = vrsqrt.pop %v2497
        %v2509 = vmul.f32 %v2508, %v2497
        %v2510 = vmul.f32 %v2509, %v2508
        %v2511 = vmul.f32 0.5, %v2510
        %v2512 = vsub.f32 1.5, %v2511
        %v2513 = vmul.f32 %v2508, %v2512
        %vm2514 = vweird.f32 %v2497
        %vm2515 = vweird.f32 %v2508
        %vm2516 = vmor %vm2514, %vm2515
        %v2517 = vsel %vm2516, %v2508, %v2513
        %v2518 = vmul.f32 %v2484, %v2507
        %v2519 = vmul.f32 %v2485, %v2517
        %v2521 = vperm.slane %v2474, 0
        %v2523 = vmul.f32 %v2518, %v2521
        %v2524 = vmul.f32 %v2519, %v2521
        %v2526 = vperm.slane %v2475, 0
        %v2528 = vadd.f32 %v2523, %v2526
        %v2529 = vadd.f32 %v2524, %v2526
        %v2530 = vpack.c.bf16 %v2529, %v2528
        %v2531 = vld [vmem:[%s57] sm:$0xff]
        %v2532 = vld [vmem:[%s57 + $0x8] sm:$0xff]
        %v2533 = vld [vmem:[%s57 + $0x10] sm:$0xff]
        %v2534 = vld [vmem:[%s57 + $0x18] sm:$0xff]
        %v2535 = vld [vmem:[%s57 + $0x20] sm:$0xff]
        %v2536 = vld [vmem:[%s57 + $0x28] sm:$0xff]
        %v2537 = vld [vmem:[%s57 + $0x30] sm:$0xff]
        %v2538 = vld [vmem:[%s57 + $0x38] sm:$0xff]
        %v2539 = vpack.c.bf16 %v2533, %v2531
        %v2540 = vpack.c.bf16 %v2534, %v2532
        %v2541 = vpack.c.bf16 %v2537, %v2535
        %v2542 = vpack.c.bf16 %v2538, %v2536
        %v2543 = vld [vmem:[%s59] sm:$0x3]
        %v2545 = vperm.slane %v2543, 0
        %v2546 = vperm.slane %v2543, 1
        %v2550 = vsel %vm2033, %v2530, 0
        %2552 = vmatpush.bf16.msra.mxu0 0
        %2553 = vmatpush.bf16.msra.mxu0 0
        %2554 = vmatpush.bf16.msra.mxu0 0
        %2555 = vmatpush.bf16.msra.mxu0 0
        %2556 = vmatpush.bf16.msra.mxu0 0
        %2557 = vmatpush.bf16.msra.mxu0 0
        %2558 = vmatpush.bf16.msra.mxu0 %v2541
        %2559 = vmatpush.bf16.msra.mxu0 %v2539
        %2560 = vmatmul.bf16.gmra.mxu0 %v2550
        %v2561 = vpop.f32.mrf.mxu0
        %v2562 = vadd.f32 %v2545, %v2561
        %v2563 = vpop.f32.mrf.mxu0
        %v2564 = vadd.f32 %v2545, %v2563
        %2565 = vdwg.mxu0
        %2566 = vmatpush.bf16.msra.mxu0 0
        %2567 = vmatpush.bf16.msra.mxu0 0
        %2568 = vmatpush.bf16.msra.mxu0 0
        %2569 = vmatpush.bf16.msra.mxu0 0
        %2570 = vmatpush.bf16.msra.mxu0 0
        %2571 = vmatpush.bf16.msra.mxu0 0
        %2572 = vmatpush.bf16.msra.mxu0 %v2542
        %2573 = vmatpush.bf16.msra.mxu0 %v2540
        %2574 = vmatmul.bf16.gmra.mxu0 %v2550
        %v2575 = vpop.f32.mrf.mxu0
        %v2576 = vadd.f32 %v2546, %v2575
        %v2577 = vpop.f32.mrf.mxu0
        %v2578 = vadd.f32 %v2546, %v2577
        %2579 = vdwg.mxu0
        %v2580 = vld [vmem:[%s61] sm:$0xff]
        %v2581 = vld [vmem:[%s61 + $0x8] sm:$0xff]
        %v2582 = vld [vmem:[%s61 + $0x10] sm:$0xff]
        %v2583 = vld [vmem:[%s61 + $0x18] sm:$0xff]
        %v2584 = vld [vmem:[%s61 + $0x20] sm:$0xff]
        %v2585 = vld [vmem:[%s61 + $0x28] sm:$0xff]
        %v2586 = vld [vmem:[%s61 + $0x30] sm:$0xff]
        %v2587 = vld [vmem:[%s61 + $0x38] sm:$0xff]
        %v2588 = vpack.c.bf16 %v2582, %v2580
        %v2589 = vpack.c.bf16 %v2583, %v2581
        %v2590 = vpack.c.bf16 %v2586, %v2584
        %v2591 = vpack.c.bf16 %v2587, %v2585
        %v2592 = vld [vmem:[%s63] sm:$0x3]
        %v2594 = vperm.slane %v2592, 0
        %v2595 = vperm.slane %v2592, 1
        %2598 = vmatpush.bf16.msra.mxu0 0
        %2599 = vmatpush.bf16.msra.mxu0 0
        %2600 = vmatpush.bf16.msra.mxu0 0
        %2601 = vmatpush.bf16.msra.mxu0 0
        %2602 = vmatpush.bf16.msra.mxu0 0
        %2603 = vmatpush.bf16.msra.mxu0 0
        %2604 = vmatpush.bf16.msra.mxu0 %v2590
        %2605 = vmatpush.bf16.msra.mxu0 %v2588
        %2606 = vmatmul.bf16.gmra.mxu0 %v2550
        %v2607 = vpop.f32.mrf.mxu0
        %v2608 = vadd.f32 %v2594, %v2607
        %v2609 = vpop.f32.mrf.mxu0
        %v2610 = vadd.f32 %v2594, %v2609
        %2611 = vdwg.mxu0
        %2612 = vmatpush.bf16.msra.mxu0 0
        %2613 = vmatpush.bf16.msra.mxu0 0
        %2614 = vmatpush.bf16.msra.mxu0 0
        %2615 = vmatpush.bf16.msra.mxu0 0
        %2616 = vmatpush.bf16.msra.mxu0 0
        %2617 = vmatpush.bf16.msra.mxu0 0
        %2618 = vmatpush.bf16.msra.mxu0 %v2591
        %2619 = vmatpush.bf16.msra.mxu0 %v2589
        %2620 = vmatmul.bf16.gmra.mxu0 %v2550
        %v2621 = vpop.f32.mrf.mxu0
        %v2622 = vadd.f32 %v2595, %v2621
        %v2623 = vpop.f32.mrf.mxu0
        %v2624 = vadd.f32 %v2595, %v2623
        %2625 = vdwg.mxu0
        %v2626 = vld [vmem:[%s65] sm:$0xff]
        %v2627 = vld [vmem:[%s65 + $0x8] sm:$0xff]
        %v2628 = vld [vmem:[%s65 + $0x10] sm:$0xff]
        %v2629 = vld [vmem:[%s65 + $0x18] sm:$0xff]
        %v2630 = vld [vmem:[%s65 + $0x20] sm:$0xff]
        %v2631 = vld [vmem:[%s65 + $0x28] sm:$0xff]
        %v2632 = vld [vmem:[%s65 + $0x30] sm:$0xff]
        %v2633 = vld [vmem:[%s65 + $0x38] sm:$0xff]
        %v2634 = vpack.c.bf16 %v2628, %v2626
        %v2635 = vpack.c.bf16 %v2629, %v2627
        %v2636 = vpack.c.bf16 %v2632, %v2630
        %v2637 = vpack.c.bf16 %v2633, %v2631
        %v2638 = vld [vmem:[%s67] sm:$0x3]
        %v2640 = vperm.slane %v2638, 0
        %v2641 = vperm.slane %v2638, 1
        %2644 = vmatpush.bf16.msra.mxu0 0
        %2645 = vmatpush.bf16.msra.mxu0 0
        %2646 = vmatpush.bf16.msra.mxu0 0
        %2647 = vmatpush.bf16.msra.mxu0 0
        %2648 = vmatpush.bf16.msra.mxu0 0
        %2649 = vmatpush.bf16.msra.mxu0 0
        %2650 = vmatpush.bf16.msra.mxu0 %v2636
        %2651 = vmatpush.bf16.msra.mxu0 %v2634
        %2652 = vmatmul.bf16.gmra.mxu0 %v2550
        %v2653 = vpop.f32.mrf.mxu0
        %v2654 = vadd.f32 %v2640, %v2653
        %v2655 = vpop.f32.mrf.mxu0
        %v2656 = vadd.f32 %v2640, %v2655
        %2657 = vdwg.mxu0
        %2658 = vmatpush.bf16.msra.mxu0 0
        %2659 = vmatpush.bf16.msra.mxu0 0
        %2660 = vmatpush.bf16.msra.mxu0 0
        %2661 = vmatpush.bf16.msra.mxu0 0
        %2662 = vmatpush.bf16.msra.mxu0 0
        %2663 = vmatpush.bf16.msra.mxu0 0
        %2664 = vmatpush.bf16.msra.mxu0 %v2637
        %2665 = vmatpush.bf16.msra.mxu0 %v2635
        %2666 = vmatmul.bf16.gmra.mxu0 %v2550
        %v2667 = vpop.f32.mrf.mxu0
        %v2668 = vadd.f32 %v2641, %v2667
        %v2669 = vpop.f32.mrf.mxu0
        %v2670 = vadd.f32 %v2641, %v2669
        %2671 = vdwg.mxu0
        %2672 = vst [vmem:[#allocation2 + $0x20] sm:$0xff] %v2608
        %2673 = vst [vmem:[#allocation2 + $0x28] sm:$0xff] %v2622
        %2674 = vst [vmem:[#allocation2 + $0x30] sm:$0xff] %v2610
        %2675 = vst [vmem:[#allocation2 + $0x38] sm:$0xff] %v2624
        %v2676 = vld [vmem:[%s69] ss:$8 sm:$0x3]
        %v2678 = vperm.slane %v2676, 0
        %v2679 = vperm.slane %v2676, 1
        %v2682 = vmul.f32 %v2608, %v2678
        %v2683 = vmul.f32 %v2622, %v2679
        %v2684 = vmul.f32 %v2610, %v2678
        %v2685 = vmul.f32 %v2624, %v2679
        %v2686 = vld [vmem:[#allocation2 + $0x10] sm:$0x80]
        %v2687 = vld [vmem:[#allocation2 + $0x18] sm:$0x80]
        %v2688 = vld [vmem:[#allocation2 + $0x20] sm:$0xff]
        %v2689 = vld [vmem:[#allocation2 + $0x28] sm:$0xff]
        %v2690 = vld [vmem:[#allocation2 + $0x30] sm:$0x7f]
        %v2691 = vld [vmem:[#allocation2 + $0x38] sm:$0x7f]
        %s2692 = scalar_lea.vmem %s69, 1
        %v2693 = vld [vmem:[%s2692] ss:$8 sm:$0x3]
        %v2695 = vperm.slane %v2693, 0
        %v2696 = vperm.slane %v2693, 1
        %v2699 = vmul.f32 %v2686, %v2695
        %v2700 = vmul.f32 %v2687, %v2696
        %v2701 = vmul.f32 %v2688, %v2695
        %v2702 = vmul.f32 %v2689, %v2696
        %v2703 = vmul.f32 %v2690, %v2695
        %v2704 = vmul.f32 %v2691, %v2696
        %vm2711 = vcmask 1040384
        %v2712 = vrot.slane %v2699, 7
        %v2713 = vrot.slane %v2701, 7
        %v2714 = vsel %vm2711, %v2712, %v2713
        %v2715 = vrot.slane %v2700, 7
        %v2716 = vrot.slane %v2702, 7
        %v2717 = vsel %vm2711, %v2715, %v2716
        %v2718 = vrot.slane %v2703, 7
        %v2719 = vsel %vm2711, %v2713, %v2718
        %v2720 = vrot.slane %v2704, 7
        %v2721 = vsel %vm2711, %v2716, %v2720
        %v2726 = vadd.f32 %v2682, %v2714
        %v2727 = vadd.f32 %v2683, %v2717
        %v2728 = vadd.f32 %v2684, %v2719
        %v2729 = vadd.f32 %v2685, %v2721
        %v2730 = vld [vmem:[#allocation2 + $0x10] sm:$0xc0]
        %v2731 = vld [vmem:[#allocation2 + $0x18] sm:$0xc0]
        %v2732 = vld [vmem:[#allocation2 + $0x30] sm:$0x3f]
        %v2733 = vld [vmem:[#allocation2 + $0x38] sm:$0x3f]
        %s2734 = scalar_lea.vmem %s69, 2
        %v2735 = vld [vmem:[%s2734] ss:$8 sm:$0x3]
        %v2737 = vperm.slane %v2735, 0
        %v2738 = vperm.slane %v2735, 1
        %v2741 = vmul.f32 %v2730, %v2737
        %v2742 = vmul.f32 %v2731, %v2738
        %v2743 = vmul.f32 %v2688, %v2737
        %v2744 = vmul.f32 %v2689, %v2738
        %v2745 = vmul.f32 %v2732, %v2737
        %v2746 = vmul.f32 %v2733, %v2738
        %vm2753 = vcmask 1041408
        %v2754 = vrot.slane %v2741, 6
        %v2755 = vrot.slane %v2743, 6
        %v2756 = vsel %vm2753, %v2754, %v2755
        %v2757 = vrot.slane %v2742, 6
        %v2758 = vrot.slane %v2744, 6
        %v2759 = vsel %vm2753, %v2757, %v2758
        %v2760 = vrot.slane %v2745, 6
        %v2761 = vsel %vm2753, %v2755, %v2760
        %v2762 = vrot.slane %v2746, 6
        %v2763 = vsel %vm2753, %v2758, %v2762
        %v2768 = vadd.f32 %v2726, %v2756
        %v2769 = vadd.f32 %v2727, %v2759
        %v2770 = vadd.f32 %v2728, %v2761
        %v2771 = vadd.f32 %v2729, %v2763
        %v2772 = vld [vmem:[#allocation2 + $0x10] sm:$0xe0]
        %v2773 = vld [vmem:[#allocation2 + $0x18] sm:$0xe0]
        %v2774 = vld [vmem:[#allocation2 + $0x30] sm:$0x1f]
        %v2775 = vld [vmem:[#allocation2 + $0x38] sm:$0x1f]
        %s2776 = scalar_lea.vmem %s69, 3
        %v2777 = vld [vmem:[%s2776] ss:$8 sm:$0x3]
        %v2779 = vperm.slane %v2777, 0
        %v2780 = vperm.slane %v2777, 1
        %v2783 = vmul.f32 %v2772, %v2779
        %v2784 = vmul.f32 %v2773, %v2780
        %v2785 = vmul.f32 %v2688, %v2779
        %v2786 = vmul.f32 %v2689, %v2780
        %v2787 = vmul.f32 %v2774, %v2779
        %v2788 = vmul.f32 %v2775, %v2780
        %vm2795 = vcmask 1042432
        %v2796 = vrot.slane %v2783, 5
        %v2797 = vrot.slane %v2785, 5
        %v2798 = vsel %vm2795, %v2796, %v2797
        %v2799 = vrot.slane %v2784, 5
        %v2800 = vrot.slane %v2786, 5
        %v2801 = vsel %vm2795, %v2799, %v2800
        %v2802 = vrot.slane %v2787, 5
        %v2803 = vsel %vm2795, %v2797, %v2802
        %v2804 = vrot.slane %v2788, 5
        %v2805 = vsel %vm2795, %v2800, %v2804
        %v2810 = vadd.f32 %v2768, %v2798
        %v2811 = vadd.f32 %v2769, %v2801
        %v2812 = vadd.f32 %v2770, %v2803
        %v2813 = vadd.f32 %v2771, %v2805
        %v2814 = vld [vmem:[#allocation2 + $0x10] sm:$0xf0]
        %v2815 = vld [vmem:[#allocation2 + $0x18] sm:$0xf0]
        %v2816 = vld [vmem:[#allocation2 + $0x30] sm:$0xf]
        %v2817 = vld [vmem:[#allocation2 + $0x38] sm:$0xf]
        %s2818 = scalar_lea.vmem %s69, 4
        %v2819 = vld [vmem:[%s2818] ss:$8 sm:$0x3]
        %v2821 = vperm.slane %v2819, 0
        %v2822 = vperm.slane %v2819, 1
        %v2825 = vmul.f32 %v2814, %v2821
        %v2826 = vmul.f32 %v2815, %v2822
        %v2827 = vmul.f32 %v2688, %v2821
        %v2828 = vmul.f32 %v2689, %v2822
        %v2829 = vmul.f32 %v2816, %v2821
        %v2830 = vmul.f32 %v2817, %v2822
        %vm2837 = vcmask 1043456
        %v2838 = vrot.slane %v2825, 4
        %v2839 = vrot.slane %v2827, 4
        %v2840 = vsel %vm2837, %v2838, %v2839
        %v2841 = vrot.slane %v2826, 4
        %v2842 = vrot.slane %v2828, 4
        %v2843 = vsel %vm2837, %v2841, %v2842
        %v2844 = vrot.slane %v2829, 4
        %v2845 = vsel %vm2837, %v2839, %v2844
        %v2846 = vrot.slane %v2830, 4
        %v2847 = vsel %vm2837, %v2842, %v2846
        %v2852 = vadd.f32 %v2810, %v2840
        %v2853 = vadd.f32 %v2811, %v2843
        %v2854 = vadd.f32 %v2812, %v2845
        %v2855 = vadd.f32 %v2813, %v2847
        %v2856 = vld [vmem:[#allocation2 + $0x10] sm:$0xf8]
        %v2857 = vld [vmem:[#allocation2 + $0x18] sm:$0xf8]
        %v2858 = vld [vmem:[#allocation2 + $0x30] sm:$0x7]
        %v2859 = vld [vmem:[#allocation2 + $0x38] sm:$0x7]
        %s2860 = scalar_lea.vmem %s69, 5
        %v2861 = vld [vmem:[%s2860] ss:$8 sm:$0x3]
        %v2863 = vperm.slane %v2861, 0
        %v2864 = vperm.slane %v2861, 1
        %v2867 = vmul.f32 %v2856, %v2863
        %v2868 = vmul.f32 %v2857, %v2864
        %v2869 = vmul.f32 %v2688, %v2863
        %v2870 = vmul.f32 %v2689, %v2864
        %v2871 = vmul.f32 %v2858, %v2863
        %v2872 = vmul.f32 %v2859, %v2864
        %vm2879 = vcmask 1044480
        %v2880 = vrot.slane %v2867, 3
        %v2881 = vrot.slane %v2869, 3
        %v2882 = vsel %vm2879, %v2880, %v2881
        %v2883 = vrot.slane %v2868, 3
        %v2884 = vrot.slane %v2870, 3
        %v2885 = vsel %vm2879, %v2883, %v2884
        %v2886 = vrot.slane %v2871, 3
        %v2887 = vsel %vm2879, %v2881, %v2886
        %v2888 = vrot.slane %v2872, 3
        %v2889 = vsel %vm2879, %v2884, %v2888
        %v2894 = vadd.f32 %v2852, %v2882
        %v2895 = vadd.f32 %v2853, %v2885
        %v2896 = vadd.f32 %v2854, %v2887
        %v2897 = vadd.f32 %v2855, %v2889
        %v2898 = vld [vmem:[#allocation2 + $0x10] sm:$0xfc]
        %v2899 = vld [vmem:[#allocation2 + $0x18] sm:$0xfc]
        %v2900 = vld [vmem:[#allocation2 + $0x30] sm:$0x3]
        %v2901 = vld [vmem:[#allocation2 + $0x38] sm:$0x3]
        %s2902 = scalar_lea.vmem %s69, 6
        %v2903 = vld [vmem:[%s2902] ss:$8 sm:$0x3]
        %v2905 = vperm.slane %v2903, 0
        %v2906 = vperm.slane %v2903, 1
        %v2909 = vmul.f32 %v2898, %v2905
        %v2910 = vmul.f32 %v2899, %v2906
        %v2911 = vmul.f32 %v2688, %v2905
        %v2912 = vmul.f32 %v2689, %v2906
        %v2913 = vmul.f32 %v2900, %v2905
        %v2914 = vmul.f32 %v2901, %v2906
        %vm2921 = vcmask 1045504
        %v2922 = vrot.slane %v2909, 2
        %v2923 = vrot.slane %v2911, 2
        %v2924 = vsel %vm2921, %v2922, %v2923
        %v2925 = vrot.slane %v2910, 2
        %v2926 = vrot.slane %v2912, 2
        %v2927 = vsel %vm2921, %v2925, %v2926
        %v2928 = vrot.slane %v2913, 2
        %v2929 = vsel %vm2921, %v2923, %v2928
        %v2930 = vrot.slane %v2914, 2
        %v2931 = vsel %vm2921, %v2926, %v2930
        %v2936 = vadd.f32 %v2894, %v2924
        %v2937 = vadd.f32 %v2895, %v2927
        %v2938 = vadd.f32 %v2896, %v2929
        %v2939 = vadd.f32 %v2897, %v2931
        %v2940 = vld [vmem:[#allocation2 + $0x10] sm:$0xfe]
        %v2941 = vld [vmem:[#allocation2 + $0x18] sm:$0xfe]
        %v2942 = vld [vmem:[#allocation2 + $0x30] sm:$0x1]
        %v2943 = vld [vmem:[#allocation2 + $0x38] sm:$0x1]
        %s2944 = scalar_lea.vmem %s69, 7
        %v2945 = vld [vmem:[%s2944] ss:$8 sm:$0x3]
        %v2947 = vperm.slane %v2945, 0
        %v2948 = vperm.slane %v2945, 1
        %v2951 = vmul.f32 %v2940, %v2947
        %v2952 = vmul.f32 %v2941, %v2948
        %v2953 = vmul.f32 %v2688, %v2947
        %v2954 = vmul.f32 %v2689, %v2948
        %v2955 = vmul.f32 %v2942, %v2947
        %v2956 = vmul.f32 %v2943, %v2948
        %vm2963 = vcmask 1046528
        %v2964 = vrot.slane %v2951, 1
        %v2965 = vrot.slane %v2953, 1
        %v2966 = vsel %vm2963, %v2964, %v2965
        %v2967 = vrot.slane %v2952, 1
        %v2968 = vrot.slane %v2954, 1
        %v2969 = vsel %vm2963, %v2967, %v2968
        %v2970 = vrot.slane %v2955, 1
        %v2971 = vsel %vm2963, %v2965, %v2970
        %v2972 = vrot.slane %v2956, 1
        %v2973 = vsel %vm2963, %v2968, %v2972
        %v2978 = vadd.f32 %v2936, %v2966
        %v2979 = vadd.f32 %v2937, %v2969
        %v2980 = vadd.f32 %v2938, %v2971
        %v2981 = vadd.f32 %v2939, %v2973
        %v2982 = vld [vmem:[#allocation2 + $0x10] sm:$0xff]
        %v2983 = vld [vmem:[#allocation2 + $0x18] sm:$0xff]
        %v2984 = vld [vmem:[#allocation2 + $0x20] sm:$0xff]
        %v2985 = vld [vmem:[#allocation2 + $0x28] sm:$0xff]
        %s2986 = scalar_lea.vmem %s69, 16
        %v2987 = vld [vmem:[%s2986] ss:$8 sm:$0x3]
        %v2989 = vperm.slane %v2987, 0
        %v2990 = vperm.slane %v2987, 1
        %v2993 = vmul.f32 %v2982, %v2989
        %v2994 = vmul.f32 %v2983, %v2990
        %v2995 = vmul.f32 %v2984, %v2989
        %v2996 = vmul.f32 %v2985, %v2990
        %v2997 = vadd.f32 %v2978, %v2993
        %v2998 = vadd.f32 %v2979, %v2994
        %v2999 = vadd.f32 %v2980, %v2995
        %v3000 = vadd.f32 %v2981, %v2996
        %v3001 = vld [vmem:[#allocation2] sm:$0x80]
        %v3002 = vld [vmem:[#allocation2 + $0x8] sm:$0x80]
        %v3003 = vld [vmem:[#allocation2 + $0x20] sm:$0x7f]
        %v3004 = vld [vmem:[#allocation2 + $0x28] sm:$0x7f]
        %s3005 = scalar_lea.vmem %s69, 17
        %v3006 = vld [vmem:[%s3005] ss:$8 sm:$0x3]
        %v3008 = vperm.slane %v3006, 0
        %v3009 = vperm.slane %v3006, 1
        %v3012 = vmul.f32 %v3001, %v3008
        %v3013 = vmul.f32 %v3002, %v3009
        %v3014 = vmul.f32 %v2982, %v3008
        %v3015 = vmul.f32 %v2983, %v3009
        %v3016 = vmul.f32 %v3003, %v3008
        %v3017 = vmul.f32 %v3004, %v3009
        %v3024 = vrot.slane %v3012, 7
        %v3025 = vrot.slane %v3014, 7
        %v3026 = vsel %vm2711, %v3024, %v3025
        %v3027 = vrot.slane %v3013, 7
        %v3028 = vrot.slane %v3015, 7
        %v3029 = vsel %vm2711, %v3027, %v3028
        %v3030 = vrot.slane %v3016, 7
        %v3031 = vsel %vm2711, %v3025, %v3030
        %v3032 = vrot.slane %v3017, 7
        %v3033 = vsel %vm2711, %v3028, %v3032
        %v3038 = vadd.f32 %v2997, %v3026
        %v3039 = vadd.f32 %v2998, %v3029
        %v3040 = vadd.f32 %v2999, %v3031
        %v3041 = vadd.f32 %v3000, %v3033
        %v3042 = vld [vmem:[#allocation2] sm:$0xc0]
        %v3043 = vld [vmem:[#allocation2 + $0x8] sm:$0xc0]
        %v3044 = vld [vmem:[#allocation2 + $0x20] sm:$0x3f]
        %v3045 = vld [vmem:[#allocation2 + $0x28] sm:$0x3f]
        %s3046 = scalar_lea.vmem %s69, 18
        %v3047 = vld [vmem:[%s3046] ss:$8 sm:$0x3]
        %v3049 = vperm.slane %v3047, 0
        %v3050 = vperm.slane %v3047, 1
        %v3053 = vmul.f32 %v3042, %v3049
        %v3054 = vmul.f32 %v3043, %v3050
        %v3055 = vmul.f32 %v2982, %v3049
        %v3056 = vmul.f32 %v2983, %v3050
        %v3057 = vmul.f32 %v3044, %v3049
        %v3058 = vmul.f32 %v3045, %v3050
        %v3065 = vrot.slane %v3053, 6
        %v3066 = vrot.slane %v3055, 6
        %v3067 = vsel %vm2753, %v3065, %v3066
        %v3068 = vrot.slane %v3054, 6
        %v3069 = vrot.slane %v3056, 6
        %v3070 = vsel %vm2753, %v3068, %v3069
        %v3071 = vrot.slane %v3057, 6
        %v3072 = vsel %vm2753, %v3066, %v3071
        %v3073 = vrot.slane %v3058, 6
        %v3074 = vsel %vm2753, %v3069, %v3073
        %v3079 = vadd.f32 %v3038, %v3067
        %v3080 = vadd.f32 %v3039, %v3070
        %v3081 = vadd.f32 %v3040, %v3072
        %v3082 = vadd.f32 %v3041, %v3074
        %v3083 = vld [vmem:[#allocation2] sm:$0xe0]
        %v3084 = vld [vmem:[#allocation2 + $0x8] sm:$0xe0]
        %v3085 = vld [vmem:[#allocation2 + $0x20] sm:$0x1f]
        %v3086 = vld [vmem:[#allocation2 + $0x28] sm:$0x1f]
        %s3087 = scalar_lea.vmem %s69, 19
        %v3088 = vld [vmem:[%s3087] ss:$8 sm:$0x3]
        %v3090 = vperm.slane %v3088, 0
        %v3091 = vperm.slane %v3088, 1
        %v3094 = vmul.f32 %v3083, %v3090
        %v3095 = vmul.f32 %v3084, %v3091
        %v3096 = vmul.f32 %v2982, %v3090
        %v3097 = vmul.f32 %v2983, %v3091
        %v3098 = vmul.f32 %v3085, %v3090
        %v3099 = vmul.f32 %v3086, %v3091
        %v3106 = vrot.slane %v3094, 5
        %v3107 = vrot.slane %v3096, 5
        %v3108 = vsel %vm2795, %v3106, %v3107
        %v3109 = vrot.slane %v3095, 5
        %v3110 = vrot.slane %v3097, 5
        %v3111 = vsel %vm2795, %v3109, %v3110
        %v3112 = vrot.slane %v3098, 5
        %v3113 = vsel %vm2795, %v3107, %v3112
        %v3114 = vrot.slane %v3099, 5
        %v3115 = vsel %vm2795, %v3110, %v3114
        %v3120 = vadd.f32 %v3079, %v3108
        %v3121 = vadd.f32 %v3080, %v3111
        %v3122 = vadd.f32 %v3081, %v3113
        %v3123 = vadd.f32 %v3082, %v3115
        %v3124 = vld [vmem:[#allocation2] sm:$0xf0]
        %v3125 = vld [vmem:[#allocation2 + $0x8] sm:$0xf0]
        %v3126 = vld [vmem:[#allocation2 + $0x20] sm:$0xf]
        %v3127 = vld [vmem:[#allocation2 + $0x28] sm:$0xf]
        %s3128 = scalar_lea.vmem %s69, 20
        %v3129 = vld [vmem:[%s3128] ss:$8 sm:$0x3]
        %v3131 = vperm.slane %v3129, 0
        %v3132 = vperm.slane %v3129, 1
        %v3135 = vmul.f32 %v3124, %v3131
        %v3136 = vmul.f32 %v3125, %v3132
        %v3137 = vmul.f32 %v2982, %v3131
        %v3138 = vmul.f32 %v2983, %v3132
        %v3139 = vmul.f32 %v3126, %v3131
        %v3140 = vmul.f32 %v3127, %v3132
        %v3147 = vrot.slane %v3135, 4
        %v3148 = vrot.slane %v3137, 4
        %v3149 = vsel %vm2837, %v3147, %v3148
        %v3150 = vrot.slane %v3136, 4
        %v3151 = vrot.slane %v3138, 4
        %v3152 = vsel %vm2837, %v3150, %v3151
        %v3153 = vrot.slane %v3139, 4
        %v3154 = vsel %vm2837, %v3148, %v3153
        %v3155 = vrot.slane %v3140, 4
        %v3156 = vsel %vm2837, %v3151, %v3155
        %v3161 = vadd.f32 %v3120, %v3149
        %v3162 = vadd.f32 %v3121, %v3152
        %v3163 = vadd.f32 %v3122, %v3154
        %v3164 = vadd.f32 %v3123, %v3156
        %v3165 = vld [vmem:[#allocation2] sm:$0xf8]
        %v3166 = vld [vmem:[#allocation2 + $0x8] sm:$0xf8]
        %v3167 = vld [vmem:[#allocation2 + $0x20] sm:$0x7]
        %v3168 = vld [vmem:[#allocation2 + $0x28] sm:$0x7]
        %s3169 = scalar_lea.vmem %s69, 21
        %v3170 = vld [vmem:[%s3169] ss:$8 sm:$0x3]
        %v3172 = vperm.slane %v3170, 0
        %v3173 = vperm.slane %v3170, 1
        %v3176 = vmul.f32 %v3165, %v3172
        %v3177 = vmul.f32 %v3166, %v3173
        %v3178 = vmul.f32 %v2982, %v3172
        %v3179 = vmul.f32 %v2983, %v3173
        %v3180 = vmul.f32 %v3167, %v3172
        %v3181 = vmul.f32 %v3168, %v3173
        %v3188 = vrot.slane %v3176, 3
        %v3189 = vrot.slane %v3178, 3
        %v3190 = vsel %vm2879, %v3188, %v3189
        %v3191 = vrot.slane %v3177, 3
        %v3192 = vrot.slane %v3179, 3
        %v3193 = vsel %vm2879, %v3191, %v3192
        %v3194 = vrot.slane %v3180, 3
        %v3195 = vsel %vm2879, %v3189, %v3194
        %v3196 = vrot.slane %v3181, 3
        %v3197 = vsel %vm2879, %v3192, %v3196
        %v3202 = vadd.f32 %v3161, %v3190
        %v3203 = vadd.f32 %v3162, %v3193
        %v3204 = vadd.f32 %v3163, %v3195
        %v3205 = vadd.f32 %v3164, %v3197
        %v3206 = vld [vmem:[#allocation2] sm:$0xfc]
        %v3207 = vld [vmem:[#allocation2 + $0x8] sm:$0xfc]
        %v3208 = vld [vmem:[#allocation2 + $0x20] sm:$0x3]
        %v3209 = vld [vmem:[#allocation2 + $0x28] sm:$0x3]
        %s3210 = scalar_lea.vmem %s69, 22
        %v3211 = vld [vmem:[%s3210] ss:$8 sm:$0x3]
        %v3213 = vperm.slane %v3211, 0
        %v3214 = vperm.slane %v3211, 1
        %v3217 = vmul.f32 %v3206, %v3213
        %v3218 = vmul.f32 %v3207, %v3214
        %v3219 = vmul.f32 %v2982, %v3213
        %v3220 = vmul.f32 %v2983, %v3214
        %v3221 = vmul.f32 %v3208, %v3213
        %v3222 = vmul.f32 %v3209, %v3214
        %v3229 = vrot.slane %v3217, 2
        %v3230 = vrot.slane %v3219, 2
        %v3231 = vsel %vm2921, %v3229, %v3230
        %v3232 = vrot.slane %v3218, 2
        %v3233 = vrot.slane %v3220, 2
        %v3234 = vsel %vm2921, %v3232, %v3233
        %v3235 = vrot.slane %v3221, 2
        %v3236 = vsel %vm2921, %v3230, %v3235
        %v3237 = vrot.slane %v3222, 2
        %v3238 = vsel %vm2921, %v3233, %v3237
        %v3243 = vadd.f32 %v3202, %v3231
        %v3244 = vadd.f32 %v3203, %v3234
        %v3245 = vadd.f32 %v3204, %v3236
        %v3246 = vadd.f32 %v3205, %v3238
        %v3247 = vld [vmem:[#allocation2] sm:$0xfe]
        %v3248 = vld [vmem:[#allocation2 + $0x8] sm:$0xfe]
        %v3249 = vld [vmem:[#allocation2 + $0x20] sm:$0x1]
        %v3250 = vld [vmem:[#allocation2 + $0x28] sm:$0x1]
        %s3251 = scalar_lea.vmem %s69, 23
        %v3252 = vld [vmem:[%s3251] ss:$8 sm:$0x3]
        %v3254 = vperm.slane %v3252, 0
        %v3255 = vperm.slane %v3252, 1
        %v3258 = vmul.f32 %v3247, %v3254
        %v3259 = vmul.f32 %v3248, %v3255
        %v3260 = vmul.f32 %v2982, %v3254
        %v3261 = vmul.f32 %v2983, %v3255
        %v3262 = vmul.f32 %v3249, %v3254
        %v3263 = vmul.f32 %v3250, %v3255
        %v3270 = vrot.slane %v3258, 1
        %v3271 = vrot.slane %v3260, 1
        %v3272 = vsel %vm2963, %v3270, %v3271
        %v3273 = vrot.slane %v3259, 1
        %v3274 = vrot.slane %v3261, 1
        %v3275 = vsel %vm2963, %v3273, %v3274
        %v3276 = vrot.slane %v3262, 1
        %v3277 = vsel %vm2963, %v3271, %v3276
        %v3278 = vrot.slane %v3263, 1
        %v3279 = vsel %vm2963, %v3274, %v3278
        %v3284 = vadd.f32 %v3243, %v3272
        %v3285 = vadd.f32 %v3244, %v3275
        %v3286 = vadd.f32 %v3245, %v3277
        %v3287 = vadd.f32 %v3246, %v3279
        %v3288 = vmul.f32 %v3284, %v2654
        %v3289 = vmul.f32 %v3285, %v2668
        %v3290 = vmul.f32 %v3286, %v2656
        %v3291 = vmul.f32 %v3287, %v2670
        %3292 = vst [vmem:[#allocation2 + $0x20] sm:$0xff] %v3288
        %3293 = vst [vmem:[#allocation2 + $0x28] sm:$0xff] %v3289
        %3294 = vst [vmem:[#allocation2 + $0x30] sm:$0xff] %v3290
        %3295 = vst [vmem:[#allocation2 + $0x38] sm:$0xff] %v3291
        %v3296 = vld [vmem:[%s71] ss:$8 sm:$0x3]
        %v3298 = vperm.slane %v3296, 0
        %v3299 = vperm.slane %v3296, 1
        %v3302 = vmul.f32 %v3288, %v3298
        %v3303 = vmul.f32 %v3289, %v3299
        %v3304 = vmul.f32 %v3290, %v3298
        %v3305 = vmul.f32 %v3291, %v3299
        %v3306 = vld [vmem:[#allocation2 + $0x10] sm:$0x80]
        %v3307 = vld [vmem:[#allocation2 + $0x18] sm:$0x80]
        %v3308 = vld [vmem:[#allocation2 + $0x20] sm:$0xff]
        %v3309 = vld [vmem:[#allocation2 + $0x28] sm:$0xff]
        %v3310 = vld [vmem:[#allocation2 + $0x30] sm:$0x7f]
        %v3311 = vld [vmem:[#allocation2 + $0x38] sm:$0x7f]
        %s3312 = scalar_lea.vmem %s71, 1
        %v3313 = vld [vmem:[%s3312] ss:$8 sm:$0x3]
        %v3315 = vperm.slane %v3313, 0
        %v3316 = vperm.slane %v3313, 1
        %v3319 = vmul.f32 %v3306, %v3315
        %v3320 = vmul.f32 %v3307, %v3316
        %v3321 = vmul.f32 %v3308, %v3315
        %v3322 = vmul.f32 %v3309, %v3316
        %v3323 = vmul.f32 %v3310, %v3315
        %v3324 = vmul.f32 %v3311, %v3316
        %v3331 = vrot.slane %v3319, 7
        %v3332 = vrot.slane %v3321, 7
        %v3333 = vsel %vm2711, %v3331, %v3332
        %v3334 = vrot.slane %v3320, 7
        %v3335 = vrot.slane %v3322, 7
        %v3336 = vsel %vm2711, %v3334, %v3335
        %v3337 = vrot.slane %v3323, 7
        %v3338 = vsel %vm2711, %v3332, %v3337
        %v3339 = vrot.slane %v3324, 7
        %v3340 = vsel %vm2711, %v3335, %v3339
        %v3345 = vadd.f32 %v3302, %v3333
        %v3346 = vadd.f32 %v3303, %v3336
        %v3347 = vadd.f32 %v3304, %v3338
        %v3348 = vadd.f32 %v3305, %v3340
        %v3349 = vld [vmem:[#allocation2 + $0x10] sm:$0xc0]
        %v3350 = vld [vmem:[#allocation2 + $0x18] sm:$0xc0]
        %v3351 = vld [vmem:[#allocation2 + $0x30] sm:$0x3f]
        %v3352 = vld [vmem:[#allocation2 + $0x38] sm:$0x3f]
        %s3353 = scalar_lea.vmem %s71, 2
        %v3354 = vld [vmem:[%s3353] ss:$8 sm:$0x3]
        %v3356 = vperm.slane %v3354, 0
        %v3357 = vperm.slane %v3354, 1
        %v3360 = vmul.f32 %v3349, %v3356
        %v3361 = vmul.f32 %v3350, %v3357
        %v3362 = vmul.f32 %v3308, %v3356
        %v3363 = vmul.f32 %v3309, %v3357
        %v3364 = vmul.f32 %v3351, %v3356
        %v3365 = vmul.f32 %v3352, %v3357
        %v3372 = vrot.slane %v3360, 6
        %v3373 = vrot.slane %v3362, 6
        %v3374 = vsel %vm2753, %v3372, %v3373
        %v3375 = vrot.slane %v3361, 6
        %v3376 = vrot.slane %v3363, 6
        %v3377 = vsel %vm2753, %v3375, %v3376
        %v3378 = vrot.slane %v3364, 6
        %v3379 = vsel %vm2753, %v3373, %v3378
        %v3380 = vrot.slane %v3365, 6
        %v3381 = vsel %vm2753, %v3376, %v3380
        %v3386 = vadd.f32 %v3345, %v3374
        %v3387 = vadd.f32 %v3346, %v3377
        %v3388 = vadd.f32 %v3347, %v3379
        %v3389 = vadd.f32 %v3348, %v3381
        %v3390 = vld [vmem:[#allocation2 + $0x10] sm:$0xe0]
        %v3391 = vld [vmem:[#allocation2 + $0x18] sm:$0xe0]
        %v3392 = vld [vmem:[#allocation2 + $0x30] sm:$0x1f]
        %v3393 = vld [vmem:[#allocation2 + $0x38] sm:$0x1f]
        %s3394 = scalar_lea.vmem %s71, 3
        %v3395 = vld [vmem:[%s3394] ss:$8 sm:$0x3]
        %v3397 = vperm.slane %v3395, 0
        %v3398 = vperm.slane %v3395, 1
        %v3401 = vmul.f32 %v3390, %v3397
        %v3402 = vmul.f32 %v3391, %v3398
        %v3403 = vmul.f32 %v3308, %v3397
        %v3404 = vmul.f32 %v3309, %v3398
        %v3405 = vmul.f32 %v3392, %v3397
        %v3406 = vmul.f32 %v3393, %v3398
        %v3413 = vrot.slane %v3401, 5
        %v3414 = vrot.slane %v3403, 5
        %v3415 = vsel %vm2795, %v3413, %v3414
        %v3416 = vrot.slane %v3402, 5
        %v3417 = vrot.slane %v3404, 5
        %v3418 = vsel %vm2795, %v3416, %v3417
        %v3419 = vrot.slane %v3405, 5
        %v3420 = vsel %vm2795, %v3414, %v3419
        %v3421 = vrot.slane %v3406, 5
        %v3422 = vsel %vm2795, %v3417, %v3421
        %v3427 = vadd.f32 %v3386, %v3415
        %v3428 = vadd.f32 %v3387, %v3418
        %v3429 = vadd.f32 %v3388, %v3420
        %v3430 = vadd.f32 %v3389, %v3422
        %v3431 = vld [vmem:[#allocation2 + $0x10] sm:$0xf0]
        %v3432 = vld [vmem:[#allocation2 + $0x18] sm:$0xf0]
        %v3433 = vld [vmem:[#allocation2 + $0x30] sm:$0xf]
        %v3434 = vld [vmem:[#allocation2 + $0x38] sm:$0xf]
        %s3435 = scalar_lea.vmem %s71, 4
        %v3436 = vld [vmem:[%s3435] ss:$8 sm:$0x3]
        %v3438 = vperm.slane %v3436, 0
        %v3439 = vperm.slane %v3436, 1
        %v3442 = vmul.f32 %v3431, %v3438
        %v3443 = vmul.f32 %v3432, %v3439
        %v3444 = vmul.f32 %v3308, %v3438
        %v3445 = vmul.f32 %v3309, %v3439
        %v3446 = vmul.f32 %v3433, %v3438
        %v3447 = vmul.f32 %v3434, %v3439
        %v3454 = vrot.slane %v3442, 4
        %v3455 = vrot.slane %v3444, 4
        %v3456 = vsel %vm2837, %v3454, %v3455
        %v3457 = vrot.slane %v3443, 4
        %v3458 = vrot.slane %v3445, 4
        %v3459 = vsel %vm2837, %v3457, %v3458
        %v3460 = vrot.slane %v3446, 4
        %v3461 = vsel %vm2837, %v3455, %v3460
        %v3462 = vrot.slane %v3447, 4
        %v3463 = vsel %vm2837, %v3458, %v3462
        %v3468 = vadd.f32 %v3427, %v3456
        %v3469 = vadd.f32 %v3428, %v3459
        %v3470 = vadd.f32 %v3429, %v3461
        %v3471 = vadd.f32 %v3430, %v3463
        %v3472 = vld [vmem:[#allocation2 + $0x10] sm:$0xf8]
        %v3473 = vld [vmem:[#allocation2 + $0x18] sm:$0xf8]
        %v3474 = vld [vmem:[#allocation2 + $0x30] sm:$0x7]
        %v3475 = vld [vmem:[#allocation2 + $0x38] sm:$0x7]
        %s3476 = scalar_lea.vmem %s71, 5
        %v3477 = vld [vmem:[%s3476] ss:$8 sm:$0x3]
        %v3479 = vperm.slane %v3477, 0
        %v3480 = vperm.slane %v3477, 1
        %v3483 = vmul.f32 %v3472, %v3479
        %v3484 = vmul.f32 %v3473, %v3480
        %v3485 = vmul.f32 %v3308, %v3479
        %v3486 = vmul.f32 %v3309, %v3480
        %v3487 = vmul.f32 %v3474, %v3479
        %v3488 = vmul.f32 %v3475, %v3480
        %v3495 = vrot.slane %v3483, 3
        %v3496 = vrot.slane %v3485, 3
        %v3497 = vsel %vm2879, %v3495, %v3496
        %v3498 = vrot.slane %v3484, 3
        %v3499 = vrot.slane %v3486, 3
        %v3500 = vsel %vm2879, %v3498, %v3499
        %v3501 = vrot.slane %v3487, 3
        %v3502 = vsel %vm2879, %v3496, %v3501
        %v3503 = vrot.slane %v3488, 3
        %v3504 = vsel %vm2879, %v3499, %v3503
        %v3509 = vadd.f32 %v3468, %v3497
        %v3510 = vadd.f32 %v3469, %v3500
        %v3511 = vadd.f32 %v3470, %v3502
        %v3512 = vadd.f32 %v3471, %v3504
        %v3513 = vld [vmem:[#allocation2 + $0x10] sm:$0xfc]
        %v3514 = vld [vmem:[#allocation2 + $0x18] sm:$0xfc]
        %v3515 = vld [vmem:[#allocation2 + $0x30] sm:$0x3]
        %v3516 = vld [vmem:[#allocation2 + $0x38] sm:$0x3]
        %s3517 = scalar_lea.vmem %s71, 6
        %v3518 = vld [vmem:[%s3517] ss:$8 sm:$0x3]
        %v3520 = vperm.slane %v3518, 0
        %v3521 = vperm.slane %v3518, 1
        %v3524 = vmul.f32 %v3513, %v3520
        %v3525 = vmul.f32 %v3514, %v3521
        %v3526 = vmul.f32 %v3308, %v3520
        %v3527 = vmul.f32 %v3309, %v3521
        %v3528 = vmul.f32 %v3515, %v3520
        %v3529 = vmul.f32 %v3516, %v3521
        %v3536 = vrot.slane %v3524, 2
        %v3537 = vrot.slane %v3526, 2
        %v3538 = vsel %vm2921, %v3536, %v3537
        %v3539 = vrot.slane %v3525, 2
        %v3540 = vrot.slane %v3527, 2
        %v3541 = vsel %vm2921, %v3539, %v3540
        %v3542 = vrot.slane %v3528, 2
        %v3543 = vsel %vm2921, %v3537, %v3542
        %v3544 = vrot.slane %v3529, 2
        %v3545 = vsel %vm2921, %v3540, %v3544
        %v3550 = vadd.f32 %v3509, %v3538
        %v3551 = vadd.f32 %v3510, %v3541
        %v3552 = vadd.f32 %v3511, %v3543
        %v3553 = vadd.f32 %v3512, %v3545
        %v3554 = vld [vmem:[#allocation2 + $0x10] sm:$0xfe]
        %v3555 = vld [vmem:[#allocation2 + $0x18] sm:$0xfe]
        %v3556 = vld [vmem:[#allocation2 + $0x30] sm:$0x1]
        %v3557 = vld [vmem:[#allocation2 + $0x38] sm:$0x1]
        %s3558 = scalar_lea.vmem %s71, 7
        %v3559 = vld [vmem:[%s3558] ss:$8 sm:$0x3]
        %v3561 = vperm.slane %v3559, 0
        %v3562 = vperm.slane %v3559, 1
        %v3565 = vmul.f32 %v3554, %v3561
        %v3566 = vmul.f32 %v3555, %v3562
        %v3567 = vmul.f32 %v3308, %v3561
        %v3568 = vmul.f32 %v3309, %v3562
        %v3569 = vmul.f32 %v3556, %v3561
        %v3570 = vmul.f32 %v3557, %v3562
        %v3577 = vrot.slane %v3565, 1
        %v3578 = vrot.slane %v3567, 1
        %v3579 = vsel %vm2963, %v3577, %v3578
        %v3580 = vrot.slane %v3566, 1
        %v3581 = vrot.slane %v3568, 1
        %v3582 = vsel %vm2963, %v3580, %v3581
        %v3583 = vrot.slane %v3569, 1
        %v3584 = vsel %vm2963, %v3578, %v3583
        %v3585 = vrot.slane %v3570, 1
        %v3586 = vsel %vm2963, %v3581, %v3585
        %v3591 = vadd.f32 %v3550, %v3579
        %v3592 = vadd.f32 %v3551, %v3582
        %v3593 = vadd.f32 %v3552, %v3584
        %v3594 = vadd.f32 %v3553, %v3586
        %v3595 = vld [vmem:[#allocation2 + $0x10] sm:$0xff]
        %v3596 = vld [vmem:[#allocation2 + $0x18] sm:$0xff]
        %v3597 = vld [vmem:[#allocation2 + $0x20] sm:$0xff]
        %v3598 = vld [vmem:[#allocation2 + $0x28] sm:$0xff]
        %s3599 = scalar_lea.vmem %s71, 16
        %v3600 = vld [vmem:[%s3599] ss:$8 sm:$0x3]
        %v3602 = vperm.slane %v3600, 0
        %v3603 = vperm.slane %v3600, 1
        %v3606 = vmul.f32 %v3595, %v3602
        %v3607 = vmul.f32 %v3596, %v3603
        %v3608 = vmul.f32 %v3597, %v3602
        %v3609 = vmul.f32 %v3598, %v3603
        %v3610 = vadd.f32 %v3591, %v3606
        %v3611 = vadd.f32 %v3592, %v3607
        %v3612 = vadd.f32 %v3593, %v3608
        %v3613 = vadd.f32 %v3594, %v3609
        %v3614 = vld [vmem:[#allocation2] sm:$0x80]
        %v3615 = vld [vmem:[#allocation2 + $0x8] sm:$0x80]
        %v3616 = vld [vmem:[#allocation2 + $0x20] sm:$0x7f]
        %v3617 = vld [vmem:[#allocation2 + $0x28] sm:$0x7f]
        %s3618 = scalar_lea.vmem %s71, 17
        %v3619 = vld [vmem:[%s3618] ss:$8 sm:$0x3]
        %v3621 = vperm.slane %v3619, 0
        %v3622 = vperm.slane %v3619, 1
        %v3625 = vmul.f32 %v3614, %v3621
        %v3626 = vmul.f32 %v3615, %v3622
        %v3627 = vmul.f32 %v3595, %v3621
        %v3628 = vmul.f32 %v3596, %v3622
        %v3629 = vmul.f32 %v3616, %v3621
        %v3630 = vmul.f32 %v3617, %v3622
        %v3637 = vrot.slane %v3625, 7
        %v3638 = vrot.slane %v3627, 7
        %v3639 = vsel %vm2711, %v3637, %v3638
        %v3640 = vrot.slane %v3626, 7
        %v3641 = vrot.slane %v3628, 7
        %v3642 = vsel %vm2711, %v3640, %v3641
        %v3643 = vrot.slane %v3629, 7
        %v3644 = vsel %vm2711, %v3638, %v3643
        %v3645 = vrot.slane %v3630, 7
        %v3646 = vsel %vm2711, %v3641, %v3645
        %v3651 = vadd.f32 %v3610, %v3639
        %v3652 = vadd.f32 %v3611, %v3642
        %v3653 = vadd.f32 %v3612, %v3644
        %v3654 = vadd.f32 %v3613, %v3646
        %v3655 = vld [vmem:[#allocation2] sm:$0xc0]
        %v3656 = vld [vmem:[#allocation2 + $0x8] sm:$0xc0]
        %v3657 = vld [vmem:[#allocation2 + $0x20] sm:$0x3f]
        %v3658 = vld [vmem:[#allocation2 + $0x28] sm:$0x3f]
        %s3659 = scalar_lea.vmem %s71, 18
        %v3660 = vld [vmem:[%s3659] ss:$8 sm:$0x3]
        %v3662 = vperm.slane %v3660, 0
        %v3663 = vperm.slane %v3660, 1
        %v3666 = vmul.f32 %v3655, %v3662
        %v3667 = vmul.f32 %v3656, %v3663
        %v3668 = vmul.f32 %v3595, %v3662
        %v3669 = vmul.f32 %v3596, %v3663
        %v3670 = vmul.f32 %v3657, %v3662
        %v3671 = vmul.f32 %v3658, %v3663
        %v3678 = vrot.slane %v3666, 6
        %v3679 = vrot.slane %v3668, 6
        %v3680 = vsel %vm2753, %v3678, %v3679
        %v3681 = vrot.slane %v3667, 6
        %v3682 = vrot.slane %v3669, 6
        %v3683 = vsel %vm2753, %v3681, %v3682
        %v3684 = vrot.slane %v3670, 6
        %v3685 = vsel %vm2753, %v3679, %v3684
        %v3686 = vrot.slane %v3671, 6
        %v3687 = vsel %vm2753, %v3682, %v3686
        %v3692 = vadd.f32 %v3651, %v3680
        %v3693 = vadd.f32 %v3652, %v3683
        %v3694 = vadd.f32 %v3653, %v3685
        %v3695 = vadd.f32 %v3654, %v3687
        %v3696 = vld [vmem:[#allocation2] sm:$0xe0]
        %v3697 = vld [vmem:[#allocation2 + $0x8] sm:$0xe0]
        %v3698 = vld [vmem:[#allocation2 + $0x20] sm:$0x1f]
        %v3699 = vld [vmem:[#allocation2 + $0x28] sm:$0x1f]
        %s3700 = scalar_lea.vmem %s71, 19
        %v3701 = vld [vmem:[%s3700] ss:$8 sm:$0x3]
        %v3703 = vperm.slane %v3701, 0
        %v3704 = vperm.slane %v3701, 1
        %v3707 = vmul.f32 %v3696, %v3703
        %v3708 = vmul.f32 %v3697, %v3704
        %v3709 = vmul.f32 %v3595, %v3703
        %v3710 = vmul.f32 %v3596, %v3704
        %v3711 = vmul.f32 %v3698, %v3703
        %v3712 = vmul.f32 %v3699, %v3704
        %v3719 = vrot.slane %v3707, 5
        %v3720 = vrot.slane %v3709, 5
        %v3721 = vsel %vm2795, %v3719, %v3720
        %v3722 = vrot.slane %v3708, 5
        %v3723 = vrot.slane %v3710, 5
        %v3724 = vsel %vm2795, %v3722, %v3723
        %v3725 = vrot.slane %v3711, 5
        %v3726 = vsel %vm2795, %v3720, %v3725
        %v3727 = vrot.slane %v3712, 5
        %v3728 = vsel %vm2795, %v3723, %v3727
        %v3733 = vadd.f32 %v3692, %v3721
        %v3734 = vadd.f32 %v3693, %v3724
        %v3735 = vadd.f32 %v3694, %v3726
        %v3736 = vadd.f32 %v3695, %v3728
        %v3737 = vld [vmem:[#allocation2] sm:$0xf0]
        %v3738 = vld [vmem:[#allocation2 + $0x8] sm:$0xf0]
        %v3739 = vld [vmem:[#allocation2 + $0x20] sm:$0xf]
        %v3740 = vld [vmem:[#allocation2 + $0x28] sm:$0xf]
        %s3741 = scalar_lea.vmem %s71, 20
        %v3742 = vld [vmem:[%s3741] ss:$8 sm:$0x3]
        %v3744 = vperm.slane %v3742, 0
        %v3745 = vperm.slane %v3742, 1
        %v3748 = vmul.f32 %v3737, %v3744
        %v3749 = vmul.f32 %v3738, %v3745
        %v3750 = vmul.f32 %v3595, %v3744
        %v3751 = vmul.f32 %v3596, %v3745
        %v3752 = vmul.f32 %v3739, %v3744
        %v3753 = vmul.f32 %v3740, %v3745
        %v3760 = vrot.slane %v3748, 4
        %v3761 = vrot.slane %v3750, 4
        %v3762 = vsel %vm2837, %v3760, %v3761
        %v3763 = vrot.slane %v3749, 4
        %v3764 = vrot.slane %v3751, 4
        %v3765 = vsel %vm2837, %v3763, %v3764
        %v3766 = vrot.slane %v3752, 4
        %v3767 = vsel %vm2837, %v3761, %v3766
        %v3768 = vrot.slane %v3753, 4
        %v3769 = vsel %vm2837, %v3764, %v3768
        %v3774 = vadd.f32 %v3733, %v3762
        %v3775 = vadd.f32 %v3734, %v3765
        %v3776 = vadd.f32 %v3735, %v3767
        %v3777 = vadd.f32 %v3736, %v3769
        %v3778 = vld [vmem:[#allocation2] sm:$0xf8]
        %v3779 = vld [vmem:[#allocation2 + $0x8] sm:$0xf8]
        %v3780 = vld [vmem:[#allocation2 + $0x20] sm:$0x7]
        %v3781 = vld [vmem:[#allocation2 + $0x28] sm:$0x7]
        %s3782 = scalar_lea.vmem %s71, 21
        %v3783 = vld [vmem:[%s3782] ss:$8 sm:$0x3]
        %v3785 = vperm.slane %v3783, 0
        %v3786 = vperm.slane %v3783, 1
        %v3789 = vmul.f32 %v3778, %v3785
        %v3790 = vmul.f32 %v3779, %v3786
        %v3791 = vmul.f32 %v3595, %v3785
        %v3792 = vmul.f32 %v3596, %v3786
        %v3793 = vmul.f32 %v3780, %v3785
        %v3794 = vmul.f32 %v3781, %v3786
        %v3801 = vrot.slane %v3789, 3
        %v3802 = vrot.slane %v3791, 3
        %v3803 = vsel %vm2879, %v3801, %v3802
        %v3804 = vrot.slane %v3790, 3
        %v3805 = vrot.slane %v3792, 3
        %v3806 = vsel %vm2879, %v3804, %v3805
        %v3807 = vrot.slane %v3793, 3
        %v3808 = vsel %vm2879, %v3802, %v3807
        %v3809 = vrot.slane %v3794, 3
        %v3810 = vsel %vm2879, %v3805, %v3809
        %v3815 = vadd.f32 %v3774, %v3803
        %v3816 = vadd.f32 %v3775, %v3806
        %v3817 = vadd.f32 %v3776, %v3808
        %v3818 = vadd.f32 %v3777, %v3810
        %v3819 = vld [vmem:[#allocation2] sm:$0xfc]
        %v3820 = vld [vmem:[#allocation2 + $0x8] sm:$0xfc]
        %v3821 = vld [vmem:[#allocation2 + $0x20] sm:$0x3]
        %v3822 = vld [vmem:[#allocation2 + $0x28] sm:$0x3]
        %s3823 = scalar_lea.vmem %s71, 22
        %v3824 = vld [vmem:[%s3823] ss:$8 sm:$0x3]
        %v3826 = vperm.slane %v3824, 0
        %v3827 = vperm.slane %v3824, 1
        %v3830 = vmul.f32 %v3819, %v3826
        %v3831 = vmul.f32 %v3820, %v3827
        %v3832 = vmul.f32 %v3595, %v3826
        %v3833 = vmul.f32 %v3596, %v3827
        %v3834 = vmul.f32 %v3821, %v3826
        %v3835 = vmul.f32 %v3822, %v3827
        %v3842 = vrot.slane %v3830, 2
        %v3843 = vrot.slane %v3832, 2
        %v3844 = vsel %vm2921, %v3842, %v3843
        %v3845 = vrot.slane %v3831, 2
        %v3846 = vrot.slane %v3833, 2
        %v3847 = vsel %vm2921, %v3845, %v3846
        %v3848 = vrot.slane %v3834, 2
        %v3849 = vsel %vm2921, %v3843, %v3848
        %v3850 = vrot.slane %v3835, 2
        %v3851 = vsel %vm2921, %v3846, %v3850
        %v3856 = vadd.f32 %v3815, %v3844
        %v3857 = vadd.f32 %v3816, %v3847
        %v3858 = vadd.f32 %v3817, %v3849
        %v3859 = vadd.f32 %v3818, %v3851
        %v3860 = vld [vmem:[#allocation2] sm:$0xfe]
        %v3861 = vld [vmem:[#allocation2 + $0x8] sm:$0xfe]
        %v3862 = vld [vmem:[#allocation2 + $0x20] sm:$0x1]
        %v3863 = vld [vmem:[#allocation2 + $0x28] sm:$0x1]
        %s3864 = scalar_lea.vmem %s71, 23
        %v3865 = vld [vmem:[%s3864] ss:$8 sm:$0x3]
        %v3867 = vperm.slane %v3865, 0
        %v3868 = vperm.slane %v3865, 1
        %v3871 = vmul.f32 %v3860, %v3867
        %v3872 = vmul.f32 %v3861, %v3868
        %v3873 = vmul.f32 %v3595, %v3867
        %v3874 = vmul.f32 %v3596, %v3868
        %v3875 = vmul.f32 %v3862, %v3867
        %v3876 = vmul.f32 %v3863, %v3868
        %v3883 = vrot.slane %v3871, 1
        %v3884 = vrot.slane %v3873, 1
        %v3885 = vsel %vm2963, %v3883, %v3884
        %v3886 = vrot.slane %v3872, 1
        %v3887 = vrot.slane %v3874, 1
        %v3888 = vsel %vm2963, %v3886, %v3887
        %v3889 = vrot.slane %v3875, 1
        %v3890 = vsel %vm2963, %v3884, %v3889
        %v3891 = vrot.slane %v3876, 1
        %v3892 = vsel %vm2963, %v3887, %v3891
        %v3897 = vadd.f32 %v3856, %v3885
        %v3898 = vadd.f32 %v3857, %v3888
        %v3899 = vadd.f32 %v3858, %v3890
        %v3900 = vadd.f32 %v3859, %v3892
        %v3901 = vmul.f32 %v2562, %v3897
        %v3902 = vmul.f32 %v2576, %v3898
        %v3903 = vmul.f32 %v2564, %v3899
        %v3904 = vmul.f32 %v2578, %v3900
        %v3905 = vpack.c.bf16 %v3903, %v3901
        %v3906 = vpack.c.bf16 %v3904, %v3902
        %v3907 = vld [vmem:[%s73] sm:$0xff]
        %v3908 = vld [vmem:[%s73 + $0x8] sm:$0xff]
        %v3909 = vld [vmem:[%s73 + $0x10] sm:$0xff]
        %v3910 = vld [vmem:[%s73 + $0x18] sm:$0xff]
        %v3911 = vld [vmem:[%s73 + $0x20] sm:$0xff]
        %v3912 = vld [vmem:[%s73 + $0x28] sm:$0xff]
        %v3913 = vld [vmem:[%s73 + $0x30] sm:$0xff]
        %v3914 = vld [vmem:[%s73 + $0x38] sm:$0xff]
        %v3915 = vld [vmem:[%s73 + $0x40] sm:$0xff]
        %v3916 = vld [vmem:[%s73 + $0x48] sm:$0xff]
        %v3917 = vld [vmem:[%s73 + $0x50] sm:$0xff]
        %v3918 = vld [vmem:[%s73 + $0x58] sm:$0xff]
        %v3919 = vld [vmem:[%s73 + $0x60] sm:$0xff]
        %v3920 = vld [vmem:[%s73 + $0x68] sm:$0xff]
        %v3921 = vld [vmem:[%s73 + $0x70] sm:$0xff]
        %v3922 = vld [vmem:[%s73 + $0x78] sm:$0xff]
        %v3923 = vld [vmem:[%s73 + $0x80] sm:$0xff]
        %v3924 = vld [vmem:[%s73 + $0x88] sm:$0xff]
        %v3925 = vld [vmem:[%s73 + $0x90] sm:$0xff]
        %v3926 = vld [vmem:[%s73 + $0x98] sm:$0xff]
        %v3927 = vld [vmem:[%s73 + $0xa0] sm:$0xff]
        %v3928 = vld [vmem:[%s73 + $0xa8] sm:$0xff]
        %v3929 = vld [vmem:[%s73 + $0xb0] sm:$0xff]
        %v3930 = vld [vmem:[%s73 + $0xb8] sm:$0xff]
        %v3931 = vld [vmem:[%s73 + $0xc0] sm:$0xff]
        %v3932 = vld [vmem:[%s73 + $0xc8] sm:$0xff]
        %v3933 = vld [vmem:[%s73 + $0xd0] sm:$0xff]
        %v3934 = vld [vmem:[%s73 + $0xd8] sm:$0xff]
        %v3935 = vld [vmem:[%s73 + $0xe0] sm:$0xff]
        %v3936 = vld [vmem:[%s73 + $0xe8] sm:$0xff]
        %v3937 = vld [vmem:[%s73 + $0xf0] sm:$0xff]
        %v3938 = vld [vmem:[%s73 + $0xf8] sm:$0xff]
        %v3939 = vpack.c.bf16 %v3908, %v3907
        %v3940 = vpack.c.bf16 %v3910, %v3909
        %v3941 = vpack.c.bf16 %v3912, %v3911
        %v3942 = vpack.c.bf16 %v3914, %v3913
        %v3943 = vpack.c.bf16 %v3916, %v3915
        %v3944 = vpack.c.bf16 %v3918, %v3917
        %v3945 = vpack.c.bf16 %v3920, %v3919
        %v3946 = vpack.c.bf16 %v3922, %v3921
        %v3947 = vpack.c.bf16 %v3924, %v3923
        %v3948 = vpack.c.bf16 %v3926, %v3925
        %v3949 = vpack.c.bf16 %v3928, %v3927
        %v3950 = vpack.c.bf16 %v3930, %v3929
        %v3951 = vpack.c.bf16 %v3932, %v3931
        %v3952 = vpack.c.bf16 %v3934, %v3933
        %v3953 = vpack.c.bf16 %v3936, %v3935
        %v3954 = vpack.c.bf16 %v3938, %v3937
        %v3955 = vld [vmem:[#allocation3] sm:$0x1]
        %v3957 = vperm.slane %v3955, 0
        %3959 = vmatpush.bf16.msra.mxu0 %v3946
        %3960 = vmatpush.bf16.msra.mxu0 %v3945
        %3961 = vmatpush.bf16.msra.mxu0 %v3944
        %3962 = vmatpush.bf16.msra.mxu0 %v3943
        %3963 = vmatpush.bf16.msra.mxu0 %v3942
        %3964 = vmatpush.bf16.msra.mxu0 %v3941
        %3965 = vmatpush.bf16.msra.mxu0 %v3940
        %3966 = vmatpush.bf16.msra.mxu0 %v3939
        %3967 = vmatmul.bf16.gmra.mxu0 %v3905
        %v3968 = vpop.f32.mrf.mxu0
        %v3969 = vadd.f32 %v3957, %v3968
        %v3970 = vpop.f32.mrf.mxu0
        %v3971 = vadd.f32 %v3957, %v3970
        %3972 = vdwg.mxu0
        %3973 = vmatpush.bf16.msra.mxu0 %v3954
        %3974 = vmatpush.bf16.msra.mxu0 %v3953
        %3975 = vmatpush.bf16.msra.mxu0 %v3952
        %3976 = vmatpush.bf16.msra.mxu0 %v3951
        %3977 = vmatpush.bf16.msra.mxu0 %v3950
        %3978 = vmatpush.bf16.msra.mxu0 %v3949
        %3979 = vmatpush.bf16.msra.mxu0 %v3948
        %3980 = vmatpush.bf16.msra.mxu0 %v3947
        %3981 = vmatmul.bf16.gmra.mxu0 %v3906
        %v3982 = vpop.f32.mrf.mxu0
        %v3983 = vadd.f32 %v3969, %v3982
        %v3984 = vpop.f32.mrf.mxu0
        %v3985 = vadd.f32 %v3971, %v3984
        %3986 = vdwg.mxu0
        %v3987 = vadd.f32 %v2470, %v3983
        %v3988 = vadd.f32 %v2472, %v3985
        %v3989 = vld [vmem:[%s27] sm:$0x1]
        %v3990 = vld [vmem:[%s29] sm:$0x1]
        %v3991 = vsel %vm1629, %v3987, 0.0
        %3992 = vadd.xlane.f32.xlu0 %v3991
        %v3993 = vpop.xlane.xlu0 %3992
        %v3994 = vsel %vm1629, %v3988, 0.0
        %3995 = vadd.xlane.f32.xlu0 %v3994
        %v3996 = vpop.xlane.xlu0 %3995
        %v3997 = vmul.f32 %v3993, %v1642
        %v3998 = vmul.f32 %v3996, %v1642
        %v3999 = vsub.f32 %v3987, %v3997
        %v4000 = vsub.f32 %v3988, %v3998
        %v4001 = vmul.f32 %v3999, %v3999
        %v4002 = vmul.f32 %v4000, %v4000
        %v4003 = vsel %vm1629, %v4001, 0.0
        %4004 = vadd.xlane.f32.xlu0 %v4003
        %v4005 = vpop.xlane.xlu0 %4004
        %v4006 = vsel %vm1629, %v4002, 0.0
        %4007 = vadd.xlane.f32.xlu0 %v4006
        %v4008 = vpop.xlane.xlu0 %4007
        %v4009 = vmul.f32 %v4005, %v1642
        %v4010 = vmul.f32 %v4008, %v1642
        %v4011 = vadd.f32 %v4009, 1e-05
        %v4012 = vadd.f32 %v4010, 1e-05
        %v4013 = vrsqrt.pop %v4011
        %v4014 = vmul.f32 %v4013, %v4011
        %v4015 = vmul.f32 %v4014, %v4013
        %v4016 = vmul.f32 0.5, %v4015
        %v4017 = vsub.f32 1.5, %v4016
        %v4018 = vmul.f32 %v4013, %v4017
        %vm4019 = vweird.f32 %v4011
        %vm4020 = vweird.f32 %v4013
        %vm4021 = vmor %vm4019, %vm4020
        %v4022 = vsel %vm4021, %v4013, %v4018
        %v4023 = vrsqrt.pop %v4012
        %v4024 = vmul.f32 %v4023, %v4012
        %v4025 = vmul.f32 %v4024, %v4023
        %v4026 = vmul.f32 0.5, %v4025
        %v4027 = vsub.f32 1.5, %v4026
        %v4028 = vmul.f32 %v4023, %v4027
        %vm4029 = vweird.f32 %v4012
        %vm4030 = vweird.f32 %v4023
        %vm4031 = vmor %vm4029, %vm4030
        %v4032 = vsel %vm4031, %v4023, %v4028
        %v4033 = vmul.f32 %v3999, %v4022
        %v4034 = vmul.f32 %v4000, %v4032
        %v4036 = vperm.slane %v3989, 0
        %v4038 = vmul.f32 %v4033, %v4036
        %v4039 = vmul.f32 %v4034, %v4036
        %v4041 = vperm.slane %v3990, 0
        %v4043 = vadd.f32 %v4038, %v4041
        %v4044 = vadd.f32 %v4039, %v4041
        %v4045 = vpack.c.bf16 %v4044, %v4043
        %v4046 = vld [vmem:[%s31] sm:$0xff]
        %v4047 = vld [vmem:[%s31 + $0x8] sm:$0xff]
        %v4048 = vld [vmem:[%s31 + $0x10] sm:$0xff]
        %v4049 = vld [vmem:[%s31 + $0x18] sm:$0xff]
        %v4050 = vld [vmem:[%s31 + $0x20] sm:$0xff]
        %v4051 = vld [vmem:[%s31 + $0x28] sm:$0xff]
        %v4052 = vld [vmem:[%s31 + $0x30] sm:$0xff]
        %v4053 = vld [vmem:[%s31 + $0x38] sm:$0xff]
        %v4054 = vld [vmem:[%s31 + $0x40] sm:$0xff]
        %v4055 = vld [vmem:[%s31 + $0x48] sm:$0xff]
        %v4056 = vld [vmem:[%s31 + $0x50] sm:$0xff]
        %v4057 = vld [vmem:[%s31 + $0x58] sm:$0xff]
        %v4058 = vld [vmem:[%s31 + $0x60] sm:$0xff]
        %v4059 = vld [vmem:[%s31 + $0x68] sm:$0xff]
        %v4060 = vld [vmem:[%s31 + $0x70] sm:$0xff]
        %v4061 = vld [vmem:[%s31 + $0x78] sm:$0xff]
        %v4062 = vpack.c.bf16 %v4048, %v4046
        %v4063 = vpack.c.bf16 %v4049, %v4047
        %v4064 = vpack.c.bf16 %v4052, %v4050
        %v4065 = vpack.c.bf16 %v4053, %v4051
        %v4066 = vpack.c.bf16 %v4056, %v4054
        %v4067 = vpack.c.bf16 %v4057, %v4055
        %v4068 = vpack.c.bf16 %v4060, %v4058
        %v4069 = vpack.c.bf16 %v4061, %v4059
        %v4070 = vld [vmem:[%s33] sm:$0x3]
        %v4072 = vperm.slane %v4070, 0
        %v4073 = vperm.slane %v4070, 1
        %v4077 = vsel %vm1629, %v4045, 0
        %4079 = vmatpush.bf16.msra.mxu0 0
        %4080 = vmatpush.bf16.msra.mxu0 0
        %4081 = vmatpush.bf16.msra.mxu0 0
        %4082 = vmatpush.bf16.msra.mxu0 0
        %4083 = vmatpush.bf16.msra.mxu0 %v4068
        %4084 = vmatpush.bf16.msra.mxu0 %v4066
        %4085 = vmatpush.bf16.msra.mxu0 %v4064
        %4086 = vmatpush.bf16.msra.mxu0 %v4062
        %4087 = vmatmul.bf16.gmra.mxu0 %v4077
        %v4088 = vpop.f32.mrf.mxu0
        %v4089 = vadd.f32 %v4072, %v4088
        %v4090 = vpop.f32.mrf.mxu0
        %v4091 = vadd.f32 %v4072, %v4090
        %4092 = vdwg.mxu0
        %4093 = vmatpush.bf16.msra.mxu0 0
        %4094 = vmatpush.bf16.msra.mxu0 0
        %4095 = vmatpush.bf16.msra.mxu0 0
        %4096 = vmatpush.bf16.msra.mxu0 0
        %4097 = vmatpush.bf16.msra.mxu0 %v4069
        %4098 = vmatpush.bf16.msra.mxu0 %v4067
        %4099 = vmatpush.bf16.msra.mxu0 %v4065
        %4100 = vmatpush.bf16.msra.mxu0 %v4063
        %4101 = vmatmul.bf16.gmra.mxu0 %v4077
        %v4102 = vpop.f32.mrf.mxu0
        %v4103 = vadd.f32 %v4073, %v4102
        %v4104 = vpop.f32.mrf.mxu0
        %v4105 = vadd.f32 %v4073, %v4104
        %4106 = vdwg.mxu0
        %v4107 = vxor.u32 %v4089, 2147483648
        %v4108 = vxor.u32 %v4103, 2147483648
        %v4109 = vxor.u32 %v4091, 2147483648
        %v4110 = vxor.u32 %v4105, 2147483648
        %v4111 = vmul.f32 %v4107, 1.442695
        %v4112 = vpow.pop %v4111
        %v4113 = vmul.f32 %v4108, 1.442695
        %v4114 = vpow.pop %v4113
        %v4115 = vmul.f32 %v4109, 1.442695
        %v4116 = vpow.pop %v4115
        %v4117 = vmul.f32 %v4110, 1.442695
        %v4118 = vpow.pop %v4117
        %v4119 = vadd.f32 %v4112, 1.0
        %v4120 = vadd.f32 %v4114, 1.0
        %v4121 = vadd.f32 %v4116, 1.0
        %v4122 = vadd.f32 %v4118, 1.0
        %v4123 = vrcp.pop %v4119
        %v4124 = vmul.f32 %v4119, %v4123
        %v4125 = vsub.f32 1.0, %v4124
        %v4126 = vmul.f32 %v4123, %v4125
        %v4127 = vadd.f32 %v4123, %v4126
        %vm4128 = vweird.f32 %v4119
        %vm4129 = vweird.f32 %v4123
        %vm4130 = vmor %vm4128, %vm4129
        %v4131 = vsel %vm4130, %v4123, %v4127
        %v4132 = vand.u32 2147483647, %v4119
        %vm4133 = vcmp.eq.f32.partialorder %v4132, 8.507059e+37
        %v4134 = vand.u32 %v4119, 2147483648
        %v4135 = vor.u32 1.1754944e-38, %v4134
        %v4136 = vsel %vm4133, %v4135, %v4131
        %v4137 = vmul.f32 1.0, %v4136
        %v4138 = vrcp.pop %v4120
        %v4139 = vmul.f32 %v4120, %v4138
        %v4140 = vsub.f32 1.0, %v4139
        %v4141 = vmul.f32 %v4138, %v4140
        %v4142 = vadd.f32 %v4138, %v4141
        %vm4143 = vweird.f32 %v4120
        %vm4144 = vweird.f32 %v4138
        %vm4145 = vmor %vm4143, %vm4144
        %v4146 = vsel %vm4145, %v4138, %v4142
        %v4147 = vand.u32 2147483647, %v4120
        %vm4148 = vcmp.eq.f32.partialorder %v4147, 8.507059e+37
        %v4149 = vand.u32 %v4120, 2147483648
        %v4150 = vor.u32 1.1754944e-38, %v4149
        %v4151 = vsel %vm4148, %v4150, %v4146
        %v4152 = vmul.f32 1.0, %v4151
        %v4153 = vrcp.pop %v4121
        %v4154 = vmul.f32 %v4121, %v4153
        %v4155 = vsub.f32 1.0, %v4154
        %v4156 = vmul.f32 %v4153, %v4155
        %v4157 = vadd.f32 %v4153, %v4156
        %vm4158 = vweird.f32 %v4121
        %vm4159 = vweird.f32 %v4153
        %vm4160 = vmor %vm4158, %vm4159
        %v4161 = vsel %vm4160, %v4153, %v4157
        %v4162 = vand.u32 2147483647, %v4121
        %vm4163 = vcmp.eq.f32.partialorder %v4162, 8.507059e+37
        %v4164 = vand.u32 %v4121, 2147483648
        %v4165 = vor.u32 1.1754944e-38, %v4164
        %v4166 = vsel %vm4163, %v4165, %v4161
        %v4167 = vmul.f32 1.0, %v4166
        %v4168 = vrcp.pop %v4122
        %v4169 = vmul.f32 %v4122, %v4168
        %v4170 = vsub.f32 1.0, %v4169
        %v4171 = vmul.f32 %v4168, %v4170
        %v4172 = vadd.f32 %v4168, %v4171
        %vm4173 = vweird.f32 %v4122
        %vm4174 = vweird.f32 %v4168
        %vm4175 = vmor %vm4173, %vm4174
        %v4176 = vsel %vm4175, %v4168, %v4172
        %v4177 = vand.u32 2147483647, %v4122
        %vm4178 = vcmp.eq.f32.partialorder %v4177, 8.507059e+37
        %v4179 = vand.u32 %v4122, 2147483648
        %v4180 = vor.u32 1.1754944e-38, %v4179
        %v4181 = vsel %vm4178, %v4180, %v4176
        %v4182 = vmul.f32 1.0, %v4181
        %v4183 = vmul.f32 %v4089, %v4137
        %v4184 = vmul.f32 %v4103, %v4152
        %v4185 = vmul.f32 %v4091, %v4167
        %v4186 = vmul.f32 %v4105, %v4182
        %v4187 = vpack.c.bf16 %v4185, %v4183
        %v4188 = vpack.c.bf16 %v4186, %v4184
        %v4189 = vld [vmem:[%s35] sm:$0xff]
        %v4190 = vld [vmem:[%s35 + $0x8] sm:$0xff]
        %v4191 = vld [vmem:[%s35 + $0x10] sm:$0xff]
        %v4192 = vld [vmem:[%s35 + $0x18] sm:$0xff]
        %v4193 = vld [vmem:[%s35 + $0x20] sm:$0xff]
        %v4194 = vld [vmem:[%s35 + $0x28] sm:$0xff]
        %v4195 = vld [vmem:[%s35 + $0x30] sm:$0xff]
        %v4196 = vld [vmem:[%s35 + $0x38] sm:$0xff]
        %v4197 = vld [vmem:[%s35 + $0x40] sm:$0xff]
        %v4198 = vld [vmem:[%s35 + $0x48] sm:$0xff]
        %v4199 = vld [vmem:[%s35 + $0x50] sm:$0xff]
        %v4200 = vld [vmem:[%s35 + $0x58] sm:$0xff]
        %v4201 = vld [vmem:[%s35 + $0x60] sm:$0xff]
        %v4202 = vld [vmem:[%s35 + $0x68] sm:$0xff]
        %v4203 = vld [vmem:[%s35 + $0x70] sm:$0xff]
        %v4204 = vld [vmem:[%s35 + $0x78] sm:$0xff]
        %v4205 = vld [vmem:[%s35 + $0x80] sm:$0xff]
        %v4206 = vld [vmem:[%s35 + $0x88] sm:$0xff]
        %v4207 = vld [vmem:[%s35 + $0x90] sm:$0xff]
        %v4208 = vld [vmem:[%s35 + $0x98] sm:$0xff]
        %v4209 = vld [vmem:[%s35 + $0xa0] sm:$0xff]
        %v4210 = vld [vmem:[%s35 + $0xa8] sm:$0xff]
        %v4211 = vld [vmem:[%s35 + $0xb0] sm:$0xff]
        %v4212 = vld [vmem:[%s35 + $0xb8] sm:$0xff]
        %v4213 = vld [vmem:[%s35 + $0xc0] sm:$0xff]
        %v4214 = vld [vmem:[%s35 + $0xc8] sm:$0xff]
        %v4215 = vld [vmem:[%s35 + $0xd0] sm:$0xff]
        %v4216 = vld [vmem:[%s35 + $0xd8] sm:$0xff]
        %v4217 = vld [vmem:[%s35 + $0xe0] sm:$0xff]
        %v4218 = vld [vmem:[%s35 + $0xe8] sm:$0xff]
        %v4219 = vld [vmem:[%s35 + $0xf0] sm:$0xff]
        %v4220 = vld [vmem:[%s35 + $0xf8] sm:$0xff]
        %v4221 = vpack.c.bf16 %v4190, %v4189
        %v4222 = vpack.c.bf16 %v4192, %v4191
        %v4223 = vpack.c.bf16 %v4194, %v4193
        %v4224 = vpack.c.bf16 %v4196, %v4195
        %v4225 = vpack.c.bf16 %v4198, %v4197
        %v4226 = vpack.c.bf16 %v4200, %v4199
        %v4227 = vpack.c.bf16 %v4202, %v4201
        %v4228 = vpack.c.bf16 %v4204, %v4203
        %v4229 = vpack.c.bf16 %v4206, %v4205
        %v4230 = vpack.c.bf16 %v4208, %v4207
        %v4231 = vpack.c.bf16 %v4210, %v4209
        %v4232 = vpack.c.bf16 %v4212, %v4211
        %v4233 = vpack.c.bf16 %v4214, %v4213
        %v4234 = vpack.c.bf16 %v4216, %v4215
        %v4235 = vpack.c.bf16 %v4218, %v4217
        %v4236 = vpack.c.bf16 %v4220, %v4219
        %v4237 = vld [vmem:[%s37] sm:$0x1]
        %v4239 = vperm.slane %v4237, 0
        %4241 = vmatpush.bf16.msra.mxu0 %v4228
        %4242 = vmatpush.bf16.msra.mxu0 %v4227
        %4243 = vmatpush.bf16.msra.mxu0 %v4226
        %4244 = vmatpush.bf16.msra.mxu0 %v4225
        %4245 = vmatpush.bf16.msra.mxu0 %v4224
        %4246 = vmatpush.bf16.msra.mxu0 %v4223
        %4247 = vmatpush.bf16.msra.mxu0 %v4222
        %4248 = vmatpush.bf16.msra.mxu0 %v4221
        %4249 = vmatmul.bf16.gmra.mxu0 %v4187
        %v4250 = vpop.f32.mrf.mxu0
        %v4251 = vadd.f32 %v4239, %v4250
        %v4252 = vpop.f32.mrf.mxu0
        %v4253 = vadd.f32 %v4239, %v4252
        %4254 = vdwg.mxu0
        %4255 = vmatpush.bf16.msra.mxu0 %v4236
        %4256 = vmatpush.bf16.msra.mxu0 %v4235
        %4257 = vmatpush.bf16.msra.mxu0 %v4234
        %4258 = vmatpush.bf16.msra.mxu0 %v4233
        %4259 = vmatpush.bf16.msra.mxu0 %v4232
        %4260 = vmatpush.bf16.msra.mxu0 %v4231
        %4261 = vmatpush.bf16.msra.mxu0 %v4230
        %4262 = vmatpush.bf16.msra.mxu0 %v4229
        %4263 = vmatmul.bf16.gmra.mxu0 %v4188
        %v4264 = vpop.f32.mrf.mxu0
        %v4265 = vadd.f32 %v4251, %v4264
        %v4266 = vpop.f32.mrf.mxu0
        %v4267 = vadd.f32 %v4253, %v4266
        %4268 = vdwg.mxu0
        %v4269 = vmul.f32 %v4265, 0.5
        %v4270 = vmul.f32 %v4267, 0.5
        %v4271 = vadd.f32 %v3987, %v4269
        %v4272 = vadd.f32 %v3988, %v4270
        %v4273 = vadd.f32 %v4271, %v1917
        %v4274 = vadd.f32 %v4272, %v1918
        %v4275 = vld [vmem:[#allocation6] sm:$0x1]
        %v4276 = vld [vmem:[#allocation8] sm:$0x1]
        %v4277 = vsel %vm1629, %v4273, 0.0
        %4278 = vadd.xlane.f32.xlu0 %v4277
        %v4279 = vpop.xlane.xlu0 %4278
        %v4280 = vsel %vm1629, %v4274, 0.0
        %4281 = vadd.xlane.f32.xlu0 %v4280
        %v4282 = vpop.xlane.xlu0 %4281
        %v4283 = vmul.f32 %v4279, %v1642
        %v4284 = vmul.f32 %v4282, %v1642
        %v4285 = vsub.f32 %v4273, %v4283
        %v4286 = vsub.f32 %v4274, %v4284
        %v4287 = vmul.f32 %v4285, %v4285
        %v4288 = vmul.f32 %v4286, %v4286
        %v4289 = vsel %vm1629, %v4287, 0.0
        %4290 = vadd.xlane.f32.xlu0 %v4289
        %v4291 = vpop.xlane.xlu0 %4290
        %v4292 = vsel %vm1629, %v4288, 0.0
        %4293 = vadd.xlane.f32.xlu0 %v4292
        %v4294 = vpop.xlane.xlu0 %4293
        %v4295 = vmul.f32 %v4291, %v1642
        %v4296 = vmul.f32 %v4294, %v1642
        %v4297 = vadd.f32 %v4295, 1e-05
        %v4298 = vadd.f32 %v4296, 1e-05
        %v4299 = vrsqrt.pop %v4297
        %v4300 = vmul.f32 %v4299, %v4297
        %v4301 = vmul.f32 %v4300, %v4299
        %v4302 = vmul.f32 0.5, %v4301
        %v4303 = vsub.f32 1.5, %v4302
        %v4304 = vmul.f32 %v4299, %v4303
        %vm4305 = vweird.f32 %v4297
        %vm4306 = vweird.f32 %v4299
        %vm4307 = vmor %vm4305, %vm4306
        %v4308 = vsel %vm4307, %v4299, %v4304
        %v4309 = vrsqrt.pop %v4298
        %v4310 = vmul.f32 %v4309, %v4298
        %v4311 = vmul.f32 %v4310, %v4309
        %v4312 = vmul.f32 0.5, %v4311
        %v4313 = vsub.f32 1.5, %v4312
        %v4314 = vmul.f32 %v4309, %v4313
        %vm4315 = vweird.f32 %v4298
        %vm4316 = vweird.f32 %v4309
        %vm4317 = vmor %vm4315, %vm4316
        %v4318 = vsel %vm4317, %v4309, %v4314
        %v4319 = vmul.f32 %v4285, %v4308
        %v4320 = vmul.f32 %v4286, %v4318
        %v4322 = vperm.slane %v4275, 0
        %v4324 = vmul.f32 %v4319, %v4322
        %v4325 = vmul.f32 %v4320, %v4322
        %v4327 = vperm.slane %v4276, 0
        %v4329 = vadd.f32 %v4324, %v4327
        %v4330 = vadd.f32 %v4325, %v4327
        %v4331 = vpack.c.bf16 %v4330, %v4329
        %v4332 = vld [vmem:[%s81] sm:$0xff]
        %v4333 = vld [vmem:[%s81 + $0x8] sm:$0xff]
        %v4334 = vld [vmem:[%s81 + $0x10] sm:$0xff]
        %v4335 = vld [vmem:[%s81 + $0x18] sm:$0xff]
        %v4336 = vld [vmem:[%s81 + $0x20] sm:$0xff]
        %v4337 = vld [vmem:[%s81 + $0x28] sm:$0xff]
        %v4338 = vld [vmem:[%s81 + $0x30] sm:$0xff]
        %v4339 = vld [vmem:[%s81 + $0x38] sm:$0xff]
        %v4340 = vpack.c.bf16 %v4333, %v4332
        %v4341 = vpack.c.bf16 %v4335, %v4334
        %v4342 = vpack.c.bf16 %v4337, %v4336
        %v4343 = vpack.c.bf16 %v4339, %v4338
        %v4344 = vld [vmem:[#allocation9] sm:$0x1]
        %v4346 = vperm.slane %v4344, 0
        %v4349 = vsel %vm1629, %v4331, 0
        %4351 = vmatpush.bf16.msra.mxu0 0
        %4352 = vmatpush.bf16.msra.mxu0 0
        %4353 = vmatpush.bf16.msra.mxu0 0
        %4354 = vmatpush.bf16.msra.mxu0 0
        %4355 = vmatpush.bf16.msra.mxu0 %v4343
        %4356 = vmatpush.bf16.msra.mxu0 %v4342
        %4357 = vmatpush.bf16.msra.mxu0 %v4341
        %4358 = vmatpush.bf16.msra.mxu0 %v4340
        %4359 = vmatmul.bf16.gmra.mxu0 %v4349
        %v4360 = vpop.f32.mrf.mxu0
        %v4361 = vadd.f32 %v4346, %v4360
        %v4362 = vpop.f32.mrf.mxu0
        %v4363 = vadd.f32 %v4346, %v4362
        %4364 = vdwg.mxu0
        %v4365 = vld [vmem:[%s85] sm:$0xff]
        %v4366 = vld [vmem:[%s85 + $0x8] sm:$0xff]
        %v4367 = vld [vmem:[%s85 + $0x10] sm:$0xff]
        %v4368 = vld [vmem:[%s85 + $0x18] sm:$0xff]
        %v4369 = vld [vmem:[%s85 + $0x20] sm:$0xff]
        %v4370 = vld [vmem:[%s85 + $0x28] sm:$0xff]
        %v4371 = vld [vmem:[%s85 + $0x30] sm:$0xff]
        %v4372 = vld [vmem:[%s85 + $0x38] sm:$0xff]
        %v4373 = vpack.c.bf16 %v4366, %v4365
        %v4374 = vpack.c.bf16 %v4368, %v4367
        %v4375 = vpack.c.bf16 %v4370, %v4369
        %v4376 = vpack.c.bf16 %v4372, %v4371
        %v4377 = vld [vmem:[#allocation11] sm:$0x1]
        %v4379 = vperm.slane %v4377, 0
        %4381 = vmatpush.bf16.msra.mxu0 0
        %4382 = vmatpush.bf16.msra.mxu0 0
        %4383 = vmatpush.bf16.msra.mxu0 0
        %4384 = vmatpush.bf16.msra.mxu0 0
        %4385 = vmatpush.bf16.msra.mxu0 %v4376
        %4386 = vmatpush.bf16.msra.mxu0 %v4375
        %4387 = vmatpush.bf16.msra.mxu0 %v4374
        %4388 = vmatpush.bf16.msra.mxu0 %v4373
        %4389 = vmatmul.bf16.gmra.mxu0 %v4349
        %v4390 = vpop.f32.mrf.mxu0
        %v4391 = vadd.f32 %v4379, %v4390
        %v4392 = vpop.f32.mrf.mxu0
        %v4393 = vadd.f32 %v4379, %v4392
        %4394 = vdwg.mxu0
        %v4395 = vxor.u32 %v4391, 2147483648
        %v4396 = vxor.u32 %v4393, 2147483648
        %v4397 = vmul.f32 %v4395, 1.442695
        %v4398 = vpow.pop %v4397
        %v4399 = vmul.f32 %v4396, 1.442695
        %v4400 = vpow.pop %v4399
        %v4401 = vadd.f32 %v4398, 1.0
        %v4402 = vadd.f32 %v4400, 1.0
        %v4403 = vrcp.pop %v4401
        %v4404 = vmul.f32 %v4401, %v4403
        %v4405 = vsub.f32 1.0, %v4404
        %v4406 = vmul.f32 %v4403, %v4405
        %v4407 = vadd.f32 %v4403, %v4406
        %vm4408 = vweird.f32 %v4401
        %vm4409 = vweird.f32 %v4403
        %vm4410 = vmor %vm4408, %vm4409
        %v4411 = vsel %vm4410, %v4403, %v4407
        %v4412 = vand.u32 2147483647, %v4401
        %vm4413 = vcmp.eq.f32.partialorder %v4412, 8.507059e+37
        %v4414 = vand.u32 %v4401, 2147483648
        %v4415 = vor.u32 1.1754944e-38, %v4414
        %v4416 = vsel %vm4413, %v4415, %v4411
        %v4417 = vmul.f32 1.0, %v4416
        %v4418 = vrcp.pop %v4402
        %v4419 = vmul.f32 %v4402, %v4418
        %v4420 = vsub.f32 1.0, %v4419
        %v4421 = vmul.f32 %v4418, %v4420
        %v4422 = vadd.f32 %v4418, %v4421
        %vm4423 = vweird.f32 %v4402
        %vm4424 = vweird.f32 %v4418
        %vm4425 = vmor %vm4423, %vm4424
        %v4426 = vsel %vm4425, %v4418, %v4422
        %v4427 = vand.u32 2147483647, %v4402
        %vm4428 = vcmp.eq.f32.partialorder %v4427, 8.507059e+37
        %v4429 = vand.u32 %v4402, 2147483648
        %v4430 = vor.u32 1.1754944e-38, %v4429
        %v4431 = vsel %vm4428, %v4430, %v4426
        %v4432 = vmul.f32 1.0, %v4431
        %v4433 = vmul.f32 %v4361, %v4417
        %v4434 = vmul.f32 %v4363, %v4432
        %4435 = vst [vmem:[#allocation2 + $0x20] sm:$0xff] %v4433
        %4436 = vst [vmem:[#allocation2 + $0x30] sm:$0xff] %v4434
        %v4437 = vld [vmem:[%s89] sm:$0x1]
        %v4438 = vperm.slane %v4437, 0
        %v4439 = vmul.f32 %v4433, %v4438
        %v4440 = vmul.f32 %v4434, %v4438
        %v4441 = vld [vmem:[#allocation2 + $0x10] sm:$0x80]
        %v4442 = vld [vmem:[#allocation2 + $0x20] sm:$0xff]
        %v4443 = vld [vmem:[#allocation2 + $0x30] sm:$0x7f]
        %v4444 = vld [vmem:[%s89 + $0x1] sm:$0x1]
        %v4445 = vperm.slane %v4444, 0
        %v4446 = vmul.f32 %v4441, %v4445
        %v4447 = vmul.f32 %v4442, %v4445
        %v4448 = vmul.f32 %v4443, %v4445
        %v4452 = vrot.slane %v4446, 7
        %v4453 = vrot.slane %v4447, 7
        %v4454 = vsel %vm2711, %v4452, %v4453
        %v4455 = vrot.slane %v4448, 7
        %v4456 = vsel %vm2711, %v4453, %v4455
        %v4459 = vadd.f32 %v4439, %v4454
        %v4460 = vadd.f32 %v4440, %v4456
        %v4461 = vld [vmem:[#allocation2 + $0x10] sm:$0xc0]
        %v4462 = vld [vmem:[#allocation2 + $0x30] sm:$0x3f]
        %v4463 = vld [vmem:[%s89 + $0x2] sm:$0x1]
        %v4464 = vperm.slane %v4463, 0
        %v4465 = vmul.f32 %v4461, %v4464
        %v4466 = vmul.f32 %v4442, %v4464
        %v4467 = vmul.f32 %v4462, %v4464
        %v4471 = vrot.slane %v4465, 6
        %v4472 = vrot.slane %v4466, 6
        %v4473 = vsel %vm2753, %v4471, %v4472
        %v4474 = vrot.slane %v4467, 6
        %v4475 = vsel %vm2753, %v4472, %v4474
        %v4478 = vadd.f32 %v4459, %v4473
        %v4479 = vadd.f32 %v4460, %v4475
        %v4480 = vld [vmem:[#allocation2 + $0x10] sm:$0xe0]
        %v4481 = vld [vmem:[#allocation2 + $0x30] sm:$0x1f]
        %v4482 = vld [vmem:[%s89 + $0x3] sm:$0x1]
        %v4483 = vperm.slane %v4482, 0
        %v4484 = vmul.f32 %v4480, %v4483
        %v4485 = vmul.f32 %v4442, %v4483
        %v4486 = vmul.f32 %v4481, %v4483
        %v4490 = vrot.slane %v4484, 5
        %v4491 = vrot.slane %v4485, 5
        %v4492 = vsel %vm2795, %v4490, %v4491
        %v4493 = vrot.slane %v4486, 5
        %v4494 = vsel %vm2795, %v4491, %v4493
        %v4497 = vadd.f32 %v4478, %v4492
        %v4498 = vadd.f32 %v4479, %v4494
        %v4499 = vld [vmem:[#allocation2 + $0x10] sm:$0xf0]
        %v4500 = vld [vmem:[#allocation2 + $0x30] sm:$0xf]
        %v4501 = vld [vmem:[%s89 + $0x4] sm:$0x1]
        %v4502 = vperm.slane %v4501, 0
        %v4503 = vmul.f32 %v4499, %v4502
        %v4504 = vmul.f32 %v4442, %v4502
        %v4505 = vmul.f32 %v4500, %v4502
        %v4509 = vrot.slane %v4503, 4
        %v4510 = vrot.slane %v4504, 4
        %v4511 = vsel %vm2837, %v4509, %v4510
        %v4512 = vrot.slane %v4505, 4
        %v4513 = vsel %vm2837, %v4510, %v4512
        %v4516 = vadd.f32 %v4497, %v4511
        %v4517 = vadd.f32 %v4498, %v4513
        %v4518 = vld [vmem:[#allocation2 + $0x10] sm:$0xf8]
        %v4519 = vld [vmem:[#allocation2 + $0x30] sm:$0x7]
        %v4520 = vld [vmem:[%s89 + $0x5] sm:$0x1]
        %v4521 = vperm.slane %v4520, 0
        %v4522 = vmul.f32 %v4518, %v4521
        %v4523 = vmul.f32 %v4442, %v4521
        %v4524 = vmul.f32 %v4519, %v4521
        %v4528 = vrot.slane %v4522, 3
        %v4529 = vrot.slane %v4523, 3
        %v4530 = vsel %vm2879, %v4528, %v4529
        %v4531 = vrot.slane %v4524, 3
        %v4532 = vsel %vm2879, %v4529, %v4531
        %v4535 = vadd.f32 %v4516, %v4530
        %v4536 = vadd.f32 %v4517, %v4532
        %v4537 = vld [vmem:[#allocation2 + $0x10] sm:$0xfc]
        %v4538 = vld [vmem:[#allocation2 + $0x30] sm:$0x3]
        %v4539 = vld [vmem:[%s89 + $0x6] sm:$0x1]
        %v4540 = vperm.slane %v4539, 0
        %v4541 = vmul.f32 %v4537, %v4540
        %v4542 = vmul.f32 %v4442, %v4540
        %v4543 = vmul.f32 %v4538, %v4540
        %v4547 = vrot.slane %v4541, 2
        %v4548 = vrot.slane %v4542, 2
        %v4549 = vsel %vm2921, %v4547, %v4548
        %v4550 = vrot.slane %v4543, 2
        %v4551 = vsel %vm2921, %v4548, %v4550
        %v4554 = vadd.f32 %v4535, %v4549
        %v4555 = vadd.f32 %v4536, %v4551
        %v4556 = vld [vmem:[#allocation2 + $0x10] sm:$0xfe]
        %v4557 = vld [vmem:[#allocation2 + $0x30] sm:$0x1]
        %v4558 = vld [vmem:[%s89 + $0x7] sm:$0x1]
        %v4559 = vperm.slane %v4558, 0
        %v4560 = vmul.f32 %v4556, %v4559
        %v4561 = vmul.f32 %v4442, %v4559
        %v4562 = vmul.f32 %v4557, %v4559
        %v4566 = vrot.slane %v4560, 1
        %v4567 = vrot.slane %v4561, 1
        %v4568 = vsel %vm2963, %v4566, %v4567
        %v4569 = vrot.slane %v4562, 1
        %v4570 = vsel %vm2963, %v4567, %v4569
        %v4573 = vadd.f32 %v4554, %v4568
        %v4574 = vadd.f32 %v4555, %v4570
        %v4575 = vld [vmem:[#allocation2 + $0x10] sm:$0xff]
        %v4576 = vld [vmem:[%s89 + $0x8] sm:$0x1]
        %v4577 = vperm.slane %v4576, 0
        %v4578 = vmul.f32 %v4575, %v4577
        %v4579 = vmul.f32 %v4442, %v4577
        %v4580 = vadd.f32 %v4573, %v4578
        %v4581 = vadd.f32 %v4574, %v4579
        %v4582 = vld [vmem:[#allocation2] sm:$0x80]
        %v4583 = vld [vmem:[#allocation2 + $0x20] sm:$0x7f]
        %v4584 = vld [vmem:[%s89 + $0x9] sm:$0x1]
        %v4585 = vperm.slane %v4584, 0
        %v4586 = vmul.f32 %v4582, %v4585
        %v4587 = vmul.f32 %v4575, %v4585
        %v4588 = vmul.f32 %v4583, %v4585
        %v4592 = vrot.slane %v4586, 7
        %v4593 = vrot.slane %v4587, 7
        %v4594 = vsel %vm2711, %v4592, %v4593
        %v4595 = vrot.slane %v4588, 7
        %v4596 = vsel %vm2711, %v4593, %v4595
        %v4599 = vadd.f32 %v4580, %v4594
        %v4600 = vadd.f32 %v4581, %v4596
        %v4601 = vld [vmem:[#allocation2] sm:$0xc0]
        %v4602 = vld [vmem:[#allocation2 + $0x20] sm:$0x3f]
        %v4603 = vld [vmem:[%s89 + $0xa] sm:$0x1]
        %v4604 = vperm.slane %v4603, 0
        %v4605 = vmul.f32 %v4601, %v4604
        %v4606 = vmul.f32 %v4575, %v4604
        %v4607 = vmul.f32 %v4602, %v4604
        %v4611 = vrot.slane %v4605, 6
        %v4612 = vrot.slane %v4606, 6
        %v4613 = vsel %vm2753, %v4611, %v4612
        %v4614 = vrot.slane %v4607, 6
        %v4615 = vsel %vm2753, %v4612, %v4614
        %v4618 = vadd.f32 %v4599, %v4613
        %v4619 = vadd.f32 %v4600, %v4615
        %v4620 = vld [vmem:[#allocation2] sm:$0xe0]
        %v4621 = vld [vmem:[#allocation2 + $0x20] sm:$0x1f]
        %v4622 = vld [vmem:[%s89 + $0xb] sm:$0x1]
        %v4623 = vperm.slane %v4622, 0
        %v4624 = vmul.f32 %v4620, %v4623
        %v4625 = vmul.f32 %v4575, %v4623
        %v4626 = vmul.f32 %v4621, %v4623
        %v4630 = vrot.slane %v4624, 5
        %v4631 = vrot.slane %v4625, 5
        %v4632 = vsel %vm2795, %v4630, %v4631
        %v4633 = vrot.slane %v4626, 5
        %v4634 = vsel %vm2795, %v4631, %v4633
        %v4637 = vadd.f32 %v4618, %v4632
        %v4638 = vadd.f32 %v4619, %v4634
        %v4639 = vld [vmem:[#allocation2] sm:$0xf0]
        %v4640 = vld [vmem:[#allocation2 + $0x20] sm:$0xf]
        %v4641 = vld [vmem:[%s89 + $0xc] sm:$0x1]
        %v4642 = vperm.slane %v4641, 0
        %v4643 = vmul.f32 %v4639, %v4642
        %v4644 = vmul.f32 %v4575, %v4642
        %v4645 = vmul.f32 %v4640, %v4642
        %v4649 = vrot.slane %v4643, 4
        %v4650 = vrot.slane %v4644, 4
        %v4651 = vsel %vm2837, %v4649, %v4650
        %v4652 = vrot.slane %v4645, 4
        %v4653 = vsel %vm2837, %v4650, %v4652
        %v4656 = vadd.f32 %v4637, %v4651
        %v4657 = vadd.f32 %v4638, %v4653
        %v4658 = vld [vmem:[#allocation2] sm:$0xf8]
        %v4659 = vld [vmem:[#allocation2 + $0x20] sm:$0x7]
        %v4660 = vld [vmem:[%s89 + $0xd] sm:$0x1]
        %v4661 = vperm.slane %v4660, 0
        %v4662 = vmul.f32 %v4658, %v4661
        %v4663 = vmul.f32 %v4575, %v4661
        %v4664 = vmul.f32 %v4659, %v4661
        %v4668 = vrot.slane %v4662, 3
        %v4669 = vrot.slane %v4663, 3
        %v4670 = vsel %vm2879, %v4668, %v4669
        %v4671 = vrot.slane %v4664, 3
        %v4672 = vsel %vm2879, %v4669, %v4671
        %v4675 = vadd.f32 %v4656, %v4670
        %v4676 = vadd.f32 %v4657, %v4672
        %v4677 = vld [vmem:[#allocation2] sm:$0xfc]
        %v4678 = vld [vmem:[#allocation2 + $0x20] sm:$0x3]
        %v4679 = vld [vmem:[%s89 + $0xe] sm:$0x1]
        %v4680 = vperm.slane %v4679, 0
        %v4681 = vmul.f32 %v4677, %v4680
        %v4682 = vmul.f32 %v4575, %v4680
        %v4683 = vmul.f32 %v4678, %v4680
        %v4687 = vrot.slane %v4681, 2
        %v4688 = vrot.slane %v4682, 2
        %v4689 = vsel %vm2921, %v4687, %v4688
        %v4690 = vrot.slane %v4683, 2
        %v4691 = vsel %vm2921, %v4688, %v4690
        %v4694 = vadd.f32 %v4675, %v4689
        %v4695 = vadd.f32 %v4676, %v4691
        %v4696 = vld [vmem:[#allocation2] sm:$0xfe]
        %v4697 = vld [vmem:[#allocation2 + $0x20] sm:$0x1]
        %v4698 = vld [vmem:[%s89 + $0xf] sm:$0x1]
        %v4699 = vperm.slane %v4698, 0
        %v4700 = vmul.f32 %v4696, %v4699
        %v4701 = vmul.f32 %v4575, %v4699
        %v4702 = vmul.f32 %v4697, %v4699
        %v4706 = vrot.slane %v4700, 1
        %v4707 = vrot.slane %v4701, 1
        %v4708 = vsel %vm2963, %v4706, %v4707
        %v4709 = vrot.slane %v4702, 1
        %v4710 = vsel %vm2963, %v4707, %v4709
        %v4713 = vadd.f32 %v4694, %v4708
        %v4714 = vadd.f32 %v4695, %v4710
        %v4715 = vld [vmem:[#allocation12] sm:$0x1]
        %v4717 = vperm.slane %v4715, 0
        %v4719 = vadd.f32 %v4713, %v4717
        %v4720 = vadd.f32 %v4714, %v4717
        %v4721 = vxor.u32 %v4719, 2147483648
        %v4722 = vxor.u32 %v4720, 2147483648
        %v4723 = vmul.f32 %v4721, 1.442695
        %v4724 = vpow.pop %v4723
        %v4725 = vmul.f32 %v4722, 1.442695
        %v4726 = vpow.pop %v4725
        %v4727 = vadd.f32 %v4724, 1.0
        %v4728 = vadd.f32 %v4726, 1.0
        %v4729 = vrcp.pop %v4727
        %v4730 = vmul.f32 %v4727, %v4729
        %v4731 = vsub.f32 1.0, %v4730
        %v4732 = vmul.f32 %v4729, %v4731
        %v4733 = vadd.f32 %v4729, %v4732
        %vm4734 = vweird.f32 %v4727
        %vm4735 = vweird.f32 %v4729
        %vm4736 = vmor %vm4734, %vm4735
        %v4737 = vsel %vm4736, %v4729, %v4733
        %v4738 = vand.u32 2147483647, %v4727
        %vm4739 = vcmp.eq.f32.partialorder %v4738, 8.507059e+37
        %v4740 = vand.u32 %v4727, 2147483648
        %v4741 = vor.u32 1.1754944e-38, %v4740
        %v4742 = vsel %vm4739, %v4741, %v4737
        %v4743 = vmul.f32 1.0, %v4742
        %v4744 = vrcp.pop %v4728
        %v4745 = vmul.f32 %v4728, %v4744
        %v4746 = vsub.f32 1.0, %v4745
        %v4747 = vmul.f32 %v4744, %v4746
        %v4748 = vadd.f32 %v4744, %v4747
        %vm4749 = vweird.f32 %v4728
        %vm4750 = vweird.f32 %v4744
        %vm4751 = vmor %vm4749, %vm4750
        %v4752 = vsel %vm4751, %v4744, %v4748
        %v4753 = vand.u32 2147483647, %v4728
        %vm4754 = vcmp.eq.f32.partialorder %v4753, 8.507059e+37
        %v4755 = vand.u32 %v4728, 2147483648
        %v4756 = vor.u32 1.1754944e-38, %v4755
        %v4757 = vsel %vm4754, %v4756, %v4752
        %v4758 = vmul.f32 1.0, %v4757
        %v4759 = vmul.f32 %v4719, %v4743
        %v4760 = vmul.f32 %v4720, %v4758
        %v4761 = vpack.c.bf16 %v4760, %v4759
        %v4762 = vld [vmem:[%s93] sm:$0xff]
        %v4763 = vld [vmem:[%s93 + $0x8] sm:$0xff]
        %v4764 = vld [vmem:[%s93 + $0x10] sm:$0xff]
        %v4765 = vld [vmem:[%s93 + $0x18] sm:$0xff]
        %v4766 = vld [vmem:[%s93 + $0x20] sm:$0xff]
        %v4767 = vld [vmem:[%s93 + $0x28] sm:$0xff]
        %v4768 = vld [vmem:[%s93 + $0x30] sm:$0xff]
        %v4769 = vld [vmem:[%s93 + $0x38] sm:$0xff]
        %v4770 = vld [vmem:[%s93 + $0x40] sm:$0xff]
        %v4771 = vld [vmem:[%s93 + $0x48] sm:$0xff]
        %v4772 = vld [vmem:[%s93 + $0x50] sm:$0xff]
        %v4773 = vld [vmem:[%s93 + $0x58] sm:$0xff]
        %v4774 = vld [vmem:[%s93 + $0x60] sm:$0xff]
        %v4775 = vld [vmem:[%s93 + $0x68] sm:$0xff]
        %v4776 = vld [vmem:[%s93 + $0x70] sm:$0xff]
        %v4777 = vld [vmem:[%s93 + $0x78] sm:$0xff]
        %v4778 = vpack.c.bf16 %v4763, %v4762
        %v4779 = vpack.c.bf16 %v4765, %v4764
        %v4780 = vpack.c.bf16 %v4767, %v4766
        %v4781 = vpack.c.bf16 %v4769, %v4768
        %v4782 = vpack.c.bf16 %v4771, %v4770
        %v4783 = vpack.c.bf16 %v4773, %v4772
        %v4784 = vpack.c.bf16 %v4775, %v4774
        %v4785 = vpack.c.bf16 %v4777, %v4776
        %v4786 = vld [vmem:[#allocation14] sm:$0x1]
        %v4788 = vperm.slane %v4786, 0
        %4790 = vmatpush.bf16.msra.mxu0 %v4785
        %4791 = vmatpush.bf16.msra.mxu0 %v4784
        %4792 = vmatpush.bf16.msra.mxu0 %v4783
        %4793 = vmatpush.bf16.msra.mxu0 %v4782
        %4794 = vmatpush.bf16.msra.mxu0 %v4781
        %4795 = vmatpush.bf16.msra.mxu0 %v4780
        %4796 = vmatpush.bf16.msra.mxu0 %v4779
        %4797 = vmatpush.bf16.msra.mxu0 %v4778
        %4798 = vmatmul.bf16.gmra.mxu0 %v4761
        %v4799 = vpop.f32.mrf.mxu0
        %v4800 = vadd.f32 %v4788, %v4799
        %v4801 = vpop.f32.mrf.mxu0
        %v4802 = vadd.f32 %v4788, %v4801
        %4803 = vdwg.mxu0
        %v4804 = vadd.f32 %v4273, %v4800
        %v4805 = vadd.f32 %v4274, %v4802
        %v4806 = vld [vmem:[%s15] sm:$0x1]
        %v4807 = vld [vmem:[%s17] sm:$0x1]
        %v4808 = vsel %vm1629, %v4804, 0.0
        %4809 = vadd.xlane.f32.xlu0 %v4808
        %v4810 = vpop.xlane.xlu0 %4809
        %v4811 = vsel %vm1629, %v4805, 0.0
        %4812 = vadd.xlane.f32.xlu0 %v4811
        %v4813 = vpop.xlane.xlu0 %4812
        %v4814 = vmul.f32 %v4810, %v1642
        %v4815 = vmul.f32 %v4813, %v1642
        %v4816 = vsub.f32 %v4804, %v4814
        %v4817 = vsub.f32 %v4805, %v4815
        %v4818 = vmul.f32 %v4816, %v4816
        %v4819 = vmul.f32 %v4817, %v4817
        %v4820 = vsel %vm1629, %v4818, 0.0
        %4821 = vadd.xlane.f32.xlu0 %v4820
        %v4822 = vpop.xlane.xlu0 %4821
        %v4823 = vsel %vm1629, %v4819, 0.0
        %4824 = vadd.xlane.f32.xlu0 %v4823
        %v4825 = vpop.xlane.xlu0 %4824
        %v4826 = vmul.f32 %v4822, %v1642
        %v4827 = vmul.f32 %v4825, %v1642
        %v4828 = vadd.f32 %v4826, 1e-05
        %v4829 = vadd.f32 %v4827, 1e-05
        %v4830 = vrsqrt.pop %v4828
        %v4831 = vmul.f32 %v4830, %v4828
        %v4832 = vmul.f32 %v4831, %v4830
        %v4833 = vmul.f32 0.5, %v4832
        %v4834 = vsub.f32 1.5, %v4833
        %v4835 = vmul.f32 %v4830, %v4834
        %vm4836 = vweird.f32 %v4828
        %vm4837 = vweird.f32 %v4830
        %vm4838 = vmor %vm4836, %vm4837
        %v4839 = vsel %vm4838, %v4830, %v4835
        %v4840 = vrsqrt.pop %v4829
        %v4841 = vmul.f32 %v4840, %v4829
        %v4842 = vmul.f32 %v4841, %v4840
        %v4843 = vmul.f32 0.5, %v4842
        %v4844 = vsub.f32 1.5, %v4843
        %v4845 = vmul.f32 %v4840, %v4844
        %vm4846 = vweird.f32 %v4829
        %vm4847 = vweird.f32 %v4840
        %vm4848 = vmor %vm4846, %vm4847
        %v4849 = vsel %vm4848, %v4840, %v4845
        %v4850 = vmul.f32 %v4816, %v4839
        %v4851 = vmul.f32 %v4817, %v4849
        %v4853 = vperm.slane %v4806, 0
        %v4855 = vmul.f32 %v4850, %v4853
        %v4856 = vmul.f32 %v4851, %v4853
        %v4858 = vperm.slane %v4807, 0
        %v4860 = vadd.f32 %v4855, %v4858
        %v4861 = vadd.f32 %v4856, %v4858
        %v4862 = vpack.c.bf16 %v4861, %v4860
        %v4863 = vld [vmem:[%s19] sm:$0xff]
        %v4864 = vld [vmem:[%s19 + $0x8] sm:$0xff]
        %v4865 = vld [vmem:[%s19 + $0x10] sm:$0xff]
        %v4866 = vld [vmem:[%s19 + $0x18] sm:$0xff]
        %v4867 = vld [vmem:[%s19 + $0x20] sm:$0xff]
        %v4868 = vld [vmem:[%s19 + $0x28] sm:$0xff]
        %v4869 = vld [vmem:[%s19 + $0x30] sm:$0xff]
        %v4870 = vld [vmem:[%s19 + $0x38] sm:$0xff]
        %v4871 = vld [vmem:[%s19 + $0x40] sm:$0xff]
        %v4872 = vld [vmem:[%s19 + $0x48] sm:$0xff]
        %v4873 = vld [vmem:[%s19 + $0x50] sm:$0xff]
        %v4874 = vld [vmem:[%s19 + $0x58] sm:$0xff]
        %v4875 = vld [vmem:[%s19 + $0x60] sm:$0xff]
        %v4876 = vld [vmem:[%s19 + $0x68] sm:$0xff]
        %v4877 = vld [vmem:[%s19 + $0x70] sm:$0xff]
        %v4878 = vld [vmem:[%s19 + $0x78] sm:$0xff]
        %v4879 = vpack.c.bf16 %v4865, %v4863
        %v4880 = vpack.c.bf16 %v4866, %v4864
        %v4881 = vpack.c.bf16 %v4869, %v4867
        %v4882 = vpack.c.bf16 %v4870, %v4868
        %v4883 = vpack.c.bf16 %v4873, %v4871
        %v4884 = vpack.c.bf16 %v4874, %v4872
        %v4885 = vpack.c.bf16 %v4877, %v4875
        %v4886 = vpack.c.bf16 %v4878, %v4876
        %v4887 = vld [vmem:[%s21] sm:$0x3]
        %v4889 = vperm.slane %v4887, 0
        %v4890 = vperm.slane %v4887, 1
        %v4894 = vsel %vm1629, %v4862, 0
        %4896 = vmatpush.bf16.msra.mxu0 0
        %4897 = vmatpush.bf16.msra.mxu0 0
        %4898 = vmatpush.bf16.msra.mxu0 0
        %4899 = vmatpush.bf16.msra.mxu0 0
        %4900 = vmatpush.bf16.msra.mxu0 %v4885
        %4901 = vmatpush.bf16.msra.mxu0 %v4883
        %4902 = vmatpush.bf16.msra.mxu0 %v4881
        %4903 = vmatpush.bf16.msra.mxu0 %v4879
        %4904 = vmatmul.bf16.gmra.mxu0 %v4894
        %v4905 = vpop.f32.mrf.mxu0
        %v4906 = vadd.f32 %v4889, %v4905
        %v4907 = vpop.f32.mrf.mxu0
        %v4908 = vadd.f32 %v4889, %v4907
        %4909 = vdwg.mxu0
        %4910 = vmatpush.bf16.msra.mxu0 0
        %4911 = vmatpush.bf16.msra.mxu0 0
        %4912 = vmatpush.bf16.msra.mxu0 0
        %4913 = vmatpush.bf16.msra.mxu0 0
        %4914 = vmatpush.bf16.msra.mxu0 %v4886
        %4915 = vmatpush.bf16.msra.mxu0 %v4884
        %4916 = vmatpush.bf16.msra.mxu0 %v4882
        %4917 = vmatpush.bf16.msra.mxu0 %v4880
        %4918 = vmatmul.bf16.gmra.mxu0 %v4894
        %v4919 = vpop.f32.mrf.mxu0
        %v4920 = vadd.f32 %v4890, %v4919
        %v4921 = vpop.f32.mrf.mxu0
        %v4922 = vadd.f32 %v4890, %v4921
        %4923 = vdwg.mxu0
        %v4924 = vxor.u32 %v4906, 2147483648
        %v4925 = vxor.u32 %v4920, 2147483648
        %v4926 = vxor.u32 %v4908, 2147483648
        %v4927 = vxor.u32 %v4922, 2147483648
        %v4928 = vmul.f32 %v4924, 1.442695
        %v4929 = vpow.pop %v4928
        %v4930 = vmul.f32 %v4925, 1.442695
        %v4931 = vpow.pop %v4930
        %v4932 = vmul.f32 %v4926, 1.442695
        %v4933 = vpow.pop %v4932
        %v4934 = vmul.f32 %v4927, 1.442695
        %v4935 = vpow.pop %v4934
        %v4936 = vadd.f32 %v4929, 1.0
        %v4937 = vadd.f32 %v4931, 1.0
        %v4938 = vadd.f32 %v4933, 1.0
        %v4939 = vadd.f32 %v4935, 1.0
        %v4940 = vrcp.pop %v4936
        %v4941 = vmul.f32 %v4936, %v4940
        %v4942 = vsub.f32 1.0, %v4941
        %v4943 = vmul.f32 %v4940, %v4942
        %v4944 = vadd.f32 %v4940, %v4943
        %vm4945 = vweird.f32 %v4936
        %vm4946 = vweird.f32 %v4940
        %vm4947 = vmor %vm4945, %vm4946
        %v4948 = vsel %vm4947, %v4940, %v4944
        %v4949 = vand.u32 2147483647, %v4936
        %vm4950 = vcmp.eq.f32.partialorder %v4949, 8.507059e+37
        %v4951 = vand.u32 %v4936, 2147483648
        %v4952 = vor.u32 1.1754944e-38, %v4951
        %v4953 = vsel %vm4950, %v4952, %v4948
        %v4954 = vmul.f32 1.0, %v4953
        %v4955 = vrcp.pop %v4937
        %v4956 = vmul.f32 %v4937, %v4955
        %v4957 = vsub.f32 1.0, %v4956
        %v4958 = vmul.f32 %v4955, %v4957
        %v4959 = vadd.f32 %v4955, %v4958
        %vm4960 = vweird.f32 %v4937
        %vm4961 = vweird.f32 %v4955
        %vm4962 = vmor %vm4960, %vm4961
        %v4963 = vsel %vm4962, %v4955, %v4959
        %v4964 = vand.u32 2147483647, %v4937
        %vm4965 = vcmp.eq.f32.partialorder %v4964, 8.507059e+37
        %v4966 = vand.u32 %v4937, 2147483648
        %v4967 = vor.u32 1.1754944e-38, %v4966
        %v4968 = vsel %vm4965, %v4967, %v4963
        %v4969 = vmul.f32 1.0, %v4968
        %v4970 = vrcp.pop %v4938
        %v4971 = vmul.f32 %v4938, %v4970
        %v4972 = vsub.f32 1.0, %v4971
        %v4973 = vmul.f32 %v4970, %v4972
        %v4974 = vadd.f32 %v4970, %v4973
        %vm4975 = vweird.f32 %v4938
        %vm4976 = vweird.f32 %v4970
        %vm4977 = vmor %vm4975, %vm4976
        %v4978 = vsel %vm4977, %v4970, %v4974
        %v4979 = vand.u32 2147483647, %v4938
        %vm4980 = vcmp.eq.f32.partialorder %v4979, 8.507059e+37
        %v4981 = vand.u32 %v4938, 2147483648
        %v4982 = vor.u32 1.1754944e-38, %v4981
        %v4983 = vsel %vm4980, %v4982, %v4978
        %v4984 = vmul.f32 1.0, %v4983
        %v4985 = vrcp.pop %v4939
        %v4986 = vmul.f32 %v4939, %v4985
        %v4987 = vsub.f32 1.0, %v4986
        %v4988 = vmul.f32 %v4985, %v4987
        %v4989 = vadd.f32 %v4985, %v4988
        %vm4990 = vweird.f32 %v4939
        %vm4991 = vweird.f32 %v4985
        %vm4992 = vmor %vm4990, %vm4991
        %v4993 = vsel %vm4992, %v4985, %v4989
        %v4994 = vand.u32 2147483647, %v4939
        %vm4995 = vcmp.eq.f32.partialorder %v4994, 8.507059e+37
        %v4996 = vand.u32 %v4939, 2147483648
        %v4997 = vor.u32 1.1754944e-38, %v4996
        %v4998 = vsel %vm4995, %v4997, %v4993
        %v4999 = vmul.f32 1.0, %v4998
        %v5000 = vmul.f32 %v4906, %v4954
        %v5001 = vmul.f32 %v4920, %v4969
        %v5002 = vmul.f32 %v4908, %v4984
        %v5003 = vmul.f32 %v4922, %v4999
        %v5004 = vpack.c.bf16 %v5002, %v5000
        %v5005 = vpack.c.bf16 %v5003, %v5001
        %v5006 = vld [vmem:[%s23] sm:$0xff]
        %v5007 = vld [vmem:[%s23 + $0x8] sm:$0xff]
        %v5008 = vld [vmem:[%s23 + $0x10] sm:$0xff]
        %v5009 = vld [vmem:[%s23 + $0x18] sm:$0xff]
        %v5010 = vld [vmem:[%s23 + $0x20] sm:$0xff]
        %v5011 = vld [vmem:[%s23 + $0x28] sm:$0xff]
        %v5012 = vld [vmem:[%s23 + $0x30] sm:$0xff]
        %v5013 = vld [vmem:[%s23 + $0x38] sm:$0xff]
        %v5014 = vld [vmem:[%s23 + $0x40] sm:$0xff]
        %v5015 = vld [vmem:[%s23 + $0x48] sm:$0xff]
        %v5016 = vld [vmem:[%s23 + $0x50] sm:$0xff]
        %v5017 = vld [vmem:[%s23 + $0x58] sm:$0xff]
        %v5018 = vld [vmem:[%s23 + $0x60] sm:$0xff]
        %v5019 = vld [vmem:[%s23 + $0x68] sm:$0xff]
        %v5020 = vld [vmem:[%s23 + $0x70] sm:$0xff]
        %v5021 = vld [vmem:[%s23 + $0x78] sm:$0xff]
        %v5022 = vld [vmem:[%s23 + $0x80] sm:$0xff]
        %v5023 = vld [vmem:[%s23 + $0x88] sm:$0xff]
        %v5024 = vld [vmem:[%s23 + $0x90] sm:$0xff]
        %v5025 = vld [vmem:[%s23 + $0x98] sm:$0xff]
        %v5026 = vld [vmem:[%s23 + $0xa0] sm:$0xff]
        %v5027 = vld [vmem:[%s23 + $0xa8] sm:$0xff]
        %v5028 = vld [vmem:[%s23 + $0xb0] sm:$0xff]
        %v5029 = vld [vmem:[%s23 + $0xb8] sm:$0xff]
        %v5030 = vld [vmem:[%s23 + $0xc0] sm:$0xff]
        %v5031 = vld [vmem:[%s23 + $0xc8] sm:$0xff]
        %v5032 = vld [vmem:[%s23 + $0xd0] sm:$0xff]
        %v5033 = vld [vmem:[%s23 + $0xd8] sm:$0xff]
        %v5034 = vld [vmem:[%s23 + $0xe0] sm:$0xff]
        %v5035 = vld [vmem:[%s23 + $0xe8] sm:$0xff]
        %v5036 = vld [vmem:[%s23 + $0xf0] sm:$0xff]
        %v5037 = vld [vmem:[%s23 + $0xf8] sm:$0xff]
        %v5038 = vpack.c.bf16 %v5007, %v5006
        %v5039 = vpack.c.bf16 %v5009, %v5008
        %v5040 = vpack.c.bf16 %v5011, %v5010
        %v5041 = vpack.c.bf16 %v5013, %v5012
        %v5042 = vpack.c.bf16 %v5015, %v5014
        %v5043 = vpack.c.bf16 %v5017, %v5016
        %v5044 = vpack.c.bf16 %v5019, %v5018
        %v5045 = vpack.c.bf16 %v5021, %v5020
        %v5046 = vpack.c.bf16 %v5023, %v5022
        %v5047 = vpack.c.bf16 %v5025, %v5024
        %v5048 = vpack.c.bf16 %v5027, %v5026
        %v5049 = vpack.c.bf16 %v5029, %v5028
        %v5050 = vpack.c.bf16 %v5031, %v5030
        %v5051 = vpack.c.bf16 %v5033, %v5032
        %v5052 = vpack.c.bf16 %v5035, %v5034
        %v5053 = vpack.c.bf16 %v5037, %v5036
        %v5054 = vld [vmem:[%s25] sm:$0x1]
        %v5056 = vperm.slane %v5054, 0
        %5058 = vmatpush.bf16.msra.mxu0 %v5045
        %5059 = vmatpush.bf16.msra.mxu0 %v5044
        %5060 = vmatpush.bf16.msra.mxu0 %v5043
        %5061 = vmatpush.bf16.msra.mxu0 %v5042
        %5062 = vmatpush.bf16.msra.mxu0 %v5041
        %5063 = vmatpush.bf16.msra.mxu0 %v5040
        %5064 = vmatpush.bf16.msra.mxu0 %v5039
        %5065 = vmatpush.bf16.msra.mxu0 %v5038
        %5066 = vmatmul.bf16.gmra.mxu0 %v5004
        %v5067 = vpop.f32.mrf.mxu0
        %v5068 = vadd.f32 %v5056, %v5067
        %v5069 = vpop.f32.mrf.mxu0
        %v5070 = vadd.f32 %v5056, %v5069
        %5071 = vdwg.mxu0
        %5072 = vmatpush.bf16.msra.mxu0 %v5053
        %5073 = vmatpush.bf16.msra.mxu0 %v5052
        %5074 = vmatpush.bf16.msra.mxu0 %v5051
        %5075 = vmatpush.bf16.msra.mxu0 %v5050
        %5076 = vmatpush.bf16.msra.mxu0 %v5049
        %5077 = vmatpush.bf16.msra.mxu0 %v5048
        %5078 = vmatpush.bf16.msra.mxu0 %v5047
        %5079 = vmatpush.bf16.msra.mxu0 %v5046
        %5080 = vmatmul.bf16.gmra.mxu0 %v5005
        %v5081 = vpop.f32.mrf.mxu0
        %v5082 = vadd.f32 %v5068, %v5081
        %v5083 = vpop.f32.mrf.mxu0
        %v5084 = vadd.f32 %v5070, %v5083
        %5085 = vdwg.mxu0
        %v5086 = vmul.f32 %v5082, 0.5
        %v5087 = vmul.f32 %v5084, 0.5
        %v5088 = vadd.f32 %v4804, %v5086
        %v5089 = vadd.f32 %v4805, %v5087
        %v5090 = vld [vmem:[#allocation15] sm:$0x1]
        %v5091 = vld [vmem:[#allocation17] sm:$0x1]
        %v5092 = vsel %vm1629, %v5088, 0.0
        %5093 = vadd.xlane.f32.xlu0 %v5092
        %v5094 = vpop.xlane.xlu0 %5093
        %v5095 = vsel %vm1629, %v5089, 0.0
        %5096 = vadd.xlane.f32.xlu0 %v5095
        %v5097 = vpop.xlane.xlu0 %5096
        %v5098 = vmul.f32 %v5094, %v1642
        %v5099 = vmul.f32 %v5097, %v1642
        %v5100 = vsub.f32 %v5088, %v5098
        %v5101 = vsub.f32 %v5089, %v5099
        %v5102 = vmul.f32 %v5100, %v5100
        %v5103 = vmul.f32 %v5101, %v5101
        %v5104 = vsel %vm1629, %v5102, 0.0
        %5105 = vadd.xlane.f32.xlu0 %v5104
        %v5106 = vpop.xlane.xlu0 %5105
        %v5107 = vsel %vm1629, %v5103, 0.0
        %5108 = vadd.xlane.f32.xlu0 %v5107
        %v5109 = vpop.xlane.xlu0 %5108
        %v5110 = vmul.f32 %v5106, %v1642
        %v5111 = vmul.f32 %v5109, %v1642
        %v5112 = vadd.f32 %v5110, 1e-05
        %v5113 = vadd.f32 %v5111, 1e-05
        %v5114 = vrsqrt.pop %v5112
        %v5115 = vmul.f32 %v5114, %v5112
        %v5116 = vmul.f32 %v5115, %v5114
        %v5117 = vmul.f32 0.5, %v5116
        %v5118 = vsub.f32 1.5, %v5117
        %v5119 = vmul.f32 %v5114, %v5118
        %vm5120 = vweird.f32 %v5112
        %vm5121 = vweird.f32 %v5114
        %vm5122 = vmor %vm5120, %vm5121
        %v5123 = vsel %vm5122, %v5114, %v5119
        %v5124 = vrsqrt.pop %v5113
        %v5125 = vmul.f32 %v5124, %v5113
        %v5126 = vmul.f32 %v5125, %v5124
        %v5127 = vmul.f32 0.5, %v5126
        %v5128 = vsub.f32 1.5, %v5127
        %v5129 = vmul.f32 %v5124, %v5128
        %vm5130 = vweird.f32 %v5113
        %vm5131 = vweird.f32 %v5124
        %vm5132 = vmor %vm5130, %vm5131
        %v5133 = vsel %vm5132, %v5124, %v5129
        %v5134 = vmul.f32 %v5100, %v5123
        %v5135 = vmul.f32 %v5101, %v5133
        %v5137 = vperm.slane %v5090, 0
        %v5139 = vmul.f32 %v5134, %v5137
        %v5140 = vmul.f32 %v5135, %v5137
        %v5142 = vperm.slane %v5091, 0
        %v5144 = vadd.f32 %v5139, %v5142
        %v5145 = vadd.f32 %v5140, %v5142
        %5146 = vst.msk [vmem:[%s1614] sm:$0xff] %vm1629, %v5144
        %5147 = vst.msk [vmem:[%s1614 + $0x8] sm:$0xff] %vm1629, %v5145
        %s5148 = sand.u32 %s1183, 1
        %s5149 = scalar_lea.sflag [#allocation5], %s5148
        %s5150 = sand.u32 %s1183, 1
        %s5151 = smul.addr %s5150, 16
        %s5152 = scalar_lea.vmem [#allocation18], %s5151
        // Predicated region
        $region257: #{h3conformer_hybrid_block.1} parent=219 // pred_check
          %p5153 = pneg %p1193
        $region258: #{h3conformer_hybrid_block.1} parent=219 // pred_check_branch
          %5155 = sbr.rel (%p5153) target = $region260
        $region259: #{h3conformer_hybrid_block.1} parent=219 // pred_region
          %5157 = vsyncadd %s5149, 0
          %s5158 = smul.addr %s120, 2
          %s5159 = smul.addr %s5158, 8
          %s5160 = scalar_lea.hbm %s101, %s5159
          %s5161 = sshll.u32 %s5152, 4
          %s5162 = int_to_ptr.vmem [resolvable:$true] %s5161
          %s5163 = sshll.u32 %s5160, 4
          %s5164 = int_to_ptr.hbm [resolvable:$true] %s5163
          %5169 = dma.vmem_to_hbm [thread:$0]  %s5162, 256, %s5164, %s5149, 128, 128, 8
        $region260: #{h3conformer_hybrid_block.1} parent=219 // pred_fallthru
          _
      $region220: #{h3conformer_hybrid_block.1} parent=5 // pred_fallthru
        _
      %p5170 = scmp.le.s32.totalorder 2, %s115
      // Predicated region
      $region261: #{h3conformer_hybrid_block.1} parent=5 // pred_check
        %p5171 = pneg %p5170
      $region262: #{h3conformer_hybrid_block.1} parent=5 // pred_check_branch
        %5173 = sbr.rel (%p5171) target = $region264
      $region263: #{h3conformer_hybrid_block.1} parent=5 // pred_region
        %s5174 = ssub.s32 %s115, 2
        // Predicated region
        $region265: #{h3conformer_hybrid_block.1} parent=263 // pred_check
          %p5175 = pneg %p1199
        $region266: #{h3conformer_hybrid_block.1} parent=263 // pred_check_branch
          %5177 = sbr.rel (%p5175) target = $region268
        $region267: #{h3conformer_hybrid_block.1} parent=263 // pred_region
          %s5178 = sand.u32 %s1184, 1
          %s5179 = scalar_lea.sflag [#allocation5], %s5178
          %s5180 = sand.u32 %s1184, 1
          %s5181 = smul.addr %s5180, 16
          %s5182 = scalar_lea.vmem [#allocation18], %s5181
          %5184 = dma.done %s5179, 256
        $region268: #{h3conformer_hybrid_block.1} parent=263 // pred_fallthru
          _
      $region264: #{h3conformer_hybrid_block.1} parent=5 // pred_fallthru
        _
    $region6: #{h3conformer_hybrid_block.1} parent=1 // loop_footer
      %s119 = sadd.s32 1, %s115
    $region7: #{h3conformer_hybrid_block.1} parent=1 // loop_footer_branch
      %114 = sbr.rel target = $region3
    $region8: #{h3conformer_hybrid_block.1} parent=1 // loop_exit
      _
    %5185 = vsyncpa [#allocation4], 1
    %s5186 = scalar_lea.sflag [#allocation4], 1
    %5187 = vsyncpa %s5186, 1
    %5188 = vsyncpa [#allocation7], 1
    %5189 = vsyncpa [#allocation10], 1
    %5190 = vsyncpa [#allocation13], 1
    %5191 = vsyncpa [#allocation16], 1
    %5192 = vsyncpa [#allocation5], 1
    %s5193 = scalar_lea.sflag [#allocation5], 1
    %5194 = vsyncpa %s5193, 1

</llo_original>
